<compile_context>
chip_gen: v6e
topology: v6e:2x2x1
jax: 0.10.0
libtpu: 0.0.40
codegen_flags: <defaults>
</compile_context>

<pallas_src>
import functools

import jax
import jax.numpy as jnp
import numpy as np
from jax.experimental import pallas as pl
from jax.experimental.pallas import tpu as pltpu

EPS = 1e-5
LANE = 128


def _bottleneck_kernel(x_ref, w1_ref, g1_ref, b1_ref,
                       w2_ref, g2_ref, b2_ref,
                       w3_ref, g3_ref, b3_ref,
                       o_ref, patch_ref, *, n, h, w):
    """Whole Bottleneck forward, resident in VMEM.

    x_ref  : (M, Cin_p)  f32   input activation, M = N*H*W, channels padded
    w1_ref : (Cin_p, Cmid_p)       bf16   1x1 conv weight
    w2_ref : (9*Cmid_p, Cmid_p)    bf16   3x3 conv weight (HWIO, im2col-reshaped)
    w3_ref : (Cmid_p, Cout_p)      bf16   1x1 conv weight
    g*/b*  : (1, C*_p)   f32   BN affine gamma / beta (zero-padded)
    o_ref  : (M, Cout_p) f32   output
    patch_ref: VMEM scratch (N, H, W, 9*Cmid_p) bf16 — im2col staging buffer
    """
    N, H, W = n, h, w
    M, _ = x_ref.shape
    Cmid = w1_ref.shape[1]
    inv_m = 1.0 / M

    def bn(y, g_ref, b_ref):
        # Single-pass training-mode BN fused into the conv epilogue.
        s = jnp.sum(y, axis=0, keepdims=True)
        ss = jnp.sum(y * y, axis=0, keepdims=True)
        mean = s * inv_m
        var = ss * inv_m - mean * mean            # biased variance
        scale = g_ref[...] * jax.lax.rsqrt(var + EPS)   # rsqrt -> EUP slot
        shift = b_ref[...] - mean * scale
        return y * scale + shift

    # ---- conv1 (1x1) + bn1 + relu : one (M,Cin)x(Cin,Cmid) MXU matmul -------
    y = jnp.dot(x_ref[...].astype(jnp.bfloat16), w1_ref[...],
                preferred_element_type=jnp.float32)
    y = jnp.maximum(bn(y, g1_ref, b1_ref), 0.0)

    # ---- conv2 (3x3, pad=1, stride=1) as a single im2col matmul -------------
    # Zero the staging buffer once (covers the halo borders), then write the
    # 9 shifted taps into lane-aligned 128-wide column blocks.
    patch_ref[...] = jnp.zeros(patch_ref.shape, patch_ref.dtype)
    y_sp = y.astype(jnp.bfloat16).reshape(N, H, W, Cmid)
    taps = ((-1, -1), (-1, 0), (-1, 1),
            (0, -1), (0, 0), (0, 1),
            (1, -1), (1, 0), (1, 1))
    for t, (dh, dw) in enumerate(taps):           # statically unrolled
        hs, he = max(0, -dh), H - max(0, dh)
        ws, we = max(0, -dw), W - max(0, dw)
        patch_ref[:, hs:he, ws:we, t * Cmid:(t + 1) * Cmid] = (
            y_sp[:, hs + dh:he + dh, ws + dw:we + dw, :])
    y = jnp.dot(patch_ref[...].reshape(M, 9 * Cmid), w2_ref[...],
                preferred_element_type=jnp.float32)
    y = jnp.maximum(bn(y, g2_ref, b2_ref), 0.0)

    # ---- conv3 (1x1) + bn3 ---------------------------------------------------
    y = jnp.dot(y.astype(jnp.bfloat16), w3_ref[...],
                preferred_element_type=jnp.float32)
    y = bn(y, g3_ref, b3_ref)

    # ---- residual + relu : re-read x from VMEM here (it was not kept live) --
    o_ref[...] = jnp.maximum(y + x_ref[...], 0.0).astype(o_ref.dtype)


def _round_up_lane(c):
    return ((c + LANE - 1) // LANE) * LANE


def _pad_axes(a, targets, axes):
    pads = [(0, 0)] * a.ndim
    for ax, t in zip(axes, targets):
        pads[ax] = (0, t - a.shape[ax])
    return jnp.pad(a, pads)


def bottleneck_pallas(x_nhwc, w1_io, g1, b1, w2_hwio, g2, b2, w3_io, g3, b3):
    """x: (N,H,W,Cin) f32; w1: (Cin,Cmid); w2: (3,3,Cmid,Cmid) HWIO; w3: (Cmid,Cout)."""
    N, H, W, Cin = x_nhwc.shape
    Cmid = w1_io.shape[1]
    Cout = w3_io.shape[1]
    assert Cin == Cout, "identity residual requires inplanes == planes * expansion"
    Cin_p = _round_up_lane(Cin)
    Cmid_p = _round_up_lane(Cmid)
    Cout_p = Cin_p                                 # same padded width as x
    M = N * H * W

    # Zero-pad channels to lane-dense widths; cast matmul operands to bf16.
    x_p = _pad_axes(x_nhwc.astype(jnp.float32), (Cin_p,), (3,)).reshape(M, Cin_p)
    w1_p = _pad_axes(w1_io, (Cin_p, Cmid_p), (0, 1)).astype(jnp.bfloat16)
    w2_p = _pad_axes(w2_hwio, (Cmid_p, Cmid_p), (2, 3)) \
        .reshape(9 * Cmid_p, Cmid_p).astype(jnp.bfloat16)
    w3_p = _pad_axes(w3_io, (Cmid_p, Cout_p), (0, 1)).astype(jnp.bfloat16)
    g1_p = _pad_axes(g1.reshape(1, -1).astype(jnp.float32), (Cmid_p,), (1,))
    b1_p = _pad_axes(b1.reshape(1, -1).astype(jnp.float32), (Cmid_p,), (1,))
    g2_p = _pad_axes(g2.reshape(1, -1).astype(jnp.float32), (Cmid_p,), (1,))
    b2_p = _pad_axes(b2.reshape(1, -1).astype(jnp.float32), (Cmid_p,), (1,))
    g3_p = _pad_axes(g3.reshape(1, -1).astype(jnp.float32), (Cout_p,), (1,))
    b3_p = _pad_axes(b3.reshape(1, -1).astype(jnp.float32), (Cout_p,), (1,))

    vmem = pl.BlockSpec(memory_space=pltpu.MemorySpace.VMEM)
    kernel = functools.partial(_bottleneck_kernel, n=N, h=H, w=W)
    out = pl.pallas_call(
        kernel,
        out_shape=jax.ShapeDtypeStruct((M, Cout_p), jnp.float32),
        in_specs=[vmem] * 10,
        out_specs=vmem,
        scratch_shapes=[pltpu.VMEM((N, H, W, 9 * Cmid_p), jnp.bfloat16)],
    )(x_p, w1_p, g1_p, b1_p, w2_p, g2_p, b2_p, w3_p, g3_p, b3_p)

    return out.reshape(N, H, W, Cout_p)[..., :Cout]


def bottleneck_reference(x_nhwc, w1_io, g1, b1, w2_hwio, g2, b2, w3_io, g3, b3):
    """Pure-JAX reference (same mixed precision: bf16 conv inputs, f32 accum/BN)."""
    def bn(y, g, b):
        mean = y.mean(axis=(0, 1, 2), keepdims=True)
        var = ((y - mean) ** 2).mean(axis=(0, 1, 2), keepdims=True)
        return (y - mean) * jax.lax.rsqrt(var + EPS) * g.reshape(1, 1, 1, -1) \
            + b.reshape(1, 1, 1, -1)

    def conv1x1(y, wio):
        return jnp.einsum("nhwc,cd->nhwd",
                          y.astype(jnp.bfloat16), wio.astype(jnp.bfloat16),
                          preferred_element_type=jnp.float32)

    def conv3x3(y, whwio):
        return jax.lax.conv_general_dilated(
            y.astype(jnp.bfloat16), whwio.astype(jnp.bfloat16),
            window_strides=(1, 1), padding="SAME",
            dimension_numbers=("NHWC", "HWIO", "NHWC"),
            preferred_element_type=jnp.float32)

    out = jax.nn.relu(bn(conv1x1(x_nhwc, w1_io), g1, b1))
    out = jax.nn.relu(bn(conv3x3(out, w2_hwio), g2, b2))
    out = bn(conv1x1(out, w3_io), g3, b3)
    return jax.nn.relu(out + x_nhwc)


if __name__ == "__main__":
    # Bottleneck(inplanes=16, planes=4, stride=1, downsample=None)
    # (identity residual requires inplanes == planes * expansion = 16)
    N, H, W = 2, 16, 16
    planes = 4
    inplanes = planes * 4

    key = jax.random.PRNGKey(0)
    kx, k1, k2, k3, kg = jax.random.split(key, 5)
    kg1, kb1, kg2, kb2, kg3, kb3 = jax.random.split(kg, 6)

    # PyTorch-shaped params (deterministic synthetic init).
    x_nchw = jax.random.normal(kx, (N, inplanes, H, W), jnp.float32)
    w1_oihw = jax.random.normal(k1, (planes, inplanes, 1, 1), jnp.float32) \
        * float(np.sqrt(2.0 / inplanes))
    w2_oihw = jax.random.normal(k2, (planes, planes, 3, 3), jnp.float32) \
        * float(np.sqrt(2.0 / (9 * planes)))
    w3_oihw = jax.random.normal(k3, (planes * 4, planes, 1, 1), jnp.float32) \
        * float(np.sqrt(2.0 / planes))
    g1 = 1.0 + 0.1 * jax.random.normal(kg1, (planes,), jnp.float32)
    b1 = 0.1 * jax.random.normal(kb1, (planes,), jnp.float32)
    g2 = 1.0 + 0.1 * jax.random.normal(kg2, (planes,), jnp.float32)
    b2 = 0.1 * jax.random.normal(kb2, (planes,), jnp.float32)
    g3 = 1.0 + 0.1 * jax.random.normal(kg3, (planes * 4,), jnp.float32)
    b3 = 0.1 * jax.random.normal(kb3, (planes * 4,), jnp.float32)

    # Boundary layout conversion: NCHW -> NHWC, OIHW -> matmul / HWIO layouts.
    x_nhwc = jnp.transpose(x_nchw, (0, 2, 3, 1))
    w1_io = jnp.transpose(w1_oihw[:, :, 0, 0], (1, 0))       # (Cin, Cmid)
    w2_hwio = jnp.transpose(w2_oihw, (2, 3, 1, 0))            # (3,3,Cmid,Cmid)
    w3_io = jnp.transpose(w3_oihw[:, :, 0, 0], (1, 0))       # (Cmid, Cout)

    out_nhwc = bottleneck_pallas(x_nhwc, w1_io, g1, b1, w2_hwio, g2, b2,
                                 w3_io, g3, b3)
    out_nhwc = jax.block_until_ready(out_nhwc)
    out_nchw = jnp.transpose(out_nhwc, (0, 3, 1, 2))          # back to PyTorch layout

    ref_nhwc = bottleneck_reference(x_nhwc, w1_io, g1, b1, w2_hwio, g2, b2,
                                    w3_io, g3, b3)
    np.testing.assert_allclose(np.asarray(out_nhwc), np.asarray(ref_nhwc),
                               rtol=2e-2, atol=2e-2)
    assert out_nchw.shape == (N, inplanes, H, W)

    print("KERNEL_OK")
</pallas_src>

<mosaic_0001>
module attributes {stable_mosaic.version = 11 : i64} {
  func.func @_bottleneck_kernel(%arg0: memref<512x128xf32, #tpu.memory_space<vmem>>, %arg1: memref<128x128xbf16, #tpu.memory_space<vmem>>, %arg2: memref<1x128xf32, #tpu.memory_space<vmem>>, %arg3: memref<1x128xf32, #tpu.memory_space<vmem>>, %arg4: memref<1152x128xbf16, #tpu.memory_space<vmem>>, %arg5: memref<1x128xf32, #tpu.memory_space<vmem>>, %arg6: memref<1x128xf32, #tpu.memory_space<vmem>>, %arg7: memref<128x128xbf16, #tpu.memory_space<vmem>>, %arg8: memref<1x128xf32, #tpu.memory_space<vmem>>, %arg9: memref<1x128xf32, #tpu.memory_space<vmem>>, %arg10: memref<512x128xf32, #tpu.memory_space<vmem>>, %arg11: memref<2x16x16x1152xbf16, #tpu.memory_space<vmem>>) attributes {dimension_semantics = [], scalar_prefetch = 0 : i64, scratch_operands = 1 : i64, tpu.core_type = #tpu.core_type<tc>} {
    %c0 = arith.constant 0 : index
    %c0_0 = arith.constant 0 : index
    %0 = vector.load %arg0[%c0, %c0_0] : memref<512x128xf32, #tpu.memory_space<vmem>>, vector<512x128xf32>
    %1 = arith.truncf %0 : vector<512x128xf32> to vector<512x128xbf16>
    %c0_1 = arith.constant 0 : index
    %c0_2 = arith.constant 0 : index
    %2 = vector.load %arg1[%c0_1, %c0_2] : memref<128x128xbf16, #tpu.memory_space<vmem>>, vector<128x128xbf16>
    %cst = arith.constant dense<0.000000e+00> : vector<512x128xf32>
    %3 = tpu.matmul %1, %2, %cst {dimension_numbers = #tpu.dot_dimension_numbers<[1], [0], [0], [1], [0, 0, 1, 1], [], []>} : vector<512x128xbf16>, vector<128x128xbf16>, vector<512x128xf32> -> vector<512x128xf32>
    %cst_3 = arith.constant dense<0.000000e+00> : vector<128xf32>
    %4 = vector.multi_reduction <add>, %3, %cst_3 [0] : vector<512x128xf32> to vector<128xf32>
    %5 = vector.shape_cast %4 : vector<128xf32> to vector<1x128xf32>
    %6 = arith.mulf %3, %3 : vector<512x128xf32>
    %cst_4 = arith.constant dense<0.000000e+00> : vector<128xf32>
    %7 = vector.multi_reduction <add>, %6, %cst_4 [0] : vector<512x128xf32> to vector<128xf32>
    %8 = vector.shape_cast %7 : vector<128xf32> to vector<1x128xf32>
    %cst_5 = arith.constant 0.001953125 : f32
    %9 = vector.broadcast %cst_5 : f32 to vector<1x128xf32>
    %10 = arith.mulf %5, %9 : vector<1x128xf32>
    %cst_6 = arith.constant 0.001953125 : f32
    %11 = vector.broadcast %cst_6 : f32 to vector<1x128xf32>
    %12 = arith.mulf %8, %11 : vector<1x128xf32>
    %13 = arith.mulf %10, %10 : vector<1x128xf32>
    %14 = arith.subf %12, %13 : vector<1x128xf32>
    %c0_7 = arith.constant 0 : index
    %c0_8 = arith.constant 0 : index
    %15 = vector.load %arg2[%c0_7, %c0_8] : memref<1x128xf32, #tpu.memory_space<vmem>>, vector<1x128xf32>
    %cst_9 = arith.constant 9.99999974E-6 : f32
    %16 = vector.broadcast %cst_9 : f32 to vector<1x128xf32>
    %17 = arith.addf %14, %16 : vector<1x128xf32>
    %18 = math.rsqrt %17 : vector<1x128xf32>
    %19 = arith.mulf %15, %18 : vector<1x128xf32>
    %c0_10 = arith.constant 0 : index
    %c0_11 = arith.constant 0 : index
    %20 = vector.load %arg3[%c0_10, %c0_11] : memref<1x128xf32, #tpu.memory_space<vmem>>, vector<1x128xf32>
    %21 = arith.mulf %10, %19 : vector<1x128xf32>
    %22 = arith.subf %20, %21 : vector<1x128xf32>
    %23 = vector.broadcast %19 : vector<1x128xf32> to vector<512x128xf32>
    %24 = arith.mulf %3, %23 : vector<512x128xf32>
    %25 = vector.broadcast %22 : vector<1x128xf32> to vector<512x128xf32>
    %26 = arith.addf %24, %25 : vector<512x128xf32>
    %cst_12 = arith.constant 0.000000e+00 : f32
    %27 = vector.broadcast %cst_12 : f32 to vector<512x128xf32>
    %28 = arith.maximumf %26, %27 : vector<512x128xf32>
    %cst_13 = arith.constant 0.000000e+00 : bf16
    %29 = vector.broadcast %cst_13 : bf16 to vector<2x16x16x1152xbf16>
    %c0_14 = arith.constant 0 : index
    %c0_15 = arith.constant 0 : index
    %c0_16 = arith.constant 0 : index
    %c0_17 = arith.constant 0 : index
    %30 = vector.load %arg11[%c0_14, %c0_15, %c0_16, %c0_17] : memref<2x16x16x1152xbf16, #tpu.memory_space<vmem>>, vector<2x16x16x1152xbf16>
    tpu.vector_store %arg11[%c0_14, %c0_15, %c0_16, %c0_17], %29 {strides = array<i32>} : memref<2x16x16x1152xbf16, #tpu.memory_space<vmem>>, vector<2x16x16x1152xbf16>,
    %31 = arith.truncf %28 : vector<512x128xf32> to vector<512x128xbf16>
    %32 = vector.shape_cast %31 : vector<512x128xbf16> to vector<2x16x16x128xbf16>
    %33 = vector.extract_strided_slice %32 {offsets = [0, 0, 0, 0], sizes = [2, 15, 15, 128], strides = [1, 1, 1, 1]} : vector<2x16x16x128xbf16> to vector<2x15x15x128xbf16>
    %c0_18 = arith.constant 0 : index
    %c1 = arith.constant 1 : index
    %c1_19 = arith.constant 1 : index
    %c0_20 = arith.constant 0 : index
    %34 = vector.load %arg11[%c0_18, %c1, %c1_19, %c0_20] : memref<2x16x16x1152xbf16, #tpu.memory_space<vmem>>, vector<2x15x15x128xbf16>
    tpu.vector_store %arg11[%c0_18, %c1, %c1_19, %c0_20], %33 {strides = array<i32>} : memref<2x16x16x1152xbf16, #tpu.memory_space<vmem>>, vector<2x15x15x128xbf16>,
    %35 = vector.extract_strided_slice %32 {offsets = [0, 0, 0, 0], sizes = [2, 15, 16, 128], strides = [1, 1, 1, 1]} : vector<2x16x16x128xbf16> to vector<2x15x16x128xbf16>
    %c0_21 = arith.constant 0 : index
    %c1_22 = arith.constant 1 : index
    %c0_23 = arith.constant 0 : index
    %c128 = arith.constant 128 : index
    %36 = vector.load %arg11[%c0_21, %c1_22, %c0_23, %c128] : memref<2x16x16x1152xbf16, #tpu.memory_space<vmem>>, vector<2x15x16x128xbf16>
    tpu.vector_store %arg11[%c0_21, %c1_22, %c0_23, %c128], %35 {strides = array<i32>} : memref<2x16x16x1152xbf16, #tpu.memory_space<vmem>>, vector<2x15x16x128xbf16>,
    %37 = vector.extract_strided_slice %32 {offsets = [0, 0, 1, 0], sizes = [2, 15, 15, 128], strides = [1, 1, 1, 1]} : vector<2x16x16x128xbf16> to vector<2x15x15x128xbf16>
    %c0_24 = arith.constant 0 : index
    %c1_25 = arith.constant 1 : index
    %c0_26 = arith.constant 0 : index
    %c256 = arith.constant 256 : index
    %38 = vector.load %arg11[%c0_24, %c1_25, %c0_26, %c256] : memref<2x16x16x1152xbf16, #tpu.memory_space<vmem>>, vector<2x15x15x128xbf16>
    tpu.vector_store %arg11[%c0_24, %c1_25, %c0_26, %c256], %37 {strides = array<i32>} : memref<2x16x16x1152xbf16, #tpu.memory_space<vmem>>, vector<2x15x15x128xbf16>,
    %39 = vector.extract_strided_slice %32 {offsets = [0, 0, 0, 0], sizes = [2, 16, 15, 128], strides = [1, 1, 1, 1]} : vector<2x16x16x128xbf16> to vector<2x16x15x128xbf16>
    %c0_27 = arith.constant 0 : index
    %c0_28 = arith.constant 0 : index
    %c1_29 = arith.constant 1 : index
    %c384 = arith.constant 384 : index
    %40 = vector.load %arg11[%c0_27, %c0_28, %c1_29, %c384] : memref<2x16x16x1152xbf16, #tpu.memory_space<vmem>>, vector<2x16x15x128xbf16>
    tpu.vector_store %arg11[%c0_27, %c0_28, %c1_29, %c384], %39 {strides = array<i32>} : memref<2x16x16x1152xbf16, #tpu.memory_space<vmem>>, vector<2x16x15x128xbf16>,
    %c0_30 = arith.constant 0 : index
    %c0_31 = arith.constant 0 : index
    %c0_32 = arith.constant 0 : index
    %c512 = arith.constant 512 : index
    %41 = vector.load %arg11[%c0_30, %c0_31, %c0_32, %c512] : memref<2x16x16x1152xbf16, #tpu.memory_space<vmem>>, vector<2x16x16x128xbf16>
    tpu.vector_store %arg11[%c0_30, %c0_31, %c0_32, %c512], %32 {strides = array<i32>} : memref<2x16x16x1152xbf16, #tpu.memory_space<vmem>>, vector<2x16x16x128xbf16>,
    %42 = vector.extract_strided_slice %32 {offsets = [0, 0, 1, 0], sizes = [2, 16, 15, 128], strides = [1, 1, 1, 1]} : vector<2x16x16x128xbf16> to vector<2x16x15x128xbf16>
    %c0_33 = arith.constant 0 : index
    %c0_34 = arith.constant 0 : index
    %c0_35 = arith.constant 0 : index
    %c640 = arith.constant 640 : index
    %43 = vector.load %arg11[%c0_33, %c0_34, %c0_35, %c640] : memref<2x16x16x1152xbf16, #tpu.memory_space<vmem>>, vector<2x16x15x128xbf16>
    tpu.vector_store %arg11[%c0_33, %c0_34, %c0_35, %c640], %42 {strides = array<i32>} : memref<2x16x16x1152xbf16, #tpu.memory_space<vmem>>, vector<2x16x15x128xbf16>,
    %44 = vector.extract_strided_slice %32 {offsets = [0, 1, 0, 0], sizes = [2, 15, 15, 128], strides = [1, 1, 1, 1]} : vector<2x16x16x128xbf16> to vector<2x15x15x128xbf16>
    %c0_36 = arith.constant 0 : index
    %c0_37 = arith.constant 0 : index
    %c1_38 = arith.constant 1 : index
    %c768 = arith.constant 768 : index
    %45 = vector.load %arg11[%c0_36, %c0_37, %c1_38, %c768] : memref<2x16x16x1152xbf16, #tpu.memory_space<vmem>>, vector<2x15x15x128xbf16>
    tpu.vector_store %arg11[%c0_36, %c0_37, %c1_38, %c768], %44 {strides = array<i32>} : memref<2x16x16x1152xbf16, #tpu.memory_space<vmem>>, vector<2x15x15x128xbf16>,
    %46 = vector.extract_strided_slice %32 {offsets = [0, 1, 0, 0], sizes = [2, 15, 16, 128], strides = [1, 1, 1, 1]} : vector<2x16x16x128xbf16> to vector<2x15x16x128xbf16>
    %c0_39 = arith.constant 0 : index
    %c0_40 = arith.constant 0 : index
    %c0_41 = arith.constant 0 : index
    %c896 = arith.constant 896 : index
    %47 = vector.load %arg11[%c0_39, %c0_40, %c0_41, %c896] : memref<2x16x16x1152xbf16, #tpu.memory_space<vmem>>, vector<2x15x16x128xbf16>
    tpu.vector_store %arg11[%c0_39, %c0_40, %c0_41, %c896], %46 {strides = array<i32>} : memref<2x16x16x1152xbf16, #tpu.memory_space<vmem>>, vector<2x15x16x128xbf16>,
    %48 = vector.extract_strided_slice %32 {offsets = [0, 1, 1, 0], sizes = [2, 15, 15, 128], strides = [1, 1, 1, 1]} : vector<2x16x16x128xbf16> to vector<2x15x15x128xbf16>
    %c0_42 = arith.constant 0 : index
    %c0_43 = arith.constant 0 : index
    %c0_44 = arith.constant 0 : index
    %c1024 = arith.constant 1024 : index
    %49 = vector.load %arg11[%c0_42, %c0_43, %c0_44, %c1024] : memref<2x16x16x1152xbf16, #tpu.memory_space<vmem>>, vector<2x15x15x128xbf16>
    tpu.vector_store %arg11[%c0_42, %c0_43, %c0_44, %c1024], %48 {strides = array<i32>} : memref<2x16x16x1152xbf16, #tpu.memory_space<vmem>>, vector<2x15x15x128xbf16>,
    %c0_45 = arith.constant 0 : index
    %c0_46 = arith.constant 0 : index
    %c0_47 = arith.constant 0 : index
    %c0_48 = arith.constant 0 : index
    %50 = vector.load %arg11[%c0_45, %c0_46, %c0_47, %c0_48] : memref<2x16x16x1152xbf16, #tpu.memory_space<vmem>>, vector<2x16x16x1152xbf16>
    %51 = vector.shape_cast %50 : vector<2x16x16x1152xbf16> to vector<512x1152xbf16>
    %c0_49 = arith.constant 0 : index
    %c0_50 = arith.constant 0 : index
    %52 = vector.load %arg4[%c0_49, %c0_50] : memref<1152x128xbf16, #tpu.memory_space<vmem>>, vector<1152x128xbf16>
    %cst_51 = arith.constant dense<0.000000e+00> : vector<512x128xf32>
    %53 = tpu.matmul %51, %52, %cst_51 {dimension_numbers = #tpu.dot_dimension_numbers<[1], [0], [0], [1], [0, 0, 1, 1], [], []>} : vector<512x1152xbf16>, vector<1152x128xbf16>, vector<512x128xf32> -> vector<512x128xf32>
    %cst_52 = arith.constant dense<0.000000e+00> : vector<128xf32>
    %54 = vector.multi_reduction <add>, %53, %cst_52 [0] : vector<512x128xf32> to vector<128xf32>
    %55 = vector.shape_cast %54 : vector<128xf32> to vector<1x128xf32>
    %56 = arith.mulf %53, %53 : vector<512x128xf32>
    %cst_53 = arith.constant dense<0.000000e+00> : vector<128xf32>
    %57 = vector.multi_reduction <add>, %56, %cst_53 [0] : vector<512x128xf32> to vector<128xf32>
    %58 = vector.shape_cast %57 : vector<128xf32> to vector<1x128xf32>
    %cst_54 = arith.constant 0.001953125 : f32
    %59 = vector.broadcast %cst_54 : f32 to vector<1x128xf32>
    %60 = arith.mulf %55, %59 : vector<1x128xf32>
    %cst_55 = arith.constant 0.001953125 : f32
    %61 = vector.broadcast %cst_55 : f32 to vector<1x128xf32>
    %62 = arith.mulf %58, %61 : vector<1x128xf32>
    %63 = arith.mulf %60, %60 : vector<1x128xf32>
    %64 = arith.subf %62, %63 : vector<1x128xf32>
    %c0_56 = arith.constant 0 : index
    %c0_57 = arith.constant 0 : index
    %65 = vector.load %arg5[%c0_56, %c0_57] : memref<1x128xf32, #tpu.memory_space<vmem>>, vector<1x128xf32>
    %cst_58 = arith.constant 9.99999974E-6 : f32
    %66 = vector.broadcast %cst_58 : f32 to vector<1x128xf32>
    %67 = arith.addf %64, %66 : vector<1x128xf32>
    %68 = math.rsqrt %67 : vector<1x128xf32>
    %69 = arith.mulf %65, %68 : vector<1x128xf32>
    %c0_59 = arith.constant 0 : index
    %c0_60 = arith.constant 0 : index
    %70 = vector.load %arg6[%c0_59, %c0_60] : memref<1x128xf32, #tpu.memory_space<vmem>>, vector<1x128xf32>
    %71 = arith.mulf %60, %69 : vector<1x128xf32>
    %72 = arith.subf %70, %71 : vector<1x128xf32>
    %73 = vector.broadcast %69 : vector<1x128xf32> to vector<512x128xf32>
    %74 = arith.mulf %53, %73 : vector<512x128xf32>
    %75 = vector.broadcast %72 : vector<1x128xf32> to vector<512x128xf32>
    %76 = arith.addf %74, %75 : vector<512x128xf32>
    %cst_61 = arith.constant 0.000000e+00 : f32
    %77 = vector.broadcast %cst_61 : f32 to vector<512x128xf32>
    %78 = arith.maximumf %76, %77 : vector<512x128xf32>
    %79 = arith.truncf %78 : vector<512x128xf32> to vector<512x128xbf16>
    %c0_62 = arith.constant 0 : index
    %c0_63 = arith.constant 0 : index
    %80 = vector.load %arg7[%c0_62, %c0_63] : memref<128x128xbf16, #tpu.memory_space<vmem>>, vector<128x128xbf16>
    %cst_64 = arith.constant dense<0.000000e+00> : vector<512x128xf32>
    %81 = tpu.matmul %79, %80, %cst_64 {dimension_numbers = #tpu.dot_dimension_numbers<[1], [0], [0], [1], [0, 0, 1, 1], [], []>} : vector<512x128xbf16>, vector<128x128xbf16>, vector<512x128xf32> -> vector<512x128xf32>
    %cst_65 = arith.constant dense<0.000000e+00> : vector<128xf32>
    %82 = vector.multi_reduction <add>, %81, %cst_65 [0] : vector<512x128xf32> to vector<128xf32>
    %83 = vector.shape_cast %82 : vector<128xf32> to vector<1x128xf32>
    %84 = arith.mulf %81, %81 : vector<512x128xf32>
    %cst_66 = arith.constant dense<0.000000e+00> : vector<128xf32>
    %85 = vector.multi_reduction <add>, %84, %cst_66 [0] : vector<512x128xf32> to vector<128xf32>
    %86 = vector.shape_cast %85 : vector<128xf32> to vector<1x128xf32>
    %cst_67 = arith.constant 0.001953125 : f32
    %87 = vector.broadcast %cst_67 : f32 to vector<1x128xf32>
    %88 = arith.mulf %83, %87 : vector<1x128xf32>
    %cst_68 = arith.constant 0.001953125 : f32
    %89 = vector.broadcast %cst_68 : f32 to vector<1x128xf32>
    %90 = arith.mulf %86, %89 : vector<1x128xf32>
    %91 = arith.mulf %88, %88 : vector<1x128xf32>
    %92 = arith.subf %90, %91 : vector<1x128xf32>
    %c0_69 = arith.constant 0 : index
    %c0_70 = arith.constant 0 : index
    %93 = vector.load %arg8[%c0_69, %c0_70] : memref<1x128xf32, #tpu.memory_space<vmem>>, vector<1x128xf32>
    %cst_71 = arith.constant 9.99999974E-6 : f32
    %94 = vector.broadcast %cst_71 : f32 to vector<1x128xf32>
    %95 = arith.addf %92, %94 : vector<1x128xf32>
    %96 = math.rsqrt %95 : vector<1x128xf32>
    %97 = arith.mulf %93, %96 : vector<1x128xf32>
    %c0_72 = arith.constant 0 : index
    %c0_73 = arith.constant 0 : index
    %98 = vector.load %arg9[%c0_72, %c0_73] : memref<1x128xf32, #tpu.memory_space<vmem>>, vector<1x128xf32>
    %99 = arith.mulf %88, %97 : vector<1x128xf32>
    %100 = arith.subf %98, %99 : vector<1x128xf32>
    %101 = vector.broadcast %97 : vector<1x128xf32> to vector<512x128xf32>
    %102 = arith.mulf %81, %101 : vector<512x128xf32>
    %103 = vector.broadcast %100 : vector<1x128xf32> to vector<512x128xf32>
    %104 = arith.addf %102, %103 : vector<512x128xf32>
    %c0_74 = arith.constant 0 : index
    %c0_75 = arith.constant 0 : index
    %105 = vector.load %arg0[%c0_74, %c0_75] : memref<512x128xf32, #tpu.memory_space<vmem>>, vector<512x128xf32>
    %106 = arith.addf %104, %105 : vector<512x128xf32>
    %cst_76 = arith.constant 0.000000e+00 : f32
    %107 = vector.broadcast %cst_76 : f32 to vector<512x128xf32>
    %108 = arith.maximumf %106, %107 : vector<512x128xf32>
    %c0_77 = arith.constant 0 : index
    %c0_78 = arith.constant 0 : index
    %109 = vector.load %arg10[%c0_77, %c0_78] : memref<512x128xf32, #tpu.memory_space<vmem>>, vector<512x128xf32>
    tpu.vector_store %arg10[%c0_77, %c0_78], %108 {strides = array<i32>} : memref<512x128xf32, #tpu.memory_space<vmem>>, vector<512x128xf32>,
    return
  }
}

</mosaic_0001>

<llo_original>
// kernel: tpu_custom_call.1
$region0: #{tpu_custom_call.1}
  #allocation0 [shape = 'u32[]', space=smem, size = 0x4, offset = 0x4, fixed_abs, tag = 'smem constant byte address 0x4 - core index']
  #allocation1 [shape = 'u32[144,128]{1,0:T(1,128)}', space=vmem, size = 0x12000, scoped, tag = 'internal scratch']
  #allocation2 [shape = 'bf16[2,16,16,1152]{3,2,1,0:T(8,128)(2,1)}', space=vmem, size = 0x120000, scoped, tag = 'scratch operand']
  %s0 = inlined_call_operand.hbm [shape: f32[512,128], index: 0, kind: input, shape index: {}]
  %s1 = inlined_call_operand.hbm [shape: bf16[128,128], index: 1, kind: input, shape index: {}]
  %s2 = inlined_call_operand.vmem [shape: f32[1,128], index: 2, kind: input, shape index: {}]
  %s3 = inlined_call_operand.vmem [shape: f32[1,128], index: 3, kind: input, shape index: {}]
  %s4 = inlined_call_operand.hbm [shape: bf16[1152,128], index: 4, kind: input, shape index: {}]
  %s5 = inlined_call_operand.vmem [shape: f32[1,128], index: 5, kind: input, shape index: {}]
  %s6 = inlined_call_operand.vmem [shape: f32[1,128], index: 6, kind: input, shape index: {}]
  %s7 = inlined_call_operand.hbm [shape: bf16[128,128], index: 7, kind: input, shape index: {}]
  %s8 = inlined_call_operand.vmem [shape: f32[1,128], index: 8, kind: input, shape index: {}]
  %s9 = inlined_call_operand.vmem [shape: f32[1,128], index: 9, kind: input, shape index: {}]
  %s10 = inlined_call_operand.hbm [shape: f32[512,128], index: 10, kind: output, shape index: {}]
  %s11 = sld [smem:[#allocation0]]
  $region66: #{tpu_custom_call.1} parent=0
    _
  %s13 = ssub.s32 1, %s11
  %s14 = scalar_select 0, %s13, %s11
  $region1: #{tpu_custom_call.1} parent=0
    #allocation3 [shape = 'u8[262144]{0}', space=vmem, size = 0x40000, scoped, tag = 'input window, operand 0, single buffered']
    #allocation4 [shape = 's32[1]{0}', space=sflag, size = 0x4, scoped, tag = 'scoped memory for tpu_custom_call.1']
    #allocation5 [shape = 's32[1]{0}', space=sflag, size = 0x4, scoped, tag = 'scoped memory for tpu_custom_call.1']
    #allocation6 [shape = 'u8[32768]{0}', space=vmem, size = 0x8000, scoped, tag = 'input window, operand 1, single buffered']
    #allocation7 [shape = 's32[1]{0}', space=sflag, size = 0x4, scoped, tag = 'scoped memory for tpu_custom_call.1']
    #allocation8 [shape = 'u8[294912]{0}', space=vmem, size = 0x48000, scoped, tag = 'input window, operand 4, single buffered']
    #allocation9 [shape = 'u8[32768]{0}', space=vmem, size = 0x8000, scoped, tag = 'input window, operand 7, single buffered']
    #allocation10 [shape = 's32[1]{0}', space=sflag, size = 0x4, scoped, tag = 'scoped memory for tpu_custom_call.1']
    #allocation11 [shape = 'u8[262144]{0}', space=vmem, size = 0x40000, scoped, tag = 'output window, operand 0, single buffered']
    %15 = vsyncpa [#allocation4], 0
    %16 = vsyncpa [#allocation7], 0
    %17 = vsyncpa [#allocation10], 0
    %18 = vsyncpa [#allocation5], 0
    // Predicated region
    $region2: #{tpu_custom_call.1} parent=1 // pred_check
      _
    $region3: #{tpu_custom_call.1} parent=1 // pred_check_branch
      %20 = sbr.rel (0) target = $region5
    $region4: #{tpu_custom_call.1} parent=1 // pred_region
      %s22 = ssub.s32 8192, 8192
      %23 = vsyncadd [#allocation4], %s22
      %s24 = sshll.u32 [#allocation3], 4
      %s25 = int_to_ptr.vmem [resolvable:$true] %s24
      %30 = dma.hbm_to_vmem [thread:$0]  %s0, 8192, %s25, [#allocation4], 128, 128, 8
    $region5: #{tpu_custom_call.1} parent=1 // pred_fallthru
      _
    // Predicated region
    $region6: #{tpu_custom_call.1} parent=1 // pred_check
      _
    $region7: #{tpu_custom_call.1} parent=1 // pred_check_branch
      %32 = sbr.rel (0) target = $region9
    $region8: #{tpu_custom_call.1} parent=1 // pred_region
      %s34 = ssub.s32 1024, 1024
      %35 = vsyncadd [#allocation7], %s34
      %s36 = sshll.u32 [#allocation6], 4
      %s37 = int_to_ptr.vmem [resolvable:$true] %s36
      %42 = dma.hbm_to_vmem [thread:$0]  %s1, 1024, %s37, [#allocation7], 64, 64, 4
    $region9: #{tpu_custom_call.1} parent=1 // pred_fallthru
      _
    // Predicated region
    $region10: #{tpu_custom_call.1} parent=1 // pred_check
      _
    $region11: #{tpu_custom_call.1} parent=1 // pred_check_branch
      %44 = sbr.rel (0) target = $region13
    $region12: #{tpu_custom_call.1} parent=1 // pred_region
      _
    $region13: #{tpu_custom_call.1} parent=1 // pred_fallthru
      _
    // Predicated region
    $region14: #{tpu_custom_call.1} parent=1 // pred_check
      _
    $region15: #{tpu_custom_call.1} parent=1 // pred_check_branch
      %46 = sbr.rel (0) target = $region17
    $region16: #{tpu_custom_call.1} parent=1 // pred_region
      _
    $region17: #{tpu_custom_call.1} parent=1 // pred_fallthru
      _
    // Predicated region
    $region18: #{tpu_custom_call.1} parent=1 // pred_check
      _
    $region19: #{tpu_custom_call.1} parent=1 // pred_check_branch
      %48 = sbr.rel (0) target = $region21
    $region20: #{tpu_custom_call.1} parent=1 // pred_region
      %s50 = ssub.s32 9216, 9216
      %51 = vsyncadd [#allocation7], %s50
      %s52 = sshll.u32 [#allocation8], 4
      %s53 = int_to_ptr.vmem [resolvable:$true] %s52
      %58 = dma.hbm_to_vmem [thread:$0]  %s4, 9216, %s53, [#allocation7], 64, 64, 4
    $region21: #{tpu_custom_call.1} parent=1 // pred_fallthru
      _
    // Predicated region
    $region22: #{tpu_custom_call.1} parent=1 // pred_check
      _
    $region23: #{tpu_custom_call.1} parent=1 // pred_check_branch
      %60 = sbr.rel (0) target = $region25
    $region24: #{tpu_custom_call.1} parent=1 // pred_region
      _
    $region25: #{tpu_custom_call.1} parent=1 // pred_fallthru
      _
    // Predicated region
    $region26: #{tpu_custom_call.1} parent=1 // pred_check
      _
    $region27: #{tpu_custom_call.1} parent=1 // pred_check_branch
      %62 = sbr.rel (0) target = $region29
    $region28: #{tpu_custom_call.1} parent=1 // pred_region
      _
    $region29: #{tpu_custom_call.1} parent=1 // pred_fallthru
      _
    // Predicated region
    $region30: #{tpu_custom_call.1} parent=1 // pred_check
      _
    $region31: #{tpu_custom_call.1} parent=1 // pred_check_branch
      %64 = sbr.rel (0) target = $region33
    $region32: #{tpu_custom_call.1} parent=1 // pred_region
      %s66 = ssub.s32 1024, 1024
      %67 = vsyncadd [#allocation10], %s66
      %s68 = sshll.u32 [#allocation9], 4
      %s69 = int_to_ptr.vmem [resolvable:$true] %s68
      %74 = dma.hbm_to_vmem [thread:$0]  %s7, 1024, %s69, [#allocation10], 64, 64, 4
    $region33: #{tpu_custom_call.1} parent=1 // pred_fallthru
      _
    // Predicated region
    $region34: #{tpu_custom_call.1} parent=1 // pred_check
      _
    $region35: #{tpu_custom_call.1} parent=1 // pred_check_branch
      %76 = sbr.rel (0) target = $region37
    $region36: #{tpu_custom_call.1} parent=1 // pred_region
      _
    $region37: #{tpu_custom_call.1} parent=1 // pred_fallthru
      _
    // Predicated region
    $region38: #{tpu_custom_call.1} parent=1 // pred_check
      _
    $region39: #{tpu_custom_call.1} parent=1 // pred_check_branch
      %78 = sbr.rel (0) target = $region41
    $region40: #{tpu_custom_call.1} parent=1 // pred_region
      _
    $region41: #{tpu_custom_call.1} parent=1 // pred_fallthru
      _
    // Predicated region
    $region42: #{tpu_custom_call.1} parent=1 // pred_check
      _
    $region43: #{tpu_custom_call.1} parent=1 // pred_check_branch
      %80 = sbr.rel (0) target = $region45
    $region44: #{tpu_custom_call.1} parent=1 // pred_region
      %81 = dma.done [#allocation4], 8192
    $region45: #{tpu_custom_call.1} parent=1 // pred_fallthru
      _
    // Predicated region
    $region46: #{tpu_custom_call.1} parent=1 // pred_check
      _
    $region47: #{tpu_custom_call.1} parent=1 // pred_check_branch
      %83 = sbr.rel (0) target = $region49
    $region48: #{tpu_custom_call.1} parent=1 // pred_region
      %84 = dma.done [#allocation7], 1024
    $region49: #{tpu_custom_call.1} parent=1 // pred_fallthru
      _
    // Predicated region
    $region50: #{tpu_custom_call.1} parent=1 // pred_check
      _
    $region51: #{tpu_custom_call.1} parent=1 // pred_check_branch
      %86 = sbr.rel (0) target = $region53
    $region52: #{tpu_custom_call.1} parent=1 // pred_region
      %87 = dma.done [#allocation7], 9216
    $region53: #{tpu_custom_call.1} parent=1 // pred_fallthru
      _
    // Predicated region
    $region54: #{tpu_custom_call.1} parent=1 // pred_check
      _
    $region55: #{tpu_custom_call.1} parent=1 // pred_check_branch
      %89 = sbr.rel (0) target = $region57
    $region56: #{tpu_custom_call.1} parent=1 // pred_region
      %90 = dma.done [#allocation10], 1024
    $region57: #{tpu_custom_call.1} parent=1 // pred_fallthru
      _
    %v92 = vld [vmem:[#allocation3] sm:$0xff]
    %v93 = vld [vmem:[#allocation3 + $0x8] sm:$0xff]
    %v94 = vld [vmem:[#allocation3 + $0x10] sm:$0xff]
    %v95 = vld [vmem:[#allocation3 + $0x18] sm:$0xff]
    %v96 = vld [vmem:[#allocation3 + $0x20] sm:$0xff]
    %v97 = vld [vmem:[#allocation3 + $0x28] sm:$0xff]
    %v98 = vld [vmem:[#allocation3 + $0x30] sm:$0xff]
    %v99 = vld [vmem:[#allocation3 + $0x38] sm:$0xff]
    %v100 = vld [vmem:[#allocation3 + $0x40] sm:$0xff]
    %v101 = vld [vmem:[#allocation3 + $0x48] sm:$0xff]
    %v102 = vld [vmem:[#allocation3 + $0x50] sm:$0xff]
    %v103 = vld [vmem:[#allocation3 + $0x58] sm:$0xff]
    %v104 = vld [vmem:[#allocation3 + $0x60] sm:$0xff]
    %v105 = vld [vmem:[#allocation3 + $0x68] sm:$0xff]
    %v106 = vld [vmem:[#allocation3 + $0x70] sm:$0xff]
    %v107 = vld [vmem:[#allocation3 + $0x78] sm:$0xff]
    %v108 = vld [vmem:[#allocation3 + $0x80] sm:$0xff]
    %v109 = vld [vmem:[#allocation3 + $0x88] sm:$0xff]
    %v110 = vld [vmem:[#allocation3 + $0x90] sm:$0xff]
    %v111 = vld [vmem:[#allocation3 + $0x98] sm:$0xff]
    %v112 = vld [vmem:[#allocation3 + $0xa0] sm:$0xff]
    %v113 = vld [vmem:[#allocation3 + $0xa8] sm:$0xff]
    %v114 = vld [vmem:[#allocation3 + $0xb0] sm:$0xff]
    %v115 = vld [vmem:[#allocation3 + $0xb8] sm:$0xff]
    %v116 = vld [vmem:[#allocation3 + $0xc0] sm:$0xff]
    %v117 = vld [vmem:[#allocation3 + $0xc8] sm:$0xff]
    %v118 = vld [vmem:[#allocation3 + $0xd0] sm:$0xff]
    %v119 = vld [vmem:[#allocation3 + $0xd8] sm:$0xff]
    %v120 = vld [vmem:[#allocation3 + $0xe0] sm:$0xff]
    %v121 = vld [vmem:[#allocation3 + $0xe8] sm:$0xff]
    %v122 = vld [vmem:[#allocation3 + $0xf0] sm:$0xff]
    %v123 = vld [vmem:[#allocation3 + $0xf8] sm:$0xff]
    %v124 = vld [vmem:[#allocation3 + $0x100] sm:$0xff]
    %v125 = vld [vmem:[#allocation3 + $0x108] sm:$0xff]
    %v126 = vld [vmem:[#allocation3 + $0x110] sm:$0xff]
    %v127 = vld [vmem:[#allocation3 + $0x118] sm:$0xff]
    %v128 = vld [vmem:[#allocation3 + $0x120] sm:$0xff]
    %v129 = vld [vmem:[#allocation3 + $0x128] sm:$0xff]
    %v130 = vld [vmem:[#allocation3 + $0x130] sm:$0xff]
    %v131 = vld [vmem:[#allocation3 + $0x138] sm:$0xff]
    %v132 = vld [vmem:[#allocation3 + $0x140] sm:$0xff]
    %v133 = vld [vmem:[#allocation3 + $0x148] sm:$0xff]
    %v134 = vld [vmem:[#allocation3 + $0x150] sm:$0xff]
    %v135 = vld [vmem:[#allocation3 + $0x158] sm:$0xff]
    %v136 = vld [vmem:[#allocation3 + $0x160] sm:$0xff]
    %v137 = vld [vmem:[#allocation3 + $0x168] sm:$0xff]
    %v138 = vld [vmem:[#allocation3 + $0x170] sm:$0xff]
    %v139 = vld [vmem:[#allocation3 + $0x178] sm:$0xff]
    %v140 = vld [vmem:[#allocation3 + $0x180] sm:$0xff]
    %v141 = vld [vmem:[#allocation3 + $0x188] sm:$0xff]
    %v142 = vld [vmem:[#allocation3 + $0x190] sm:$0xff]
    %v143 = vld [vmem:[#allocation3 + $0x198] sm:$0xff]
    %v144 = vld [vmem:[#allocation3 + $0x1a0] sm:$0xff]
    %v145 = vld [vmem:[#allocation3 + $0x1a8] sm:$0xff]
    %v146 = vld [vmem:[#allocation3 + $0x1b0] sm:$0xff]
    %v147 = vld [vmem:[#allocation3 + $0x1b8] sm:$0xff]
    %v148 = vld [vmem:[#allocation3 + $0x1c0] sm:$0xff]
    %v149 = vld [vmem:[#allocation3 + $0x1c8] sm:$0xff]
    %v150 = vld [vmem:[#allocation3 + $0x1d0] sm:$0xff]
    %v151 = vld [vmem:[#allocation3 + $0x1d8] sm:$0xff]
    %v152 = vld [vmem:[#allocation3 + $0x1e0] sm:$0xff]
    %v153 = vld [vmem:[#allocation3 + $0x1e8] sm:$0xff]
    %v154 = vld [vmem:[#allocation3 + $0x1f0] sm:$0xff]
    %v155 = vld [vmem:[#allocation3 + $0x1f8] sm:$0xff]
    %v156 = vpack.c.bf16 %v93, %v92
    %v157 = vpack.c.bf16 %v95, %v94
    %v158 = vpack.c.bf16 %v97, %v96
    %v159 = vpack.c.bf16 %v99, %v98
    %v160 = vpack.c.bf16 %v101, %v100
    %v161 = vpack.c.bf16 %v103, %v102
    %v162 = vpack.c.bf16 %v105, %v104
    %v163 = vpack.c.bf16 %v107, %v106
    %v164 = vpack.c.bf16 %v109, %v108
    %v165 = vpack.c.bf16 %v111, %v110
    %v166 = vpack.c.bf16 %v113, %v112
    %v167 = vpack.c.bf16 %v115, %v114
    %v168 = vpack.c.bf16 %v117, %v116
    %v169 = vpack.c.bf16 %v119, %v118
    %v170 = vpack.c.bf16 %v121, %v120
    %v171 = vpack.c.bf16 %v123, %v122
    %v172 = vpack.c.bf16 %v125, %v124
    %v173 = vpack.c.bf16 %v127, %v126
    %v174 = vpack.c.bf16 %v129, %v128
    %v175 = vpack.c.bf16 %v131, %v130
    %v176 = vpack.c.bf16 %v133, %v132
    %v177 = vpack.c.bf16 %v135, %v134
    %v178 = vpack.c.bf16 %v137, %v136
    %v179 = vpack.c.bf16 %v139, %v138
    %v180 = vpack.c.bf16 %v141, %v140
    %v181 = vpack.c.bf16 %v143, %v142
    %v182 = vpack.c.bf16 %v145, %v144
    %v183 = vpack.c.bf16 %v147, %v146
    %v184 = vpack.c.bf16 %v149, %v148
    %v185 = vpack.c.bf16 %v151, %v150
    %v186 = vpack.c.bf16 %v153, %v152
    %v187 = vpack.c.bf16 %v155, %v154
    %v188 = vld [vmem:[#allocation6] sm:$0xf]
    %v189 = vld [vmem:[#allocation6 + $0x4] sm:$0xf]
    %v190 = vld [vmem:[#allocation6 + $0x8] sm:$0xf]
    %v191 = vld [vmem:[#allocation6 + $0xc] sm:$0xf]
    %v192 = vld [vmem:[#allocation6 + $0x10] sm:$0xf]
    %v193 = vld [vmem:[#allocation6 + $0x14] sm:$0xf]
    %v194 = vld [vmem:[#allocation6 + $0x18] sm:$0xf]
    %v195 = vld [vmem:[#allocation6 + $0x1c] sm:$0xf]
    %v196 = vld [vmem:[#allocation6 + $0x20] sm:$0xf]
    %v197 = vld [vmem:[#allocation6 + $0x24] sm:$0xf]
    %v198 = vld [vmem:[#allocation6 + $0x28] sm:$0xf]
    %v199 = vld [vmem:[#allocation6 + $0x2c] sm:$0xf]
    %v200 = vld [vmem:[#allocation6 + $0x30] sm:$0xf]
    %v201 = vld [vmem:[#allocation6 + $0x34] sm:$0xf]
    %v202 = vld [vmem:[#allocation6 + $0x38] sm:$0xf]
    %v203 = vld [vmem:[#allocation6 + $0x3c] sm:$0xf]
    %v220 = vunpack.c.l.b16 %v188
    %v221 = vunpack.c.l.b16 %v189
    %v222 = vunpack.c.l.b16 %v190
    %v223 = vunpack.c.l.b16 %v191
    %v224 = vunpack.c.l.b16 %v192
    %v225 = vunpack.c.l.b16 %v193
    %v226 = vunpack.c.l.b16 %v194
    %v227 = vunpack.c.l.b16 %v195
    %v228 = vunpack.c.l.b16 %v196
    %v229 = vunpack.c.l.b16 %v197
    %v230 = vunpack.c.l.b16 %v198
    %v231 = vunpack.c.l.b16 %v199
    %v232 = vunpack.c.l.b16 %v200
    %v233 = vunpack.c.l.b16 %v201
    %v234 = vunpack.c.l.b16 %v202
    %v235 = vunpack.c.l.b16 %v203
    %v236 = vpack.c.b16 %v221, %v220
    %v237 = vpack.c.b16 %v223, %v222
    %v238 = vpack.c.b16 %v225, %v224
    %v239 = vpack.c.b16 %v227, %v226
    %v240 = vpack.c.b16 %v229, %v228
    %v241 = vpack.c.b16 %v231, %v230
    %v242 = vpack.c.b16 %v233, %v232
    %v243 = vpack.c.b16 %v235, %v234
    %252 = vmatprep.subr.bf16.mxu0 0
    %253 = vmatpush1.bf16.msra.mxu0 %v243
    %254 = vmatprep.subr.bf16.mxu0 0
    %255 = vmatpush1.bf16.msra.mxu0 %v242
    %256 = vmatprep.subr.bf16.mxu0 0
    %257 = vmatpush1.bf16.msra.mxu0 %v241
    %258 = vmatprep.subr.bf16.mxu0 0
    %259 = vmatpush1.bf16.msra.mxu0 %v240
    %260 = vmatprep.subr.bf16.mxu0 0
    %261 = vmatpush1.bf16.msra.mxu0 %v239
    %262 = vmatprep.subr.bf16.mxu0 0
    %263 = vmatpush1.bf16.msra.mxu0 %v238
    %264 = vmatprep.subr.bf16.mxu0 0
    %265 = vmatpush1.bf16.msra.mxu0 %v237
    %266 = vmatprep.subr.bf16.mxu0 0
    %267 = vmatpush1.bf16.msra.mxu0 %v236
    %268 = vmatprep.subr.bf16.mxu0 0
    %269 = vmatpush2.bf16.msra.mxu0 0
    %270 = vmatprep.subr.bf16.mxu0 0
    %271 = vmatpush2.bf16.msra.mxu0 0
    %272 = vmatprep.subr.bf16.mxu0 0
    %273 = vmatpush2.bf16.msra.mxu0 0
    %274 = vmatprep.subr.bf16.mxu0 0
    %275 = vmatpush2.bf16.msra.mxu0 0
    %276 = vmatprep.subr.bf16.mxu0 0
    %277 = vmatpush2.bf16.msra.mxu0 0
    %278 = vmatprep.subr.bf16.mxu0 0
    %279 = vmatpush2.bf16.msra.mxu0 0
    %280 = vmatprep.subr.bf16.mxu0 0
    %281 = vmatpush2.bf16.msra.mxu0 0
    %282 = vmatprep.subr.bf16.mxu0 0
    %283 = vmatpush2.bf16.msra.mxu0 0
    %284 = vmatprep.mubr.bf16.mxu0 0
    %285 = vmatmul.mubr.bf16.gmra.mxu0 %v156
    %v286 = vpop.f32.mrf.mxu0
    %v287 = vadd.f32 0.0, %v286
    %v288 = vpop.f32.mrf.mxu0
    %v289 = vpop.f32.mrf.mxu0
    %v290 = vadd.f32 0.0, %v289
    %v291 = vpop.f32.mrf.mxu0
    %292 = vmatprep.mubr.bf16.mxu0 0
    %293 = vmatmul.mubr.bf16.gmra.mxu0 %v157
    %v294 = vpop.f32.mrf.mxu0
    %v295 = vadd.f32 0.0, %v294
    %v296 = vpop.f32.mrf.mxu0
    %v297 = vpop.f32.mrf.mxu0
    %v298 = vadd.f32 0.0, %v297
    %v299 = vpop.f32.mrf.mxu0
    %300 = vmatprep.mubr.bf16.mxu0 0
    %301 = vmatmul.mubr.bf16.gmra.mxu0 %v158
    %v302 = vpop.f32.mrf.mxu0
    %v303 = vadd.f32 0.0, %v302
    %v304 = vpop.f32.mrf.mxu0
    %v305 = vpop.f32.mrf.mxu0
    %v306 = vadd.f32 0.0, %v305
    %v307 = vpop.f32.mrf.mxu0
    %308 = vmatprep.mubr.bf16.mxu0 0
    %309 = vmatmul.mubr.bf16.gmra.mxu0 %v159
    %v310 = vpop.f32.mrf.mxu0
    %v311 = vadd.f32 0.0, %v310
    %v312 = vpop.f32.mrf.mxu0
    %v313 = vpop.f32.mrf.mxu0
    %v314 = vadd.f32 0.0, %v313
    %v315 = vpop.f32.mrf.mxu0
    %316 = vmatprep.mubr.bf16.mxu0 0
    %317 = vmatmul.mubr.bf16.gmra.mxu0 %v160
    %v318 = vpop.f32.mrf.mxu0
    %v319 = vadd.f32 0.0, %v318
    %v320 = vpop.f32.mrf.mxu0
    %v321 = vpop.f32.mrf.mxu0
    %v322 = vadd.f32 0.0, %v321
    %v323 = vpop.f32.mrf.mxu0
    %324 = vmatprep.mubr.bf16.mxu0 0
    %325 = vmatmul.mubr.bf16.gmra.mxu0 %v161
    %v326 = vpop.f32.mrf.mxu0
    %v327 = vadd.f32 0.0, %v326
    %v328 = vpop.f32.mrf.mxu0
    %v329 = vpop.f32.mrf.mxu0
    %v330 = vadd.f32 0.0, %v329
    %v331 = vpop.f32.mrf.mxu0
    %332 = vmatprep.mubr.bf16.mxu0 0
    %333 = vmatmul.mubr.bf16.gmra.mxu0 %v162
    %v334 = vpop.f32.mrf.mxu0
    %v335 = vadd.f32 0.0, %v334
    %v336 = vpop.f32.mrf.mxu0
    %v337 = vpop.f32.mrf.mxu0
    %v338 = vadd.f32 0.0, %v337
    %v339 = vpop.f32.mrf.mxu0
    %340 = vmatprep.mubr.bf16.mxu0 0
    %341 = vmatmul.mubr.bf16.gmra.mxu0 %v163
    %v342 = vpop.f32.mrf.mxu0
    %v343 = vadd.f32 0.0, %v342
    %v344 = vpop.f32.mrf.mxu0
    %v345 = vpop.f32.mrf.mxu0
    %v346 = vadd.f32 0.0, %v345
    %v347 = vpop.f32.mrf.mxu0
    %348 = vmatprep.mubr.bf16.mxu0 0
    %349 = vmatmul.mubr.bf16.gmra.mxu0 %v164
    %v350 = vpop.f32.mrf.mxu0
    %v351 = vadd.f32 0.0, %v350
    %v352 = vpop.f32.mrf.mxu0
    %v353 = vpop.f32.mrf.mxu0
    %v354 = vadd.f32 0.0, %v353
    %v355 = vpop.f32.mrf.mxu0
    %356 = vmatprep.mubr.bf16.mxu0 0
    %357 = vmatmul.mubr.bf16.gmra.mxu0 %v165
    %v358 = vpop.f32.mrf.mxu0
    %v359 = vadd.f32 0.0, %v358
    %v360 = vpop.f32.mrf.mxu0
    %v361 = vpop.f32.mrf.mxu0
    %v362 = vadd.f32 0.0, %v361
    %v363 = vpop.f32.mrf.mxu0
    %364 = vmatprep.mubr.bf16.mxu0 0
    %365 = vmatmul.mubr.bf16.gmra.mxu0 %v166
    %v366 = vpop.f32.mrf.mxu0
    %v367 = vadd.f32 0.0, %v366
    %v368 = vpop.f32.mrf.mxu0
    %v369 = vpop.f32.mrf.mxu0
    %v370 = vadd.f32 0.0, %v369
    %v371 = vpop.f32.mrf.mxu0
    %372 = vmatprep.mubr.bf16.mxu0 0
    %373 = vmatmul.mubr.bf16.gmra.mxu0 %v167
    %v374 = vpop.f32.mrf.mxu0
    %v375 = vadd.f32 0.0, %v374
    %v376 = vpop.f32.mrf.mxu0
    %v377 = vpop.f32.mrf.mxu0
    %v378 = vadd.f32 0.0, %v377
    %v379 = vpop.f32.mrf.mxu0
    %380 = vmatprep.mubr.bf16.mxu0 0
    %381 = vmatmul.mubr.bf16.gmra.mxu0 %v168
    %v382 = vpop.f32.mrf.mxu0
    %v383 = vadd.f32 0.0, %v382
    %v384 = vpop.f32.mrf.mxu0
    %v385 = vpop.f32.mrf.mxu0
    %v386 = vadd.f32 0.0, %v385
    %v387 = vpop.f32.mrf.mxu0
    %388 = vmatprep.mubr.bf16.mxu0 0
    %389 = vmatmul.mubr.bf16.gmra.mxu0 %v169
    %v390 = vpop.f32.mrf.mxu0
    %v391 = vadd.f32 0.0, %v390
    %v392 = vpop.f32.mrf.mxu0
    %v393 = vpop.f32.mrf.mxu0
    %v394 = vadd.f32 0.0, %v393
    %v395 = vpop.f32.mrf.mxu0
    %396 = vmatprep.mubr.bf16.mxu0 0
    %397 = vmatmul.mubr.bf16.gmra.mxu0 %v170
    %v398 = vpop.f32.mrf.mxu0
    %v399 = vadd.f32 0.0, %v398
    %v400 = vpop.f32.mrf.mxu0
    %v401 = vpop.f32.mrf.mxu0
    %v402 = vadd.f32 0.0, %v401
    %v403 = vpop.f32.mrf.mxu0
    %404 = vmatprep.mubr.bf16.mxu0 0
    %405 = vmatmul.mubr.bf16.gmra.mxu0 %v171
    %v406 = vpop.f32.mrf.mxu0
    %v407 = vadd.f32 0.0, %v406
    %v408 = vpop.f32.mrf.mxu0
    %v409 = vpop.f32.mrf.mxu0
    %v410 = vadd.f32 0.0, %v409
    %v411 = vpop.f32.mrf.mxu0
    %412 = vmatprep.mubr.bf16.mxu0 0
    %413 = vmatmul.mubr.bf16.gmra.mxu0 %v172
    %v414 = vpop.f32.mrf.mxu0
    %v415 = vadd.f32 0.0, %v414
    %v416 = vpop.f32.mrf.mxu0
    %v417 = vpop.f32.mrf.mxu0
    %v418 = vadd.f32 0.0, %v417
    %v419 = vpop.f32.mrf.mxu0
    %420 = vmatprep.mubr.bf16.mxu0 0
    %421 = vmatmul.mubr.bf16.gmra.mxu0 %v173
    %v422 = vpop.f32.mrf.mxu0
    %v423 = vadd.f32 0.0, %v422
    %v424 = vpop.f32.mrf.mxu0
    %v425 = vpop.f32.mrf.mxu0
    %v426 = vadd.f32 0.0, %v425
    %v427 = vpop.f32.mrf.mxu0
    %428 = vmatprep.mubr.bf16.mxu0 0
    %429 = vmatmul.mubr.bf16.gmra.mxu0 %v174
    %v430 = vpop.f32.mrf.mxu0
    %v431 = vadd.f32 0.0, %v430
    %v432 = vpop.f32.mrf.mxu0
    %v433 = vpop.f32.mrf.mxu0
    %v434 = vadd.f32 0.0, %v433
    %v435 = vpop.f32.mrf.mxu0
    %436 = vmatprep.mubr.bf16.mxu0 0
    %437 = vmatmul.mubr.bf16.gmra.mxu0 %v175
    %v438 = vpop.f32.mrf.mxu0
    %v439 = vadd.f32 0.0, %v438
    %v440 = vpop.f32.mrf.mxu0
    %v441 = vpop.f32.mrf.mxu0
    %v442 = vadd.f32 0.0, %v441
    %v443 = vpop.f32.mrf.mxu0
    %444 = vmatprep.mubr.bf16.mxu0 0
    %445 = vmatmul.mubr.bf16.gmra.mxu0 %v176
    %v446 = vpop.f32.mrf.mxu0
    %v447 = vadd.f32 0.0, %v446
    %v448 = vpop.f32.mrf.mxu0
    %v449 = vpop.f32.mrf.mxu0
    %v450 = vadd.f32 0.0, %v449
    %v451 = vpop.f32.mrf.mxu0
    %452 = vmatprep.mubr.bf16.mxu0 0
    %453 = vmatmul.mubr.bf16.gmra.mxu0 %v177
    %v454 = vpop.f32.mrf.mxu0
    %v455 = vadd.f32 0.0, %v454
    %v456 = vpop.f32.mrf.mxu0
    %v457 = vpop.f32.mrf.mxu0
    %v458 = vadd.f32 0.0, %v457
    %v459 = vpop.f32.mrf.mxu0
    %460 = vmatprep.mubr.bf16.mxu0 0
    %461 = vmatmul.mubr.bf16.gmra.mxu0 %v178
    %v462 = vpop.f32.mrf.mxu0
    %v463 = vadd.f32 0.0, %v462
    %v464 = vpop.f32.mrf.mxu0
    %v465 = vpop.f32.mrf.mxu0
    %v466 = vadd.f32 0.0, %v465
    %v467 = vpop.f32.mrf.mxu0
    %468 = vmatprep.mubr.bf16.mxu0 0
    %469 = vmatmul.mubr.bf16.gmra.mxu0 %v179
    %v470 = vpop.f32.mrf.mxu0
    %v471 = vadd.f32 0.0, %v470
    %v472 = vpop.f32.mrf.mxu0
    %v473 = vpop.f32.mrf.mxu0
    %v474 = vadd.f32 0.0, %v473
    %v475 = vpop.f32.mrf.mxu0
    %476 = vmatprep.mubr.bf16.mxu0 0
    %477 = vmatmul.mubr.bf16.gmra.mxu0 %v180
    %v478 = vpop.f32.mrf.mxu0
    %v479 = vadd.f32 0.0, %v478
    %v480 = vpop.f32.mrf.mxu0
    %v481 = vpop.f32.mrf.mxu0
    %v482 = vadd.f32 0.0, %v481
    %v483 = vpop.f32.mrf.mxu0
    %484 = vmatprep.mubr.bf16.mxu0 0
    %485 = vmatmul.mubr.bf16.gmra.mxu0 %v181
    %v486 = vpop.f32.mrf.mxu0
    %v487 = vadd.f32 0.0, %v486
    %v488 = vpop.f32.mrf.mxu0
    %v489 = vpop.f32.mrf.mxu0
    %v490 = vadd.f32 0.0, %v489
    %v491 = vpop.f32.mrf.mxu0
    %492 = vmatprep.mubr.bf16.mxu0 0
    %493 = vmatmul.mubr.bf16.gmra.mxu0 %v182
    %v494 = vpop.f32.mrf.mxu0
    %v495 = vadd.f32 0.0, %v494
    %v496 = vpop.f32.mrf.mxu0
    %v497 = vpop.f32.mrf.mxu0
    %v498 = vadd.f32 0.0, %v497
    %v499 = vpop.f32.mrf.mxu0
    %500 = vmatprep.mubr.bf16.mxu0 0
    %501 = vmatmul.mubr.bf16.gmra.mxu0 %v183
    %v502 = vpop.f32.mrf.mxu0
    %v503 = vadd.f32 0.0, %v502
    %v504 = vpop.f32.mrf.mxu0
    %v505 = vpop.f32.mrf.mxu0
    %v506 = vadd.f32 0.0, %v505
    %v507 = vpop.f32.mrf.mxu0
    %508 = vmatprep.mubr.bf16.mxu0 0
    %509 = vmatmul.mubr.bf16.gmra.mxu0 %v184
    %v510 = vpop.f32.mrf.mxu0
    %v511 = vadd.f32 0.0, %v510
    %v512 = vpop.f32.mrf.mxu0
    %v513 = vpop.f32.mrf.mxu0
    %v514 = vadd.f32 0.0, %v513
    %v515 = vpop.f32.mrf.mxu0
    %516 = vmatprep.mubr.bf16.mxu0 0
    %517 = vmatmul.mubr.bf16.gmra.mxu0 %v185
    %v518 = vpop.f32.mrf.mxu0
    %v519 = vadd.f32 0.0, %v518
    %v520 = vpop.f32.mrf.mxu0
    %v521 = vpop.f32.mrf.mxu0
    %v522 = vadd.f32 0.0, %v521
    %v523 = vpop.f32.mrf.mxu0
    %524 = vmatprep.mubr.bf16.mxu0 0
    %525 = vmatmul.mubr.bf16.gmra.mxu0 %v186
    %v526 = vpop.f32.mrf.mxu0
    %v527 = vadd.f32 0.0, %v526
    %v528 = vpop.f32.mrf.mxu0
    %v529 = vpop.f32.mrf.mxu0
    %v530 = vadd.f32 0.0, %v529
    %v531 = vpop.f32.mrf.mxu0
    %532 = vmatprep.mubr.bf16.mxu0 0
    %533 = vmatmul.mubr.bf16.gmra.mxu0 %v187
    %v534 = vpop.f32.mrf.mxu0
    %v535 = vadd.f32 0.0, %v534
    %v536 = vpop.f32.mrf.mxu0
    %v537 = vpop.f32.mrf.mxu0
    %v538 = vadd.f32 0.0, %v537
    %v539 = vpop.f32.mrf.mxu0
    %540 = vdwg.mxu0
    %v541 = vadd.f32 %v287, %v290
    %v542 = vadd.f32 %v541, %v295
    %v543 = vadd.f32 %v542, %v298
    %v544 = vadd.f32 %v543, %v303
    %v545 = vadd.f32 %v544, %v306
    %v546 = vadd.f32 %v545, %v311
    %v547 = vadd.f32 %v546, %v314
    %v548 = vadd.f32 %v547, %v319
    %v549 = vadd.f32 %v548, %v322
    %v550 = vadd.f32 %v549, %v327
    %v551 = vadd.f32 %v550, %v330
    %v552 = vadd.f32 %v551, %v335
    %v553 = vadd.f32 %v552, %v338
    %v554 = vadd.f32 %v553, %v343
    %v555 = vadd.f32 %v554, %v346
    %v556 = vadd.f32 %v555, %v351
    %v557 = vadd.f32 %v556, %v354
    %v558 = vadd.f32 %v557, %v359
    %v559 = vadd.f32 %v558, %v362
    %v560 = vadd.f32 %v559, %v367
    %v561 = vadd.f32 %v560, %v370
    %v562 = vadd.f32 %v561, %v375
    %v563 = vadd.f32 %v562, %v378
    %v564 = vadd.f32 %v563, %v383
    %v565 = vadd.f32 %v564, %v386
    %v566 = vadd.f32 %v565, %v391
    %v567 = vadd.f32 %v566, %v394
    %v568 = vadd.f32 %v567, %v399
    %v569 = vadd.f32 %v568, %v402
    %v570 = vadd.f32 %v569, %v407
    %v571 = vadd.f32 %v570, %v410
    %v572 = vadd.f32 %v571, %v415
    %v573 = vadd.f32 %v572, %v418
    %v574 = vadd.f32 %v573, %v423
    %v575 = vadd.f32 %v574, %v426
    %v576 = vadd.f32 %v575, %v431
    %v577 = vadd.f32 %v576, %v434
    %v578 = vadd.f32 %v577, %v439
    %v579 = vadd.f32 %v578, %v442
    %v580 = vadd.f32 %v579, %v447
    %v581 = vadd.f32 %v580, %v450
    %v582 = vadd.f32 %v581, %v455
    %v583 = vadd.f32 %v582, %v458
    %v584 = vadd.f32 %v583, %v463
    %v585 = vadd.f32 %v584, %v466
    %v586 = vadd.f32 %v585, %v471
    %v587 = vadd.f32 %v586, %v474
    %v588 = vadd.f32 %v587, %v479
    %v589 = vadd.f32 %v588, %v482
    %v590 = vadd.f32 %v589, %v487
    %v591 = vadd.f32 %v590, %v490
    %v592 = vadd.f32 %v591, %v495
    %v593 = vadd.f32 %v592, %v498
    %v594 = vadd.f32 %v593, %v503
    %v595 = vadd.f32 %v594, %v506
    %v596 = vadd.f32 %v595, %v511
    %v597 = vadd.f32 %v596, %v514
    %v598 = vadd.f32 %v597, %v519
    %v599 = vadd.f32 %v598, %v522
    %v600 = vadd.f32 %v599, %v527
    %v601 = vadd.f32 %v600, %v530
    %v602 = vadd.f32 %v601, %v535
    %v603 = vadd.f32 %v602, %v538
    %v604 = vrot.slane %v603, 4
    %v605 = vadd.f32 %v603, %v604
    %v606 = vrot.slane %v605, 2
    %v607 = vadd.f32 %v605, %v606
    %v608 = vrot.slane %v607, 1
    %v609 = vadd.f32 %v607, %v608
    %v610 = vmul.f32 %v287, %v287
    %v611 = vmul.f32 %v290, %v290
    %v612 = vmul.f32 %v295, %v295
    %v613 = vmul.f32 %v298, %v298
    %v614 = vmul.f32 %v303, %v303
    %v615 = vmul.f32 %v306, %v306
    %v616 = vmul.f32 %v311, %v311
    %v617 = vmul.f32 %v314, %v314
    %v618 = vmul.f32 %v319, %v319
    %v619 = vmul.f32 %v322, %v322
    %v620 = vmul.f32 %v327, %v327
    %v621 = vmul.f32 %v330, %v330
    %v622 = vmul.f32 %v335, %v335
    %v623 = vmul.f32 %v338, %v338
    %v624 = vmul.f32 %v343, %v343
    %v625 = vmul.f32 %v346, %v346
    %v626 = vmul.f32 %v351, %v351
    %v627 = vmul.f32 %v354, %v354
    %v628 = vmul.f32 %v359, %v359
    %v629 = vmul.f32 %v362, %v362
    %v630 = vmul.f32 %v367, %v367
    %v631 = vmul.f32 %v370, %v370
    %v632 = vmul.f32 %v375, %v375
    %v633 = vmul.f32 %v378, %v378
    %v634 = vmul.f32 %v383, %v383
    %v635 = vmul.f32 %v386, %v386
    %v636 = vmul.f32 %v391, %v391
    %v637 = vmul.f32 %v394, %v394
    %v638 = vmul.f32 %v399, %v399
    %v639 = vmul.f32 %v402, %v402
    %v640 = vmul.f32 %v407, %v407
    %v641 = vmul.f32 %v410, %v410
    %v642 = vmul.f32 %v415, %v415
    %v643 = vmul.f32 %v418, %v418
    %v644 = vmul.f32 %v423, %v423
    %v645 = vmul.f32 %v426, %v426
    %v646 = vmul.f32 %v431, %v431
    %v647 = vmul.f32 %v434, %v434
    %v648 = vmul.f32 %v439, %v439
    %v649 = vmul.f32 %v442, %v442
    %v650 = vmul.f32 %v447, %v447
    %v651 = vmul.f32 %v450, %v450
    %v652 = vmul.f32 %v455, %v455
    %v653 = vmul.f32 %v458, %v458
    %v654 = vmul.f32 %v463, %v463
    %v655 = vmul.f32 %v466, %v466
    %v656 = vmul.f32 %v471, %v471
    %v657 = vmul.f32 %v474, %v474
    %v658 = vmul.f32 %v479, %v479
    %v659 = vmul.f32 %v482, %v482
    %v660 = vmul.f32 %v487, %v487
    %v661 = vmul.f32 %v490, %v490
    %v662 = vmul.f32 %v495, %v495
    %v663 = vmul.f32 %v498, %v498
    %v664 = vmul.f32 %v503, %v503
    %v665 = vmul.f32 %v506, %v506
    %v666 = vmul.f32 %v511, %v511
    %v667 = vmul.f32 %v514, %v514
    %v668 = vmul.f32 %v519, %v519
    %v669 = vmul.f32 %v522, %v522
    %v670 = vmul.f32 %v527, %v527
    %v671 = vmul.f32 %v530, %v530
    %v672 = vmul.f32 %v535, %v535
    %v673 = vmul.f32 %v538, %v538
    %v674 = vadd.f32 %v610, %v611
    %v675 = vadd.f32 %v674, %v612
    %v676 = vadd.f32 %v675, %v613
    %v677 = vadd.f32 %v676, %v614
    %v678 = vadd.f32 %v677, %v615
    %v679 = vadd.f32 %v678, %v616
    %v680 = vadd.f32 %v679, %v617
    %v681 = vadd.f32 %v680, %v618
    %v682 = vadd.f32 %v681, %v619
    %v683 = vadd.f32 %v682, %v620
    %v684 = vadd.f32 %v683, %v621
    %v685 = vadd.f32 %v684, %v622
    %v686 = vadd.f32 %v685, %v623
    %v687 = vadd.f32 %v686, %v624
    %v688 = vadd.f32 %v687, %v625
    %v689 = vadd.f32 %v688, %v626
    %v690 = vadd.f32 %v689, %v627
    %v691 = vadd.f32 %v690, %v628
    %v692 = vadd.f32 %v691, %v629
    %v693 = vadd.f32 %v692, %v630
    %v694 = vadd.f32 %v693, %v631
    %v695 = vadd.f32 %v694, %v632
    %v696 = vadd.f32 %v695, %v633
    %v697 = vadd.f32 %v696, %v634
    %v698 = vadd.f32 %v697, %v635
    %v699 = vadd.f32 %v698, %v636
    %v700 = vadd.f32 %v699, %v637
    %v701 = vadd.f32 %v700, %v638
    %v702 = vadd.f32 %v701, %v639
    %v703 = vadd.f32 %v702, %v640
    %v704 = vadd.f32 %v703, %v641
    %v705 = vadd.f32 %v704, %v642
    %v706 = vadd.f32 %v705, %v643
    %v707 = vadd.f32 %v706, %v644
    %v708 = vadd.f32 %v707, %v645
    %v709 = vadd.f32 %v708, %v646
    %v710 = vadd.f32 %v709, %v647
    %v711 = vadd.f32 %v710, %v648
    %v712 = vadd.f32 %v711, %v649
    %v713 = vadd.f32 %v712, %v650
    %v714 = vadd.f32 %v713, %v651
    %v715 = vadd.f32 %v714, %v652
    %v716 = vadd.f32 %v715, %v653
    %v717 = vadd.f32 %v716, %v654
    %v718 = vadd.f32 %v717, %v655
    %v719 = vadd.f32 %v718, %v656
    %v720 = vadd.f32 %v719, %v657
    %v721 = vadd.f32 %v720, %v658
    %v722 = vadd.f32 %v721, %v659
    %v723 = vadd.f32 %v722, %v660
    %v724 = vadd.f32 %v723, %v661
    %v725 = vadd.f32 %v724, %v662
    %v726 = vadd.f32 %v725, %v663
    %v727 = vadd.f32 %v726, %v664
    %v728 = vadd.f32 %v727, %v665
    %v729 = vadd.f32 %v728, %v666
    %v730 = vadd.f32 %v729, %v667
    %v731 = vadd.f32 %v730, %v668
    %v732 = vadd.f32 %v731, %v669
    %v733 = vadd.f32 %v732, %v670
    %v734 = vadd.f32 %v733, %v671
    %v735 = vadd.f32 %v734, %v672
    %v736 = vadd.f32 %v735, %v673
    %v737 = vrot.slane %v736, 4
    %v738 = vadd.f32 %v736, %v737
    %v739 = vrot.slane %v738, 2
    %v740 = vadd.f32 %v738, %v739
    %v741 = vrot.slane %v740, 1
    %v742 = vadd.f32 %v740, %v741
    %v743 = vmul.f32 %v609, 0.001953125
    %v744 = vmul.f32 %v742, 0.001953125
    %v745 = vmul.f32 %v743, %v743
    %v746 = vsub.f32 %v744, %v745
    %v747 = vld [vmem:[%s2] sm:$0x1]
    %v748 = vadd.f32 %v746, 1e-05
    %v749 = vrsqrt.pop %v748
    %v750 = vmul.f32 %v747, %v749
    %v751 = vld [vmem:[%s3] sm:$0x1]
    %v752 = vmul.f32 %v743, %v750
    %v753 = vsub.f32 %v751, %v752
    %v755 = vlaneseq
    %v756 = vshrl.u32 %v755, 7
    %v757 = vsub.s32 0, %v756
    %v758 = vrot.slane %v750, %v757
    %v760 = vmul.f32 %v287, %v758
    %v761 = vmul.f32 %v290, %v758
    %v762 = vmul.f32 %v295, %v758
    %v763 = vmul.f32 %v298, %v758
    %v764 = vmul.f32 %v303, %v758
    %v765 = vmul.f32 %v306, %v758
    %v766 = vmul.f32 %v311, %v758
    %v767 = vmul.f32 %v314, %v758
    %v768 = vmul.f32 %v319, %v758
    %v769 = vmul.f32 %v322, %v758
    %v770 = vmul.f32 %v327, %v758
    %v771 = vmul.f32 %v330, %v758
    %v772 = vmul.f32 %v335, %v758
    %v773 = vmul.f32 %v338, %v758
    %v774 = vmul.f32 %v343, %v758
    %v775 = vmul.f32 %v346, %v758
    %v776 = vmul.f32 %v351, %v758
    %v777 = vmul.f32 %v354, %v758
    %v778 = vmul.f32 %v359, %v758
    %v779 = vmul.f32 %v362, %v758
    %v780 = vmul.f32 %v367, %v758
    %v781 = vmul.f32 %v370, %v758
    %v782 = vmul.f32 %v375, %v758
    %v783 = vmul.f32 %v378, %v758
    %v784 = vmul.f32 %v383, %v758
    %v785 = vmul.f32 %v386, %v758
    %v786 = vmul.f32 %v391, %v758
    %v787 = vmul.f32 %v394, %v758
    %v788 = vmul.f32 %v399, %v758
    %v789 = vmul.f32 %v402, %v758
    %v790 = vmul.f32 %v407, %v758
    %v791 = vmul.f32 %v410, %v758
    %v792 = vmul.f32 %v415, %v758
    %v793 = vmul.f32 %v418, %v758
    %v794 = vmul.f32 %v423, %v758
    %v795 = vmul.f32 %v426, %v758
    %v796 = vmul.f32 %v431, %v758
    %v797 = vmul.f32 %v434, %v758
    %v798 = vmul.f32 %v439, %v758
    %v799 = vmul.f32 %v442, %v758
    %v800 = vmul.f32 %v447, %v758
    %v801 = vmul.f32 %v450, %v758
    %v802 = vmul.f32 %v455, %v758
    %v803 = vmul.f32 %v458, %v758
    %v804 = vmul.f32 %v463, %v758
    %v805 = vmul.f32 %v466, %v758
    %v806 = vmul.f32 %v471, %v758
    %v807 = vmul.f32 %v474, %v758
    %v808 = vmul.f32 %v479, %v758
    %v809 = vmul.f32 %v482, %v758
    %v810 = vmul.f32 %v487, %v758
    %v811 = vmul.f32 %v490, %v758
    %v812 = vmul.f32 %v495, %v758
    %v813 = vmul.f32 %v498, %v758
    %v814 = vmul.f32 %v503, %v758
    %v815 = vmul.f32 %v506, %v758
    %v816 = vmul.f32 %v511, %v758
    %v817 = vmul.f32 %v514, %v758
    %v818 = vmul.f32 %v519, %v758
    %v819 = vmul.f32 %v522, %v758
    %v820 = vmul.f32 %v527, %v758
    %v821 = vmul.f32 %v530, %v758
    %v822 = vmul.f32 %v535, %v758
    %v823 = vmul.f32 %v538, %v758
    %v825 = vlaneseq
    %v826 = vshrl.u32 %v825, 7
    %v827 = vsub.s32 0, %v826
    %v828 = vrot.slane %v753, %v827
    %v830 = vadd.f32 %v760, %v828
    %v831 = vadd.f32 %v761, %v828
    %v832 = vadd.f32 %v762, %v828
    %v833 = vadd.f32 %v763, %v828
    %v834 = vadd.f32 %v764, %v828
    %v835 = vadd.f32 %v765, %v828
    %v836 = vadd.f32 %v766, %v828
    %v837 = vadd.f32 %v767, %v828
    %v838 = vadd.f32 %v768, %v828
    %v839 = vadd.f32 %v769, %v828
    %v840 = vadd.f32 %v770, %v828
    %v841 = vadd.f32 %v771, %v828
    %v842 = vadd.f32 %v772, %v828
    %v843 = vadd.f32 %v773, %v828
    %v844 = vadd.f32 %v774, %v828
    %v845 = vadd.f32 %v775, %v828
    %v846 = vadd.f32 %v776, %v828
    %v847 = vadd.f32 %v777, %v828
    %v848 = vadd.f32 %v778, %v828
    %v849 = vadd.f32 %v779, %v828
    %v850 = vadd.f32 %v780, %v828
    %v851 = vadd.f32 %v781, %v828
    %v852 = vadd.f32 %v782, %v828
    %v853 = vadd.f32 %v783, %v828
    %v854 = vadd.f32 %v784, %v828
    %v855 = vadd.f32 %v785, %v828
    %v856 = vadd.f32 %v786, %v828
    %v857 = vadd.f32 %v787, %v828
    %v858 = vadd.f32 %v788, %v828
    %v859 = vadd.f32 %v789, %v828
    %v860 = vadd.f32 %v790, %v828
    %v861 = vadd.f32 %v791, %v828
    %v862 = vadd.f32 %v792, %v828
    %v863 = vadd.f32 %v793, %v828
    %v864 = vadd.f32 %v794, %v828
    %v865 = vadd.f32 %v795, %v828
    %v866 = vadd.f32 %v796, %v828
    %v867 = vadd.f32 %v797, %v828
    %v868 = vadd.f32 %v798, %v828
    %v869 = vadd.f32 %v799, %v828
    %v870 = vadd.f32 %v800, %v828
    %v871 = vadd.f32 %v801, %v828
    %v872 = vadd.f32 %v802, %v828
    %v873 = vadd.f32 %v803, %v828
    %v874 = vadd.f32 %v804, %v828
    %v875 = vadd.f32 %v805, %v828
    %v876 = vadd.f32 %v806, %v828
    %v877 = vadd.f32 %v807, %v828
    %v878 = vadd.f32 %v808, %v828
    %v879 = vadd.f32 %v809, %v828
    %v880 = vadd.f32 %v810, %v828
    %v881 = vadd.f32 %v811, %v828
    %v882 = vadd.f32 %v812, %v828
    %v883 = vadd.f32 %v813, %v828
    %v884 = vadd.f32 %v814, %v828
    %v885 = vadd.f32 %v815, %v828
    %v886 = vadd.f32 %v816, %v828
    %v887 = vadd.f32 %v817, %v828
    %v888 = vadd.f32 %v818, %v828
    %v889 = vadd.f32 %v819, %v828
    %v890 = vadd.f32 %v820, %v828
    %v891 = vadd.f32 %v821, %v828
    %v892 = vadd.f32 %v822, %v828
    %v893 = vadd.f32 %v823, %v828
    %v894 = vmax.f32 %v830, 0.0
    %v895 = vmax.f32 %v831, 0.0
    %v896 = vmax.f32 %v832, 0.0
    %v897 = vmax.f32 %v833, 0.0
    %v898 = vmax.f32 %v834, 0.0
    %v899 = vmax.f32 %v835, 0.0
    %v900 = vmax.f32 %v836, 0.0
    %v901 = vmax.f32 %v837, 0.0
    %v902 = vmax.f32 %v838, 0.0
    %v903 = vmax.f32 %v839, 0.0
    %v904 = vmax.f32 %v840, 0.0
    %v905 = vmax.f32 %v841, 0.0
    %v906 = vmax.f32 %v842, 0.0
    %v907 = vmax.f32 %v843, 0.0
    %v908 = vmax.f32 %v844, 0.0
    %v909 = vmax.f32 %v845, 0.0
    %v910 = vmax.f32 %v846, 0.0
    %v911 = vmax.f32 %v847, 0.0
    %v912 = vmax.f32 %v848, 0.0
    %v913 = vmax.f32 %v849, 0.0
    %v914 = vmax.f32 %v850, 0.0
    %v915 = vmax.f32 %v851, 0.0
    %v916 = vmax.f32 %v852, 0.0
    %v917 = vmax.f32 %v853, 0.0
    %v918 = vmax.f32 %v854, 0.0
    %v919 = vmax.f32 %v855, 0.0
    %v920 = vmax.f32 %v856, 0.0
    %v921 = vmax.f32 %v857, 0.0
    %v922 = vmax.f32 %v858, 0.0
    %v923 = vmax.f32 %v859, 0.0
    %v924 = vmax.f32 %v860, 0.0
    %v925 = vmax.f32 %v861, 0.0
    %v926 = vmax.f32 %v862, 0.0
    %v927 = vmax.f32 %v863, 0.0
    %v928 = vmax.f32 %v864, 0.0
    %v929 = vmax.f32 %v865, 0.0
    %v930 = vmax.f32 %v866, 0.0
    %v931 = vmax.f32 %v867, 0.0
    %v932 = vmax.f32 %v868, 0.0
    %v933 = vmax.f32 %v869, 0.0
    %v934 = vmax.f32 %v870, 0.0
    %v935 = vmax.f32 %v871, 0.0
    %v936 = vmax.f32 %v872, 0.0
    %v937 = vmax.f32 %v873, 0.0
    %v938 = vmax.f32 %v874, 0.0
    %v939 = vmax.f32 %v875, 0.0
    %v940 = vmax.f32 %v876, 0.0
    %v941 = vmax.f32 %v877, 0.0
    %v942 = vmax.f32 %v878, 0.0
    %v943 = vmax.f32 %v879, 0.0
    %v944 = vmax.f32 %v880, 0.0
    %v945 = vmax.f32 %v881, 0.0
    %v946 = vmax.f32 %v882, 0.0
    %v947 = vmax.f32 %v883, 0.0
    %v948 = vmax.f32 %v884, 0.0
    %v949 = vmax.f32 %v885, 0.0
    %v950 = vmax.f32 %v886, 0.0
    %v951 = vmax.f32 %v887, 0.0
    %v952 = vmax.f32 %v888, 0.0
    %v953 = vmax.f32 %v889, 0.0
    %v954 = vmax.f32 %v890, 0.0
    %v955 = vmax.f32 %v891, 0.0
    %v956 = vmax.f32 %v892, 0.0
    %v957 = vmax.f32 %v893, 0.0
    %958 = vst [vmem:[#allocation2] sm:$0xff] 0
    %959 = vst [vmem:[#allocation2 + $0x8] sm:$0xff] 0
    %960 = vst [vmem:[#allocation2 + $0x10] sm:$0xff] 0
    %961 = vst [vmem:[#allocation2 + $0x18] sm:$0xff] 0
    %962 = vst [vmem:[#allocation2 + $0x20] sm:$0xf] 0
    %963 = vst [vmem:[#allocation2 + $0x24] sm:$0xff] 0
    %964 = vst [vmem:[#allocation2 + $0x2c] sm:$0xff] 0
    %965 = vst [vmem:[#allocation2 + $0x34] sm:$0xff] 0
    %966 = vst [vmem:[#allocation2 + $0x3c] sm:$0xff] 0
    %967 = vst [vmem:[#allocation2 + $0x44] sm:$0xf] 0
    %968 = vst [vmem:[#allocation2 + $0x48] sm:$0xff] 0
    %969 = vst [vmem:[#allocation2 + $0x50] sm:$0xff] 0
    %970 = vst [vmem:[#allocation2 + $0x58] sm:$0xff] 0
    %971 = vst [vmem:[#allocation2 + $0x60] sm:$0xff] 0
    %972 = vst [vmem:[#allocation2 + $0x68] sm:$0xf] 0
    %973 = vst [vmem:[#allocation2 + $0x6c] sm:$0xff] 0
    %974 = vst [vmem:[#allocation2 + $0x74] sm:$0xff] 0
    %975 = vst [vmem:[#allocation2 + $0x7c] sm:$0xff] 0
    %976 = vst [vmem:[#allocation2 + $0x84] sm:$0xff] 0
    %977 = vst [vmem:[#allocation2 + $0x8c] sm:$0xf] 0
    %978 = vst [vmem:[#allocation2 + $0x90] sm:$0xff] 0
    %979 = vst [vmem:[#allocation2 + $0x98] sm:$0xff] 0
    %980 = vst [vmem:[#allocation2 + $0xa0] sm:$0xff] 0
    %981 = vst [vmem:[#allocation2 + $0xa8] sm:$0xff] 0
    %982 = vst [vmem:[#allocation2 + $0xb0] sm:$0xf] 0
    %983 = vst [vmem:[#allocation2 + $0xb4] sm:$0xff] 0
    %984 = vst [vmem:[#allocation2 + $0xbc] sm:$0xff] 0
    %985 = vst [vmem:[#allocation2 + $0xc4] sm:$0xff] 0
    %986 = vst [vmem:[#allocation2 + $0xcc] sm:$0xff] 0
    %987 = vst [vmem:[#allocation2 + $0xd4] sm:$0xf] 0
    %988 = vst [vmem:[#allocation2 + $0xd8] sm:$0xff] 0
    %989 = vst [vmem:[#allocation2 + $0xe0] sm:$0xff] 0
    %990 = vst [vmem:[#allocation2 + $0xe8] sm:$0xff] 0
    %991 = vst [vmem:[#allocation2 + $0xf0] sm:$0xff] 0
    %992 = vst [vmem:[#allocation2 + $0xf8] sm:$0xf] 0
    %993 = vst [vmem:[#allocation2 + $0xfc] sm:$0xff] 0
    %994 = vst [vmem:[#allocation2 + $0x104] sm:$0xff] 0
    %995 = vst [vmem:[#allocation2 + $0x10c] sm:$0xff] 0
    %996 = vst [vmem:[#allocation2 + $0x114] sm:$0xff] 0
    %997 = vst [vmem:[#allocation2 + $0x11c] sm:$0xf] 0
    %998 = vst [vmem:[#allocation2 + $0x120] sm:$0xff] 0
    %999 = vst [vmem:[#allocation2 + $0x128] sm:$0xff] 0
    %1000 = vst [vmem:[#allocation2 + $0x130] sm:$0xff] 0
    %1001 = vst [vmem:[#allocation2 + $0x138] sm:$0xff] 0
    %1002 = vst [vmem:[#allocation2 + $0x140] sm:$0xf] 0
    %1003 = vst [vmem:[#allocation2 + $0x144] sm:$0xff] 0
    %1004 = vst [vmem:[#allocation2 + $0x14c] sm:$0xff] 0
    %1005 = vst [vmem:[#allocation2 + $0x154] sm:$0xff] 0
    %1006 = vst [vmem:[#allocation2 + $0x15c] sm:$0xff] 0
    %1007 = vst [vmem:[#allocation2 + $0x164] sm:$0xf] 0
    %1008 = vst [vmem:[#allocation2 + $0x168] sm:$0xff] 0
    %1009 = vst [vmem:[#allocation2 + $0x170] sm:$0xff] 0
    %1010 = vst [vmem:[#allocation2 + $0x178] sm:$0xff] 0
    %1011 = vst [vmem:[#allocation2 + $0x180] sm:$0xff] 0
    %1012 = vst [vmem:[#allocation2 + $0x188] sm:$0xf] 0
    %1013 = vst [vmem:[#allocation2 + $0x18c] sm:$0xff] 0
    %1014 = vst [vmem:[#allocation2 + $0x194] sm:$0xff] 0
    %1015 = vst [vmem:[#allocation2 + $0x19c] sm:$0xff] 0
    %1016 = vst [vmem:[#allocation2 + $0x1a4] sm:$0xff] 0
    %1017 = vst [vmem:[#allocation2 + $0x1ac] sm:$0xf] 0
    %1018 = vst [vmem:[#allocation2 + $0x1b0] sm:$0xff] 0
    %1019 = vst [vmem:[#allocation2 + $0x1b8] sm:$0xff] 0
    %1020 = vst [vmem:[#allocation2 + $0x1c0] sm:$0xff] 0
    %1021 = vst [vmem:[#allocation2 + $0x1c8] sm:$0xff] 0
    %1022 = vst [vmem:[#allocation2 + $0x1d0] sm:$0xf] 0
    %1023 = vst [vmem:[#allocation2 + $0x1d4] sm:$0xff] 0
    %1024 = vst [vmem:[#allocation2 + $0x1dc] sm:$0xff] 0
    %1025 = vst [vmem:[#allocation2 + $0x1e4] sm:$0xff] 0
    %1026 = vst [vmem:[#allocation2 + $0x1ec] sm:$0xff] 0
    %1027 = vst [vmem:[#allocation2 + $0x1f4] sm:$0xf] 0
    %1028 = vst [vmem:[#allocation2 + $0x1f8] sm:$0xff] 0
    %1029 = vst [vmem:[#allocation2 + $0x200] sm:$0xff] 0
    %1030 = vst [vmem:[#allocation2 + $0x208] sm:$0xff] 0
    %1031 = vst [vmem:[#allocation2 + $0x210] sm:$0xff] 0
    %1032 = vst [vmem:[#allocation2 + $0x218] sm:$0xf] 0
    %1033 = vst [vmem:[#allocation2 + $0x21c] sm:$0xff] 0
    %1034 = vst [vmem:[#allocation2 + $0x224] sm:$0xff] 0
    %1035 = vst [vmem:[#allocation2 + $0x22c] sm:$0xff] 0
    %1036 = vst [vmem:[#allocation2 + $0x234] sm:$0xff] 0
    %1037 = vst [vmem:[#allocation2 + $0x23c] sm:$0xf] 0
    %1038 = vst [vmem:[#allocation2 + $0x240] sm:$0xff] 0
    %1039 = vst [vmem:[#allocation2 + $0x248] sm:$0xff] 0
    %1040 = vst [vmem:[#allocation2 + $0x250] sm:$0xff] 0
    %1041 = vst [vmem:[#allocation2 + $0x258] sm:$0xff] 0
    %1042 = vst [vmem:[#allocation2 + $0x260] sm:$0xf] 0
    %1043 = vst [vmem:[#allocation2 + $0x264] sm:$0xff] 0
    %1044 = vst [vmem:[#allocation2 + $0x26c] sm:$0xff] 0
    %1045 = vst [vmem:[#allocation2 + $0x274] sm:$0xff] 0
    %1046 = vst [vmem:[#allocation2 + $0x27c] sm:$0xff] 0
    %1047 = vst [vmem:[#allocation2 + $0x284] sm:$0xf] 0
    %1048 = vst [vmem:[#allocation2 + $0x288] sm:$0xff] 0
    %1049 = vst [vmem:[#allocation2 + $0x290] sm:$0xff] 0
    %1050 = vst [vmem:[#allocation2 + $0x298] sm:$0xff] 0
    %1051 = vst [vmem:[#allocation2 + $0x2a0] sm:$0xff] 0
    %1052 = vst [vmem:[#allocation2 + $0x2a8] sm:$0xf] 0
    %1053 = vst [vmem:[#allocation2 + $0x2ac] sm:$0xff] 0
    %1054 = vst [vmem:[#allocation2 + $0x2b4] sm:$0xff] 0
    %1055 = vst [vmem:[#allocation2 + $0x2bc] sm:$0xff] 0
    %1056 = vst [vmem:[#allocation2 + $0x2c4] sm:$0xff] 0
    %1057 = vst [vmem:[#allocation2 + $0x2cc] sm:$0xf] 0
    %1058 = vst [vmem:[#allocation2 + $0x2d0] sm:$0xff] 0
    %1059 = vst [vmem:[#allocation2 + $0x2d8] sm:$0xff] 0
    %1060 = vst [vmem:[#allocation2 + $0x2e0] sm:$0xff] 0
    %1061 = vst [vmem:[#allocation2 + $0x2e8] sm:$0xff] 0
    %1062 = vst [vmem:[#allocation2 + $0x2f0] sm:$0xf] 0
    %1063 = vst [vmem:[#allocation2 + $0x2f4] sm:$0xff] 0
    %1064 = vst [vmem:[#allocation2 + $0x2fc] sm:$0xff] 0
    %1065 = vst [vmem:[#allocation2 + $0x304] sm:$0xff] 0
    %1066 = vst [vmem:[#allocation2 + $0x30c] sm:$0xff] 0
    %1067 = vst [vmem:[#allocation2 + $0x314] sm:$0xf] 0
    %1068 = vst [vmem:[#allocation2 + $0x318] sm:$0xff] 0
    %1069 = vst [vmem:[#allocation2 + $0x320] sm:$0xff] 0
    %1070 = vst [vmem:[#allocation2 + $0x328] sm:$0xff] 0
    %1071 = vst [vmem:[#allocation2 + $0x330] sm:$0xff] 0
    %1072 = vst [vmem:[#allocation2 + $0x338] sm:$0xf] 0
    %1073 = vst [vmem:[#allocation2 + $0x33c] sm:$0xff] 0
    %1074 = vst [vmem:[#allocation2 + $0x344] sm:$0xff] 0
    %1075 = vst [vmem:[#allocation2 + $0x34c] sm:$0xff] 0
    %1076 = vst [vmem:[#allocation2 + $0x354] sm:$0xff] 0
    %1077 = vst [vmem:[#allocation2 + $0x35c] sm:$0xf] 0
    %1078 = vst [vmem:[#allocation2 + $0x360] sm:$0xff] 0
    %1079 = vst [vmem:[#allocation2 + $0x368] sm:$0xff] 0
    %1080 = vst [vmem:[#allocation2 + $0x370] sm:$0xff] 0
    %1081 = vst [vmem:[#allocation2 + $0x378] sm:$0xff] 0
    %1082 = vst [vmem:[#allocation2 + $0x380] sm:$0xf] 0
    %1083 = vst [vmem:[#allocation2 + $0x384] sm:$0xff] 0
    %1084 = vst [vmem:[#allocation2 + $0x38c] sm:$0xff] 0
    %1085 = vst [vmem:[#allocation2 + $0x394] sm:$0xff] 0
    %1086 = vst [vmem:[#allocation2 + $0x39c] sm:$0xff] 0
    %1087 = vst [vmem:[#allocation2 + $0x3a4] sm:$0xf] 0
    %1088 = vst [vmem:[#allocation2 + $0x3a8] sm:$0xff] 0
    %1089 = vst [vmem:[#allocation2 + $0x3b0] sm:$0xff] 0
    %1090 = vst [vmem:[#allocation2 + $0x3b8] sm:$0xff] 0
    %1091 = vst [vmem:[#allocation2 + $0x3c0] sm:$0xff] 0
    %1092 = vst [vmem:[#allocation2 + $0x3c8] sm:$0xf] 0
    %1093 = vst [vmem:[#allocation2 + $0x3cc] sm:$0xff] 0
    %1094 = vst [vmem:[#allocation2 + $0x3d4] sm:$0xff] 0
    %1095 = vst [vmem:[#allocation2 + $0x3dc] sm:$0xff] 0
    %1096 = vst [vmem:[#allocation2 + $0x3e4] sm:$0xff] 0
    %1097 = vst [vmem:[#allocation2 + $0x3ec] sm:$0xf] 0
    %1098 = vst [vmem:[#allocation2 + $0x3f0] sm:$0xff] 0
    %1099 = vst [vmem:[#allocation2 + $0x3f8] sm:$0xff] 0
    %1100 = vst [vmem:[#allocation2 + $0x400] sm:$0xff] 0
    %1101 = vst [vmem:[#allocation2 + $0x408] sm:$0xff] 0
    %1102 = vst [vmem:[#allocation2 + $0x410] sm:$0xf] 0
    %1103 = vst [vmem:[#allocation2 + $0x414] sm:$0xff] 0
    %1104 = vst [vmem:[#allocation2 + $0x41c] sm:$0xff] 0
    %1105 = vst [vmem:[#allocation2 + $0x424] sm:$0xff] 0
    %1106 = vst [vmem:[#allocation2 + $0x42c] sm:$0xff] 0
    %1107 = vst [vmem:[#allocation2 + $0x434] sm:$0xf] 0
    %1108 = vst [vmem:[#allocation2 + $0x438] sm:$0xff] 0
    %1109 = vst [vmem:[#allocation2 + $0x440] sm:$0xff] 0
    %1110 = vst [vmem:[#allocation2 + $0x448] sm:$0xff] 0
    %1111 = vst [vmem:[#allocation2 + $0x450] sm:$0xff] 0
    %1112 = vst [vmem:[#allocation2 + $0x458] sm:$0xf] 0
    %1113 = vst [vmem:[#allocation2 + $0x45c] sm:$0xff] 0
    %1114 = vst [vmem:[#allocation2 + $0x464] sm:$0xff] 0
    %1115 = vst [vmem:[#allocation2 + $0x46c] sm:$0xff] 0
    %1116 = vst [vmem:[#allocation2 + $0x474] sm:$0xff] 0
    %1117 = vst [vmem:[#allocation2 + $0x47c] sm:$0xf] 0
    %1118 = vst [vmem:[#allocation2 + $0x480] sm:$0xff] 0
    %1119 = vst [vmem:[#allocation2 + $0x488] sm:$0xff] 0
    %1120 = vst [vmem:[#allocation2 + $0x490] sm:$0xff] 0
    %1121 = vst [vmem:[#allocation2 + $0x498] sm:$0xff] 0
    %1122 = vst [vmem:[#allocation2 + $0x4a0] sm:$0xf] 0
    %1123 = vst [vmem:[#allocation2 + $0x4a4] sm:$0xff] 0
    %1124 = vst [vmem:[#allocation2 + $0x4ac] sm:$0xff] 0
    %1125 = vst [vmem:[#allocation2 + $0x4b4] sm:$0xff] 0
    %1126 = vst [vmem:[#allocation2 + $0x4bc] sm:$0xff] 0
    %1127 = vst [vmem:[#allocation2 + $0x4c4] sm:$0xf] 0
    %1128 = vst [vmem:[#allocation2 + $0x4c8] sm:$0xff] 0
    %1129 = vst [vmem:[#allocation2 + $0x4d0] sm:$0xff] 0
    %1130 = vst [vmem:[#allocation2 + $0x4d8] sm:$0xff] 0
    %1131 = vst [vmem:[#allocation2 + $0x4e0] sm:$0xff] 0
    %1132 = vst [vmem:[#allocation2 + $0x4e8] sm:$0xf] 0
    %1133 = vst [vmem:[#allocation2 + $0x4ec] sm:$0xff] 0
    %1134 = vst [vmem:[#allocation2 + $0x4f4] sm:$0xff] 0
    %1135 = vst [vmem:[#allocation2 + $0x4fc] sm:$0xff] 0
    %1136 = vst [vmem:[#allocation2 + $0x504] sm:$0xff] 0
    %1137 = vst [vmem:[#allocation2 + $0x50c] sm:$0xf] 0
    %1138 = vst [vmem:[#allocation2 + $0x510] sm:$0xff] 0
    %1139 = vst [vmem:[#allocation2 + $0x518] sm:$0xff] 0
    %1140 = vst [vmem:[#allocation2 + $0x520] sm:$0xff] 0
    %1141 = vst [vmem:[#allocation2 + $0x528] sm:$0xff] 0
    %1142 = vst [vmem:[#allocation2 + $0x530] sm:$0xf] 0
    %1143 = vst [vmem:[#allocation2 + $0x534] sm:$0xff] 0
    %1144 = vst [vmem:[#allocation2 + $0x53c] sm:$0xff] 0
    %1145 = vst [vmem:[#allocation2 + $0x544] sm:$0xff] 0
    %1146 = vst [vmem:[#allocation2 + $0x54c] sm:$0xff] 0
    %1147 = vst [vmem:[#allocation2 + $0x554] sm:$0xf] 0
    %1148 = vst [vmem:[#allocation2 + $0x558] sm:$0xff] 0
    %1149 = vst [vmem:[#allocation2 + $0x560] sm:$0xff] 0
    %1150 = vst [vmem:[#allocation2 + $0x568] sm:$0xff] 0
    %1151 = vst [vmem:[#allocation2 + $0x570] sm:$0xff] 0
    %1152 = vst [vmem:[#allocation2 + $0x578] sm:$0xf] 0
    %1153 = vst [vmem:[#allocation2 + $0x57c] sm:$0xff] 0
    %1154 = vst [vmem:[#allocation2 + $0x584] sm:$0xff] 0
    %1155 = vst [vmem:[#allocation2 + $0x58c] sm:$0xff] 0
    %1156 = vst [vmem:[#allocation2 + $0x594] sm:$0xff] 0
    %1157 = vst [vmem:[#allocation2 + $0x59c] sm:$0xf] 0
    %1158 = vst [vmem:[#allocation2 + $0x5a0] sm:$0xff] 0
    %1159 = vst [vmem:[#allocation2 + $0x5a8] sm:$0xff] 0
    %1160 = vst [vmem:[#allocation2 + $0x5b0] sm:$0xff] 0
    %1161 = vst [vmem:[#allocation2 + $0x5b8] sm:$0xff] 0
    %1162 = vst [vmem:[#allocation2 + $0x5c0] sm:$0xf] 0
    %1163 = vst [vmem:[#allocation2 + $0x5c4] sm:$0xff] 0
    %1164 = vst [vmem:[#allocation2 + $0x5cc] sm:$0xff] 0
    %1165 = vst [vmem:[#allocation2 + $0x5d4] sm:$0xff] 0
    %1166 = vst [vmem:[#allocation2 + $0x5dc] sm:$0xff] 0
    %1167 = vst [vmem:[#allocation2 + $0x5e4] sm:$0xf] 0
    %1168 = vst [vmem:[#allocation2 + $0x5e8] sm:$0xff] 0
    %1169 = vst [vmem:[#allocation2 + $0x5f0] sm:$0xff] 0
    %1170 = vst [vmem:[#allocation2 + $0x5f8] sm:$0xff] 0
    %1171 = vst [vmem:[#allocation2 + $0x600] sm:$0xff] 0
    %1172 = vst [vmem:[#allocation2 + $0x608] sm:$0xf] 0
    %1173 = vst [vmem:[#allocation2 + $0x60c] sm:$0xff] 0
    %1174 = vst [vmem:[#allocation2 + $0x614] sm:$0xff] 0
    %1175 = vst [vmem:[#allocation2 + $0x61c] sm:$0xff] 0
    %1176 = vst [vmem:[#allocation2 + $0x624] sm:$0xff] 0
    %1177 = vst [vmem:[#allocation2 + $0x62c] sm:$0xf] 0
    %1178 = vst [vmem:[#allocation2 + $0x630] sm:$0xff] 0
    %1179 = vst [vmem:[#allocation2 + $0x638] sm:$0xff] 0
    %1180 = vst [vmem:[#allocation2 + $0x640] sm:$0xff] 0
    %1181 = vst [vmem:[#allocation2 + $0x648] sm:$0xff] 0
    %1182 = vst [vmem:[#allocation2 + $0x650] sm:$0xf] 0
    %1183 = vst [vmem:[#allocation2 + $0x654] sm:$0xff] 0
    %1184 = vst [vmem:[#allocation2 + $0x65c] sm:$0xff] 0
    %1185 = vst [vmem:[#allocation2 + $0x664] sm:$0xff] 0
    %1186 = vst [vmem:[#allocation2 + $0x66c] sm:$0xff] 0
    %1187 = vst [vmem:[#allocation2 + $0x674] sm:$0xf] 0
    %1188 = vst [vmem:[#allocation2 + $0x678] sm:$0xff] 0
    %1189 = vst [vmem:[#allocation2 + $0x680] sm:$0xff] 0
    %1190 = vst [vmem:[#allocation2 + $0x688] sm:$0xff] 0
    %1191 = vst [vmem:[#allocation2 + $0x690] sm:$0xff] 0
    %1192 = vst [vmem:[#allocation2 + $0x698] sm:$0xf] 0
    %1193 = vst [vmem:[#allocation2 + $0x69c] sm:$0xff] 0
    %1194 = vst [vmem:[#allocation2 + $0x6a4] sm:$0xff] 0
    %1195 = vst [vmem:[#allocation2 + $0x6ac] sm:$0xff] 0
    %1196 = vst [vmem:[#allocation2 + $0x6b4] sm:$0xff] 0
    %1197 = vst [vmem:[#allocation2 + $0x6bc] sm:$0xf] 0
    %1198 = vst [vmem:[#allocation2 + $0x6c0] sm:$0xff] 0
    %1199 = vst [vmem:[#allocation2 + $0x6c8] sm:$0xff] 0
    %1200 = vst [vmem:[#allocation2 + $0x6d0] sm:$0xff] 0
    %1201 = vst [vmem:[#allocation2 + $0x6d8] sm:$0xff] 0
    %1202 = vst [vmem:[#allocation2 + $0x6e0] sm:$0xf] 0
    %1203 = vst [vmem:[#allocation2 + $0x6e4] sm:$0xff] 0
    %1204 = vst [vmem:[#allocation2 + $0x6ec] sm:$0xff] 0
    %1205 = vst [vmem:[#allocation2 + $0x6f4] sm:$0xff] 0
    %1206 = vst [vmem:[#allocation2 + $0x6fc] sm:$0xff] 0
    %1207 = vst [vmem:[#allocation2 + $0x704] sm:$0xf] 0
    %1208 = vst [vmem:[#allocation2 + $0x708] sm:$0xff] 0
    %1209 = vst [vmem:[#allocation2 + $0x710] sm:$0xff] 0
    %1210 = vst [vmem:[#allocation2 + $0x718] sm:$0xff] 0
    %1211 = vst [vmem:[#allocation2 + $0x720] sm:$0xff] 0
    %1212 = vst [vmem:[#allocation2 + $0x728] sm:$0xf] 0
    %1213 = vst [vmem:[#allocation2 + $0x72c] sm:$0xff] 0
    %1214 = vst [vmem:[#allocation2 + $0x734] sm:$0xff] 0
    %1215 = vst [vmem:[#allocation2 + $0x73c] sm:$0xff] 0
    %1216 = vst [vmem:[#allocation2 + $0x744] sm:$0xff] 0
    %1217 = vst [vmem:[#allocation2 + $0x74c] sm:$0xf] 0
    %1218 = vst [vmem:[#allocation2 + $0x750] sm:$0xff] 0
    %1219 = vst [vmem:[#allocation2 + $0x758] sm:$0xff] 0
    %1220 = vst [vmem:[#allocation2 + $0x760] sm:$0xff] 0
    %1221 = vst [vmem:[#allocation2 + $0x768] sm:$0xff] 0
    %1222 = vst [vmem:[#allocation2 + $0x770] sm:$0xf] 0
    %1223 = vst [vmem:[#allocation2 + $0x774] sm:$0xff] 0
    %1224 = vst [vmem:[#allocation2 + $0x77c] sm:$0xff] 0
    %1225 = vst [vmem:[#allocation2 + $0x784] sm:$0xff] 0
    %1226 = vst [vmem:[#allocation2 + $0x78c] sm:$0xff] 0
    %1227 = vst [vmem:[#allocation2 + $0x794] sm:$0xf] 0
    %1228 = vst [vmem:[#allocation2 + $0x798] sm:$0xff] 0
    %1229 = vst [vmem:[#allocation2 + $0x7a0] sm:$0xff] 0
    %1230 = vst [vmem:[#allocation2 + $0x7a8] sm:$0xff] 0
    %1231 = vst [vmem:[#allocation2 + $0x7b0] sm:$0xff] 0
    %1232 = vst [vmem:[#allocation2 + $0x7b8] sm:$0xf] 0
    %1233 = vst [vmem:[#allocation2 + $0x7bc] sm:$0xff] 0
    %1234 = vst [vmem:[#allocation2 + $0x7c4] sm:$0xff] 0
    %1235 = vst [vmem:[#allocation2 + $0x7cc] sm:$0xff] 0
    %1236 = vst [vmem:[#allocation2 + $0x7d4] sm:$0xff] 0
    %1237 = vst [vmem:[#allocation2 + $0x7dc] sm:$0xf] 0
    %1238 = vst [vmem:[#allocation2 + $0x7e0] sm:$0xff] 0
    %1239 = vst [vmem:[#allocation2 + $0x7e8] sm:$0xff] 0
    %1240 = vst [vmem:[#allocation2 + $0x7f0] sm:$0xff] 0
    %1241 = vst [vmem:[#allocation2 + $0x7f8] sm:$0xff] 0
    %1242 = vst [vmem:[#allocation2 + $0x800] sm:$0xf] 0
    %1243 = vst [vmem:[#allocation2 + $0x804] sm:$0xff] 0
    %1244 = vst [vmem:[#allocation2 + $0x80c] sm:$0xff] 0
    %1245 = vst [vmem:[#allocation2 + $0x814] sm:$0xff] 0
    %1246 = vst [vmem:[#allocation2 + $0x81c] sm:$0xff] 0
    %1247 = vst [vmem:[#allocation2 + $0x824] sm:$0xf] 0
    %1248 = vst [vmem:[#allocation2 + $0x828] sm:$0xff] 0
    %1249 = vst [vmem:[#allocation2 + $0x830] sm:$0xff] 0
    %1250 = vst [vmem:[#allocation2 + $0x838] sm:$0xff] 0
    %1251 = vst [vmem:[#allocation2 + $0x840] sm:$0xff] 0
    %1252 = vst [vmem:[#allocation2 + $0x848] sm:$0xf] 0
    %1253 = vst [vmem:[#allocation2 + $0x84c] sm:$0xff] 0
    %1254 = vst [vmem:[#allocation2 + $0x854] sm:$0xff] 0
    %1255 = vst [vmem:[#allocation2 + $0x85c] sm:$0xff] 0
    %1256 = vst [vmem:[#allocation2 + $0x864] sm:$0xff] 0
    %1257 = vst [vmem:[#allocation2 + $0x86c] sm:$0xf] 0
    %1258 = vst [vmem:[#allocation2 + $0x870] sm:$0xff] 0
    %1259 = vst [vmem:[#allocation2 + $0x878] sm:$0xff] 0
    %1260 = vst [vmem:[#allocation2 + $0x880] sm:$0xff] 0
    %1261 = vst [vmem:[#allocation2 + $0x888] sm:$0xff] 0
    %1262 = vst [vmem:[#allocation2 + $0x890] sm:$0xf] 0
    %1263 = vst [vmem:[#allocation2 + $0x894] sm:$0xff] 0
    %1264 = vst [vmem:[#allocation2 + $0x89c] sm:$0xff] 0
    %1265 = vst [vmem:[#allocation2 + $0x8a4] sm:$0xff] 0
    %1266 = vst [vmem:[#allocation2 + $0x8ac] sm:$0xff] 0
    %1267 = vst [vmem:[#allocation2 + $0x8b4] sm:$0xf] 0
    %1268 = vst [vmem:[#allocation2 + $0x8b8] sm:$0xff] 0
    %1269 = vst [vmem:[#allocation2 + $0x8c0] sm:$0xff] 0
    %1270 = vst [vmem:[#allocation2 + $0x8c8] sm:$0xff] 0
    %1271 = vst [vmem:[#allocation2 + $0x8d0] sm:$0xff] 0
    %1272 = vst [vmem:[#allocation2 + $0x8d8] sm:$0xf] 0
    %1273 = vst [vmem:[#allocation2 + $0x8dc] sm:$0xff] 0
    %1274 = vst [vmem:[#allocation2 + $0x8e4] sm:$0xff] 0
    %1275 = vst [vmem:[#allocation2 + $0x8ec] sm:$0xff] 0
    %1276 = vst [vmem:[#allocation2 + $0x8f4] sm:$0xff] 0
    %1277 = vst [vmem:[#allocation2 + $0x8fc] sm:$0xf] 0
    %v1278 = vpack.c.bf16 %v895, %v894
    %v1279 = vpack.c.bf16 %v897, %v896
    %v1280 = vpack.c.bf16 %v899, %v898
    %v1281 = vpack.c.bf16 %v901, %v900
    %v1282 = vpack.c.bf16 %v903, %v902
    %v1283 = vpack.c.bf16 %v905, %v904
    %v1284 = vpack.c.bf16 %v907, %v906
    %v1285 = vpack.c.bf16 %v909, %v908
    %v1286 = vpack.c.bf16 %v911, %v910
    %v1287 = vpack.c.bf16 %v913, %v912
    %v1288 = vpack.c.bf16 %v915, %v914
    %v1289 = vpack.c.bf16 %v917, %v916
    %v1290 = vpack.c.bf16 %v919, %v918
    %v1291 = vpack.c.bf16 %v921, %v920
    %v1292 = vpack.c.bf16 %v923, %v922
    %v1293 = vpack.c.bf16 %v925, %v924
    %v1294 = vpack.c.bf16 %v927, %v926
    %v1295 = vpack.c.bf16 %v929, %v928
    %v1296 = vpack.c.bf16 %v931, %v930
    %v1297 = vpack.c.bf16 %v933, %v932
    %v1298 = vpack.c.bf16 %v935, %v934
    %v1299 = vpack.c.bf16 %v937, %v936
    %v1300 = vpack.c.bf16 %v939, %v938
    %v1301 = vpack.c.bf16 %v941, %v940
    %v1302 = vpack.c.bf16 %v943, %v942
    %v1303 = vpack.c.bf16 %v945, %v944
    %v1304 = vpack.c.bf16 %v947, %v946
    %v1305 = vpack.c.bf16 %v949, %v948
    %v1306 = vpack.c.bf16 %v951, %v950
    %v1307 = vpack.c.bf16 %v953, %v952
    %v1308 = vpack.c.bf16 %v955, %v954
    %v1309 = vpack.c.bf16 %v957, %v956
    %v1340 = vunpack.c.l.b16 %v1278
    %v1341 = vunpack.c.h.b16 %v1278
    %v1342 = vunpack.c.l.b16 %v1279
    %v1343 = vunpack.c.h.b16 %v1279
    %v1344 = vunpack.c.l.b16 %v1280
    %v1345 = vunpack.c.h.b16 %v1280
    %v1346 = vunpack.c.l.b16 %v1281
    %v1347 = vunpack.c.h.b16 %v1281
    %v1348 = vunpack.c.l.b16 %v1282
    %v1349 = vunpack.c.h.b16 %v1282
    %v1350 = vunpack.c.l.b16 %v1283
    %v1351 = vunpack.c.h.b16 %v1283
    %v1352 = vunpack.c.l.b16 %v1284
    %v1353 = vunpack.c.h.b16 %v1284
    %v1354 = vunpack.c.l.b16 %v1285
    %v1355 = vunpack.c.h.b16 %v1285
    %v1356 = vunpack.c.l.b16 %v1286
    %v1357 = vunpack.c.h.b16 %v1286
    %v1358 = vunpack.c.l.b16 %v1287
    %v1359 = vunpack.c.h.b16 %v1287
    %v1360 = vunpack.c.l.b16 %v1288
    %v1361 = vunpack.c.h.b16 %v1288
    %v1362 = vunpack.c.l.b16 %v1289
    %v1363 = vunpack.c.h.b16 %v1289
    %v1364 = vunpack.c.l.b16 %v1290
    %v1365 = vunpack.c.h.b16 %v1290
    %v1366 = vunpack.c.l.b16 %v1291
    %v1367 = vunpack.c.h.b16 %v1291
    %v1368 = vunpack.c.l.b16 %v1292
    %v1369 = vunpack.c.h.b16 %v1292
    %v1370 = vunpack.c.l.b16 %v1294
    %v1371 = vunpack.c.h.b16 %v1294
    %v1372 = vunpack.c.l.b16 %v1295
    %v1373 = vunpack.c.h.b16 %v1295
    %v1374 = vunpack.c.l.b16 %v1296
    %v1375 = vunpack.c.h.b16 %v1296
    %v1376 = vunpack.c.l.b16 %v1297
    %v1377 = vunpack.c.h.b16 %v1297
    %v1378 = vunpack.c.l.b16 %v1298
    %v1379 = vunpack.c.h.b16 %v1298
    %v1380 = vunpack.c.l.b16 %v1299
    %v1381 = vunpack.c.h.b16 %v1299
    %v1382 = vunpack.c.l.b16 %v1300
    %v1383 = vunpack.c.h.b16 %v1300
    %v1384 = vunpack.c.l.b16 %v1301
    %v1385 = vunpack.c.h.b16 %v1301
    %v1386 = vunpack.c.l.b16 %v1302
    %v1387 = vunpack.c.h.b16 %v1302
    %v1388 = vunpack.c.l.b16 %v1303
    %v1389 = vunpack.c.h.b16 %v1303
    %v1390 = vunpack.c.l.b16 %v1304
    %v1391 = vunpack.c.h.b16 %v1304
    %v1392 = vunpack.c.l.b16 %v1305
    %v1393 = vunpack.c.h.b16 %v1305
    %v1394 = vunpack.c.l.b16 %v1306
    %v1395 = vunpack.c.h.b16 %v1306
    %v1396 = vunpack.c.l.b16 %v1307
    %v1397 = vunpack.c.h.b16 %v1307
    %v1398 = vunpack.c.l.b16 %v1308
    %v1399 = vunpack.c.h.b16 %v1308
    %v1400 = vpack.c.b16 %v1340, %v1340
    %v1401 = vpack.c.b16 %v1341, %v1341
    %v1402 = vpack.c.b16 %v1342, %v1342
    %v1403 = vpack.c.b16 %v1343, %v1343
    %v1404 = vpack.c.b16 %v1344, %v1344
    %v1405 = vpack.c.b16 %v1345, %v1345
    %v1406 = vpack.c.b16 %v1346, %v1346
    %v1407 = vpack.c.b16 %v1347, %v1347
    %v1408 = vpack.c.b16 %v1348, %v1348
    %v1409 = vpack.c.b16 %v1349, %v1349
    %v1410 = vpack.c.b16 %v1350, %v1350
    %v1411 = vpack.c.b16 %v1351, %v1351
    %v1412 = vpack.c.b16 %v1352, %v1352
    %v1413 = vpack.c.b16 %v1353, %v1353
    %v1414 = vpack.c.b16 %v1354, %v1354
    %v1415 = vpack.c.b16 %v1355, %v1355
    %v1416 = vpack.c.b16 %v1356, %v1356
    %v1417 = vpack.c.b16 %v1357, %v1357
    %v1418 = vpack.c.b16 %v1358, %v1358
    %v1419 = vpack.c.b16 %v1359, %v1359
    %v1420 = vpack.c.b16 %v1360, %v1360
    %v1421 = vpack.c.b16 %v1361, %v1361
    %v1422 = vpack.c.b16 %v1362, %v1362
    %v1423 = vpack.c.b16 %v1363, %v1363
    %v1424 = vpack.c.b16 %v1364, %v1364
    %v1425 = vpack.c.b16 %v1365, %v1365
    %v1426 = vpack.c.b16 %v1366, %v1366
    %v1427 = vpack.c.b16 %v1367, %v1367
    %v1428 = vpack.c.b16 %v1368, %v1368
    %v1429 = vpack.c.b16 %v1369, %v1369
    %v1430 = vpack.c.b16 %v1370, %v1370
    %v1431 = vpack.c.b16 %v1371, %v1371
    %v1432 = vpack.c.b16 %v1372, %v1372
    %v1433 = vpack.c.b16 %v1373, %v1373
    %v1434 = vpack.c.b16 %v1374, %v1374
    %v1435 = vpack.c.b16 %v1375, %v1375
    %v1436 = vpack.c.b16 %v1376, %v1376
    %v1437 = vpack.c.b16 %v1377, %v1377
    %v1438 = vpack.c.b16 %v1378, %v1378
    %v1439 = vpack.c.b16 %v1379, %v1379
    %v1440 = vpack.c.b16 %v1380, %v1380
    %v1441 = vpack.c.b16 %v1381, %v1381
    %v1442 = vpack.c.b16 %v1382, %v1382
    %v1443 = vpack.c.b16 %v1383, %v1383
    %v1444 = vpack.c.b16 %v1384, %v1384
    %v1445 = vpack.c.b16 %v1385, %v1385
    %v1446 = vpack.c.b16 %v1386, %v1386
    %v1447 = vpack.c.b16 %v1387, %v1387
    %v1448 = vpack.c.b16 %v1388, %v1388
    %v1449 = vpack.c.b16 %v1389, %v1389
    %v1450 = vpack.c.b16 %v1390, %v1390
    %v1451 = vpack.c.b16 %v1391, %v1391
    %v1452 = vpack.c.b16 %v1392, %v1392
    %v1453 = vpack.c.b16 %v1393, %v1393
    %v1454 = vpack.c.b16 %v1394, %v1394
    %v1455 = vpack.c.b16 %v1395, %v1395
    %v1456 = vpack.c.b16 %v1396, %v1396
    %v1457 = vpack.c.b16 %v1397, %v1397
    %v1458 = vpack.c.b16 %v1398, %v1398
    %v1459 = vpack.c.b16 %v1399, %v1399
    %vm1460 = vsmask.f32 256
    %vm1461 = vsmask.f32 4368
    %vm1462 = vmor %vm1460, %vm1461
    %v1464 = vshrl.u32 %v1400, 16
    %v1466 = vrot.slane %v1464, 7
    %v1467 = vshll.u32 %v1400, 16
    %v1469 = vor.u32 %v1466, %v1467
    %v1470 = vrot.slane %v1466, 4
    %v1472 = vshrl.u32 %v1401, 16
    %v1474 = vrot.slane %v1472, 7
    %v1475 = vshll.u32 %v1401, 16
    %v1477 = vor.u32 %v1474, %v1475
    %v1478 = vsel %vm1462, %v1470, %v1477
    %v1480 = vshrl.u32 %v1402, 16
    %v1482 = vrot.slane %v1480, 7
    %v1483 = vshll.u32 %v1402, 16
    %v1485 = vor.u32 %v1482, %v1483
    %v1486 = vrot.slane %v1482, 4
    %v1488 = vshrl.u32 %v1403, 16
    %v1490 = vrot.slane %v1488, 7
    %v1491 = vshll.u32 %v1403, 16
    %v1493 = vor.u32 %v1490, %v1491
    %v1494 = vsel %vm1462, %v1486, %v1493
    %v1496 = vshrl.u32 %v1404, 16
    %v1498 = vrot.slane %v1496, 7
    %v1499 = vshll.u32 %v1404, 16
    %v1501 = vor.u32 %v1498, %v1499
    %v1502 = vrot.slane %v1498, 4
    %v1504 = vshrl.u32 %v1405, 16
    %v1506 = vrot.slane %v1504, 7
    %v1507 = vshll.u32 %v1405, 16
    %v1509 = vor.u32 %v1506, %v1507
    %v1510 = vsel %vm1462, %v1502, %v1509
    %v1512 = vshrl.u32 %v1406, 16
    %v1514 = vrot.slane %v1512, 7
    %v1515 = vshll.u32 %v1406, 16
    %v1517 = vor.u32 %v1514, %v1515
    %v1518 = vrot.slane %v1514, 4
    %v1520 = vshrl.u32 %v1407, 16
    %v1522 = vrot.slane %v1520, 7
    %v1523 = vshll.u32 %v1407, 16
    %v1525 = vor.u32 %v1522, %v1523
    %v1526 = vsel %vm1462, %v1518, %v1525
    %v1528 = vshrl.u32 %v1408, 16
    %v1530 = vrot.slane %v1528, 7
    %v1531 = vshll.u32 %v1408, 16
    %v1533 = vor.u32 %v1530, %v1531
    %v1534 = vrot.slane %v1530, 4
    %v1536 = vshrl.u32 %v1409, 16
    %v1538 = vrot.slane %v1536, 7
    %v1539 = vshll.u32 %v1409, 16
    %v1541 = vor.u32 %v1538, %v1539
    %v1542 = vsel %vm1462, %v1534, %v1541
    %v1544 = vshrl.u32 %v1410, 16
    %v1546 = vrot.slane %v1544, 7
    %v1547 = vshll.u32 %v1410, 16
    %v1549 = vor.u32 %v1546, %v1547
    %v1550 = vrot.slane %v1546, 4
    %v1552 = vshrl.u32 %v1411, 16
    %v1554 = vrot.slane %v1552, 7
    %v1555 = vshll.u32 %v1411, 16
    %v1557 = vor.u32 %v1554, %v1555
    %v1558 = vsel %vm1462, %v1550, %v1557
    %v1560 = vshrl.u32 %v1412, 16
    %v1562 = vrot.slane %v1560, 7
    %v1563 = vshll.u32 %v1412, 16
    %v1565 = vor.u32 %v1562, %v1563
    %v1566 = vrot.slane %v1562, 4
    %v1568 = vshrl.u32 %v1413, 16
    %v1570 = vrot.slane %v1568, 7
    %v1571 = vshll.u32 %v1413, 16
    %v1573 = vor.u32 %v1570, %v1571
    %v1574 = vsel %vm1462, %v1566, %v1573
    %v1576 = vshrl.u32 %v1414, 16
    %v1578 = vrot.slane %v1576, 7
    %v1579 = vshll.u32 %v1414, 16
    %v1581 = vor.u32 %v1578, %v1579
    %v1582 = vrot.slane %v1578, 4
    %v1584 = vshrl.u32 %v1415, 16
    %v1586 = vrot.slane %v1584, 7
    %v1587 = vshll.u32 %v1415, 16
    %v1589 = vor.u32 %v1586, %v1587
    %v1590 = vsel %vm1462, %v1582, %v1589
    %v1592 = vshrl.u32 %v1416, 16
    %v1594 = vrot.slane %v1592, 7
    %v1595 = vshll.u32 %v1416, 16
    %v1597 = vor.u32 %v1594, %v1595
    %v1598 = vrot.slane %v1594, 4
    %v1600 = vshrl.u32 %v1417, 16
    %v1602 = vrot.slane %v1600, 7
    %v1603 = vshll.u32 %v1417, 16
    %v1605 = vor.u32 %v1602, %v1603
    %v1606 = vsel %vm1462, %v1598, %v1605
    %v1608 = vshrl.u32 %v1418, 16
    %v1610 = vrot.slane %v1608, 7
    %v1611 = vshll.u32 %v1418, 16
    %v1613 = vor.u32 %v1610, %v1611
    %v1614 = vrot.slane %v1610, 4
    %v1616 = vshrl.u32 %v1419, 16
    %v1618 = vrot.slane %v1616, 7
    %v1619 = vshll.u32 %v1419, 16
    %v1621 = vor.u32 %v1618, %v1619
    %v1622 = vsel %vm1462, %v1614, %v1621
    %v1624 = vshrl.u32 %v1420, 16
    %v1626 = vrot.slane %v1624, 7
    %v1627 = vshll.u32 %v1420, 16
    %v1629 = vor.u32 %v1626, %v1627
    %v1630 = vrot.slane %v1626, 4
    %v1632 = vshrl.u32 %v1421, 16
    %v1634 = vrot.slane %v1632, 7
    %v1635 = vshll.u32 %v1421, 16
    %v1637 = vor.u32 %v1634, %v1635
    %v1638 = vsel %vm1462, %v1630, %v1637
    %v1640 = vshrl.u32 %v1422, 16
    %v1642 = vrot.slane %v1640, 7
    %v1643 = vshll.u32 %v1422, 16
    %v1645 = vor.u32 %v1642, %v1643
    %v1646 = vrot.slane %v1642, 4
    %v1648 = vshrl.u32 %v1423, 16
    %v1650 = vrot.slane %v1648, 7
    %v1651 = vshll.u32 %v1423, 16
    %v1653 = vor.u32 %v1650, %v1651
    %v1654 = vsel %vm1462, %v1646, %v1653
    %v1656 = vshrl.u32 %v1424, 16
    %v1658 = vrot.slane %v1656, 7
    %v1659 = vshll.u32 %v1424, 16
    %v1661 = vor.u32 %v1658, %v1659
    %v1662 = vrot.slane %v1658, 4
    %v1664 = vshrl.u32 %v1425, 16
    %v1666 = vrot.slane %v1664, 7
    %v1667 = vshll.u32 %v1425, 16
    %v1669 = vor.u32 %v1666, %v1667
    %v1670 = vsel %vm1462, %v1662, %v1669
    %v1672 = vshrl.u32 %v1426, 16
    %v1674 = vrot.slane %v1672, 7
    %v1675 = vshll.u32 %v1426, 16
    %v1677 = vor.u32 %v1674, %v1675
    %v1678 = vrot.slane %v1674, 4
    %v1680 = vshrl.u32 %v1427, 16
    %v1682 = vrot.slane %v1680, 7
    %v1683 = vshll.u32 %v1427, 16
    %v1685 = vor.u32 %v1682, %v1683
    %v1686 = vsel %vm1462, %v1678, %v1685
    %v1688 = vshrl.u32 %v1428, 16
    %v1690 = vrot.slane %v1688, 7
    %v1691 = vshll.u32 %v1428, 16
    %v1693 = vor.u32 %v1690, %v1691
    %v1694 = vrot.slane %v1690, 4
    %v1696 = vshrl.u32 %v1429, 16
    %v1698 = vrot.slane %v1696, 7
    %v1699 = vshll.u32 %v1429, 16
    %v1701 = vor.u32 %v1698, %v1699
    %v1702 = vsel %vm1462, %v1694, %v1701
    %v1704 = vshrl.u32 %v1430, 16
    %v1706 = vrot.slane %v1704, 7
    %v1707 = vshll.u32 %v1430, 16
    %v1709 = vor.u32 %v1706, %v1707
    %v1710 = vrot.slane %v1706, 4
    %v1712 = vshrl.u32 %v1431, 16
    %v1714 = vrot.slane %v1712, 7
    %v1715 = vshll.u32 %v1431, 16
    %v1717 = vor.u32 %v1714, %v1715
    %v1718 = vsel %vm1462, %v1710, %v1717
    %v1720 = vshrl.u32 %v1432, 16
    %v1722 = vrot.slane %v1720, 7
    %v1723 = vshll.u32 %v1432, 16
    %v1725 = vor.u32 %v1722, %v1723
    %v1726 = vrot.slane %v1722, 4
    %v1728 = vshrl.u32 %v1433, 16
    %v1730 = vrot.slane %v1728, 7
    %v1731 = vshll.u32 %v1433, 16
    %v1733 = vor.u32 %v1730, %v1731
    %v1734 = vsel %vm1462, %v1726, %v1733
    %v1736 = vshrl.u32 %v1434, 16
    %v1738 = vrot.slane %v1736, 7
    %v1739 = vshll.u32 %v1434, 16
    %v1741 = vor.u32 %v1738, %v1739
    %v1742 = vrot.slane %v1738, 4
    %v1744 = vshrl.u32 %v1435, 16
    %v1746 = vrot.slane %v1744, 7
    %v1747 = vshll.u32 %v1435, 16
    %v1749 = vor.u32 %v1746, %v1747
    %v1750 = vsel %vm1462, %v1742, %v1749
    %v1752 = vshrl.u32 %v1436, 16
    %v1754 = vrot.slane %v1752, 7
    %v1755 = vshll.u32 %v1436, 16
    %v1757 = vor.u32 %v1754, %v1755
    %v1758 = vrot.slane %v1754, 4
    %v1760 = vshrl.u32 %v1437, 16
    %v1762 = vrot.slane %v1760, 7
    %v1763 = vshll.u32 %v1437, 16
    %v1765 = vor.u32 %v1762, %v1763
    %v1766 = vsel %vm1462, %v1758, %v1765
    %v1768 = vshrl.u32 %v1438, 16
    %v1770 = vrot.slane %v1768, 7
    %v1771 = vshll.u32 %v1438, 16
    %v1773 = vor.u32 %v1770, %v1771
    %v1774 = vrot.slane %v1770, 4
    %v1776 = vshrl.u32 %v1439, 16
    %v1778 = vrot.slane %v1776, 7
    %v1779 = vshll.u32 %v1439, 16
    %v1781 = vor.u32 %v1778, %v1779
    %v1782 = vsel %vm1462, %v1774, %v1781
    %v1784 = vshrl.u32 %v1440, 16
    %v1786 = vrot.slane %v1784, 7
    %v1787 = vshll.u32 %v1440, 16
    %v1789 = vor.u32 %v1786, %v1787
    %v1790 = vrot.slane %v1786, 4
    %v1792 = vshrl.u32 %v1441, 16
    %v1794 = vrot.slane %v1792, 7
    %v1795 = vshll.u32 %v1441, 16
    %v1797 = vor.u32 %v1794, %v1795
    %v1798 = vsel %vm1462, %v1790, %v1797
    %v1800 = vshrl.u32 %v1442, 16
    %v1802 = vrot.slane %v1800, 7
    %v1803 = vshll.u32 %v1442, 16
    %v1805 = vor.u32 %v1802, %v1803
    %v1806 = vrot.slane %v1802, 4
    %v1808 = vshrl.u32 %v1443, 16
    %v1810 = vrot.slane %v1808, 7
    %v1811 = vshll.u32 %v1443, 16
    %v1813 = vor.u32 %v1810, %v1811
    %v1814 = vsel %vm1462, %v1806, %v1813
    %v1816 = vshrl.u32 %v1444, 16
    %v1818 = vrot.slane %v1816, 7
    %v1819 = vshll.u32 %v1444, 16
    %v1821 = vor.u32 %v1818, %v1819
    %v1822 = vrot.slane %v1818, 4
    %v1824 = vshrl.u32 %v1445, 16
    %v1826 = vrot.slane %v1824, 7
    %v1827 = vshll.u32 %v1445, 16
    %v1829 = vor.u32 %v1826, %v1827
    %v1830 = vsel %vm1462, %v1822, %v1829
    %v1832 = vshrl.u32 %v1446, 16
    %v1834 = vrot.slane %v1832, 7
    %v1835 = vshll.u32 %v1446, 16
    %v1837 = vor.u32 %v1834, %v1835
    %v1838 = vrot.slane %v1834, 4
    %v1840 = vshrl.u32 %v1447, 16
    %v1842 = vrot.slane %v1840, 7
    %v1843 = vshll.u32 %v1447, 16
    %v1845 = vor.u32 %v1842, %v1843
    %v1846 = vsel %vm1462, %v1838, %v1845
    %v1848 = vshrl.u32 %v1448, 16
    %v1850 = vrot.slane %v1848, 7
    %v1851 = vshll.u32 %v1448, 16
    %v1853 = vor.u32 %v1850, %v1851
    %v1854 = vrot.slane %v1850, 4
    %v1856 = vshrl.u32 %v1449, 16
    %v1858 = vrot.slane %v1856, 7
    %v1859 = vshll.u32 %v1449, 16
    %v1861 = vor.u32 %v1858, %v1859
    %v1862 = vsel %vm1462, %v1854, %v1861
    %v1864 = vshrl.u32 %v1450, 16
    %v1866 = vrot.slane %v1864, 7
    %v1867 = vshll.u32 %v1450, 16
    %v1869 = vor.u32 %v1866, %v1867
    %v1870 = vrot.slane %v1866, 4
    %v1872 = vshrl.u32 %v1451, 16
    %v1874 = vrot.slane %v1872, 7
    %v1875 = vshll.u32 %v1451, 16
    %v1877 = vor.u32 %v1874, %v1875
    %v1878 = vsel %vm1462, %v1870, %v1877
    %v1880 = vshrl.u32 %v1452, 16
    %v1882 = vrot.slane %v1880, 7
    %v1883 = vshll.u32 %v1452, 16
    %v1885 = vor.u32 %v1882, %v1883
    %v1886 = vrot.slane %v1882, 4
    %v1888 = vshrl.u32 %v1453, 16
    %v1890 = vrot.slane %v1888, 7
    %v1891 = vshll.u32 %v1453, 16
    %v1893 = vor.u32 %v1890, %v1891
    %v1894 = vsel %vm1462, %v1886, %v1893
    %v1896 = vshrl.u32 %v1454, 16
    %v1898 = vrot.slane %v1896, 7
    %v1899 = vshll.u32 %v1454, 16
    %v1901 = vor.u32 %v1898, %v1899
    %v1902 = vrot.slane %v1898, 4
    %v1904 = vshrl.u32 %v1455, 16
    %v1906 = vrot.slane %v1904, 7
    %v1907 = vshll.u32 %v1455, 16
    %v1909 = vor.u32 %v1906, %v1907
    %v1910 = vsel %vm1462, %v1902, %v1909
    %v1912 = vshrl.u32 %v1456, 16
    %v1914 = vrot.slane %v1912, 7
    %v1915 = vshll.u32 %v1456, 16
    %v1917 = vor.u32 %v1914, %v1915
    %v1918 = vrot.slane %v1914, 4
    %v1920 = vshrl.u32 %v1457, 16
    %v1922 = vrot.slane %v1920, 7
    %v1923 = vshll.u32 %v1457, 16
    %v1925 = vor.u32 %v1922, %v1923
    %v1926 = vsel %vm1462, %v1918, %v1925
    %v1928 = vshrl.u32 %v1458, 16
    %v1930 = vrot.slane %v1928, 7
    %v1931 = vshll.u32 %v1458, 16
    %v1933 = vor.u32 %v1930, %v1931
    %v1934 = vrot.slane %v1930, 4
    %v1936 = vshrl.u32 %v1459, 16
    %v1938 = vrot.slane %v1936, 7
    %v1939 = vshll.u32 %v1459, 16
    %v1941 = vor.u32 %v1938, %v1939
    %v1942 = vsel %vm1462, %v1934, %v1941
    %s2003 = scalar_lea.vmem [#allocation2], 72
    %vm2004 = vcmask 1043456
    %vm2005 = vsmask.f32 7938
    %vm2006 = vmand %vm2004, %vm2005
    %v2007 = vld [vmem:[%s2003] sm:$0xf]
    %v2008 = vsel %vm2006, %v1469, %v2007
    %2009 = vst [vmem:[%s2003] sm:$0xf] %v2008
    %2010 = vst [vmem:[%s2003 + $0x24] sm:$0xf] %v1478
    %v2011 = vld [vmem:[%s2003 + $0x48] sm:$0xf]
    %v2012 = vsel %vm2006, %v1485, %v2011
    %2013 = vst [vmem:[%s2003 + $0x48] sm:$0xf] %v2012
    %2014 = vst [vmem:[%s2003 + $0x6c] sm:$0xf] %v1494
    %v2015 = vld [vmem:[%s2003 + $0x90] sm:$0xf]
    %v2016 = vsel %vm2006, %v1501, %v2015
    %2017 = vst [vmem:[%s2003 + $0x90] sm:$0xf] %v2016
    %2018 = vst [vmem:[%s2003 + $0xb4] sm:$0xf] %v1510
    %v2019 = vld [vmem:[%s2003 + $0xd8] sm:$0xf]
    %v2020 = vsel %vm2006, %v1517, %v2019
    %2021 = vst [vmem:[%s2003 + $0xd8] sm:$0xf] %v2020
    %2022 = vst [vmem:[%s2003 + $0xfc] sm:$0xf] %v1526
    %v2023 = vld [vmem:[%s2003 + $0x120] sm:$0xf]
    %v2024 = vsel %vm2006, %v1533, %v2023
    %2025 = vst [vmem:[%s2003 + $0x120] sm:$0xf] %v2024
    %2026 = vst [vmem:[%s2003 + $0x144] sm:$0xf] %v1542
    %v2027 = vld [vmem:[%s2003 + $0x168] sm:$0xf]
    %v2028 = vsel %vm2006, %v1549, %v2027
    %2029 = vst [vmem:[%s2003 + $0x168] sm:$0xf] %v2028
    %2030 = vst [vmem:[%s2003 + $0x18c] sm:$0xf] %v1558
    %v2031 = vld [vmem:[%s2003 + $0x1b0] sm:$0xf]
    %v2032 = vsel %vm2006, %v1565, %v2031
    %2033 = vst [vmem:[%s2003 + $0x1b0] sm:$0xf] %v2032
    %2034 = vst [vmem:[%s2003 + $0x1d4] sm:$0xf] %v1574
    %v2035 = vld [vmem:[%s2003 + $0x1f8] sm:$0xf]
    %v2036 = vsel %vm2006, %v1581, %v2035
    %2037 = vst [vmem:[%s2003 + $0x1f8] sm:$0xf] %v2036
    %2038 = vst [vmem:[%s2003 + $0x21c] sm:$0xf] %v1590
    %v2039 = vld [vmem:[%s2003 + $0x240] sm:$0xf]
    %v2040 = vsel %vm2006, %v1597, %v2039
    %2041 = vst [vmem:[%s2003 + $0x240] sm:$0xf] %v2040
    %2042 = vst [vmem:[%s2003 + $0x264] sm:$0xf] %v1606
    %v2043 = vld [vmem:[%s2003 + $0x288] sm:$0xf]
    %v2044 = vsel %vm2006, %v1613, %v2043
    %2045 = vst [vmem:[%s2003 + $0x288] sm:$0xf] %v2044
    %2046 = vst [vmem:[%s2003 + $0x2ac] sm:$0xf] %v1622
    %v2047 = vld [vmem:[%s2003 + $0x2d0] sm:$0xf]
    %v2048 = vsel %vm2006, %v1629, %v2047
    %2049 = vst [vmem:[%s2003 + $0x2d0] sm:$0xf] %v2048
    %2050 = vst [vmem:[%s2003 + $0x2f4] sm:$0xf] %v1638
    %v2051 = vld [vmem:[%s2003 + $0x318] sm:$0xf]
    %v2052 = vsel %vm2006, %v1645, %v2051
    %2053 = vst [vmem:[%s2003 + $0x318] sm:$0xf] %v2052
    %2054 = vst [vmem:[%s2003 + $0x33c] sm:$0xf] %v1654
    %v2055 = vld [vmem:[%s2003 + $0x360] sm:$0xf]
    %v2056 = vsel %vm2006, %v1661, %v2055
    %2057 = vst [vmem:[%s2003 + $0x360] sm:$0xf] %v2056
    %2058 = vst [vmem:[%s2003 + $0x384] sm:$0xf] %v1670
    %v2059 = vld [vmem:[%s2003 + $0x3a8] sm:$0xf]
    %v2060 = vsel %vm2006, %v1677, %v2059
    %2061 = vst [vmem:[%s2003 + $0x3a8] sm:$0xf] %v2060
    %2062 = vst [vmem:[%s2003 + $0x3cc] sm:$0xf] %v1686
    %v2063 = vld [vmem:[%s2003 + $0x3f0] sm:$0xf]
    %v2064 = vsel %vm2006, %v1693, %v2063
    %2065 = vst [vmem:[%s2003 + $0x3f0] sm:$0xf] %v2064
    %2066 = vst [vmem:[%s2003 + $0x414] sm:$0xf] %v1702
    %v2067 = vld [vmem:[%s2003 + $0x480] sm:$0xf]
    %v2068 = vsel %vm2006, %v1709, %v2067
    %2069 = vst [vmem:[%s2003 + $0x480] sm:$0xf] %v2068
    %2070 = vst [vmem:[%s2003 + $0x4a4] sm:$0xf] %v1718
    %v2071 = vld [vmem:[%s2003 + $0x4c8] sm:$0xf]
    %v2072 = vsel %vm2006, %v1725, %v2071
    %2073 = vst [vmem:[%s2003 + $0x4c8] sm:$0xf] %v2072
    %2074 = vst [vmem:[%s2003 + $0x4ec] sm:$0xf] %v1734
    %v2075 = vld [vmem:[%s2003 + $0x510] sm:$0xf]
    %v2076 = vsel %vm2006, %v1741, %v2075
    %2077 = vst [vmem:[%s2003 + $0x510] sm:$0xf] %v2076
    %2078 = vst [vmem:[%s2003 + $0x534] sm:$0xf] %v1750
    %v2079 = vld [vmem:[%s2003 + $0x558] sm:$0xf]
    %v2080 = vsel %vm2006, %v1757, %v2079
    %2081 = vst [vmem:[%s2003 + $0x558] sm:$0xf] %v2080
    %2082 = vst [vmem:[%s2003 + $0x57c] sm:$0xf] %v1766
    %v2083 = vld [vmem:[%s2003 + $0x5a0] sm:$0xf]
    %v2084 = vsel %vm2006, %v1773, %v2083
    %2085 = vst [vmem:[%s2003 + $0x5a0] sm:$0xf] %v2084
    %2086 = vst [vmem:[%s2003 + $0x5c4] sm:$0xf] %v1782
    %v2087 = vld [vmem:[%s2003 + $0x5e8] sm:$0xf]
    %v2088 = vsel %vm2006, %v1789, %v2087
    %2089 = vst [vmem:[%s2003 + $0x5e8] sm:$0xf] %v2088
    %2090 = vst [vmem:[%s2003 + $0x60c] sm:$0xf] %v1798
    %v2091 = vld [vmem:[%s2003 + $0x630] sm:$0xf]
    %v2092 = vsel %vm2006, %v1805, %v2091
    %2093 = vst [vmem:[%s2003 + $0x630] sm:$0xf] %v2092
    %2094 = vst [vmem:[%s2003 + $0x654] sm:$0xf] %v1814
    %v2095 = vld [vmem:[%s2003 + $0x678] sm:$0xf]
    %v2096 = vsel %vm2006, %v1821, %v2095
    %2097 = vst [vmem:[%s2003 + $0x678] sm:$0xf] %v2096
    %2098 = vst [vmem:[%s2003 + $0x69c] sm:$0xf] %v1830
    %v2099 = vld [vmem:[%s2003 + $0x6c0] sm:$0xf]
    %v2100 = vsel %vm2006, %v1837, %v2099
    %2101 = vst [vmem:[%s2003 + $0x6c0] sm:$0xf] %v2100
    %2102 = vst [vmem:[%s2003 + $0x6e4] sm:$0xf] %v1846
    %v2103 = vld [vmem:[%s2003 + $0x708] sm:$0xf]
    %v2104 = vsel %vm2006, %v1853, %v2103
    %2105 = vst [vmem:[%s2003 + $0x708] sm:$0xf] %v2104
    %2106 = vst [vmem:[%s2003 + $0x72c] sm:$0xf] %v1862
    %v2107 = vld [vmem:[%s2003 + $0x750] sm:$0xf]
    %v2108 = vsel %vm2006, %v1869, %v2107
    %2109 = vst [vmem:[%s2003 + $0x750] sm:$0xf] %v2108
    %2110 = vst [vmem:[%s2003 + $0x774] sm:$0xf] %v1878
    %v2111 = vld [vmem:[%s2003 + $0x798] sm:$0xf]
    %v2112 = vsel %vm2006, %v1885, %v2111
    %2113 = vst [vmem:[%s2003 + $0x798] sm:$0xf] %v2112
    %2114 = vst [vmem:[%s2003 + $0x7bc] sm:$0xf] %v1894
    %v2115 = vld [vmem:[%s2003 + $0x7e0] sm:$0xf]
    %v2116 = vsel %vm2006, %v1901, %v2115
    %2117 = vst [vmem:[%s2003 + $0x7e0] sm:$0xf] %v2116
    %2118 = vst [vmem:[%s2003 + $0x804] sm:$0xf] %v1910
    %v2119 = vld [vmem:[%s2003 + $0x828] sm:$0xf]
    %v2120 = vsel %vm2006, %v1917, %v2119
    %2121 = vst [vmem:[%s2003 + $0x828] sm:$0xf] %v2120
    %2122 = vst [vmem:[%s2003 + $0x84c] sm:$0xf] %v1926
    %v2123 = vld [vmem:[%s2003 + $0x870] sm:$0xf]
    %v2124 = vsel %vm2006, %v1933, %v2123
    %2125 = vst [vmem:[%s2003 + $0x870] sm:$0xf] %v2124
    %2126 = vst [vmem:[%s2003 + $0x894] sm:$0xf] %v1942
    %2187 = vst [vmem:[%s2003 + $0x4] sm:$0xf] %v1400
    %2188 = vst [vmem:[%s2003 + $0x28] sm:$0xf] %v1401
    %2189 = vst [vmem:[%s2003 + $0x4c] sm:$0xf] %v1402
    %2190 = vst [vmem:[%s2003 + $0x70] sm:$0xf] %v1403
    %2191 = vst [vmem:[%s2003 + $0x94] sm:$0xf] %v1404
    %2192 = vst [vmem:[%s2003 + $0xb8] sm:$0xf] %v1405
    %2193 = vst [vmem:[%s2003 + $0xdc] sm:$0xf] %v1406
    %2194 = vst [vmem:[%s2003 + $0x100] sm:$0xf] %v1407
    %2195 = vst [vmem:[%s2003 + $0x124] sm:$0xf] %v1408
    %2196 = vst [vmem:[%s2003 + $0x148] sm:$0xf] %v1409
    %2197 = vst [vmem:[%s2003 + $0x16c] sm:$0xf] %v1410
    %2198 = vst [vmem:[%s2003 + $0x190] sm:$0xf] %v1411
    %2199 = vst [vmem:[%s2003 + $0x1b4] sm:$0xf] %v1412
    %2200 = vst [vmem:[%s2003 + $0x1d8] sm:$0xf] %v1413
    %2201 = vst [vmem:[%s2003 + $0x1fc] sm:$0xf] %v1414
    %2202 = vst [vmem:[%s2003 + $0x220] sm:$0xf] %v1415
    %2203 = vst [vmem:[%s2003 + $0x244] sm:$0xf] %v1416
    %2204 = vst [vmem:[%s2003 + $0x268] sm:$0xf] %v1417
    %2205 = vst [vmem:[%s2003 + $0x28c] sm:$0xf] %v1418
    %2206 = vst [vmem:[%s2003 + $0x2b0] sm:$0xf] %v1419
    %2207 = vst [vmem:[%s2003 + $0x2d4] sm:$0xf] %v1420
    %2208 = vst [vmem:[%s2003 + $0x2f8] sm:$0xf] %v1421
    %2209 = vst [vmem:[%s2003 + $0x31c] sm:$0xf] %v1422
    %2210 = vst [vmem:[%s2003 + $0x340] sm:$0xf] %v1423
    %2211 = vst [vmem:[%s2003 + $0x364] sm:$0xf] %v1424
    %2212 = vst [vmem:[%s2003 + $0x388] sm:$0xf] %v1425
    %2213 = vst [vmem:[%s2003 + $0x3ac] sm:$0xf] %v1426
    %2214 = vst [vmem:[%s2003 + $0x3d0] sm:$0xf] %v1427
    %2215 = vst [vmem:[%s2003 + $0x3f4] sm:$0xf] %v1428
    %2216 = vst [vmem:[%s2003 + $0x418] sm:$0xf] %v1429
    %2217 = vst [vmem:[%s2003 + $0x484] sm:$0xf] %v1430
    %2218 = vst [vmem:[%s2003 + $0x4a8] sm:$0xf] %v1431
    %2219 = vst [vmem:[%s2003 + $0x4cc] sm:$0xf] %v1432
    %2220 = vst [vmem:[%s2003 + $0x4f0] sm:$0xf] %v1433
    %2221 = vst [vmem:[%s2003 + $0x514] sm:$0xf] %v1434
    %2222 = vst [vmem:[%s2003 + $0x538] sm:$0xf] %v1435
    %2223 = vst [vmem:[%s2003 + $0x55c] sm:$0xf] %v1436
    %2224 = vst [vmem:[%s2003 + $0x580] sm:$0xf] %v1437
    %2225 = vst [vmem:[%s2003 + $0x5a4] sm:$0xf] %v1438
    %2226 = vst [vmem:[%s2003 + $0x5c8] sm:$0xf] %v1439
    %2227 = vst [vmem:[%s2003 + $0x5ec] sm:$0xf] %v1440
    %2228 = vst [vmem:[%s2003 + $0x610] sm:$0xf] %v1441
    %2229 = vst [vmem:[%s2003 + $0x634] sm:$0xf] %v1442
    %2230 = vst [vmem:[%s2003 + $0x658] sm:$0xf] %v1443
    %2231 = vst [vmem:[%s2003 + $0x67c] sm:$0xf] %v1444
    %2232 = vst [vmem:[%s2003 + $0x6a0] sm:$0xf] %v1445
    %2233 = vst [vmem:[%s2003 + $0x6c4] sm:$0xf] %v1446
    %2234 = vst [vmem:[%s2003 + $0x6e8] sm:$0xf] %v1447
    %2235 = vst [vmem:[%s2003 + $0x70c] sm:$0xf] %v1448
    %2236 = vst [vmem:[%s2003 + $0x730] sm:$0xf] %v1449
    %2237 = vst [vmem:[%s2003 + $0x754] sm:$0xf] %v1450
    %2238 = vst [vmem:[%s2003 + $0x778] sm:$0xf] %v1451
    %2239 = vst [vmem:[%s2003 + $0x79c] sm:$0xf] %v1452
    %2240 = vst [vmem:[%s2003 + $0x7c0] sm:$0xf] %v1453
    %2241 = vst [vmem:[%s2003 + $0x7e4] sm:$0xf] %v1454
    %2242 = vst [vmem:[%s2003 + $0x808] sm:$0xf] %v1455
    %2243 = vst [vmem:[%s2003 + $0x82c] sm:$0xf] %v1456
    %2244 = vst [vmem:[%s2003 + $0x850] sm:$0xf] %v1457
    %2245 = vst [vmem:[%s2003 + $0x874] sm:$0xf] %v1458
    %2246 = vst [vmem:[%s2003 + $0x898] sm:$0xf] %v1459
    %vm2247 = vsmask.f32 3328
    %vm2248 = vsmask.f32 7440
    %vm2249 = vmor %vm2247, %vm2248
    %v2250 = vrot.slane %v1464, 4
    %v2251 = vrot.slane %v1467, 5
    %v2252 = vor.u32 %v2250, %v2251
    %v2253 = vrot.slane %v2252, 4
    %v2254 = vrot.slane %v1475, 5
    %v2255 = vsel %vm2249, %v2253, %v2254
    %v2256 = vrot.slane %v1472, 4
    %v2257 = vor.u32 %v2256, %v2254
    %v2258 = vrot.slane %v2257, 4
    %v2259 = vrot.slane %v1480, 4
    %v2260 = vrot.slane %v1483, 5
    %v2261 = vor.u32 %v2259, %v2260
    %v2262 = vrot.slane %v2261, 4
    %v2263 = vrot.slane %v1491, 5
    %v2264 = vsel %vm2249, %v2262, %v2263
    %v2265 = vrot.slane %v1488, 4
    %v2266 = vor.u32 %v2265, %v2263
    %v2267 = vrot.slane %v2266, 4
    %v2268 = vrot.slane %v1496, 4
    %v2269 = vrot.slane %v1499, 5
    %v2270 = vor.u32 %v2268, %v2269
    %v2271 = vrot.slane %v2270, 4
    %v2272 = vrot.slane %v1507, 5
    %v2273 = vsel %vm2249, %v2271, %v2272
    %v2274 = vrot.slane %v1504, 4
    %v2275 = vor.u32 %v2274, %v2272
    %v2276 = vrot.slane %v2275, 4
    %v2277 = vrot.slane %v1512, 4
    %v2278 = vrot.slane %v1515, 5
    %v2279 = vor.u32 %v2277, %v2278
    %v2280 = vrot.slane %v2279, 4
    %v2281 = vrot.slane %v1523, 5
    %v2282 = vsel %vm2249, %v2280, %v2281
    %v2283 = vrot.slane %v1520, 4
    %v2284 = vor.u32 %v2283, %v2281
    %v2285 = vrot.slane %v2284, 4
    %v2286 = vrot.slane %v1528, 4
    %v2287 = vrot.slane %v1531, 5
    %v2288 = vor.u32 %v2286, %v2287
    %v2289 = vrot.slane %v2288, 4
    %v2290 = vrot.slane %v1539, 5
    %v2291 = vsel %vm2249, %v2289, %v2290
    %v2292 = vrot.slane %v1536, 4
    %v2293 = vor.u32 %v2292, %v2290
    %v2294 = vrot.slane %v2293, 4
    %v2295 = vrot.slane %v1544, 4
    %v2296 = vrot.slane %v1547, 5
    %v2297 = vor.u32 %v2295, %v2296
    %v2298 = vrot.slane %v2297, 4
    %v2299 = vrot.slane %v1555, 5
    %v2300 = vsel %vm2249, %v2298, %v2299
    %v2301 = vrot.slane %v1552, 4
    %v2302 = vor.u32 %v2301, %v2299
    %v2303 = vrot.slane %v2302, 4
    %v2304 = vrot.slane %v1560, 4
    %v2305 = vrot.slane %v1563, 5
    %v2306 = vor.u32 %v2304, %v2305
    %v2307 = vrot.slane %v2306, 4
    %v2308 = vrot.slane %v1571, 5
    %v2309 = vsel %vm2249, %v2307, %v2308
    %v2310 = vrot.slane %v1568, 4
    %v2311 = vor.u32 %v2310, %v2308
    %v2312 = vrot.slane %v2311, 4
    %v2313 = vrot.slane %v1576, 4
    %v2314 = vrot.slane %v1579, 5
    %v2315 = vor.u32 %v2313, %v2314
    %v2316 = vrot.slane %v2315, 4
    %v2317 = vrot.slane %v1587, 5
    %v2318 = vsel %vm2249, %v2316, %v2317
    %v2319 = vrot.slane %v1584, 4
    %v2320 = vor.u32 %v2319, %v2317
    %v2321 = vrot.slane %v2320, 4
    %v2322 = vrot.slane %v1592, 4
    %v2323 = vrot.slane %v1595, 5
    %v2324 = vor.u32 %v2322, %v2323
    %v2325 = vrot.slane %v2324, 4
    %v2326 = vrot.slane %v1603, 5
    %v2327 = vsel %vm2249, %v2325, %v2326
    %v2328 = vrot.slane %v1600, 4
    %v2329 = vor.u32 %v2328, %v2326
    %v2330 = vrot.slane %v2329, 4
    %v2331 = vrot.slane %v1608, 4
    %v2332 = vrot.slane %v1611, 5
    %v2333 = vor.u32 %v2331, %v2332
    %v2334 = vrot.slane %v2333, 4
    %v2335 = vrot.slane %v1619, 5
    %v2336 = vsel %vm2249, %v2334, %v2335
    %v2337 = vrot.slane %v1616, 4
    %v2338 = vor.u32 %v2337, %v2335
    %v2339 = vrot.slane %v2338, 4
    %v2340 = vrot.slane %v1624, 4
    %v2341 = vrot.slane %v1627, 5
    %v2342 = vor.u32 %v2340, %v2341
    %v2343 = vrot.slane %v2342, 4
    %v2344 = vrot.slane %v1635, 5
    %v2345 = vsel %vm2249, %v2343, %v2344
    %v2346 = vrot.slane %v1632, 4
    %v2347 = vor.u32 %v2346, %v2344
    %v2348 = vrot.slane %v2347, 4
    %v2349 = vrot.slane %v1640, 4
    %v2350 = vrot.slane %v1643, 5
    %v2351 = vor.u32 %v2349, %v2350
    %v2352 = vrot.slane %v2351, 4
    %v2353 = vrot.slane %v1651, 5
    %v2354 = vsel %vm2249, %v2352, %v2353
    %v2355 = vrot.slane %v1648, 4
    %v2356 = vor.u32 %v2355, %v2353
    %v2357 = vrot.slane %v2356, 4
    %v2358 = vrot.slane %v1656, 4
    %v2359 = vrot.slane %v1659, 5
    %v2360 = vor.u32 %v2358, %v2359
    %v2361 = vrot.slane %v2360, 4
    %v2362 = vrot.slane %v1667, 5
    %v2363 = vsel %vm2249, %v2361, %v2362
    %v2364 = vrot.slane %v1664, 4
    %v2365 = vor.u32 %v2364, %v2362
    %v2366 = vrot.slane %v2365, 4
    %v2367 = vrot.slane %v1672, 4
    %v2368 = vrot.slane %v1675, 5
    %v2369 = vor.u32 %v2367, %v2368
    %v2370 = vrot.slane %v2369, 4
    %v2371 = vrot.slane %v1683, 5
    %v2372 = vsel %vm2249, %v2370, %v2371
    %v2373 = vrot.slane %v1680, 4
    %v2374 = vor.u32 %v2373, %v2371
    %v2375 = vrot.slane %v2374, 4
    %v2376 = vrot.slane %v1688, 4
    %v2377 = vrot.slane %v1691, 5
    %v2378 = vor.u32 %v2376, %v2377
    %v2379 = vrot.slane %v2378, 4
    %v2380 = vrot.slane %v1699, 5
    %v2381 = vsel %vm2249, %v2379, %v2380
    %v2382 = vrot.slane %v1696, 4
    %v2383 = vor.u32 %v2382, %v2380
    %v2384 = vrot.slane %v2383, 4
    %v2385 = vrot.slane %v1704, 4
    %v2386 = vrot.slane %v1707, 5
    %v2387 = vor.u32 %v2385, %v2386
    %v2388 = vrot.slane %v2387, 4
    %v2389 = vrot.slane %v1715, 5
    %v2390 = vsel %vm2249, %v2388, %v2389
    %v2391 = vrot.slane %v1712, 4
    %v2392 = vor.u32 %v2391, %v2389
    %v2393 = vrot.slane %v2392, 4
    %v2394 = vrot.slane %v1720, 4
    %v2395 = vrot.slane %v1723, 5
    %v2396 = vor.u32 %v2394, %v2395
    %v2397 = vrot.slane %v2396, 4
    %v2398 = vrot.slane %v1731, 5
    %v2399 = vsel %vm2249, %v2397, %v2398
    %v2400 = vrot.slane %v1728, 4
    %v2401 = vor.u32 %v2400, %v2398
    %v2402 = vrot.slane %v2401, 4
    %v2403 = vrot.slane %v1736, 4
    %v2404 = vrot.slane %v1739, 5
    %v2405 = vor.u32 %v2403, %v2404
    %v2406 = vrot.slane %v2405, 4
    %v2407 = vrot.slane %v1747, 5
    %v2408 = vsel %vm2249, %v2406, %v2407
    %v2409 = vrot.slane %v1744, 4
    %v2410 = vor.u32 %v2409, %v2407
    %v2411 = vrot.slane %v2410, 4
    %v2412 = vrot.slane %v1752, 4
    %v2413 = vrot.slane %v1755, 5
    %v2414 = vor.u32 %v2412, %v2413
    %v2415 = vrot.slane %v2414, 4
    %v2416 = vrot.slane %v1763, 5
    %v2417 = vsel %vm2249, %v2415, %v2416
    %v2418 = vrot.slane %v1760, 4
    %v2419 = vor.u32 %v2418, %v2416
    %v2420 = vrot.slane %v2419, 4
    %v2421 = vrot.slane %v1768, 4
    %v2422 = vrot.slane %v1771, 5
    %v2423 = vor.u32 %v2421, %v2422
    %v2424 = vrot.slane %v2423, 4
    %v2425 = vrot.slane %v1779, 5
    %v2426 = vsel %vm2249, %v2424, %v2425
    %v2427 = vrot.slane %v1776, 4
    %v2428 = vor.u32 %v2427, %v2425
    %v2429 = vrot.slane %v2428, 4
    %v2430 = vrot.slane %v1784, 4
    %v2431 = vrot.slane %v1787, 5
    %v2432 = vor.u32 %v2430, %v2431
    %v2433 = vrot.slane %v2432, 4
    %v2434 = vrot.slane %v1795, 5
    %v2435 = vsel %vm2249, %v2433, %v2434
    %v2436 = vrot.slane %v1792, 4
    %v2437 = vor.u32 %v2436, %v2434
    %v2438 = vrot.slane %v2437, 4
    %v2439 = vrot.slane %v1800, 4
    %v2440 = vrot.slane %v1803, 5
    %v2441 = vor.u32 %v2439, %v2440
    %v2442 = vrot.slane %v2441, 4
    %v2443 = vrot.slane %v1811, 5
    %v2444 = vsel %vm2249, %v2442, %v2443
    %v2445 = vrot.slane %v1808, 4
    %v2446 = vor.u32 %v2445, %v2443
    %v2447 = vrot.slane %v2446, 4
    %v2448 = vrot.slane %v1816, 4
    %v2449 = vrot.slane %v1819, 5
    %v2450 = vor.u32 %v2448, %v2449
    %v2451 = vrot.slane %v2450, 4
    %v2452 = vrot.slane %v1827, 5
    %v2453 = vsel %vm2249, %v2451, %v2452
    %v2454 = vrot.slane %v1824, 4
    %v2455 = vor.u32 %v2454, %v2452
    %v2456 = vrot.slane %v2455, 4
    %v2457 = vrot.slane %v1832, 4
    %v2458 = vrot.slane %v1835, 5
    %v2459 = vor.u32 %v2457, %v2458
    %v2460 = vrot.slane %v2459, 4
    %v2461 = vrot.slane %v1843, 5
    %v2462 = vsel %vm2249, %v2460, %v2461
    %v2463 = vrot.slane %v1840, 4
    %v2464 = vor.u32 %v2463, %v2461
    %v2465 = vrot.slane %v2464, 4
    %v2466 = vrot.slane %v1848, 4
    %v2467 = vrot.slane %v1851, 5
    %v2468 = vor.u32 %v2466, %v2467
    %v2469 = vrot.slane %v2468, 4
    %v2470 = vrot.slane %v1859, 5
    %v2471 = vsel %vm2249, %v2469, %v2470
    %v2472 = vrot.slane %v1856, 4
    %v2473 = vor.u32 %v2472, %v2470
    %v2474 = vrot.slane %v2473, 4
    %v2475 = vrot.slane %v1864, 4
    %v2476 = vrot.slane %v1867, 5
    %v2477 = vor.u32 %v2475, %v2476
    %v2478 = vrot.slane %v2477, 4
    %v2479 = vrot.slane %v1875, 5
    %v2480 = vsel %vm2249, %v2478, %v2479
    %v2481 = vrot.slane %v1872, 4
    %v2482 = vor.u32 %v2481, %v2479
    %v2483 = vrot.slane %v2482, 4
    %v2484 = vrot.slane %v1880, 4
    %v2485 = vrot.slane %v1883, 5
    %v2486 = vor.u32 %v2484, %v2485
    %v2487 = vrot.slane %v2486, 4
    %v2488 = vrot.slane %v1891, 5
    %v2489 = vsel %vm2249, %v2487, %v2488
    %v2490 = vrot.slane %v1888, 4
    %v2491 = vor.u32 %v2490, %v2488
    %v2492 = vrot.slane %v2491, 4
    %v2493 = vrot.slane %v1896, 4
    %v2494 = vrot.slane %v1899, 5
    %v2495 = vor.u32 %v2493, %v2494
    %v2496 = vrot.slane %v2495, 4
    %v2497 = vrot.slane %v1907, 5
    %v2498 = vsel %vm2249, %v2496, %v2497
    %v2499 = vrot.slane %v1904, 4
    %v2500 = vor.u32 %v2499, %v2497
    %v2501 = vrot.slane %v2500, 4
    %v2502 = vrot.slane %v1912, 4
    %v2503 = vrot.slane %v1915, 5
    %v2504 = vor.u32 %v2502, %v2503
    %v2505 = vrot.slane %v2504, 4
    %v2506 = vrot.slane %v1923, 5
    %v2507 = vsel %vm2249, %v2505, %v2506
    %v2508 = vrot.slane %v1920, 4
    %v2509 = vor.u32 %v2508, %v2506
    %v2510 = vrot.slane %v2509, 4
    %v2511 = vrot.slane %v1928, 4
    %v2512 = vrot.slane %v1931, 5
    %v2513 = vor.u32 %v2511, %v2512
    %v2514 = vrot.slane %v2513, 4
    %v2515 = vrot.slane %v1939, 5
    %v2516 = vsel %vm2249, %v2514, %v2515
    %v2517 = vrot.slane %v1936, 4
    %v2518 = vor.u32 %v2517, %v2515
    %v2519 = vrot.slane %v2518, 4
    %2580 = vst [vmem:[%s2003 + $0x8] sm:$0xf] %v2255
    %vm2581 = vmand %vm2004, %vm2247
    %v2582 = vld [vmem:[%s2003 + $0x2c] sm:$0xf]
    %v2583 = vsel %vm2581, %v2258, %v2582
    %2584 = vst [vmem:[%s2003 + $0x2c] sm:$0xf] %v2583
    %2585 = vst [vmem:[%s2003 + $0x50] sm:$0xf] %v2264
    %v2586 = vld [vmem:[%s2003 + $0x74] sm:$0xf]
    %v2587 = vsel %vm2581, %v2267, %v2586
    %2588 = vst [vmem:[%s2003 + $0x74] sm:$0xf] %v2587
    %2589 = vst [vmem:[%s2003 + $0x98] sm:$0xf] %v2273
    %v2590 = vld [vmem:[%s2003 + $0xbc] sm:$0xf]
    %v2591 = vsel %vm2581, %v2276, %v2590
    %2592 = vst [vmem:[%s2003 + $0xbc] sm:$0xf] %v2591
    %2593 = vst [vmem:[%s2003 + $0xe0] sm:$0xf] %v2282
    %v2594 = vld [vmem:[%s2003 + $0x104] sm:$0xf]
    %v2595 = vsel %vm2581, %v2285, %v2594
    %2596 = vst [vmem:[%s2003 + $0x104] sm:$0xf] %v2595
    %2597 = vst [vmem:[%s2003 + $0x128] sm:$0xf] %v2291
    %v2598 = vld [vmem:[%s2003 + $0x14c] sm:$0xf]
    %v2599 = vsel %vm2581, %v2294, %v2598
    %2600 = vst [vmem:[%s2003 + $0x14c] sm:$0xf] %v2599
    %2601 = vst [vmem:[%s2003 + $0x170] sm:$0xf] %v2300
    %v2602 = vld [vmem:[%s2003 + $0x194] sm:$0xf]
    %v2603 = vsel %vm2581, %v2303, %v2602
    %2604 = vst [vmem:[%s2003 + $0x194] sm:$0xf] %v2603
    %2605 = vst [vmem:[%s2003 + $0x1b8] sm:$0xf] %v2309
    %v2606 = vld [vmem:[%s2003 + $0x1dc] sm:$0xf]
    %v2607 = vsel %vm2581, %v2312, %v2606
    %2608 = vst [vmem:[%s2003 + $0x1dc] sm:$0xf] %v2607
    %2609 = vst [vmem:[%s2003 + $0x200] sm:$0xf] %v2318
    %v2610 = vld [vmem:[%s2003 + $0x224] sm:$0xf]
    %v2611 = vsel %vm2581, %v2321, %v2610
    %2612 = vst [vmem:[%s2003 + $0x224] sm:$0xf] %v2611
    %2613 = vst [vmem:[%s2003 + $0x248] sm:$0xf] %v2327
    %v2614 = vld [vmem:[%s2003 + $0x26c] sm:$0xf]
    %v2615 = vsel %vm2581, %v2330, %v2614
    %2616 = vst [vmem:[%s2003 + $0x26c] sm:$0xf] %v2615
    %2617 = vst [vmem:[%s2003 + $0x290] sm:$0xf] %v2336
    %v2618 = vld [vmem:[%s2003 + $0x2b4] sm:$0xf]
    %v2619 = vsel %vm2581, %v2339, %v2618
    %2620 = vst [vmem:[%s2003 + $0x2b4] sm:$0xf] %v2619
    %2621 = vst [vmem:[%s2003 + $0x2d8] sm:$0xf] %v2345
    %v2622 = vld [vmem:[%s2003 + $0x2fc] sm:$0xf]
    %v2623 = vsel %vm2581, %v2348, %v2622
    %2624 = vst [vmem:[%s2003 + $0x2fc] sm:$0xf] %v2623
    %2625 = vst [vmem:[%s2003 + $0x320] sm:$0xf] %v2354
    %v2626 = vld [vmem:[%s2003 + $0x344] sm:$0xf]
    %v2627 = vsel %vm2581, %v2357, %v2626
    %2628 = vst [vmem:[%s2003 + $0x344] sm:$0xf] %v2627
    %2629 = vst [vmem:[%s2003 + $0x368] sm:$0xf] %v2363
    %v2630 = vld [vmem:[%s2003 + $0x38c] sm:$0xf]
    %v2631 = vsel %vm2581, %v2366, %v2630
    %2632 = vst [vmem:[%s2003 + $0x38c] sm:$0xf] %v2631
    %2633 = vst [vmem:[%s2003 + $0x3b0] sm:$0xf] %v2372
    %v2634 = vld [vmem:[%s2003 + $0x3d4] sm:$0xf]
    %v2635 = vsel %vm2581, %v2375, %v2634
    %2636 = vst [vmem:[%s2003 + $0x3d4] sm:$0xf] %v2635
    %2637 = vst [vmem:[%s2003 + $0x3f8] sm:$0xf] %v2381
    %v2638 = vld [vmem:[%s2003 + $0x41c] sm:$0xf]
    %v2639 = vsel %vm2581, %v2384, %v2638
    %2640 = vst [vmem:[%s2003 + $0x41c] sm:$0xf] %v2639
    %2641 = vst [vmem:[%s2003 + $0x488] sm:$0xf] %v2390
    %v2642 = vld [vmem:[%s2003 + $0x4ac] sm:$0xf]
    %v2643 = vsel %vm2581, %v2393, %v2642
    %2644 = vst [vmem:[%s2003 + $0x4ac] sm:$0xf] %v2643
    %2645 = vst [vmem:[%s2003 + $0x4d0] sm:$0xf] %v2399
    %v2646 = vld [vmem:[%s2003 + $0x4f4] sm:$0xf]
    %v2647 = vsel %vm2581, %v2402, %v2646
    %2648 = vst [vmem:[%s2003 + $0x4f4] sm:$0xf] %v2647
    %2649 = vst [vmem:[%s2003 + $0x518] sm:$0xf] %v2408
    %v2650 = vld [vmem:[%s2003 + $0x53c] sm:$0xf]
    %v2651 = vsel %vm2581, %v2411, %v2650
    %2652 = vst [vmem:[%s2003 + $0x53c] sm:$0xf] %v2651
    %2653 = vst [vmem:[%s2003 + $0x560] sm:$0xf] %v2417
    %v2654 = vld [vmem:[%s2003 + $0x584] sm:$0xf]
    %v2655 = vsel %vm2581, %v2420, %v2654
    %2656 = vst [vmem:[%s2003 + $0x584] sm:$0xf] %v2655
    %2657 = vst [vmem:[%s2003 + $0x5a8] sm:$0xf] %v2426
    %v2658 = vld [vmem:[%s2003 + $0x5cc] sm:$0xf]
    %v2659 = vsel %vm2581, %v2429, %v2658
    %2660 = vst [vmem:[%s2003 + $0x5cc] sm:$0xf] %v2659
    %2661 = vst [vmem:[%s2003 + $0x5f0] sm:$0xf] %v2435
    %v2662 = vld [vmem:[%s2003 + $0x614] sm:$0xf]
    %v2663 = vsel %vm2581, %v2438, %v2662
    %2664 = vst [vmem:[%s2003 + $0x614] sm:$0xf] %v2663
    %2665 = vst [vmem:[%s2003 + $0x638] sm:$0xf] %v2444
    %v2666 = vld [vmem:[%s2003 + $0x65c] sm:$0xf]
    %v2667 = vsel %vm2581, %v2447, %v2666
    %2668 = vst [vmem:[%s2003 + $0x65c] sm:$0xf] %v2667
    %2669 = vst [vmem:[%s2003 + $0x680] sm:$0xf] %v2453
    %v2670 = vld [vmem:[%s2003 + $0x6a4] sm:$0xf]
    %v2671 = vsel %vm2581, %v2456, %v2670
    %2672 = vst [vmem:[%s2003 + $0x6a4] sm:$0xf] %v2671
    %2673 = vst [vmem:[%s2003 + $0x6c8] sm:$0xf] %v2462
    %v2674 = vld [vmem:[%s2003 + $0x6ec] sm:$0xf]
    %v2675 = vsel %vm2581, %v2465, %v2674
    %2676 = vst [vmem:[%s2003 + $0x6ec] sm:$0xf] %v2675
    %2677 = vst [vmem:[%s2003 + $0x710] sm:$0xf] %v2471
    %v2678 = vld [vmem:[%s2003 + $0x734] sm:$0xf]
    %v2679 = vsel %vm2581, %v2474, %v2678
    %2680 = vst [vmem:[%s2003 + $0x734] sm:$0xf] %v2679
    %2681 = vst [vmem:[%s2003 + $0x758] sm:$0xf] %v2480
    %v2682 = vld [vmem:[%s2003 + $0x77c] sm:$0xf]
    %v2683 = vsel %vm2581, %v2483, %v2682
    %2684 = vst [vmem:[%s2003 + $0x77c] sm:$0xf] %v2683
    %2685 = vst [vmem:[%s2003 + $0x7a0] sm:$0xf] %v2489
    %v2686 = vld [vmem:[%s2003 + $0x7c4] sm:$0xf]
    %v2687 = vsel %vm2581, %v2492, %v2686
    %2688 = vst [vmem:[%s2003 + $0x7c4] sm:$0xf] %v2687
    %2689 = vst [vmem:[%s2003 + $0x7e8] sm:$0xf] %v2498
    %v2690 = vld [vmem:[%s2003 + $0x80c] sm:$0xf]
    %v2691 = vsel %vm2581, %v2501, %v2690
    %2692 = vst [vmem:[%s2003 + $0x80c] sm:$0xf] %v2691
    %2693 = vst [vmem:[%s2003 + $0x830] sm:$0xf] %v2507
    %v2694 = vld [vmem:[%s2003 + $0x854] sm:$0xf]
    %v2695 = vsel %vm2581, %v2510, %v2694
    %2696 = vst [vmem:[%s2003 + $0x854] sm:$0xf] %v2695
    %2697 = vst [vmem:[%s2003 + $0x878] sm:$0xf] %v2516
    %v2698 = vld [vmem:[%s2003 + $0x89c] sm:$0xf]
    %v2699 = vsel %vm2581, %v2519, %v2698
    %2700 = vst [vmem:[%s2003 + $0x89c] sm:$0xf] %v2699
    %v2703 = vunpack.c.l.b16 %v1293
    %v2704 = vunpack.c.h.b16 %v1293
    %v2705 = vunpack.c.l.b16 %v1309
    %v2706 = vunpack.c.h.b16 %v1309
    %v2707 = vpack.c.b16 %v2703, %v2703
    %v2708 = vpack.c.b16 %v2704, %v2704
    %v2709 = vpack.c.b16 %v2705, %v2705
    %v2710 = vpack.c.b16 %v2706, %v2706
    %v2712 = vshrl.u32 %v2707, 16
    %v2714 = vrot.slane %v2712, 7
    %v2715 = vshll.u32 %v2707, 16
    %v2717 = vor.u32 %v2714, %v2715
    %v2718 = vrot.slane %v2714, 4
    %v2720 = vshrl.u32 %v2708, 16
    %v2722 = vrot.slane %v2720, 7
    %v2723 = vshll.u32 %v2708, 16
    %v2725 = vor.u32 %v2722, %v2723
    %v2726 = vsel %vm1462, %v2718, %v2725
    %v2728 = vshrl.u32 %v2709, 16
    %v2730 = vrot.slane %v2728, 7
    %v2731 = vshll.u32 %v2709, 16
    %v2733 = vor.u32 %v2730, %v2731
    %v2734 = vrot.slane %v2730, 4
    %v2736 = vshrl.u32 %v2710, 16
    %v2738 = vrot.slane %v2736, 7
    %v2739 = vshll.u32 %v2710, 16
    %v2741 = vor.u32 %v2738, %v2739
    %v2742 = vsel %vm1462, %v2734, %v2741
    %v2747 = vld [vmem:[#allocation2 + $0xc] sm:$0xf]
    %v2748 = vsel %vm2006, %v1469, %v2747
    %2749 = vst [vmem:[#allocation2 + $0xc] sm:$0xf] %v2748
    %2750 = vst [vmem:[#allocation2 + $0x30] sm:$0xf] %v1478
    %v2751 = vld [vmem:[#allocation2 + $0x54] sm:$0xf]
    %v2752 = vsel %vm2006, %v1485, %v2751
    %2753 = vst [vmem:[#allocation2 + $0x54] sm:$0xf] %v2752
    %2754 = vst [vmem:[#allocation2 + $0x78] sm:$0xf] %v1494
    %v2755 = vld [vmem:[#allocation2 + $0x9c] sm:$0xf]
    %v2756 = vsel %vm2006, %v1501, %v2755
    %2757 = vst [vmem:[#allocation2 + $0x9c] sm:$0xf] %v2756
    %2758 = vst [vmem:[#allocation2 + $0xc0] sm:$0xf] %v1510
    %v2759 = vld [vmem:[#allocation2 + $0xe4] sm:$0xf]
    %v2760 = vsel %vm2006, %v1517, %v2759
    %2761 = vst [vmem:[#allocation2 + $0xe4] sm:$0xf] %v2760
    %2762 = vst [vmem:[#allocation2 + $0x108] sm:$0xf] %v1526
    %v2763 = vld [vmem:[#allocation2 + $0x12c] sm:$0xf]
    %v2764 = vsel %vm2006, %v1533, %v2763
    %2765 = vst [vmem:[#allocation2 + $0x12c] sm:$0xf] %v2764
    %2766 = vst [vmem:[#allocation2 + $0x150] sm:$0xf] %v1542
    %v2767 = vld [vmem:[#allocation2 + $0x174] sm:$0xf]
    %v2768 = vsel %vm2006, %v1549, %v2767
    %2769 = vst [vmem:[#allocation2 + $0x174] sm:$0xf] %v2768
    %2770 = vst [vmem:[#allocation2 + $0x198] sm:$0xf] %v1558
    %v2771 = vld [vmem:[#allocation2 + $0x1bc] sm:$0xf]
    %v2772 = vsel %vm2006, %v1565, %v2771
    %2773 = vst [vmem:[#allocation2 + $0x1bc] sm:$0xf] %v2772
    %2774 = vst [vmem:[#allocation2 + $0x1e0] sm:$0xf] %v1574
    %v2775 = vld [vmem:[#allocation2 + $0x204] sm:$0xf]
    %v2776 = vsel %vm2006, %v1581, %v2775
    %2777 = vst [vmem:[#allocation2 + $0x204] sm:$0xf] %v2776
    %2778 = vst [vmem:[#allocation2 + $0x228] sm:$0xf] %v1590
    %v2779 = vld [vmem:[#allocation2 + $0x24c] sm:$0xf]
    %v2780 = vsel %vm2006, %v1597, %v2779
    %2781 = vst [vmem:[#allocation2 + $0x24c] sm:$0xf] %v2780
    %2782 = vst [vmem:[#allocation2 + $0x270] sm:$0xf] %v1606
    %v2783 = vld [vmem:[#allocation2 + $0x294] sm:$0xf]
    %v2784 = vsel %vm2006, %v1613, %v2783
    %2785 = vst [vmem:[#allocation2 + $0x294] sm:$0xf] %v2784
    %2786 = vst [vmem:[#allocation2 + $0x2b8] sm:$0xf] %v1622
    %v2787 = vld [vmem:[#allocation2 + $0x2dc] sm:$0xf]
    %v2788 = vsel %vm2006, %v1629, %v2787
    %2789 = vst [vmem:[#allocation2 + $0x2dc] sm:$0xf] %v2788
    %2790 = vst [vmem:[#allocation2 + $0x300] sm:$0xf] %v1638
    %v2791 = vld [vmem:[#allocation2 + $0x324] sm:$0xf]
    %v2792 = vsel %vm2006, %v1645, %v2791
    %2793 = vst [vmem:[#allocation2 + $0x324] sm:$0xf] %v2792
    %2794 = vst [vmem:[#allocation2 + $0x348] sm:$0xf] %v1654
    %v2795 = vld [vmem:[#allocation2 + $0x36c] sm:$0xf]
    %v2796 = vsel %vm2006, %v1661, %v2795
    %2797 = vst [vmem:[#allocation2 + $0x36c] sm:$0xf] %v2796
    %2798 = vst [vmem:[#allocation2 + $0x390] sm:$0xf] %v1670
    %v2799 = vld [vmem:[#allocation2 + $0x3b4] sm:$0xf]
    %v2800 = vsel %vm2006, %v1677, %v2799
    %2801 = vst [vmem:[#allocation2 + $0x3b4] sm:$0xf] %v2800
    %2802 = vst [vmem:[#allocation2 + $0x3d8] sm:$0xf] %v1686
    %v2803 = vld [vmem:[#allocation2 + $0x3fc] sm:$0xf]
    %v2804 = vsel %vm2006, %v1693, %v2803
    %2805 = vst [vmem:[#allocation2 + $0x3fc] sm:$0xf] %v2804
    %2806 = vst [vmem:[#allocation2 + $0x420] sm:$0xf] %v1702
    %v2807 = vld [vmem:[#allocation2 + $0x444] sm:$0xf]
    %v2808 = vsel %vm2006, %v2717, %v2807
    %2809 = vst [vmem:[#allocation2 + $0x444] sm:$0xf] %v2808
    %2810 = vst [vmem:[#allocation2 + $0x468] sm:$0xf] %v2726
    %v2811 = vld [vmem:[#allocation2 + $0x48c] sm:$0xf]
    %v2812 = vsel %vm2006, %v1709, %v2811
    %2813 = vst [vmem:[#allocation2 + $0x48c] sm:$0xf] %v2812
    %2814 = vst [vmem:[#allocation2 + $0x4b0] sm:$0xf] %v1718
    %v2815 = vld [vmem:[#allocation2 + $0x4d4] sm:$0xf]
    %v2816 = vsel %vm2006, %v1725, %v2815
    %2817 = vst [vmem:[#allocation2 + $0x4d4] sm:$0xf] %v2816
    %2818 = vst [vmem:[#allocation2 + $0x4f8] sm:$0xf] %v1734
    %v2819 = vld [vmem:[#allocation2 + $0x51c] sm:$0xf]
    %v2820 = vsel %vm2006, %v1741, %v2819
    %2821 = vst [vmem:[#allocation2 + $0x51c] sm:$0xf] %v2820
    %2822 = vst [vmem:[#allocation2 + $0x540] sm:$0xf] %v1750
    %v2823 = vld [vmem:[#allocation2 + $0x564] sm:$0xf]
    %v2824 = vsel %vm2006, %v1757, %v2823
    %2825 = vst [vmem:[#allocation2 + $0x564] sm:$0xf] %v2824
    %2826 = vst [vmem:[#allocation2 + $0x588] sm:$0xf] %v1766
    %v2827 = vld [vmem:[#allocation2 + $0x5ac] sm:$0xf]
    %v2828 = vsel %vm2006, %v1773, %v2827
    %2829 = vst [vmem:[#allocation2 + $0x5ac] sm:$0xf] %v2828
    %2830 = vst [vmem:[#allocation2 + $0x5d0] sm:$0xf] %v1782
    %v2831 = vld [vmem:[#allocation2 + $0x5f4] sm:$0xf]
    %v2832 = vsel %vm2006, %v1789, %v2831
    %2833 = vst [vmem:[#allocation2 + $0x5f4] sm:$0xf] %v2832
    %2834 = vst [vmem:[#allocation2 + $0x618] sm:$0xf] %v1798
    %v2835 = vld [vmem:[#allocation2 + $0x63c] sm:$0xf]
    %v2836 = vsel %vm2006, %v1805, %v2835
    %2837 = vst [vmem:[#allocation2 + $0x63c] sm:$0xf] %v2836
    %2838 = vst [vmem:[#allocation2 + $0x660] sm:$0xf] %v1814
    %v2839 = vld [vmem:[#allocation2 + $0x684] sm:$0xf]
    %v2840 = vsel %vm2006, %v1821, %v2839
    %2841 = vst [vmem:[#allocation2 + $0x684] sm:$0xf] %v2840
    %2842 = vst [vmem:[#allocation2 + $0x6a8] sm:$0xf] %v1830
    %v2843 = vld [vmem:[#allocation2 + $0x6cc] sm:$0xf]
    %v2844 = vsel %vm2006, %v1837, %v2843
    %2845 = vst [vmem:[#allocation2 + $0x6cc] sm:$0xf] %v2844
    %2846 = vst [vmem:[#allocation2 + $0x6f0] sm:$0xf] %v1846
    %v2847 = vld [vmem:[#allocation2 + $0x714] sm:$0xf]
    %v2848 = vsel %vm2006, %v1853, %v2847
    %2849 = vst [vmem:[#allocation2 + $0x714] sm:$0xf] %v2848
    %2850 = vst [vmem:[#allocation2 + $0x738] sm:$0xf] %v1862
    %v2851 = vld [vmem:[#allocation2 + $0x75c] sm:$0xf]
    %v2852 = vsel %vm2006, %v1869, %v2851
    %2853 = vst [vmem:[#allocation2 + $0x75c] sm:$0xf] %v2852
    %2854 = vst [vmem:[#allocation2 + $0x780] sm:$0xf] %v1878
    %v2855 = vld [vmem:[#allocation2 + $0x7a4] sm:$0xf]
    %v2856 = vsel %vm2006, %v1885, %v2855
    %2857 = vst [vmem:[#allocation2 + $0x7a4] sm:$0xf] %v2856
    %2858 = vst [vmem:[#allocation2 + $0x7c8] sm:$0xf] %v1894
    %v2859 = vld [vmem:[#allocation2 + $0x7ec] sm:$0xf]
    %v2860 = vsel %vm2006, %v1901, %v2859
    %2861 = vst [vmem:[#allocation2 + $0x7ec] sm:$0xf] %v2860
    %2862 = vst [vmem:[#allocation2 + $0x810] sm:$0xf] %v1910
    %v2863 = vld [vmem:[#allocation2 + $0x834] sm:$0xf]
    %v2864 = vsel %vm2006, %v1917, %v2863
    %2865 = vst [vmem:[#allocation2 + $0x834] sm:$0xf] %v2864
    %2866 = vst [vmem:[#allocation2 + $0x858] sm:$0xf] %v1926
    %v2867 = vld [vmem:[#allocation2 + $0x87c] sm:$0xf]
    %v2868 = vsel %vm2006, %v1933, %v2867
    %2869 = vst [vmem:[#allocation2 + $0x87c] sm:$0xf] %v2868
    %2870 = vst [vmem:[#allocation2 + $0x8a0] sm:$0xf] %v1942
    %v2871 = vld [vmem:[#allocation2 + $0x8c4] sm:$0xf]
    %v2872 = vsel %vm2006, %v2733, %v2871
    %2873 = vst [vmem:[#allocation2 + $0x8c4] sm:$0xf] %v2872
    %2874 = vst [vmem:[#allocation2 + $0x8e8] sm:$0xf] %v2742
    %2879 = vst [vmem:[#allocation2 + $0x10] sm:$0xf] %v1400
    %2880 = vst [vmem:[#allocation2 + $0x34] sm:$0xf] %v1401
    %2881 = vst [vmem:[#allocation2 + $0x58] sm:$0xf] %v1402
    %2882 = vst [vmem:[#allocation2 + $0x7c] sm:$0xf] %v1403
    %2883 = vst [vmem:[#allocation2 + $0xa0] sm:$0xf] %v1404
    %2884 = vst [vmem:[#allocation2 + $0xc4] sm:$0xf] %v1405
    %2885 = vst [vmem:[#allocation2 + $0xe8] sm:$0xf] %v1406
    %2886 = vst [vmem:[#allocation2 + $0x10c] sm:$0xf] %v1407
    %2887 = vst [vmem:[#allocation2 + $0x130] sm:$0xf] %v1408
    %2888 = vst [vmem:[#allocation2 + $0x154] sm:$0xf] %v1409
    %2889 = vst [vmem:[#allocation2 + $0x178] sm:$0xf] %v1410
    %2890 = vst [vmem:[#allocation2 + $0x19c] sm:$0xf] %v1411
    %2891 = vst [vmem:[#allocation2 + $0x1c0] sm:$0xf] %v1412
    %2892 = vst [vmem:[#allocation2 + $0x1e4] sm:$0xf] %v1413
    %2893 = vst [vmem:[#allocation2 + $0x208] sm:$0xf] %v1414
    %2894 = vst [vmem:[#allocation2 + $0x22c] sm:$0xf] %v1415
    %2895 = vst [vmem:[#allocation2 + $0x250] sm:$0xf] %v1416
    %2896 = vst [vmem:[#allocation2 + $0x274] sm:$0xf] %v1417
    %2897 = vst [vmem:[#allocation2 + $0x298] sm:$0xf] %v1418
    %2898 = vst [vmem:[#allocation2 + $0x2bc] sm:$0xf] %v1419
    %2899 = vst [vmem:[#allocation2 + $0x2e0] sm:$0xf] %v1420
    %2900 = vst [vmem:[#allocation2 + $0x304] sm:$0xf] %v1421
    %2901 = vst [vmem:[#allocation2 + $0x328] sm:$0xf] %v1422
    %2902 = vst [vmem:[#allocation2 + $0x34c] sm:$0xf] %v1423
    %2903 = vst [vmem:[#allocation2 + $0x370] sm:$0xf] %v1424
    %2904 = vst [vmem:[#allocation2 + $0x394] sm:$0xf] %v1425
    %2905 = vst [vmem:[#allocation2 + $0x3b8] sm:$0xf] %v1426
    %2906 = vst [vmem:[#allocation2 + $0x3dc] sm:$0xf] %v1427
    %2907 = vst [vmem:[#allocation2 + $0x400] sm:$0xf] %v1428
    %2908 = vst [vmem:[#allocation2 + $0x424] sm:$0xf] %v1429
    %2909 = vst [vmem:[#allocation2 + $0x448] sm:$0xf] %v2707
    %2910 = vst [vmem:[#allocation2 + $0x46c] sm:$0xf] %v2708
    %2911 = vst [vmem:[#allocation2 + $0x490] sm:$0xf] %v1430
    %2912 = vst [vmem:[#allocation2 + $0x4b4] sm:$0xf] %v1431
    %2913 = vst [vmem:[#allocation2 + $0x4d8] sm:$0xf] %v1432
    %2914 = vst [vmem:[#allocation2 + $0x4fc] sm:$0xf] %v1433
    %2915 = vst [vmem:[#allocation2 + $0x520] sm:$0xf] %v1434
    %2916 = vst [vmem:[#allocation2 + $0x544] sm:$0xf] %v1435
    %2917 = vst [vmem:[#allocation2 + $0x568] sm:$0xf] %v1436
    %2918 = vst [vmem:[#allocation2 + $0x58c] sm:$0xf] %v1437
    %2919 = vst [vmem:[#allocation2 + $0x5b0] sm:$0xf] %v1438
    %2920 = vst [vmem:[#allocation2 + $0x5d4] sm:$0xf] %v1439
    %2921 = vst [vmem:[#allocation2 + $0x5f8] sm:$0xf] %v1440
    %2922 = vst [vmem:[#allocation2 + $0x61c] sm:$0xf] %v1441
    %2923 = vst [vmem:[#allocation2 + $0x640] sm:$0xf] %v1442
    %2924 = vst [vmem:[#allocation2 + $0x664] sm:$0xf] %v1443
    %2925 = vst [vmem:[#allocation2 + $0x688] sm:$0xf] %v1444
    %2926 = vst [vmem:[#allocation2 + $0x6ac] sm:$0xf] %v1445
    %2927 = vst [vmem:[#allocation2 + $0x6d0] sm:$0xf] %v1446
    %2928 = vst [vmem:[#allocation2 + $0x6f4] sm:$0xf] %v1447
    %2929 = vst [vmem:[#allocation2 + $0x718] sm:$0xf] %v1448
    %2930 = vst [vmem:[#allocation2 + $0x73c] sm:$0xf] %v1449
    %2931 = vst [vmem:[#allocation2 + $0x760] sm:$0xf] %v1450
    %2932 = vst [vmem:[#allocation2 + $0x784] sm:$0xf] %v1451
    %2933 = vst [vmem:[#allocation2 + $0x7a8] sm:$0xf] %v1452
    %2934 = vst [vmem:[#allocation2 + $0x7cc] sm:$0xf] %v1453
    %2935 = vst [vmem:[#allocation2 + $0x7f0] sm:$0xf] %v1454
    %2936 = vst [vmem:[#allocation2 + $0x814] sm:$0xf] %v1455
    %2937 = vst [vmem:[#allocation2 + $0x838] sm:$0xf] %v1456
    %2938 = vst [vmem:[#allocation2 + $0x85c] sm:$0xf] %v1457
    %2939 = vst [vmem:[#allocation2 + $0x880] sm:$0xf] %v1458
    %2940 = vst [vmem:[#allocation2 + $0x8a4] sm:$0xf] %v1459
    %2941 = vst [vmem:[#allocation2 + $0x8c8] sm:$0xf] %v2709
    %2942 = vst [vmem:[#allocation2 + $0x8ec] sm:$0xf] %v2710
    %v2943 = vrot.slane %v2712, 4
    %v2944 = vrot.slane %v2715, 5
    %v2945 = vor.u32 %v2943, %v2944
    %v2946 = vrot.slane %v2945, 4
    %v2947 = vrot.slane %v2723, 5
    %v2948 = vsel %vm2249, %v2946, %v2947
    %v2949 = vrot.slane %v2720, 4
    %v2950 = vor.u32 %v2949, %v2947
    %v2951 = vrot.slane %v2950, 4
    %v2952 = vrot.slane %v2728, 4
    %v2953 = vrot.slane %v2731, 5
    %v2954 = vor.u32 %v2952, %v2953
    %v2955 = vrot.slane %v2954, 4
    %v2956 = vrot.slane %v2739, 5
    %v2957 = vsel %vm2249, %v2955, %v2956
    %v2958 = vrot.slane %v2736, 4
    %v2959 = vor.u32 %v2958, %v2956
    %v2960 = vrot.slane %v2959, 4
    %2965 = vst [vmem:[#allocation2 + $0x14] sm:$0xf] %v2255
    %v2966 = vld [vmem:[#allocation2 + $0x38] sm:$0xf]
    %v2967 = vsel %vm2581, %v2258, %v2966
    %2968 = vst [vmem:[#allocation2 + $0x38] sm:$0xf] %v2967
    %2969 = vst [vmem:[#allocation2 + $0x5c] sm:$0xf] %v2264
    %v2970 = vld [vmem:[#allocation2 + $0x80] sm:$0xf]
    %v2971 = vsel %vm2581, %v2267, %v2970
    %2972 = vst [vmem:[#allocation2 + $0x80] sm:$0xf] %v2971
    %2973 = vst [vmem:[#allocation2 + $0xa4] sm:$0xf] %v2273
    %v2974 = vld [vmem:[#allocation2 + $0xc8] sm:$0xf]
    %v2975 = vsel %vm2581, %v2276, %v2974
    %2976 = vst [vmem:[#allocation2 + $0xc8] sm:$0xf] %v2975
    %2977 = vst [vmem:[#allocation2 + $0xec] sm:$0xf] %v2282
    %v2978 = vld [vmem:[#allocation2 + $0x110] sm:$0xf]
    %v2979 = vsel %vm2581, %v2285, %v2978
    %2980 = vst [vmem:[#allocation2 + $0x110] sm:$0xf] %v2979
    %2981 = vst [vmem:[#allocation2 + $0x134] sm:$0xf] %v2291
    %v2982 = vld [vmem:[#allocation2 + $0x158] sm:$0xf]
    %v2983 = vsel %vm2581, %v2294, %v2982
    %2984 = vst [vmem:[#allocation2 + $0x158] sm:$0xf] %v2983
    %2985 = vst [vmem:[#allocation2 + $0x17c] sm:$0xf] %v2300
    %v2986 = vld [vmem:[#allocation2 + $0x1a0] sm:$0xf]
    %v2987 = vsel %vm2581, %v2303, %v2986
    %2988 = vst [vmem:[#allocation2 + $0x1a0] sm:$0xf] %v2987
    %2989 = vst [vmem:[#allocation2 + $0x1c4] sm:$0xf] %v2309
    %v2990 = vld [vmem:[#allocation2 + $0x1e8] sm:$0xf]
    %v2991 = vsel %vm2581, %v2312, %v2990
    %2992 = vst [vmem:[#allocation2 + $0x1e8] sm:$0xf] %v2991
    %2993 = vst [vmem:[#allocation2 + $0x20c] sm:$0xf] %v2318
    %v2994 = vld [vmem:[#allocation2 + $0x230] sm:$0xf]
    %v2995 = vsel %vm2581, %v2321, %v2994
    %2996 = vst [vmem:[#allocation2 + $0x230] sm:$0xf] %v2995
    %2997 = vst [vmem:[#allocation2 + $0x254] sm:$0xf] %v2327
    %v2998 = vld [vmem:[#allocation2 + $0x278] sm:$0xf]
    %v2999 = vsel %vm2581, %v2330, %v2998
    %3000 = vst [vmem:[#allocation2 + $0x278] sm:$0xf] %v2999
    %3001 = vst [vmem:[#allocation2 + $0x29c] sm:$0xf] %v2336
    %v3002 = vld [vmem:[#allocation2 + $0x2c0] sm:$0xf]
    %v3003 = vsel %vm2581, %v2339, %v3002
    %3004 = vst [vmem:[#allocation2 + $0x2c0] sm:$0xf] %v3003
    %3005 = vst [vmem:[#allocation2 + $0x2e4] sm:$0xf] %v2345
    %v3006 = vld [vmem:[#allocation2 + $0x308] sm:$0xf]
    %v3007 = vsel %vm2581, %v2348, %v3006
    %3008 = vst [vmem:[#allocation2 + $0x308] sm:$0xf] %v3007
    %3009 = vst [vmem:[#allocation2 + $0x32c] sm:$0xf] %v2354
    %v3010 = vld [vmem:[#allocation2 + $0x350] sm:$0xf]
    %v3011 = vsel %vm2581, %v2357, %v3010
    %3012 = vst [vmem:[#allocation2 + $0x350] sm:$0xf] %v3011
    %3013 = vst [vmem:[#allocation2 + $0x374] sm:$0xf] %v2363
    %v3014 = vld [vmem:[#allocation2 + $0x398] sm:$0xf]
    %v3015 = vsel %vm2581, %v2366, %v3014
    %3016 = vst [vmem:[#allocation2 + $0x398] sm:$0xf] %v3015
    %3017 = vst [vmem:[#allocation2 + $0x3bc] sm:$0xf] %v2372
    %v3018 = vld [vmem:[#allocation2 + $0x3e0] sm:$0xf]
    %v3019 = vsel %vm2581, %v2375, %v3018
    %3020 = vst [vmem:[#allocation2 + $0x3e0] sm:$0xf] %v3019
    %3021 = vst [vmem:[#allocation2 + $0x404] sm:$0xf] %v2381
    %v3022 = vld [vmem:[#allocation2 + $0x428] sm:$0xf]
    %v3023 = vsel %vm2581, %v2384, %v3022
    %3024 = vst [vmem:[#allocation2 + $0x428] sm:$0xf] %v3023
    %3025 = vst [vmem:[#allocation2 + $0x44c] sm:$0xf] %v2948
    %v3026 = vld [vmem:[#allocation2 + $0x470] sm:$0xf]
    %v3027 = vsel %vm2581, %v2951, %v3026
    %3028 = vst [vmem:[#allocation2 + $0x470] sm:$0xf] %v3027
    %3029 = vst [vmem:[#allocation2 + $0x494] sm:$0xf] %v2390
    %v3030 = vld [vmem:[#allocation2 + $0x4b8] sm:$0xf]
    %v3031 = vsel %vm2581, %v2393, %v3030
    %3032 = vst [vmem:[#allocation2 + $0x4b8] sm:$0xf] %v3031
    %3033 = vst [vmem:[#allocation2 + $0x4dc] sm:$0xf] %v2399
    %v3034 = vld [vmem:[#allocation2 + $0x500] sm:$0xf]
    %v3035 = vsel %vm2581, %v2402, %v3034
    %3036 = vst [vmem:[#allocation2 + $0x500] sm:$0xf] %v3035
    %3037 = vst [vmem:[#allocation2 + $0x524] sm:$0xf] %v2408
    %v3038 = vld [vmem:[#allocation2 + $0x548] sm:$0xf]
    %v3039 = vsel %vm2581, %v2411, %v3038
    %3040 = vst [vmem:[#allocation2 + $0x548] sm:$0xf] %v3039
    %3041 = vst [vmem:[#allocation2 + $0x56c] sm:$0xf] %v2417
    %v3042 = vld [vmem:[#allocation2 + $0x590] sm:$0xf]
    %v3043 = vsel %vm2581, %v2420, %v3042
    %3044 = vst [vmem:[#allocation2 + $0x590] sm:$0xf] %v3043
    %3045 = vst [vmem:[#allocation2 + $0x5b4] sm:$0xf] %v2426
    %v3046 = vld [vmem:[#allocation2 + $0x5d8] sm:$0xf]
    %v3047 = vsel %vm2581, %v2429, %v3046
    %3048 = vst [vmem:[#allocation2 + $0x5d8] sm:$0xf] %v3047
    %3049 = vst [vmem:[#allocation2 + $0x5fc] sm:$0xf] %v2435
    %v3050 = vld [vmem:[#allocation2 + $0x620] sm:$0xf]
    %v3051 = vsel %vm2581, %v2438, %v3050
    %3052 = vst [vmem:[#allocation2 + $0x620] sm:$0xf] %v3051
    %3053 = vst [vmem:[#allocation2 + $0x644] sm:$0xf] %v2444
    %v3054 = vld [vmem:[#allocation2 + $0x668] sm:$0xf]
    %v3055 = vsel %vm2581, %v2447, %v3054
    %3056 = vst [vmem:[#allocation2 + $0x668] sm:$0xf] %v3055
    %3057 = vst [vmem:[#allocation2 + $0x68c] sm:$0xf] %v2453
    %v3058 = vld [vmem:[#allocation2 + $0x6b0] sm:$0xf]
    %v3059 = vsel %vm2581, %v2456, %v3058
    %3060 = vst [vmem:[#allocation2 + $0x6b0] sm:$0xf] %v3059
    %3061 = vst [vmem:[#allocation2 + $0x6d4] sm:$0xf] %v2462
    %v3062 = vld [vmem:[#allocation2 + $0x6f8] sm:$0xf]
    %v3063 = vsel %vm2581, %v2465, %v3062
    %3064 = vst [vmem:[#allocation2 + $0x6f8] sm:$0xf] %v3063
    %3065 = vst [vmem:[#allocation2 + $0x71c] sm:$0xf] %v2471
    %v3066 = vld [vmem:[#allocation2 + $0x740] sm:$0xf]
    %v3067 = vsel %vm2581, %v2474, %v3066
    %3068 = vst [vmem:[#allocation2 + $0x740] sm:$0xf] %v3067
    %3069 = vst [vmem:[#allocation2 + $0x764] sm:$0xf] %v2480
    %v3070 = vld [vmem:[#allocation2 + $0x788] sm:$0xf]
    %v3071 = vsel %vm2581, %v2483, %v3070
    %3072 = vst [vmem:[#allocation2 + $0x788] sm:$0xf] %v3071
    %3073 = vst [vmem:[#allocation2 + $0x7ac] sm:$0xf] %v2489
    %v3074 = vld [vmem:[#allocation2 + $0x7d0] sm:$0xf]
    %v3075 = vsel %vm2581, %v2492, %v3074
    %3076 = vst [vmem:[#allocation2 + $0x7d0] sm:$0xf] %v3075
    %3077 = vst [vmem:[#allocation2 + $0x7f4] sm:$0xf] %v2498
    %v3078 = vld [vmem:[#allocation2 + $0x818] sm:$0xf]
    %v3079 = vsel %vm2581, %v2501, %v3078
    %3080 = vst [vmem:[#allocation2 + $0x818] sm:$0xf] %v3079
    %3081 = vst [vmem:[#allocation2 + $0x83c] sm:$0xf] %v2507
    %v3082 = vld [vmem:[#allocation2 + $0x860] sm:$0xf]
    %v3083 = vsel %vm2581, %v2510, %v3082
    %3084 = vst [vmem:[#allocation2 + $0x860] sm:$0xf] %v3083
    %3085 = vst [vmem:[#allocation2 + $0x884] sm:$0xf] %v2516
    %v3086 = vld [vmem:[#allocation2 + $0x8a8] sm:$0xf]
    %v3087 = vsel %vm2581, %v2519, %v3086
    %3088 = vst [vmem:[#allocation2 + $0x8a8] sm:$0xf] %v3087
    %3089 = vst [vmem:[#allocation2 + $0x8cc] sm:$0xf] %v2957
    %v3090 = vld [vmem:[#allocation2 + $0x8f0] sm:$0xf]
    %v3091 = vsel %vm2581, %v2960, %v3090
    %3092 = vst [vmem:[#allocation2 + $0x8f0] sm:$0xf] %v3091
    %v3093 = vld [vmem:[#allocation2 + $0x18] sm:$0xf]
    %v3094 = vsel %vm2006, %v1485, %v3093
    %3095 = vst [vmem:[#allocation2 + $0x18] sm:$0xf] %v3094
    %3096 = vst [vmem:[#allocation2 + $0x3c] sm:$0xf] %v1494
    %v3097 = vld [vmem:[#allocation2 + $0x60] sm:$0xf]
    %v3098 = vsel %vm2006, %v1501, %v3097
    %3099 = vst [vmem:[#allocation2 + $0x60] sm:$0xf] %v3098
    %3100 = vst [vmem:[#allocation2 + $0x84] sm:$0xf] %v1510
    %v3101 = vld [vmem:[#allocation2 + $0xa8] sm:$0xf]
    %v3102 = vsel %vm2006, %v1517, %v3101
    %3103 = vst [vmem:[#allocation2 + $0xa8] sm:$0xf] %v3102
    %3104 = vst [vmem:[#allocation2 + $0xcc] sm:$0xf] %v1526
    %v3105 = vld [vmem:[#allocation2 + $0xf0] sm:$0xf]
    %v3106 = vsel %vm2006, %v1533, %v3105
    %3107 = vst [vmem:[#allocation2 + $0xf0] sm:$0xf] %v3106
    %3108 = vst [vmem:[#allocation2 + $0x114] sm:$0xf] %v1542
    %v3109 = vld [vmem:[#allocation2 + $0x138] sm:$0xf]
    %v3110 = vsel %vm2006, %v1549, %v3109
    %3111 = vst [vmem:[#allocation2 + $0x138] sm:$0xf] %v3110
    %3112 = vst [vmem:[#allocation2 + $0x15c] sm:$0xf] %v1558
    %v3113 = vld [vmem:[#allocation2 + $0x180] sm:$0xf]
    %v3114 = vsel %vm2006, %v1565, %v3113
    %3115 = vst [vmem:[#allocation2 + $0x180] sm:$0xf] %v3114
    %3116 = vst [vmem:[#allocation2 + $0x1a4] sm:$0xf] %v1574
    %v3117 = vld [vmem:[#allocation2 + $0x1c8] sm:$0xf]
    %v3118 = vsel %vm2006, %v1581, %v3117
    %3119 = vst [vmem:[#allocation2 + $0x1c8] sm:$0xf] %v3118
    %3120 = vst [vmem:[#allocation2 + $0x1ec] sm:$0xf] %v1590
    %v3121 = vld [vmem:[#allocation2 + $0x210] sm:$0xf]
    %v3122 = vsel %vm2006, %v1597, %v3121
    %3123 = vst [vmem:[#allocation2 + $0x210] sm:$0xf] %v3122
    %3124 = vst [vmem:[#allocation2 + $0x234] sm:$0xf] %v1606
    %v3125 = vld [vmem:[#allocation2 + $0x258] sm:$0xf]
    %v3126 = vsel %vm2006, %v1613, %v3125
    %3127 = vst [vmem:[#allocation2 + $0x258] sm:$0xf] %v3126
    %3128 = vst [vmem:[#allocation2 + $0x27c] sm:$0xf] %v1622
    %v3129 = vld [vmem:[#allocation2 + $0x2a0] sm:$0xf]
    %v3130 = vsel %vm2006, %v1629, %v3129
    %3131 = vst [vmem:[#allocation2 + $0x2a0] sm:$0xf] %v3130
    %3132 = vst [vmem:[#allocation2 + $0x2c4] sm:$0xf] %v1638
    %v3133 = vld [vmem:[#allocation2 + $0x2e8] sm:$0xf]
    %v3134 = vsel %vm2006, %v1645, %v3133
    %3135 = vst [vmem:[#allocation2 + $0x2e8] sm:$0xf] %v3134
    %3136 = vst [vmem:[#allocation2 + $0x30c] sm:$0xf] %v1654
    %v3137 = vld [vmem:[#allocation2 + $0x330] sm:$0xf]
    %v3138 = vsel %vm2006, %v1661, %v3137
    %3139 = vst [vmem:[#allocation2 + $0x330] sm:$0xf] %v3138
    %3140 = vst [vmem:[#allocation2 + $0x354] sm:$0xf] %v1670
    %v3141 = vld [vmem:[#allocation2 + $0x378] sm:$0xf]
    %v3142 = vsel %vm2006, %v1677, %v3141
    %3143 = vst [vmem:[#allocation2 + $0x378] sm:$0xf] %v3142
    %3144 = vst [vmem:[#allocation2 + $0x39c] sm:$0xf] %v1686
    %v3145 = vld [vmem:[#allocation2 + $0x3c0] sm:$0xf]
    %v3146 = vsel %vm2006, %v1693, %v3145
    %3147 = vst [vmem:[#allocation2 + $0x3c0] sm:$0xf] %v3146
    %3148 = vst [vmem:[#allocation2 + $0x3e4] sm:$0xf] %v1702
    %v3149 = vld [vmem:[#allocation2 + $0x408] sm:$0xf]
    %v3150 = vsel %vm2006, %v2717, %v3149
    %3151 = vst [vmem:[#allocation2 + $0x408] sm:$0xf] %v3150
    %3152 = vst [vmem:[#allocation2 + $0x42c] sm:$0xf] %v2726
    %v3153 = vld [vmem:[#allocation2 + $0x498] sm:$0xf]
    %v3154 = vsel %vm2006, %v1725, %v3153
    %3155 = vst [vmem:[#allocation2 + $0x498] sm:$0xf] %v3154
    %3156 = vst [vmem:[#allocation2 + $0x4bc] sm:$0xf] %v1734
    %v3157 = vld [vmem:[#allocation2 + $0x4e0] sm:$0xf]
    %v3158 = vsel %vm2006, %v1741, %v3157
    %3159 = vst [vmem:[#allocation2 + $0x4e0] sm:$0xf] %v3158
    %3160 = vst [vmem:[#allocation2 + $0x504] sm:$0xf] %v1750
    %v3161 = vld [vmem:[#allocation2 + $0x528] sm:$0xf]
    %v3162 = vsel %vm2006, %v1757, %v3161
    %3163 = vst [vmem:[#allocation2 + $0x528] sm:$0xf] %v3162
    %3164 = vst [vmem:[#allocation2 + $0x54c] sm:$0xf] %v1766
    %v3165 = vld [vmem:[#allocation2 + $0x570] sm:$0xf]
    %v3166 = vsel %vm2006, %v1773, %v3165
    %3167 = vst [vmem:[#allocation2 + $0x570] sm:$0xf] %v3166
    %3168 = vst [vmem:[#allocation2 + $0x594] sm:$0xf] %v1782
    %v3169 = vld [vmem:[#allocation2 + $0x5b8] sm:$0xf]
    %v3170 = vsel %vm2006, %v1789, %v3169
    %3171 = vst [vmem:[#allocation2 + $0x5b8] sm:$0xf] %v3170
    %3172 = vst [vmem:[#allocation2 + $0x5dc] sm:$0xf] %v1798
    %v3173 = vld [vmem:[#allocation2 + $0x600] sm:$0xf]
    %v3174 = vsel %vm2006, %v1805, %v3173
    %3175 = vst [vmem:[#allocation2 + $0x600] sm:$0xf] %v3174
    %3176 = vst [vmem:[#allocation2 + $0x624] sm:$0xf] %v1814
    %v3177 = vld [vmem:[#allocation2 + $0x648] sm:$0xf]
    %v3178 = vsel %vm2006, %v1821, %v3177
    %3179 = vst [vmem:[#allocation2 + $0x648] sm:$0xf] %v3178
    %3180 = vst [vmem:[#allocation2 + $0x66c] sm:$0xf] %v1830
    %v3181 = vld [vmem:[#allocation2 + $0x690] sm:$0xf]
    %v3182 = vsel %vm2006, %v1837, %v3181
    %3183 = vst [vmem:[#allocation2 + $0x690] sm:$0xf] %v3182
    %3184 = vst [vmem:[#allocation2 + $0x6b4] sm:$0xf] %v1846
    %v3185 = vld [vmem:[#allocation2 + $0x6d8] sm:$0xf]
    %v3186 = vsel %vm2006, %v1853, %v3185
    %3187 = vst [vmem:[#allocation2 + $0x6d8] sm:$0xf] %v3186
    %3188 = vst [vmem:[#allocation2 + $0x6fc] sm:$0xf] %v1862
    %v3189 = vld [vmem:[#allocation2 + $0x720] sm:$0xf]
    %v3190 = vsel %vm2006, %v1869, %v3189
    %3191 = vst [vmem:[#allocation2 + $0x720] sm:$0xf] %v3190
    %3192 = vst [vmem:[#allocation2 + $0x744] sm:$0xf] %v1878
    %v3193 = vld [vmem:[#allocation2 + $0x768] sm:$0xf]
    %v3194 = vsel %vm2006, %v1885, %v3193
    %3195 = vst [vmem:[#allocation2 + $0x768] sm:$0xf] %v3194
    %3196 = vst [vmem:[#allocation2 + $0x78c] sm:$0xf] %v1894
    %v3197 = vld [vmem:[#allocation2 + $0x7b0] sm:$0xf]
    %v3198 = vsel %vm2006, %v1901, %v3197
    %3199 = vst [vmem:[#allocation2 + $0x7b0] sm:$0xf] %v3198
    %3200 = vst [vmem:[#allocation2 + $0x7d4] sm:$0xf] %v1910
    %v3201 = vld [vmem:[#allocation2 + $0x7f8] sm:$0xf]
    %v3202 = vsel %vm2006, %v1917, %v3201
    %3203 = vst [vmem:[#allocation2 + $0x7f8] sm:$0xf] %v3202
    %3204 = vst [vmem:[#allocation2 + $0x81c] sm:$0xf] %v1926
    %v3205 = vld [vmem:[#allocation2 + $0x840] sm:$0xf]
    %v3206 = vsel %vm2006, %v1933, %v3205
    %3207 = vst [vmem:[#allocation2 + $0x840] sm:$0xf] %v3206
    %3208 = vst [vmem:[#allocation2 + $0x864] sm:$0xf] %v1942
    %v3209 = vld [vmem:[#allocation2 + $0x888] sm:$0xf]
    %v3210 = vsel %vm2006, %v2733, %v3209
    %3211 = vst [vmem:[#allocation2 + $0x888] sm:$0xf] %v3210
    %3212 = vst [vmem:[#allocation2 + $0x8ac] sm:$0xf] %v2742
    %3213 = vst [vmem:[#allocation2 + $0x1c] sm:$0xf] %v1402
    %3214 = vst [vmem:[#allocation2 + $0x40] sm:$0xf] %v1403
    %3215 = vst [vmem:[#allocation2 + $0x64] sm:$0xf] %v1404
    %3216 = vst [vmem:[#allocation2 + $0x88] sm:$0xf] %v1405
    %3217 = vst [vmem:[#allocation2 + $0xac] sm:$0xf] %v1406
    %3218 = vst [vmem:[#allocation2 + $0xd0] sm:$0xf] %v1407
    %3219 = vst [vmem:[#allocation2 + $0xf4] sm:$0xf] %v1408
    %3220 = vst [vmem:[#allocation2 + $0x118] sm:$0xf] %v1409
    %3221 = vst [vmem:[#allocation2 + $0x13c] sm:$0xf] %v1410
    %3222 = vst [vmem:[#allocation2 + $0x160] sm:$0xf] %v1411
    %3223 = vst [vmem:[#allocation2 + $0x184] sm:$0xf] %v1412
    %3224 = vst [vmem:[#allocation2 + $0x1a8] sm:$0xf] %v1413
    %3225 = vst [vmem:[#allocation2 + $0x1cc] sm:$0xf] %v1414
    %3226 = vst [vmem:[#allocation2 + $0x1f0] sm:$0xf] %v1415
    %3227 = vst [vmem:[#allocation2 + $0x214] sm:$0xf] %v1416
    %3228 = vst [vmem:[#allocation2 + $0x238] sm:$0xf] %v1417
    %3229 = vst [vmem:[#allocation2 + $0x25c] sm:$0xf] %v1418
    %3230 = vst [vmem:[#allocation2 + $0x280] sm:$0xf] %v1419
    %3231 = vst [vmem:[#allocation2 + $0x2a4] sm:$0xf] %v1420
    %3232 = vst [vmem:[#allocation2 + $0x2c8] sm:$0xf] %v1421
    %3233 = vst [vmem:[#allocation2 + $0x2ec] sm:$0xf] %v1422
    %3234 = vst [vmem:[#allocation2 + $0x310] sm:$0xf] %v1423
    %3235 = vst [vmem:[#allocation2 + $0x334] sm:$0xf] %v1424
    %3236 = vst [vmem:[#allocation2 + $0x358] sm:$0xf] %v1425
    %3237 = vst [vmem:[#allocation2 + $0x37c] sm:$0xf] %v1426
    %3238 = vst [vmem:[#allocation2 + $0x3a0] sm:$0xf] %v1427
    %3239 = vst [vmem:[#allocation2 + $0x3c4] sm:$0xf] %v1428
    %3240 = vst [vmem:[#allocation2 + $0x3e8] sm:$0xf] %v1429
    %3241 = vst [vmem:[#allocation2 + $0x40c] sm:$0xf] %v2707
    %3242 = vst [vmem:[#allocation2 + $0x430] sm:$0xf] %v2708
    %3243 = vst [vmem:[#allocation2 + $0x49c] sm:$0xf] %v1432
    %3244 = vst [vmem:[#allocation2 + $0x4c0] sm:$0xf] %v1433
    %3245 = vst [vmem:[#allocation2 + $0x4e4] sm:$0xf] %v1434
    %3246 = vst [vmem:[#allocation2 + $0x508] sm:$0xf] %v1435
    %3247 = vst [vmem:[#allocation2 + $0x52c] sm:$0xf] %v1436
    %3248 = vst [vmem:[#allocation2 + $0x550] sm:$0xf] %v1437
    %3249 = vst [vmem:[#allocation2 + $0x574] sm:$0xf] %v1438
    %3250 = vst [vmem:[#allocation2 + $0x598] sm:$0xf] %v1439
    %3251 = vst [vmem:[#allocation2 + $0x5bc] sm:$0xf] %v1440
    %3252 = vst [vmem:[#allocation2 + $0x5e0] sm:$0xf] %v1441
    %3253 = vst [vmem:[#allocation2 + $0x604] sm:$0xf] %v1442
    %3254 = vst [vmem:[#allocation2 + $0x628] sm:$0xf] %v1443
    %3255 = vst [vmem:[#allocation2 + $0x64c] sm:$0xf] %v1444
    %3256 = vst [vmem:[#allocation2 + $0x670] sm:$0xf] %v1445
    %3257 = vst [vmem:[#allocation2 + $0x694] sm:$0xf] %v1446
    %3258 = vst [vmem:[#allocation2 + $0x6b8] sm:$0xf] %v1447
    %3259 = vst [vmem:[#allocation2 + $0x6dc] sm:$0xf] %v1448
    %3260 = vst [vmem:[#allocation2 + $0x700] sm:$0xf] %v1449
    %3261 = vst [vmem:[#allocation2 + $0x724] sm:$0xf] %v1450
    %3262 = vst [vmem:[#allocation2 + $0x748] sm:$0xf] %v1451
    %3263 = vst [vmem:[#allocation2 + $0x76c] sm:$0xf] %v1452
    %3264 = vst [vmem:[#allocation2 + $0x790] sm:$0xf] %v1453
    %3265 = vst [vmem:[#allocation2 + $0x7b4] sm:$0xf] %v1454
    %3266 = vst [vmem:[#allocation2 + $0x7d8] sm:$0xf] %v1455
    %3267 = vst [vmem:[#allocation2 + $0x7fc] sm:$0xf] %v1456
    %3268 = vst [vmem:[#allocation2 + $0x820] sm:$0xf] %v1457
    %3269 = vst [vmem:[#allocation2 + $0x844] sm:$0xf] %v1458
    %3270 = vst [vmem:[#allocation2 + $0x868] sm:$0xf] %v1459
    %3271 = vst [vmem:[#allocation2 + $0x88c] sm:$0xf] %v2709
    %3272 = vst [vmem:[#allocation2 + $0x8b0] sm:$0xf] %v2710
    %3273 = vst [vmem:[#allocation2 + $0x20] sm:$0xf] %v2264
    %v3274 = vld [vmem:[#allocation2 + $0x44] sm:$0xf]
    %v3275 = vsel %vm2581, %v2267, %v3274
    %3276 = vst [vmem:[#allocation2 + $0x44] sm:$0xf] %v3275
    %3277 = vst [vmem:[#allocation2 + $0x68] sm:$0xf] %v2273
    %v3278 = vld [vmem:[#allocation2 + $0x8c] sm:$0xf]
    %v3279 = vsel %vm2581, %v2276, %v3278
    %3280 = vst [vmem:[#allocation2 + $0x8c] sm:$0xf] %v3279
    %3281 = vst [vmem:[#allocation2 + $0xb0] sm:$0xf] %v2282
    %v3282 = vld [vmem:[#allocation2 + $0xd4] sm:$0xf]
    %v3283 = vsel %vm2581, %v2285, %v3282
    %3284 = vst [vmem:[#allocation2 + $0xd4] sm:$0xf] %v3283
    %3285 = vst [vmem:[#allocation2 + $0xf8] sm:$0xf] %v2291
    %v3286 = vld [vmem:[#allocation2 + $0x11c] sm:$0xf]
    %v3287 = vsel %vm2581, %v2294, %v3286
    %3288 = vst [vmem:[#allocation2 + $0x11c] sm:$0xf] %v3287
    %3289 = vst [vmem:[#allocation2 + $0x140] sm:$0xf] %v2300
    %v3290 = vld [vmem:[#allocation2 + $0x164] sm:$0xf]
    %v3291 = vsel %vm2581, %v2303, %v3290
    %3292 = vst [vmem:[#allocation2 + $0x164] sm:$0xf] %v3291
    %3293 = vst [vmem:[#allocation2 + $0x188] sm:$0xf] %v2309
    %v3294 = vld [vmem:[#allocation2 + $0x1ac] sm:$0xf]
    %v3295 = vsel %vm2581, %v2312, %v3294
    %3296 = vst [vmem:[#allocation2 + $0x1ac] sm:$0xf] %v3295
    %3297 = vst [vmem:[#allocation2 + $0x1d0] sm:$0xf] %v2318
    %v3298 = vld [vmem:[#allocation2 + $0x1f4] sm:$0xf]
    %v3299 = vsel %vm2581, %v2321, %v3298
    %3300 = vst [vmem:[#allocation2 + $0x1f4] sm:$0xf] %v3299
    %3301 = vst [vmem:[#allocation2 + $0x218] sm:$0xf] %v2327
    %v3302 = vld [vmem:[#allocation2 + $0x23c] sm:$0xf]
    %v3303 = vsel %vm2581, %v2330, %v3302
    %3304 = vst [vmem:[#allocation2 + $0x23c] sm:$0xf] %v3303
    %3305 = vst [vmem:[#allocation2 + $0x260] sm:$0xf] %v2336
    %v3306 = vld [vmem:[#allocation2 + $0x284] sm:$0xf]
    %v3307 = vsel %vm2581, %v2339, %v3306
    %3308 = vst [vmem:[#allocation2 + $0x284] sm:$0xf] %v3307
    %3309 = vst [vmem:[#allocation2 + $0x2a8] sm:$0xf] %v2345
    %v3310 = vld [vmem:[#allocation2 + $0x2cc] sm:$0xf]
    %v3311 = vsel %vm2581, %v2348, %v3310
    %3312 = vst [vmem:[#allocation2 + $0x2cc] sm:$0xf] %v3311
    %3313 = vst [vmem:[#allocation2 + $0x2f0] sm:$0xf] %v2354
    %v3314 = vld [vmem:[#allocation2 + $0x314] sm:$0xf]
    %v3315 = vsel %vm2581, %v2357, %v3314
    %3316 = vst [vmem:[#allocation2 + $0x314] sm:$0xf] %v3315
    %3317 = vst [vmem:[#allocation2 + $0x338] sm:$0xf] %v2363
    %v3318 = vld [vmem:[#allocation2 + $0x35c] sm:$0xf]
    %v3319 = vsel %vm2581, %v2366, %v3318
    %3320 = vst [vmem:[#allocation2 + $0x35c] sm:$0xf] %v3319
    %3321 = vst [vmem:[#allocation2 + $0x380] sm:$0xf] %v2372
    %v3322 = vld [vmem:[#allocation2 + $0x3a4] sm:$0xf]
    %v3323 = vsel %vm2581, %v2375, %v3322
    %3324 = vst [vmem:[#allocation2 + $0x3a4] sm:$0xf] %v3323
    %3325 = vst [vmem:[#allocation2 + $0x3c8] sm:$0xf] %v2381
    %v3326 = vld [vmem:[#allocation2 + $0x3ec] sm:$0xf]
    %v3327 = vsel %vm2581, %v2384, %v3326
    %3328 = vst [vmem:[#allocation2 + $0x3ec] sm:$0xf] %v3327
    %3329 = vst [vmem:[#allocation2 + $0x410] sm:$0xf] %v2948
    %v3330 = vld [vmem:[#allocation2 + $0x434] sm:$0xf]
    %v3331 = vsel %vm2581, %v2951, %v3330
    %3332 = vst [vmem:[#allocation2 + $0x434] sm:$0xf] %v3331
    %3333 = vst [vmem:[#allocation2 + $0x4a0] sm:$0xf] %v2399
    %v3334 = vld [vmem:[#allocation2 + $0x4c4] sm:$0xf]
    %v3335 = vsel %vm2581, %v2402, %v3334
    %3336 = vst [vmem:[#allocation2 + $0x4c4] sm:$0xf] %v3335
    %3337 = vst [vmem:[#allocation2 + $0x4e8] sm:$0xf] %v2408
    %v3338 = vld [vmem:[#allocation2 + $0x50c] sm:$0xf]
    %v3339 = vsel %vm2581, %v2411, %v3338
    %3340 = vst [vmem:[#allocation2 + $0x50c] sm:$0xf] %v3339
    %3341 = vst [vmem:[#allocation2 + $0x530] sm:$0xf] %v2417
    %v3342 = vld [vmem:[#allocation2 + $0x554] sm:$0xf]
    %v3343 = vsel %vm2581, %v2420, %v3342
    %3344 = vst [vmem:[#allocation2 + $0x554] sm:$0xf] %v3343
    %3345 = vst [vmem:[#allocation2 + $0x578] sm:$0xf] %v2426
    %v3346 = vld [vmem:[#allocation2 + $0x59c] sm:$0xf]
    %v3347 = vsel %vm2581, %v2429, %v3346
    %3348 = vst [vmem:[#allocation2 + $0x59c] sm:$0xf] %v3347
    %3349 = vst [vmem:[#allocation2 + $0x5c0] sm:$0xf] %v2435
    %v3350 = vld [vmem:[#allocation2 + $0x5e4] sm:$0xf]
    %v3351 = vsel %vm2581, %v2438, %v3350
    %3352 = vst [vmem:[#allocation2 + $0x5e4] sm:$0xf] %v3351
    %3353 = vst [vmem:[#allocation2 + $0x608] sm:$0xf] %v2444
    %v3354 = vld [vmem:[#allocation2 + $0x62c] sm:$0xf]
    %v3355 = vsel %vm2581, %v2447, %v3354
    %3356 = vst [vmem:[#allocation2 + $0x62c] sm:$0xf] %v3355
    %3357 = vst [vmem:[#allocation2 + $0x650] sm:$0xf] %v2453
    %v3358 = vld [vmem:[#allocation2 + $0x674] sm:$0xf]
    %v3359 = vsel %vm2581, %v2456, %v3358
    %3360 = vst [vmem:[#allocation2 + $0x674] sm:$0xf] %v3359
    %3361 = vst [vmem:[#allocation2 + $0x698] sm:$0xf] %v2462
    %v3362 = vld [vmem:[#allocation2 + $0x6bc] sm:$0xf]
    %v3363 = vsel %vm2581, %v2465, %v3362
    %3364 = vst [vmem:[#allocation2 + $0x6bc] sm:$0xf] %v3363
    %3365 = vst [vmem:[#allocation2 + $0x6e0] sm:$0xf] %v2471
    %v3366 = vld [vmem:[#allocation2 + $0x704] sm:$0xf]
    %v3367 = vsel %vm2581, %v2474, %v3366
    %3368 = vst [vmem:[#allocation2 + $0x704] sm:$0xf] %v3367
    %3369 = vst [vmem:[#allocation2 + $0x728] sm:$0xf] %v2480
    %v3370 = vld [vmem:[#allocation2 + $0x74c] sm:$0xf]
    %v3371 = vsel %vm2581, %v2483, %v3370
    %3372 = vst [vmem:[#allocation2 + $0x74c] sm:$0xf] %v3371
    %3373 = vst [vmem:[#allocation2 + $0x770] sm:$0xf] %v2489
    %v3374 = vld [vmem:[#allocation2 + $0x794] sm:$0xf]
    %v3375 = vsel %vm2581, %v2492, %v3374
    %3376 = vst [vmem:[#allocation2 + $0x794] sm:$0xf] %v3375
    %3377 = vst [vmem:[#allocation2 + $0x7b8] sm:$0xf] %v2498
    %v3378 = vld [vmem:[#allocation2 + $0x7dc] sm:$0xf]
    %v3379 = vsel %vm2581, %v2501, %v3378
    %3380 = vst [vmem:[#allocation2 + $0x7dc] sm:$0xf] %v3379
    %3381 = vst [vmem:[#allocation2 + $0x800] sm:$0xf] %v2507
    %v3382 = vld [vmem:[#allocation2 + $0x824] sm:$0xf]
    %v3383 = vsel %vm2581, %v2510, %v3382
    %3384 = vst [vmem:[#allocation2 + $0x824] sm:$0xf] %v3383
    %3385 = vst [vmem:[#allocation2 + $0x848] sm:$0xf] %v2516
    %v3386 = vld [vmem:[#allocation2 + $0x86c] sm:$0xf]
    %v3387 = vsel %vm2581, %v2519, %v3386
    %3388 = vst [vmem:[#allocation2 + $0x86c] sm:$0xf] %v3387
    %3389 = vst [vmem:[#allocation2 + $0x890] sm:$0xf] %v2957
    %v3390 = vld [vmem:[#allocation2 + $0x8b4] sm:$0xf]
    %v3391 = vsel %vm2581, %v2960, %v3390
    %3392 = vst [vmem:[#allocation2 + $0x8b4] sm:$0xf] %v3391
    %v3393 = vld [vmem:[#allocation2] sm:$0xff]
    %v3394 = vld [vmem:[#allocation2 + $0x8] sm:$0xff]
    %v3395 = vld [vmem:[#allocation2 + $0x10] sm:$0xff]
    %v3396 = vld [vmem:[#allocation2 + $0x18] sm:$0xff]
    %v3397 = vld [vmem:[#allocation2 + $0x20] sm:$0xf]
    %v3398 = vld [vmem:[#allocation2 + $0x24] sm:$0xff]
    %v3399 = vld [vmem:[#allocation2 + $0x2c] sm:$0xff]
    %v3400 = vld [vmem:[#allocation2 + $0x34] sm:$0xff]
    %v3401 = vld [vmem:[#allocation2 + $0x3c] sm:$0xff]
    %v3402 = vld [vmem:[#allocation2 + $0x44] sm:$0xf]
    %v3403 = vld [vmem:[#allocation2 + $0x48] sm:$0xff]
    %v3404 = vld [vmem:[#allocation2 + $0x50] sm:$0xff]
    %v3405 = vld [vmem:[#allocation2 + $0x58] sm:$0xff]
    %v3406 = vld [vmem:[#allocation2 + $0x60] sm:$0xff]
    %v3407 = vld [vmem:[#allocation2 + $0x68] sm:$0xf]
    %v3408 = vld [vmem:[#allocation2 + $0x6c] sm:$0xff]
    %v3409 = vld [vmem:[#allocation2 + $0x74] sm:$0xff]
    %v3410 = vld [vmem:[#allocation2 + $0x7c] sm:$0xff]
    %v3411 = vld [vmem:[#allocation2 + $0x84] sm:$0xff]
    %v3412 = vld [vmem:[#allocation2 + $0x8c] sm:$0xf]
    %v3413 = vld [vmem:[#allocation2 + $0x90] sm:$0xff]
    %v3414 = vld [vmem:[#allocation2 + $0x98] sm:$0xff]
    %v3415 = vld [vmem:[#allocation2 + $0xa0] sm:$0xff]
    %v3416 = vld [vmem:[#allocation2 + $0xa8] sm:$0xff]
    %v3417 = vld [vmem:[#allocation2 + $0xb0] sm:$0xf]
    %v3418 = vld [vmem:[#allocation2 + $0xb4] sm:$0xff]
    %v3419 = vld [vmem:[#allocation2 + $0xbc] sm:$0xff]
    %v3420 = vld [vmem:[#allocation2 + $0xc4] sm:$0xff]
    %v3421 = vld [vmem:[#allocation2 + $0xcc] sm:$0xff]
    %v3422 = vld [vmem:[#allocation2 + $0xd4] sm:$0xf]
    %v3423 = vld [vmem:[#allocation2 + $0xd8] sm:$0xff]
    %v3424 = vld [vmem:[#allocation2 + $0xe0] sm:$0xff]
    %v3425 = vld [vmem:[#allocation2 + $0xe8] sm:$0xff]
    %v3426 = vld [vmem:[#allocation2 + $0xf0] sm:$0xff]
    %v3427 = vld [vmem:[#allocation2 + $0xf8] sm:$0xf]
    %v3428 = vld [vmem:[#allocation2 + $0xfc] sm:$0xff]
    %v3429 = vld [vmem:[#allocation2 + $0x104] sm:$0xff]
    %v3430 = vld [vmem:[#allocation2 + $0x10c] sm:$0xff]
    %v3431 = vld [vmem:[#allocation2 + $0x114] sm:$0xff]
    %v3432 = vld [vmem:[#allocation2 + $0x11c] sm:$0xf]
    %v3433 = vld [vmem:[#allocation2 + $0x120] sm:$0xff]
    %v3434 = vld [vmem:[#allocation2 + $0x128] sm:$0xff]
    %v3435 = vld [vmem:[#allocation2 + $0x130] sm:$0xff]
    %v3436 = vld [vmem:[#allocation2 + $0x138] sm:$0xff]
    %v3437 = vld [vmem:[#allocation2 + $0x140] sm:$0xf]
    %v3438 = vld [vmem:[#allocation2 + $0x144] sm:$0xff]
    %v3439 = vld [vmem:[#allocation2 + $0x14c] sm:$0xff]
    %v3440 = vld [vmem:[#allocation2 + $0x154] sm:$0xff]
    %v3441 = vld [vmem:[#allocation2 + $0x15c] sm:$0xff]
    %v3442 = vld [vmem:[#allocation2 + $0x164] sm:$0xf]
    %v3443 = vld [vmem:[#allocation2 + $0x168] sm:$0xff]
    %v3444 = vld [vmem:[#allocation2 + $0x170] sm:$0xff]
    %v3445 = vld [vmem:[#allocation2 + $0x178] sm:$0xff]
    %v3446 = vld [vmem:[#allocation2 + $0x180] sm:$0xff]
    %v3447 = vld [vmem:[#allocation2 + $0x188] sm:$0xf]
    %v3448 = vld [vmem:[#allocation2 + $0x18c] sm:$0xff]
    %v3449 = vld [vmem:[#allocation2 + $0x194] sm:$0xff]
    %v3450 = vld [vmem:[#allocation2 + $0x19c] sm:$0xff]
    %v3451 = vld [vmem:[#allocation2 + $0x1a4] sm:$0xff]
    %v3452 = vld [vmem:[#allocation2 + $0x1ac] sm:$0xf]
    %v3453 = vld [vmem:[#allocation2 + $0x1b0] sm:$0xff]
    %v3454 = vld [vmem:[#allocation2 + $0x1b8] sm:$0xff]
    %v3455 = vld [vmem:[#allocation2 + $0x1c0] sm:$0xff]
    %v3456 = vld [vmem:[#allocation2 + $0x1c8] sm:$0xff]
    %v3457 = vld [vmem:[#allocation2 + $0x1d0] sm:$0xf]
    %v3458 = vld [vmem:[#allocation2 + $0x1d4] sm:$0xff]
    %v3459 = vld [vmem:[#allocation2 + $0x1dc] sm:$0xff]
    %v3460 = vld [vmem:[#allocation2 + $0x1e4] sm:$0xff]
    %v3461 = vld [vmem:[#allocation2 + $0x1ec] sm:$0xff]
    %v3462 = vld [vmem:[#allocation2 + $0x1f4] sm:$0xf]
    %v3463 = vld [vmem:[#allocation2 + $0x1f8] sm:$0xff]
    %v3464 = vld [vmem:[#allocation2 + $0x200] sm:$0xff]
    %v3465 = vld [vmem:[#allocation2 + $0x208] sm:$0xff]
    %v3466 = vld [vmem:[#allocation2 + $0x210] sm:$0xff]
    %v3467 = vld [vmem:[#allocation2 + $0x218] sm:$0xf]
    %v3468 = vld [vmem:[#allocation2 + $0x21c] sm:$0xff]
    %v3469 = vld [vmem:[#allocation2 + $0x224] sm:$0xff]
    %v3470 = vld [vmem:[#allocation2 + $0x22c] sm:$0xff]
    %v3471 = vld [vmem:[#allocation2 + $0x234] sm:$0xff]
    %v3472 = vld [vmem:[#allocation2 + $0x23c] sm:$0xf]
    %v3473 = vld [vmem:[#allocation2 + $0x240] sm:$0xff]
    %v3474 = vld [vmem:[#allocation2 + $0x248] sm:$0xff]
    %v3475 = vld [vmem:[#allocation2 + $0x250] sm:$0xff]
    %v3476 = vld [vmem:[#allocation2 + $0x258] sm:$0xff]
    %v3477 = vld [vmem:[#allocation2 + $0x260] sm:$0xf]
    %v3478 = vld [vmem:[#allocation2 + $0x264] sm:$0xff]
    %v3479 = vld [vmem:[#allocation2 + $0x26c] sm:$0xff]
    %v3480 = vld [vmem:[#allocation2 + $0x274] sm:$0xff]
    %v3481 = vld [vmem:[#allocation2 + $0x27c] sm:$0xff]
    %v3482 = vld [vmem:[#allocation2 + $0x284] sm:$0xf]
    %v3483 = vld [vmem:[#allocation2 + $0x288] sm:$0xff]
    %v3484 = vld [vmem:[#allocation2 + $0x290] sm:$0xff]
    %v3485 = vld [vmem:[#allocation2 + $0x298] sm:$0xff]
    %v3486 = vld [vmem:[#allocation2 + $0x2a0] sm:$0xff]
    %v3487 = vld [vmem:[#allocation2 + $0x2a8] sm:$0xf]
    %v3488 = vld [vmem:[#allocation2 + $0x2ac] sm:$0xff]
    %v3489 = vld [vmem:[#allocation2 + $0x2b4] sm:$0xff]
    %v3490 = vld [vmem:[#allocation2 + $0x2bc] sm:$0xff]
    %v3491 = vld [vmem:[#allocation2 + $0x2c4] sm:$0xff]
    %v3492 = vld [vmem:[#allocation2 + $0x2cc] sm:$0xf]
    %v3493 = vld [vmem:[#allocation2 + $0x2d0] sm:$0xff]
    %v3494 = vld [vmem:[#allocation2 + $0x2d8] sm:$0xff]
    %v3495 = vld [vmem:[#allocation2 + $0x2e0] sm:$0xff]
    %v3496 = vld [vmem:[#allocation2 + $0x2e8] sm:$0xff]
    %v3497 = vld [vmem:[#allocation2 + $0x2f0] sm:$0xf]
    %v3498 = vld [vmem:[#allocation2 + $0x2f4] sm:$0xff]
    %v3499 = vld [vmem:[#allocation2 + $0x2fc] sm:$0xff]
    %v3500 = vld [vmem:[#allocation2 + $0x304] sm:$0xff]
    %v3501 = vld [vmem:[#allocation2 + $0x30c] sm:$0xff]
    %v3502 = vld [vmem:[#allocation2 + $0x314] sm:$0xf]
    %v3503 = vld [vmem:[#allocation2 + $0x318] sm:$0xff]
    %v3504 = vld [vmem:[#allocation2 + $0x320] sm:$0xff]
    %v3505 = vld [vmem:[#allocation2 + $0x328] sm:$0xff]
    %v3506 = vld [vmem:[#allocation2 + $0x330] sm:$0xff]
    %v3507 = vld [vmem:[#allocation2 + $0x338] sm:$0xf]
    %v3508 = vld [vmem:[#allocation2 + $0x33c] sm:$0xff]
    %v3509 = vld [vmem:[#allocation2 + $0x344] sm:$0xff]
    %v3510 = vld [vmem:[#allocation2 + $0x34c] sm:$0xff]
    %v3511 = vld [vmem:[#allocation2 + $0x354] sm:$0xff]
    %v3512 = vld [vmem:[#allocation2 + $0x35c] sm:$0xf]
    %v3513 = vld [vmem:[#allocation2 + $0x360] sm:$0xff]
    %v3514 = vld [vmem:[#allocation2 + $0x368] sm:$0xff]
    %v3515 = vld [vmem:[#allocation2 + $0x370] sm:$0xff]
    %v3516 = vld [vmem:[#allocation2 + $0x378] sm:$0xff]
    %v3517 = vld [vmem:[#allocation2 + $0x380] sm:$0xf]
    %v3518 = vld [vmem:[#allocation2 + $0x384] sm:$0xff]
    %v3519 = vld [vmem:[#allocation2 + $0x38c] sm:$0xff]
    %v3520 = vld [vmem:[#allocation2 + $0x394] sm:$0xff]
    %v3521 = vld [vmem:[#allocation2 + $0x39c] sm:$0xff]
    %v3522 = vld [vmem:[#allocation2 + $0x3a4] sm:$0xf]
    %v3523 = vld [vmem:[#allocation2 + $0x3a8] sm:$0xff]
    %v3524 = vld [vmem:[#allocation2 + $0x3b0] sm:$0xff]
    %v3525 = vld [vmem:[#allocation2 + $0x3b8] sm:$0xff]
    %v3526 = vld [vmem:[#allocation2 + $0x3c0] sm:$0xff]
    %v3527 = vld [vmem:[#allocation2 + $0x3c8] sm:$0xf]
    %v3528 = vld [vmem:[#allocation2 + $0x3cc] sm:$0xff]
    %v3529 = vld [vmem:[#allocation2 + $0x3d4] sm:$0xff]
    %v3530 = vld [vmem:[#allocation2 + $0x3dc] sm:$0xff]
    %v3531 = vld [vmem:[#allocation2 + $0x3e4] sm:$0xff]
    %v3532 = vld [vmem:[#allocation2 + $0x3ec] sm:$0xf]
    %v3533 = vld [vmem:[#allocation2 + $0x3f0] sm:$0xff]
    %v3534 = vld [vmem:[#allocation2 + $0x3f8] sm:$0xff]
    %v3535 = vld [vmem:[#allocation2 + $0x400] sm:$0xff]
    %v3536 = vld [vmem:[#allocation2 + $0x408] sm:$0xff]
    %v3537 = vld [vmem:[#allocation2 + $0x410] sm:$0xf]
    %v3538 = vld [vmem:[#allocation2 + $0x414] sm:$0xff]
    %v3539 = vld [vmem:[#allocation2 + $0x41c] sm:$0xff]
    %v3540 = vld [vmem:[#allocation2 + $0x424] sm:$0xff]
    %v3541 = vld [vmem:[#allocation2 + $0x42c] sm:$0xff]
    %v3542 = vld [vmem:[#allocation2 + $0x434] sm:$0xf]
    %v3543 = vld [vmem:[#allocation2 + $0x438] sm:$0xff]
    %v3544 = vld [vmem:[#allocation2 + $0x440] sm:$0xff]
    %v3545 = vld [vmem:[#allocation2 + $0x448] sm:$0xff]
    %v3546 = vld [vmem:[#allocation2 + $0x450] sm:$0xff]
    %v3547 = vld [vmem:[#allocation2 + $0x458] sm:$0xf]
    %v3548 = vld [vmem:[#allocation2 + $0x45c] sm:$0xff]
    %v3549 = vld [vmem:[#allocation2 + $0x464] sm:$0xff]
    %v3550 = vld [vmem:[#allocation2 + $0x46c] sm:$0xff]
    %v3551 = vld [vmem:[#allocation2 + $0x474] sm:$0xff]
    %v3552 = vld [vmem:[#allocation2 + $0x47c] sm:$0xf]
    %v3553 = vld [vmem:[#allocation2 + $0x480] sm:$0xff]
    %v3554 = vld [vmem:[#allocation2 + $0x488] sm:$0xff]
    %v3555 = vld [vmem:[#allocation2 + $0x490] sm:$0xff]
    %v3556 = vld [vmem:[#allocation2 + $0x498] sm:$0xff]
    %v3557 = vld [vmem:[#allocation2 + $0x4a0] sm:$0xf]
    %v3558 = vld [vmem:[#allocation2 + $0x4a4] sm:$0xff]
    %v3559 = vld [vmem:[#allocation2 + $0x4ac] sm:$0xff]
    %v3560 = vld [vmem:[#allocation2 + $0x4b4] sm:$0xff]
    %v3561 = vld [vmem:[#allocation2 + $0x4bc] sm:$0xff]
    %v3562 = vld [vmem:[#allocation2 + $0x4c4] sm:$0xf]
    %v3563 = vld [vmem:[#allocation2 + $0x4c8] sm:$0xff]
    %v3564 = vld [vmem:[#allocation2 + $0x4d0] sm:$0xff]
    %v3565 = vld [vmem:[#allocation2 + $0x4d8] sm:$0xff]
    %v3566 = vld [vmem:[#allocation2 + $0x4e0] sm:$0xff]
    %v3567 = vld [vmem:[#allocation2 + $0x4e8] sm:$0xf]
    %v3568 = vld [vmem:[#allocation2 + $0x4ec] sm:$0xff]
    %v3569 = vld [vmem:[#allocation2 + $0x4f4] sm:$0xff]
    %v3570 = vld [vmem:[#allocation2 + $0x4fc] sm:$0xff]
    %v3571 = vld [vmem:[#allocation2 + $0x504] sm:$0xff]
    %v3572 = vld [vmem:[#allocation2 + $0x50c] sm:$0xf]
    %v3573 = vld [vmem:[#allocation2 + $0x510] sm:$0xff]
    %v3574 = vld [vmem:[#allocation2 + $0x518] sm:$0xff]
    %v3575 = vld [vmem:[#allocation2 + $0x520] sm:$0xff]
    %v3576 = vld [vmem:[#allocation2 + $0x528] sm:$0xff]
    %v3577 = vld [vmem:[#allocation2 + $0x530] sm:$0xf]
    %v3578 = vld [vmem:[#allocation2 + $0x534] sm:$0xff]
    %v3579 = vld [vmem:[#allocation2 + $0x53c] sm:$0xff]
    %v3580 = vld [vmem:[#allocation2 + $0x544] sm:$0xff]
    %v3581 = vld [vmem:[#allocation2 + $0x54c] sm:$0xff]
    %v3582 = vld [vmem:[#allocation2 + $0x554] sm:$0xf]
    %v3583 = vld [vmem:[#allocation2 + $0x558] sm:$0xff]
    %v3584 = vld [vmem:[#allocation2 + $0x560] sm:$0xff]
    %v3585 = vld [vmem:[#allocation2 + $0x568] sm:$0xff]
    %v3586 = vld [vmem:[#allocation2 + $0x570] sm:$0xff]
    %v3587 = vld [vmem:[#allocation2 + $0x578] sm:$0xf]
    %v3588 = vld [vmem:[#allocation2 + $0x57c] sm:$0xff]
    %v3589 = vld [vmem:[#allocation2 + $0x584] sm:$0xff]
    %v3590 = vld [vmem:[#allocation2 + $0x58c] sm:$0xff]
    %v3591 = vld [vmem:[#allocation2 + $0x594] sm:$0xff]
    %v3592 = vld [vmem:[#allocation2 + $0x59c] sm:$0xf]
    %v3593 = vld [vmem:[#allocation2 + $0x5a0] sm:$0xff]
    %v3594 = vld [vmem:[#allocation2 + $0x5a8] sm:$0xff]
    %v3595 = vld [vmem:[#allocation2 + $0x5b0] sm:$0xff]
    %v3596 = vld [vmem:[#allocation2 + $0x5b8] sm:$0xff]
    %v3597 = vld [vmem:[#allocation2 + $0x5c0] sm:$0xf]
    %v3598 = vld [vmem:[#allocation2 + $0x5c4] sm:$0xff]
    %v3599 = vld [vmem:[#allocation2 + $0x5cc] sm:$0xff]
    %v3600 = vld [vmem:[#allocation2 + $0x5d4] sm:$0xff]
    %v3601 = vld [vmem:[#allocation2 + $0x5dc] sm:$0xff]
    %v3602 = vld [vmem:[#allocation2 + $0x5e4] sm:$0xf]
    %v3603 = vld [vmem:[#allocation2 + $0x5e8] sm:$0xff]
    %v3604 = vld [vmem:[#allocation2 + $0x5f0] sm:$0xff]
    %v3605 = vld [vmem:[#allocation2 + $0x5f8] sm:$0xff]
    %v3606 = vld [vmem:[#allocation2 + $0x600] sm:$0xff]
    %v3607 = vld [vmem:[#allocation2 + $0x608] sm:$0xf]
    %v3608 = vld [vmem:[#allocation2 + $0x60c] sm:$0xff]
    %v3609 = vld [vmem:[#allocation2 + $0x614] sm:$0xff]
    %v3610 = vld [vmem:[#allocation2 + $0x61c] sm:$0xff]
    %v3611 = vld [vmem:[#allocation2 + $0x624] sm:$0xff]
    %v3612 = vld [vmem:[#allocation2 + $0x62c] sm:$0xf]
    %v3613 = vld [vmem:[#allocation2 + $0x630] sm:$0xff]
    %v3614 = vld [vmem:[#allocation2 + $0x638] sm:$0xff]
    %v3615 = vld [vmem:[#allocation2 + $0x640] sm:$0xff]
    %v3616 = vld [vmem:[#allocation2 + $0x648] sm:$0xff]
    %v3617 = vld [vmem:[#allocation2 + $0x650] sm:$0xf]
    %v3618 = vld [vmem:[#allocation2 + $0x654] sm:$0xff]
    %v3619 = vld [vmem:[#allocation2 + $0x65c] sm:$0xff]
    %v3620 = vld [vmem:[#allocation2 + $0x664] sm:$0xff]
    %v3621 = vld [vmem:[#allocation2 + $0x66c] sm:$0xff]
    %v3622 = vld [vmem:[#allocation2 + $0x674] sm:$0xf]
    %v3623 = vld [vmem:[#allocation2 + $0x678] sm:$0xff]
    %v3624 = vld [vmem:[#allocation2 + $0x680] sm:$0xff]
    %v3625 = vld [vmem:[#allocation2 + $0x688] sm:$0xff]
    %v3626 = vld [vmem:[#allocation2 + $0x690] sm:$0xff]
    %v3627 = vld [vmem:[#allocation2 + $0x698] sm:$0xf]
    %v3628 = vld [vmem:[#allocation2 + $0x69c] sm:$0xff]
    %v3629 = vld [vmem:[#allocation2 + $0x6a4] sm:$0xff]
    %v3630 = vld [vmem:[#allocation2 + $0x6ac] sm:$0xff]
    %v3631 = vld [vmem:[#allocation2 + $0x6b4] sm:$0xff]
    %v3632 = vld [vmem:[#allocation2 + $0x6bc] sm:$0xf]
    %v3633 = vld [vmem:[#allocation2 + $0x6c0] sm:$0xff]
    %v3634 = vld [vmem:[#allocation2 + $0x6c8] sm:$0xff]
    %v3635 = vld [vmem:[#allocation2 + $0x6d0] sm:$0xff]
    %v3636 = vld [vmem:[#allocation2 + $0x6d8] sm:$0xff]
    %v3637 = vld [vmem:[#allocation2 + $0x6e0] sm:$0xf]
    %v3638 = vld [vmem:[#allocation2 + $0x6e4] sm:$0xff]
    %v3639 = vld [vmem:[#allocation2 + $0x6ec] sm:$0xff]
    %v3640 = vld [vmem:[#allocation2 + $0x6f4] sm:$0xff]
    %v3641 = vld [vmem:[#allocation2 + $0x6fc] sm:$0xff]
    %v3642 = vld [vmem:[#allocation2 + $0x704] sm:$0xf]
    %v3643 = vld [vmem:[#allocation2 + $0x708] sm:$0xff]
    %v3644 = vld [vmem:[#allocation2 + $0x710] sm:$0xff]
    %v3645 = vld [vmem:[#allocation2 + $0x718] sm:$0xff]
    %v3646 = vld [vmem:[#allocation2 + $0x720] sm:$0xff]
    %v3647 = vld [vmem:[#allocation2 + $0x728] sm:$0xf]
    %v3648 = vld [vmem:[#allocation2 + $0x72c] sm:$0xff]
    %v3649 = vld [vmem:[#allocation2 + $0x734] sm:$0xff]
    %v3650 = vld [vmem:[#allocation2 + $0x73c] sm:$0xff]
    %v3651 = vld [vmem:[#allocation2 + $0x744] sm:$0xff]
    %v3652 = vld [vmem:[#allocation2 + $0x74c] sm:$0xf]
    %v3653 = vld [vmem:[#allocation2 + $0x750] sm:$0xff]
    %v3654 = vld [vmem:[#allocation2 + $0x758] sm:$0xff]
    %v3655 = vld [vmem:[#allocation2 + $0x760] sm:$0xff]
    %v3656 = vld [vmem:[#allocation2 + $0x768] sm:$0xff]
    %v3657 = vld [vmem:[#allocation2 + $0x770] sm:$0xf]
    %v3658 = vld [vmem:[#allocation2 + $0x774] sm:$0xff]
    %v3659 = vld [vmem:[#allocation2 + $0x77c] sm:$0xff]
    %v3660 = vld [vmem:[#allocation2 + $0x784] sm:$0xff]
    %v3661 = vld [vmem:[#allocation2 + $0x78c] sm:$0xff]
    %v3662 = vld [vmem:[#allocation2 + $0x794] sm:$0xf]
    %v3663 = vld [vmem:[#allocation2 + $0x798] sm:$0xff]
    %v3664 = vld [vmem:[#allocation2 + $0x7a0] sm:$0xff]
    %v3665 = vld [vmem:[#allocation2 + $0x7a8] sm:$0xff]
    %v3666 = vld [vmem:[#allocation2 + $0x7b0] sm:$0xff]
    %v3667 = vld [vmem:[#allocation2 + $0x7b8] sm:$0xf]
    %v3668 = vld [vmem:[#allocation2 + $0x7bc] sm:$0xff]
    %v3669 = vld [vmem:[#allocation2 + $0x7c4] sm:$0xff]
    %v3670 = vld [vmem:[#allocation2 + $0x7cc] sm:$0xff]
    %v3671 = vld [vmem:[#allocation2 + $0x7d4] sm:$0xff]
    %v3672 = vld [vmem:[#allocation2 + $0x7dc] sm:$0xf]
    %v3673 = vld [vmem:[#allocation2 + $0x7e0] sm:$0xff]
    %v3674 = vld [vmem:[#allocation2 + $0x7e8] sm:$0xff]
    %v3675 = vld [vmem:[#allocation2 + $0x7f0] sm:$0xff]
    %v3676 = vld [vmem:[#allocation2 + $0x7f8] sm:$0xff]
    %v3677 = vld [vmem:[#allocation2 + $0x800] sm:$0xf]
    %v3678 = vld [vmem:[#allocation2 + $0x804] sm:$0xff]
    %v3679 = vld [vmem:[#allocation2 + $0x80c] sm:$0xff]
    %v3680 = vld [vmem:[#allocation2 + $0x814] sm:$0xff]
    %v3681 = vld [vmem:[#allocation2 + $0x81c] sm:$0xff]
    %v3682 = vld [vmem:[#allocation2 + $0x824] sm:$0xf]
    %v3683 = vld [vmem:[#allocation2 + $0x828] sm:$0xff]
    %v3684 = vld [vmem:[#allocation2 + $0x830] sm:$0xff]
    %v3685 = vld [vmem:[#allocation2 + $0x838] sm:$0xff]
    %v3686 = vld [vmem:[#allocation2 + $0x840] sm:$0xff]
    %v3687 = vld [vmem:[#allocation2 + $0x848] sm:$0xf]
    %v3688 = vld [vmem:[#allocation2 + $0x84c] sm:$0xff]
    %v3689 = vld [vmem:[#allocation2 + $0x854] sm:$0xff]
    %v3690 = vld [vmem:[#allocation2 + $0x85c] sm:$0xff]
    %v3691 = vld [vmem:[#allocation2 + $0x864] sm:$0xff]
    %v3692 = vld [vmem:[#allocation2 + $0x86c] sm:$0xf]
    %v3693 = vld [vmem:[#allocation2 + $0x870] sm:$0xff]
    %v3694 = vld [vmem:[#allocation2 + $0x878] sm:$0xff]
    %v3695 = vld [vmem:[#allocation2 + $0x880] sm:$0xff]
    %v3696 = vld [vmem:[#allocation2 + $0x888] sm:$0xff]
    %v3697 = vld [vmem:[#allocation2 + $0x890] sm:$0xf]
    %v3698 = vld [vmem:[#allocation2 + $0x894] sm:$0xff]
    %v3699 = vld [vmem:[#allocation2 + $0x89c] sm:$0xff]
    %v3700 = vld [vmem:[#allocation2 + $0x8a4] sm:$0xff]
    %v3701 = vld [vmem:[#allocation2 + $0x8ac] sm:$0xff]
    %v3702 = vld [vmem:[#allocation2 + $0x8b4] sm:$0xf]
    %v3703 = vld [vmem:[#allocation2 + $0x8b8] sm:$0xff]
    %v3704 = vld [vmem:[#allocation2 + $0x8c0] sm:$0xff]
    %v3705 = vld [vmem:[#allocation2 + $0x8c8] sm:$0xff]
    %v3706 = vld [vmem:[#allocation2 + $0x8d0] sm:$0xff]
    %v3707 = vld [vmem:[#allocation2 + $0x8d8] sm:$0xf]
    %v3708 = vld [vmem:[#allocation2 + $0x8dc] sm:$0xff]
    %v3709 = vld [vmem:[#allocation2 + $0x8e4] sm:$0xff]
    %v3710 = vld [vmem:[#allocation2 + $0x8ec] sm:$0xff]
    %v3711 = vld [vmem:[#allocation2 + $0x8f4] sm:$0xff]
    %v3712 = vld [vmem:[#allocation2 + $0x8fc] sm:$0xf]
    %v3713 = vld [vmem:[#allocation8] sm:$0xf]
    %v3714 = vld [vmem:[#allocation8 + $0x4] sm:$0xf]
    %v3715 = vld [vmem:[#allocation8 + $0x8] sm:$0xf]
    %v3716 = vld [vmem:[#allocation8 + $0xc] sm:$0xf]
    %v3717 = vld [vmem:[#allocation8 + $0x10] sm:$0xf]
    %v3718 = vld [vmem:[#allocation8 + $0x14] sm:$0xf]
    %v3719 = vld [vmem:[#allocation8 + $0x18] sm:$0xf]
    %v3720 = vld [vmem:[#allocation8 + $0x1c] sm:$0xf]
    %v3721 = vld [vmem:[#allocation8 + $0x20] sm:$0xf]
    %v3722 = vld [vmem:[#allocation8 + $0x24] sm:$0xf]
    %v3723 = vld [vmem:[#allocation8 + $0x28] sm:$0xf]
    %v3724 = vld [vmem:[#allocation8 + $0x2c] sm:$0xf]
    %v3725 = vld [vmem:[#allocation8 + $0x30] sm:$0xf]
    %v3726 = vld [vmem:[#allocation8 + $0x34] sm:$0xf]
    %v3727 = vld [vmem:[#allocation8 + $0x38] sm:$0xf]
    %v3728 = vld [vmem:[#allocation8 + $0x3c] sm:$0xf]
    %v3729 = vld [vmem:[#allocation8 + $0x40] sm:$0xf]
    %v3730 = vld [vmem:[#allocation8 + $0x44] sm:$0xf]
    %v3731 = vld [vmem:[#allocation8 + $0x48] sm:$0xf]
    %v3732 = vld [vmem:[#allocation8 + $0x4c] sm:$0xf]
    %v3733 = vld [vmem:[#allocation8 + $0x50] sm:$0xf]
    %v3734 = vld [vmem:[#allocation8 + $0x54] sm:$0xf]
    %v3735 = vld [vmem:[#allocation8 + $0x58] sm:$0xf]
    %v3736 = vld [vmem:[#allocation8 + $0x5c] sm:$0xf]
    %v3737 = vld [vmem:[#allocation8 + $0x60] sm:$0xf]
    %v3738 = vld [vmem:[#allocation8 + $0x64] sm:$0xf]
    %v3739 = vld [vmem:[#allocation8 + $0x68] sm:$0xf]
    %v3740 = vld [vmem:[#allocation8 + $0x6c] sm:$0xf]
    %v3741 = vld [vmem:[#allocation8 + $0x70] sm:$0xf]
    %v3742 = vld [vmem:[#allocation8 + $0x74] sm:$0xf]
    %v3743 = vld [vmem:[#allocation8 + $0x78] sm:$0xf]
    %v3744 = vld [vmem:[#allocation8 + $0x7c] sm:$0xf]
    %v3745 = vld [vmem:[#allocation8 + $0x80] sm:$0xf]
    %v3746 = vld [vmem:[#allocation8 + $0x84] sm:$0xf]
    %v3747 = vld [vmem:[#allocation8 + $0x88] sm:$0xf]
    %v3748 = vld [vmem:[#allocation8 + $0x8c] sm:$0xf]
    %v3749 = vld [vmem:[#allocation8 + $0x90] sm:$0xf]
    %v3750 = vld [vmem:[#allocation8 + $0x94] sm:$0xf]
    %v3751 = vld [vmem:[#allocation8 + $0x98] sm:$0xf]
    %v3752 = vld [vmem:[#allocation8 + $0x9c] sm:$0xf]
    %v3753 = vld [vmem:[#allocation8 + $0xa0] sm:$0xf]
    %v3754 = vld [vmem:[#allocation8 + $0xa4] sm:$0xf]
    %v3755 = vld [vmem:[#allocation8 + $0xa8] sm:$0xf]
    %v3756 = vld [vmem:[#allocation8 + $0xac] sm:$0xf]
    %v3757 = vld [vmem:[#allocation8 + $0xb0] sm:$0xf]
    %v3758 = vld [vmem:[#allocation8 + $0xb4] sm:$0xf]
    %v3759 = vld [vmem:[#allocation8 + $0xb8] sm:$0xf]
    %v3760 = vld [vmem:[#allocation8 + $0xbc] sm:$0xf]
    %v3761 = vld [vmem:[#allocation8 + $0xc0] sm:$0xf]
    %v3762 = vld [vmem:[#allocation8 + $0xc4] sm:$0xf]
    %v3763 = vld [vmem:[#allocation8 + $0xc8] sm:$0xf]
    %v3764 = vld [vmem:[#allocation8 + $0xcc] sm:$0xf]
    %v3765 = vld [vmem:[#allocation8 + $0xd0] sm:$0xf]
    %v3766 = vld [vmem:[#allocation8 + $0xd4] sm:$0xf]
    %v3767 = vld [vmem:[#allocation8 + $0xd8] sm:$0xf]
    %v3768 = vld [vmem:[#allocation8 + $0xdc] sm:$0xf]
    %v3769 = vld [vmem:[#allocation8 + $0xe0] sm:$0xf]
    %v3770 = vld [vmem:[#allocation8 + $0xe4] sm:$0xf]
    %v3771 = vld [vmem:[#allocation8 + $0xe8] sm:$0xf]
    %v3772 = vld [vmem:[#allocation8 + $0xec] sm:$0xf]
    %v3773 = vld [vmem:[#allocation8 + $0xf0] sm:$0xf]
    %v3774 = vld [vmem:[#allocation8 + $0xf4] sm:$0xf]
    %v3775 = vld [vmem:[#allocation8 + $0xf8] sm:$0xf]
    %v3776 = vld [vmem:[#allocation8 + $0xfc] sm:$0xf]
    %v3777 = vld [vmem:[#allocation8 + $0x100] sm:$0xf]
    %v3778 = vld [vmem:[#allocation8 + $0x104] sm:$0xf]
    %v3779 = vld [vmem:[#allocation8 + $0x108] sm:$0xf]
    %v3780 = vld [vmem:[#allocation8 + $0x10c] sm:$0xf]
    %v3781 = vld [vmem:[#allocation8 + $0x110] sm:$0xf]
    %v3782 = vld [vmem:[#allocation8 + $0x114] sm:$0xf]
    %v3783 = vld [vmem:[#allocation8 + $0x118] sm:$0xf]
    %v3784 = vld [vmem:[#allocation8 + $0x11c] sm:$0xf]
    %v3785 = vld [vmem:[#allocation8 + $0x120] sm:$0xf]
    %v3786 = vld [vmem:[#allocation8 + $0x124] sm:$0xf]
    %v3787 = vld [vmem:[#allocation8 + $0x128] sm:$0xf]
    %v3788 = vld [vmem:[#allocation8 + $0x12c] sm:$0xf]
    %v3789 = vld [vmem:[#allocation8 + $0x130] sm:$0xf]
    %v3790 = vld [vmem:[#allocation8 + $0x134] sm:$0xf]
    %v3791 = vld [vmem:[#allocation8 + $0x138] sm:$0xf]
    %v3792 = vld [vmem:[#allocation8 + $0x13c] sm:$0xf]
    %v3793 = vld [vmem:[#allocation8 + $0x140] sm:$0xf]
    %v3794 = vld [vmem:[#allocation8 + $0x144] sm:$0xf]
    %v3795 = vld [vmem:[#allocation8 + $0x148] sm:$0xf]
    %v3796 = vld [vmem:[#allocation8 + $0x14c] sm:$0xf]
    %v3797 = vld [vmem:[#allocation8 + $0x150] sm:$0xf]
    %v3798 = vld [vmem:[#allocation8 + $0x154] sm:$0xf]
    %v3799 = vld [vmem:[#allocation8 + $0x158] sm:$0xf]
    %v3800 = vld [vmem:[#allocation8 + $0x15c] sm:$0xf]
    %v3801 = vld [vmem:[#allocation8 + $0x160] sm:$0xf]
    %v3802 = vld [vmem:[#allocation8 + $0x164] sm:$0xf]
    %v3803 = vld [vmem:[#allocation8 + $0x168] sm:$0xf]
    %v3804 = vld [vmem:[#allocation8 + $0x16c] sm:$0xf]
    %v3805 = vld [vmem:[#allocation8 + $0x170] sm:$0xf]
    %v3806 = vld [vmem:[#allocation8 + $0x174] sm:$0xf]
    %v3807 = vld [vmem:[#allocation8 + $0x178] sm:$0xf]
    %v3808 = vld [vmem:[#allocation8 + $0x17c] sm:$0xf]
    %v3809 = vld [vmem:[#allocation8 + $0x180] sm:$0xf]
    %v3810 = vld [vmem:[#allocation8 + $0x184] sm:$0xf]
    %v3811 = vld [vmem:[#allocation8 + $0x188] sm:$0xf]
    %v3812 = vld [vmem:[#allocation8 + $0x18c] sm:$0xf]
    %v3813 = vld [vmem:[#allocation8 + $0x190] sm:$0xf]
    %v3814 = vld [vmem:[#allocation8 + $0x194] sm:$0xf]
    %v3815 = vld [vmem:[#allocation8 + $0x198] sm:$0xf]
    %v3816 = vld [vmem:[#allocation8 + $0x19c] sm:$0xf]
    %v3817 = vld [vmem:[#allocation8 + $0x1a0] sm:$0xf]
    %v3818 = vld [vmem:[#allocation8 + $0x1a4] sm:$0xf]
    %v3819 = vld [vmem:[#allocation8 + $0x1a8] sm:$0xf]
    %v3820 = vld [vmem:[#allocation8 + $0x1ac] sm:$0xf]
    %v3821 = vld [vmem:[#allocation8 + $0x1b0] sm:$0xf]
    %v3822 = vld [vmem:[#allocation8 + $0x1b4] sm:$0xf]
    %v3823 = vld [vmem:[#allocation8 + $0x1b8] sm:$0xf]
    %v3824 = vld [vmem:[#allocation8 + $0x1bc] sm:$0xf]
    %v3825 = vld [vmem:[#allocation8 + $0x1c0] sm:$0xf]
    %v3826 = vld [vmem:[#allocation8 + $0x1c4] sm:$0xf]
    %v3827 = vld [vmem:[#allocation8 + $0x1c8] sm:$0xf]
    %v3828 = vld [vmem:[#allocation8 + $0x1cc] sm:$0xf]
    %v3829 = vld [vmem:[#allocation8 + $0x1d0] sm:$0xf]
    %v3830 = vld [vmem:[#allocation8 + $0x1d4] sm:$0xf]
    %v3831 = vld [vmem:[#allocation8 + $0x1d8] sm:$0xf]
    %v3832 = vld [vmem:[#allocation8 + $0x1dc] sm:$0xf]
    %v3833 = vld [vmem:[#allocation8 + $0x1e0] sm:$0xf]
    %v3834 = vld [vmem:[#allocation8 + $0x1e4] sm:$0xf]
    %v3835 = vld [vmem:[#allocation8 + $0x1e8] sm:$0xf]
    %v3836 = vld [vmem:[#allocation8 + $0x1ec] sm:$0xf]
    %v3837 = vld [vmem:[#allocation8 + $0x1f0] sm:$0xf]
    %v3838 = vld [vmem:[#allocation8 + $0x1f4] sm:$0xf]
    %v3839 = vld [vmem:[#allocation8 + $0x1f8] sm:$0xf]
    %v3840 = vld [vmem:[#allocation8 + $0x1fc] sm:$0xf]
    %v3841 = vld [vmem:[#allocation8 + $0x200] sm:$0xf]
    %v3842 = vld [vmem:[#allocation8 + $0x204] sm:$0xf]
    %v3843 = vld [vmem:[#allocation8 + $0x208] sm:$0xf]
    %v3844 = vld [vmem:[#allocation8 + $0x20c] sm:$0xf]
    %v3845 = vld [vmem:[#allocation8 + $0x210] sm:$0xf]
    %v3846 = vld [vmem:[#allocation8 + $0x214] sm:$0xf]
    %v3847 = vld [vmem:[#allocation8 + $0x218] sm:$0xf]
    %v3848 = vld [vmem:[#allocation8 + $0x21c] sm:$0xf]
    %v3849 = vld [vmem:[#allocation8 + $0x220] sm:$0xf]
    %v3850 = vld [vmem:[#allocation8 + $0x224] sm:$0xf]
    %v3851 = vld [vmem:[#allocation8 + $0x228] sm:$0xf]
    %v3852 = vld [vmem:[#allocation8 + $0x22c] sm:$0xf]
    %v3853 = vld [vmem:[#allocation8 + $0x230] sm:$0xf]
    %v3854 = vld [vmem:[#allocation8 + $0x234] sm:$0xf]
    %v3855 = vld [vmem:[#allocation8 + $0x238] sm:$0xf]
    %v3856 = vld [vmem:[#allocation8 + $0x23c] sm:$0xf]
    %v4177 = vunpack.c.l.b16 %v3393
    %v4178 = vunpack.c.h.b16 %v3393
    %v4179 = vunpack.c.l.b16 %v3394
    %v4180 = vunpack.c.h.b16 %v3394
    %v4181 = vunpack.c.l.b16 %v3395
    %v4182 = vunpack.c.h.b16 %v3395
    %v4183 = vunpack.c.l.b16 %v3396
    %v4184 = vunpack.c.h.b16 %v3396
    %v4185 = vunpack.c.l.b16 %v3397
    %v4186 = vunpack.c.l.b16 %v3398
    %v4187 = vunpack.c.h.b16 %v3398
    %v4188 = vunpack.c.l.b16 %v3399
    %v4189 = vunpack.c.h.b16 %v3399
    %v4190 = vunpack.c.l.b16 %v3400
    %v4191 = vunpack.c.h.b16 %v3400
    %v4192 = vunpack.c.l.b16 %v3401
    %v4193 = vunpack.c.h.b16 %v3401
    %v4194 = vunpack.c.l.b16 %v3402
    %v4195 = vunpack.c.l.b16 %v3403
    %v4196 = vunpack.c.h.b16 %v3403
    %v4197 = vunpack.c.l.b16 %v3404
    %v4198 = vunpack.c.h.b16 %v3404
    %v4199 = vunpack.c.l.b16 %v3405
    %v4200 = vunpack.c.h.b16 %v3405
    %v4201 = vunpack.c.l.b16 %v3406
    %v4202 = vunpack.c.h.b16 %v3406
    %v4203 = vunpack.c.l.b16 %v3407
    %v4204 = vunpack.c.l.b16 %v3408
    %v4205 = vunpack.c.h.b16 %v3408
    %v4206 = vunpack.c.l.b16 %v3409
    %v4207 = vunpack.c.h.b16 %v3409
    %v4208 = vunpack.c.l.b16 %v3410
    %v4209 = vunpack.c.h.b16 %v3410
    %v4210 = vunpack.c.l.b16 %v3411
    %v4211 = vunpack.c.h.b16 %v3411
    %v4212 = vunpack.c.l.b16 %v3412
    %v4213 = vunpack.c.l.b16 %v3413
    %v4214 = vunpack.c.h.b16 %v3413
    %v4215 = vunpack.c.l.b16 %v3414
    %v4216 = vunpack.c.h.b16 %v3414
    %v4217 = vunpack.c.l.b16 %v3415
    %v4218 = vunpack.c.h.b16 %v3415
    %v4219 = vunpack.c.l.b16 %v3416
    %v4220 = vunpack.c.h.b16 %v3416
    %v4221 = vunpack.c.l.b16 %v3417
    %v4222 = vunpack.c.l.b16 %v3418
    %v4223 = vunpack.c.h.b16 %v3418
    %v4224 = vunpack.c.l.b16 %v3419
    %v4225 = vunpack.c.h.b16 %v3419
    %v4226 = vunpack.c.l.b16 %v3420
    %v4227 = vunpack.c.h.b16 %v3420
    %v4228 = vunpack.c.l.b16 %v3421
    %v4229 = vunpack.c.h.b16 %v3421
    %v4230 = vunpack.c.l.b16 %v3422
    %v4231 = vunpack.c.l.b16 %v3423
    %v4232 = vunpack.c.h.b16 %v3423
    %v4233 = vunpack.c.l.b16 %v3424
    %v4234 = vunpack.c.h.b16 %v3424
    %v4235 = vunpack.c.l.b16 %v3425
    %v4236 = vunpack.c.h.b16 %v3425
    %v4237 = vunpack.c.l.b16 %v3426
    %v4238 = vunpack.c.h.b16 %v3426
    %v4239 = vunpack.c.l.b16 %v3427
    %v4240 = vunpack.c.l.b16 %v3428
    %v4241 = vunpack.c.h.b16 %v3428
    %v4242 = vunpack.c.l.b16 %v3429
    %v4243 = vunpack.c.h.b16 %v3429
    %v4244 = vunpack.c.l.b16 %v3430
    %v4245 = vunpack.c.h.b16 %v3430
    %v4246 = vunpack.c.l.b16 %v3431
    %v4247 = vunpack.c.h.b16 %v3431
    %v4248 = vunpack.c.l.b16 %v3432
    %v4249 = vunpack.c.l.b16 %v3433
    %v4250 = vunpack.c.h.b16 %v3433
    %v4251 = vunpack.c.l.b16 %v3434
    %v4252 = vunpack.c.h.b16 %v3434
    %v4253 = vunpack.c.l.b16 %v3435
    %v4254 = vunpack.c.h.b16 %v3435
    %v4255 = vunpack.c.l.b16 %v3436
    %v4256 = vunpack.c.h.b16 %v3436
    %v4257 = vunpack.c.l.b16 %v3437
    %v4258 = vunpack.c.l.b16 %v3438
    %v4259 = vunpack.c.h.b16 %v3438
    %v4260 = vunpack.c.l.b16 %v3439
    %v4261 = vunpack.c.h.b16 %v3439
    %v4262 = vunpack.c.l.b16 %v3440
    %v4263 = vunpack.c.h.b16 %v3440
    %v4264 = vunpack.c.l.b16 %v3441
    %v4265 = vunpack.c.h.b16 %v3441
    %v4266 = vunpack.c.l.b16 %v3442
    %v4267 = vunpack.c.l.b16 %v3443
    %v4268 = vunpack.c.h.b16 %v3443
    %v4269 = vunpack.c.l.b16 %v3444
    %v4270 = vunpack.c.h.b16 %v3444
    %v4271 = vunpack.c.l.b16 %v3445
    %v4272 = vunpack.c.h.b16 %v3445
    %v4273 = vunpack.c.l.b16 %v3446
    %v4274 = vunpack.c.h.b16 %v3446
    %v4275 = vunpack.c.l.b16 %v3447
    %v4276 = vunpack.c.l.b16 %v3448
    %v4277 = vunpack.c.h.b16 %v3448
    %v4278 = vunpack.c.l.b16 %v3449
    %v4279 = vunpack.c.h.b16 %v3449
    %v4280 = vunpack.c.l.b16 %v3450
    %v4281 = vunpack.c.h.b16 %v3450
    %v4282 = vunpack.c.l.b16 %v3451
    %v4283 = vunpack.c.h.b16 %v3451
    %v4284 = vunpack.c.l.b16 %v3452
    %v4285 = vunpack.c.l.b16 %v3453
    %v4286 = vunpack.c.h.b16 %v3453
    %v4287 = vunpack.c.l.b16 %v3454
    %v4288 = vunpack.c.h.b16 %v3454
    %v4289 = vunpack.c.l.b16 %v3455
    %v4290 = vunpack.c.h.b16 %v3455
    %v4291 = vunpack.c.l.b16 %v3456
    %v4292 = vunpack.c.h.b16 %v3456
    %v4293 = vunpack.c.l.b16 %v3457
    %v4294 = vunpack.c.l.b16 %v3458
    %v4295 = vunpack.c.h.b16 %v3458
    %v4296 = vunpack.c.l.b16 %v3459
    %v4297 = vunpack.c.h.b16 %v3459
    %v4298 = vunpack.c.l.b16 %v3460
    %v4299 = vunpack.c.h.b16 %v3460
    %v4300 = vunpack.c.l.b16 %v3461
    %v4301 = vunpack.c.h.b16 %v3461
    %v4302 = vunpack.c.l.b16 %v3462
    %v4303 = vunpack.c.l.b16 %v3463
    %v4304 = vunpack.c.h.b16 %v3463
    %v4305 = vunpack.c.l.b16 %v3464
    %v4306 = vunpack.c.h.b16 %v3464
    %v4307 = vunpack.c.l.b16 %v3465
    %v4308 = vunpack.c.h.b16 %v3465
    %v4309 = vunpack.c.l.b16 %v3466
    %v4310 = vunpack.c.h.b16 %v3466
    %v4311 = vunpack.c.l.b16 %v3467
    %v4312 = vunpack.c.l.b16 %v3468
    %v4313 = vunpack.c.h.b16 %v3468
    %v4314 = vunpack.c.l.b16 %v3469
    %v4315 = vunpack.c.h.b16 %v3469
    %v4316 = vunpack.c.l.b16 %v3470
    %v4317 = vunpack.c.h.b16 %v3470
    %v4318 = vunpack.c.l.b16 %v3471
    %v4319 = vunpack.c.h.b16 %v3471
    %v4320 = vunpack.c.l.b16 %v3472
    %v4321 = vunpack.c.l.b16 %v3473
    %v4322 = vunpack.c.h.b16 %v3473
    %v4323 = vunpack.c.l.b16 %v3474
    %v4324 = vunpack.c.h.b16 %v3474
    %v4325 = vunpack.c.l.b16 %v3475
    %v4326 = vunpack.c.h.b16 %v3475
    %v4327 = vunpack.c.l.b16 %v3476
    %v4328 = vunpack.c.h.b16 %v3476
    %v4329 = vunpack.c.l.b16 %v3477
    %v4330 = vunpack.c.l.b16 %v3478
    %v4331 = vunpack.c.h.b16 %v3478
    %v4332 = vunpack.c.l.b16 %v3479
    %v4333 = vunpack.c.h.b16 %v3479
    %v4334 = vunpack.c.l.b16 %v3480
    %v4335 = vunpack.c.h.b16 %v3480
    %v4336 = vunpack.c.l.b16 %v3481
    %v4337 = vunpack.c.h.b16 %v3481
    %v4338 = vunpack.c.l.b16 %v3482
    %v4339 = vunpack.c.l.b16 %v3483
    %v4340 = vunpack.c.h.b16 %v3483
    %v4341 = vunpack.c.l.b16 %v3484
    %v4342 = vunpack.c.h.b16 %v3484
    %v4343 = vunpack.c.l.b16 %v3485
    %v4344 = vunpack.c.h.b16 %v3485
    %v4345 = vunpack.c.l.b16 %v3486
    %v4346 = vunpack.c.h.b16 %v3486
    %v4347 = vunpack.c.l.b16 %v3487
    %v4348 = vunpack.c.l.b16 %v3488
    %v4349 = vunpack.c.h.b16 %v3488
    %v4350 = vunpack.c.l.b16 %v3489
    %v4351 = vunpack.c.h.b16 %v3489
    %v4352 = vunpack.c.l.b16 %v3490
    %v4353 = vunpack.c.h.b16 %v3490
    %v4354 = vunpack.c.l.b16 %v3491
    %v4355 = vunpack.c.h.b16 %v3491
    %v4356 = vunpack.c.l.b16 %v3492
    %v4357 = vunpack.c.l.b16 %v3493
    %v4358 = vunpack.c.h.b16 %v3493
    %v4359 = vunpack.c.l.b16 %v3494
    %v4360 = vunpack.c.h.b16 %v3494
    %v4361 = vunpack.c.l.b16 %v3495
    %v4362 = vunpack.c.h.b16 %v3495
    %v4363 = vunpack.c.l.b16 %v3496
    %v4364 = vunpack.c.h.b16 %v3496
    %v4365 = vunpack.c.l.b16 %v3497
    %v4366 = vunpack.c.l.b16 %v3498
    %v4367 = vunpack.c.h.b16 %v3498
    %v4368 = vunpack.c.l.b16 %v3499
    %v4369 = vunpack.c.h.b16 %v3499
    %v4370 = vunpack.c.l.b16 %v3500
    %v4371 = vunpack.c.h.b16 %v3500
    %v4372 = vunpack.c.l.b16 %v3501
    %v4373 = vunpack.c.h.b16 %v3501
    %v4374 = vunpack.c.l.b16 %v3502
    %v4375 = vunpack.c.l.b16 %v3503
    %v4376 = vunpack.c.h.b16 %v3503
    %v4377 = vunpack.c.l.b16 %v3504
    %v4378 = vunpack.c.h.b16 %v3504
    %v4379 = vunpack.c.l.b16 %v3505
    %v4380 = vunpack.c.h.b16 %v3505
    %v4381 = vunpack.c.l.b16 %v3506
    %v4382 = vunpack.c.h.b16 %v3506
    %v4383 = vunpack.c.l.b16 %v3507
    %v4384 = vunpack.c.l.b16 %v3508
    %v4385 = vunpack.c.h.b16 %v3508
    %v4386 = vunpack.c.l.b16 %v3509
    %v4387 = vunpack.c.h.b16 %v3509
    %v4388 = vunpack.c.l.b16 %v3510
    %v4389 = vunpack.c.h.b16 %v3510
    %v4390 = vunpack.c.l.b16 %v3511
    %v4391 = vunpack.c.h.b16 %v3511
    %v4392 = vunpack.c.l.b16 %v3512
    %v4393 = vunpack.c.l.b16 %v3513
    %v4394 = vunpack.c.h.b16 %v3513
    %v4395 = vunpack.c.l.b16 %v3514
    %v4396 = vunpack.c.h.b16 %v3514
    %v4397 = vunpack.c.l.b16 %v3515
    %v4398 = vunpack.c.h.b16 %v3515
    %v4399 = vunpack.c.l.b16 %v3516
    %v4400 = vunpack.c.h.b16 %v3516
    %v4401 = vunpack.c.l.b16 %v3517
    %v4402 = vunpack.c.l.b16 %v3518
    %v4403 = vunpack.c.h.b16 %v3518
    %v4404 = vunpack.c.l.b16 %v3519
    %v4405 = vunpack.c.h.b16 %v3519
    %v4406 = vunpack.c.l.b16 %v3520
    %v4407 = vunpack.c.h.b16 %v3520
    %v4408 = vunpack.c.l.b16 %v3521
    %v4409 = vunpack.c.h.b16 %v3521
    %v4410 = vunpack.c.l.b16 %v3522
    %v4411 = vunpack.c.l.b16 %v3523
    %v4412 = vunpack.c.h.b16 %v3523
    %v4413 = vunpack.c.l.b16 %v3524
    %v4414 = vunpack.c.h.b16 %v3524
    %v4415 = vunpack.c.l.b16 %v3525
    %v4416 = vunpack.c.h.b16 %v3525
    %v4417 = vunpack.c.l.b16 %v3526
    %v4418 = vunpack.c.h.b16 %v3526
    %v4419 = vunpack.c.l.b16 %v3527
    %v4420 = vunpack.c.l.b16 %v3528
    %v4421 = vunpack.c.h.b16 %v3528
    %v4422 = vunpack.c.l.b16 %v3529
    %v4423 = vunpack.c.h.b16 %v3529
    %v4424 = vunpack.c.l.b16 %v3530
    %v4425 = vunpack.c.h.b16 %v3530
    %v4426 = vunpack.c.l.b16 %v3531
    %v4427 = vunpack.c.h.b16 %v3531
    %v4428 = vunpack.c.l.b16 %v3532
    %v4429 = vunpack.c.l.b16 %v3533
    %v4430 = vunpack.c.h.b16 %v3533
    %v4431 = vunpack.c.l.b16 %v3534
    %v4432 = vunpack.c.h.b16 %v3534
    %v4433 = vunpack.c.l.b16 %v3535
    %v4434 = vunpack.c.h.b16 %v3535
    %v4435 = vunpack.c.l.b16 %v3536
    %v4436 = vunpack.c.h.b16 %v3536
    %v4437 = vunpack.c.l.b16 %v3537
    %v4438 = vunpack.c.l.b16 %v3538
    %v4439 = vunpack.c.h.b16 %v3538
    %v4440 = vunpack.c.l.b16 %v3539
    %v4441 = vunpack.c.h.b16 %v3539
    %v4442 = vunpack.c.l.b16 %v3540
    %v4443 = vunpack.c.h.b16 %v3540
    %v4444 = vunpack.c.l.b16 %v3541
    %v4445 = vunpack.c.h.b16 %v3541
    %v4446 = vunpack.c.l.b16 %v3542
    %v4447 = vunpack.c.l.b16 %v3543
    %v4448 = vunpack.c.h.b16 %v3543
    %v4449 = vunpack.c.l.b16 %v3544
    %v4450 = vunpack.c.h.b16 %v3544
    %v4451 = vunpack.c.l.b16 %v3545
    %v4452 = vunpack.c.h.b16 %v3545
    %v4453 = vunpack.c.l.b16 %v3546
    %v4454 = vunpack.c.h.b16 %v3546
    %v4455 = vunpack.c.l.b16 %v3547
    %v4456 = vunpack.c.l.b16 %v3548
    %v4457 = vunpack.c.h.b16 %v3548
    %v4458 = vunpack.c.l.b16 %v3549
    %v4459 = vunpack.c.h.b16 %v3549
    %v4460 = vunpack.c.l.b16 %v3550
    %v4461 = vunpack.c.h.b16 %v3550
    %v4462 = vunpack.c.l.b16 %v3551
    %v4463 = vunpack.c.h.b16 %v3551
    %v4464 = vunpack.c.l.b16 %v3552
    %v4465 = vunpack.c.l.b16 %v3553
    %v4466 = vunpack.c.h.b16 %v3553
    %v4467 = vunpack.c.l.b16 %v3554
    %v4468 = vunpack.c.h.b16 %v3554
    %v4469 = vunpack.c.l.b16 %v3555
    %v4470 = vunpack.c.h.b16 %v3555
    %v4471 = vunpack.c.l.b16 %v3556
    %v4472 = vunpack.c.h.b16 %v3556
    %v4473 = vunpack.c.l.b16 %v3557
    %v4474 = vunpack.c.l.b16 %v3558
    %v4475 = vunpack.c.h.b16 %v3558
    %v4476 = vunpack.c.l.b16 %v3559
    %v4477 = vunpack.c.h.b16 %v3559
    %v4478 = vunpack.c.l.b16 %v3560
    %v4479 = vunpack.c.h.b16 %v3560
    %v4480 = vunpack.c.l.b16 %v3561
    %v4481 = vunpack.c.h.b16 %v3561
    %v4482 = vunpack.c.l.b16 %v3562
    %v4483 = vunpack.c.l.b16 %v3563
    %v4484 = vunpack.c.h.b16 %v3563
    %v4485 = vunpack.c.l.b16 %v3564
    %v4486 = vunpack.c.h.b16 %v3564
    %v4487 = vunpack.c.l.b16 %v3565
    %v4488 = vunpack.c.h.b16 %v3565
    %v4489 = vunpack.c.l.b16 %v3566
    %v4490 = vunpack.c.h.b16 %v3566
    %v4491 = vunpack.c.l.b16 %v3567
    %v4492 = vunpack.c.l.b16 %v3568
    %v4493 = vunpack.c.h.b16 %v3568
    %v4494 = vunpack.c.l.b16 %v3569
    %v4495 = vunpack.c.h.b16 %v3569
    %v4496 = vunpack.c.l.b16 %v3570
    %v4497 = vunpack.c.h.b16 %v3570
    %v4498 = vunpack.c.l.b16 %v3571
    %v4499 = vunpack.c.h.b16 %v3571
    %v4500 = vunpack.c.l.b16 %v3572
    %v4501 = vunpack.c.l.b16 %v3573
    %v4502 = vunpack.c.h.b16 %v3573
    %v4503 = vunpack.c.l.b16 %v3574
    %v4504 = vunpack.c.h.b16 %v3574
    %v4505 = vunpack.c.l.b16 %v3575
    %v4506 = vunpack.c.h.b16 %v3575
    %v4507 = vunpack.c.l.b16 %v3576
    %v4508 = vunpack.c.h.b16 %v3576
    %v4509 = vunpack.c.l.b16 %v3577
    %v4510 = vunpack.c.l.b16 %v3578
    %v4511 = vunpack.c.h.b16 %v3578
    %v4512 = vunpack.c.l.b16 %v3579
    %v4513 = vunpack.c.h.b16 %v3579
    %v4514 = vunpack.c.l.b16 %v3580
    %v4515 = vunpack.c.h.b16 %v3580
    %v4516 = vunpack.c.l.b16 %v3581
    %v4517 = vunpack.c.h.b16 %v3581
    %v4518 = vunpack.c.l.b16 %v3582
    %v4519 = vunpack.c.l.b16 %v3583
    %v4520 = vunpack.c.h.b16 %v3583
    %v4521 = vunpack.c.l.b16 %v3584
    %v4522 = vunpack.c.h.b16 %v3584
    %v4523 = vunpack.c.l.b16 %v3585
    %v4524 = vunpack.c.h.b16 %v3585
    %v4525 = vunpack.c.l.b16 %v3586
    %v4526 = vunpack.c.h.b16 %v3586
    %v4527 = vunpack.c.l.b16 %v3587
    %v4528 = vunpack.c.l.b16 %v3588
    %v4529 = vunpack.c.h.b16 %v3588
    %v4530 = vunpack.c.l.b16 %v3589
    %v4531 = vunpack.c.h.b16 %v3589
    %v4532 = vunpack.c.l.b16 %v3590
    %v4533 = vunpack.c.h.b16 %v3590
    %v4534 = vunpack.c.l.b16 %v3591
    %v4535 = vunpack.c.h.b16 %v3591
    %v4536 = vunpack.c.l.b16 %v3592
    %v4537 = vunpack.c.l.b16 %v3593
    %v4538 = vunpack.c.h.b16 %v3593
    %v4539 = vunpack.c.l.b16 %v3594
    %v4540 = vunpack.c.h.b16 %v3594
    %v4541 = vunpack.c.l.b16 %v3595
    %v4542 = vunpack.c.h.b16 %v3595
    %v4543 = vunpack.c.l.b16 %v3596
    %v4544 = vunpack.c.h.b16 %v3596
    %v4545 = vunpack.c.l.b16 %v3597
    %v4546 = vunpack.c.l.b16 %v3598
    %v4547 = vunpack.c.h.b16 %v3598
    %v4548 = vunpack.c.l.b16 %v3599
    %v4549 = vunpack.c.h.b16 %v3599
    %v4550 = vunpack.c.l.b16 %v3600
    %v4551 = vunpack.c.h.b16 %v3600
    %v4552 = vunpack.c.l.b16 %v3601
    %v4553 = vunpack.c.h.b16 %v3601
    %v4554 = vunpack.c.l.b16 %v3602
    %v4555 = vunpack.c.l.b16 %v3603
    %v4556 = vunpack.c.h.b16 %v3603
    %v4557 = vunpack.c.l.b16 %v3604
    %v4558 = vunpack.c.h.b16 %v3604
    %v4559 = vunpack.c.l.b16 %v3605
    %v4560 = vunpack.c.h.b16 %v3605
    %v4561 = vunpack.c.l.b16 %v3606
    %v4562 = vunpack.c.h.b16 %v3606
    %v4563 = vunpack.c.l.b16 %v3607
    %v4564 = vunpack.c.l.b16 %v3608
    %v4565 = vunpack.c.h.b16 %v3608
    %v4566 = vunpack.c.l.b16 %v3609
    %v4567 = vunpack.c.h.b16 %v3609
    %v4568 = vunpack.c.l.b16 %v3610
    %v4569 = vunpack.c.h.b16 %v3610
    %v4570 = vunpack.c.l.b16 %v3611
    %v4571 = vunpack.c.h.b16 %v3611
    %v4572 = vunpack.c.l.b16 %v3612
    %v4573 = vunpack.c.l.b16 %v3613
    %v4574 = vunpack.c.h.b16 %v3613
    %v4575 = vunpack.c.l.b16 %v3614
    %v4576 = vunpack.c.h.b16 %v3614
    %v4577 = vunpack.c.l.b16 %v3615
    %v4578 = vunpack.c.h.b16 %v3615
    %v4579 = vunpack.c.l.b16 %v3616
    %v4580 = vunpack.c.h.b16 %v3616
    %v4581 = vunpack.c.l.b16 %v3617
    %v4582 = vunpack.c.l.b16 %v3618
    %v4583 = vunpack.c.h.b16 %v3618
    %v4584 = vunpack.c.l.b16 %v3619
    %v4585 = vunpack.c.h.b16 %v3619
    %v4586 = vunpack.c.l.b16 %v3620
    %v4587 = vunpack.c.h.b16 %v3620
    %v4588 = vunpack.c.l.b16 %v3621
    %v4589 = vunpack.c.h.b16 %v3621
    %v4590 = vunpack.c.l.b16 %v3622
    %v4591 = vunpack.c.l.b16 %v3623
    %v4592 = vunpack.c.h.b16 %v3623
    %v4593 = vunpack.c.l.b16 %v3624
    %v4594 = vunpack.c.h.b16 %v3624
    %v4595 = vunpack.c.l.b16 %v3625
    %v4596 = vunpack.c.h.b16 %v3625
    %v4597 = vunpack.c.l.b16 %v3626
    %v4598 = vunpack.c.h.b16 %v3626
    %v4599 = vunpack.c.l.b16 %v3627
    %v4600 = vunpack.c.l.b16 %v3628
    %v4601 = vunpack.c.h.b16 %v3628
    %v4602 = vunpack.c.l.b16 %v3629
    %v4603 = vunpack.c.h.b16 %v3629
    %v4604 = vunpack.c.l.b16 %v3630
    %v4605 = vunpack.c.h.b16 %v3630
    %v4606 = vunpack.c.l.b16 %v3631
    %v4607 = vunpack.c.h.b16 %v3631
    %v4608 = vunpack.c.l.b16 %v3632
    %v4609 = vunpack.c.l.b16 %v3633
    %v4610 = vunpack.c.h.b16 %v3633
    %v4611 = vunpack.c.l.b16 %v3634
    %v4612 = vunpack.c.h.b16 %v3634
    %v4613 = vunpack.c.l.b16 %v3635
    %v4614 = vunpack.c.h.b16 %v3635
    %v4615 = vunpack.c.l.b16 %v3636
    %v4616 = vunpack.c.h.b16 %v3636
    %v4617 = vunpack.c.l.b16 %v3637
    %v4618 = vunpack.c.l.b16 %v3638
    %v4619 = vunpack.c.h.b16 %v3638
    %v4620 = vunpack.c.l.b16 %v3639
    %v4621 = vunpack.c.h.b16 %v3639
    %v4622 = vunpack.c.l.b16 %v3640
    %v4623 = vunpack.c.h.b16 %v3640
    %v4624 = vunpack.c.l.b16 %v3641
    %v4625 = vunpack.c.h.b16 %v3641
    %v4626 = vunpack.c.l.b16 %v3642
    %v4627 = vunpack.c.l.b16 %v3643
    %v4628 = vunpack.c.h.b16 %v3643
    %v4629 = vunpack.c.l.b16 %v3644
    %v4630 = vunpack.c.h.b16 %v3644
    %v4631 = vunpack.c.l.b16 %v3645
    %v4632 = vunpack.c.h.b16 %v3645
    %v4633 = vunpack.c.l.b16 %v3646
    %v4634 = vunpack.c.h.b16 %v3646
    %v4635 = vunpack.c.l.b16 %v3647
    %v4636 = vunpack.c.l.b16 %v3648
    %v4637 = vunpack.c.h.b16 %v3648
    %v4638 = vunpack.c.l.b16 %v3649
    %v4639 = vunpack.c.h.b16 %v3649
    %v4640 = vunpack.c.l.b16 %v3650
    %v4641 = vunpack.c.h.b16 %v3650
    %v4642 = vunpack.c.l.b16 %v3651
    %v4643 = vunpack.c.h.b16 %v3651
    %v4644 = vunpack.c.l.b16 %v3652
    %v4645 = vunpack.c.l.b16 %v3653
    %v4646 = vunpack.c.h.b16 %v3653
    %v4647 = vunpack.c.l.b16 %v3654
    %v4648 = vunpack.c.h.b16 %v3654
    %v4649 = vunpack.c.l.b16 %v3655
    %v4650 = vunpack.c.h.b16 %v3655
    %v4651 = vunpack.c.l.b16 %v3656
    %v4652 = vunpack.c.h.b16 %v3656
    %v4653 = vunpack.c.l.b16 %v3657
    %v4654 = vunpack.c.l.b16 %v3658
    %v4655 = vunpack.c.h.b16 %v3658
    %v4656 = vunpack.c.l.b16 %v3659
    %v4657 = vunpack.c.h.b16 %v3659
    %v4658 = vunpack.c.l.b16 %v3660
    %v4659 = vunpack.c.h.b16 %v3660
    %v4660 = vunpack.c.l.b16 %v3661
    %v4661 = vunpack.c.h.b16 %v3661
    %v4662 = vunpack.c.l.b16 %v3662
    %v4663 = vunpack.c.l.b16 %v3663
    %v4664 = vunpack.c.h.b16 %v3663
    %v4665 = vunpack.c.l.b16 %v3664
    %v4666 = vunpack.c.h.b16 %v3664
    %v4667 = vunpack.c.l.b16 %v3665
    %v4668 = vunpack.c.h.b16 %v3665
    %v4669 = vunpack.c.l.b16 %v3666
    %v4670 = vunpack.c.h.b16 %v3666
    %v4671 = vunpack.c.l.b16 %v3667
    %v4672 = vunpack.c.l.b16 %v3668
    %v4673 = vunpack.c.h.b16 %v3668
    %v4674 = vunpack.c.l.b16 %v3669
    %v4675 = vunpack.c.h.b16 %v3669
    %v4676 = vunpack.c.l.b16 %v3670
    %v4677 = vunpack.c.h.b16 %v3670
    %v4678 = vunpack.c.l.b16 %v3671
    %v4679 = vunpack.c.h.b16 %v3671
    %v4680 = vunpack.c.l.b16 %v3672
    %v4681 = vunpack.c.l.b16 %v3673
    %v4682 = vunpack.c.h.b16 %v3673
    %v4683 = vunpack.c.l.b16 %v3674
    %v4684 = vunpack.c.h.b16 %v3674
    %v4685 = vunpack.c.l.b16 %v3675
    %v4686 = vunpack.c.h.b16 %v3675
    %v4687 = vunpack.c.l.b16 %v3676
    %v4688 = vunpack.c.h.b16 %v3676
    %v4689 = vunpack.c.l.b16 %v3677
    %v4690 = vunpack.c.l.b16 %v3678
    %v4691 = vunpack.c.h.b16 %v3678
    %v4692 = vunpack.c.l.b16 %v3679
    %v4693 = vunpack.c.h.b16 %v3679
    %v4694 = vunpack.c.l.b16 %v3680
    %v4695 = vunpack.c.h.b16 %v3680
    %v4696 = vunpack.c.l.b16 %v3681
    %v4697 = vunpack.c.h.b16 %v3681
    %v4698 = vunpack.c.l.b16 %v3682
    %v4699 = vunpack.c.l.b16 %v3683
    %v4700 = vunpack.c.h.b16 %v3683
    %v4701 = vunpack.c.l.b16 %v3684
    %v4702 = vunpack.c.h.b16 %v3684
    %v4703 = vunpack.c.l.b16 %v3685
    %v4704 = vunpack.c.h.b16 %v3685
    %v4705 = vunpack.c.l.b16 %v3686
    %v4706 = vunpack.c.h.b16 %v3686
    %v4707 = vunpack.c.l.b16 %v3687
    %v4708 = vunpack.c.l.b16 %v3688
    %v4709 = vunpack.c.h.b16 %v3688
    %v4710 = vunpack.c.l.b16 %v3689
    %v4711 = vunpack.c.h.b16 %v3689
    %v4712 = vunpack.c.l.b16 %v3690
    %v4713 = vunpack.c.h.b16 %v3690
    %v4714 = vunpack.c.l.b16 %v3691
    %v4715 = vunpack.c.h.b16 %v3691
    %v4716 = vunpack.c.l.b16 %v3692
    %v4717 = vunpack.c.l.b16 %v3693
    %v4718 = vunpack.c.h.b16 %v3693
    %v4719 = vunpack.c.l.b16 %v3694
    %v4720 = vunpack.c.h.b16 %v3694
    %v4721 = vunpack.c.l.b16 %v3695
    %v4722 = vunpack.c.h.b16 %v3695
    %v4723 = vunpack.c.l.b16 %v3696
    %v4724 = vunpack.c.h.b16 %v3696
    %v4725 = vunpack.c.l.b16 %v3697
    %v4726 = vunpack.c.l.b16 %v3698
    %v4727 = vunpack.c.h.b16 %v3698
    %v4728 = vunpack.c.l.b16 %v3699
    %v4729 = vunpack.c.h.b16 %v3699
    %v4730 = vunpack.c.l.b16 %v3700
    %v4731 = vunpack.c.h.b16 %v3700
    %v4732 = vunpack.c.l.b16 %v3701
    %v4733 = vunpack.c.h.b16 %v3701
    %v4734 = vunpack.c.l.b16 %v3702
    %v4735 = vunpack.c.l.b16 %v3703
    %v4736 = vunpack.c.h.b16 %v3703
    %v4737 = vunpack.c.l.b16 %v3704
    %v4738 = vunpack.c.h.b16 %v3704
    %v4739 = vunpack.c.l.b16 %v3705
    %v4740 = vunpack.c.h.b16 %v3705
    %v4741 = vunpack.c.l.b16 %v3706
    %v4742 = vunpack.c.h.b16 %v3706
    %v4743 = vunpack.c.l.b16 %v3707
    %v4744 = vunpack.c.l.b16 %v3708
    %v4745 = vunpack.c.h.b16 %v3708
    %v4746 = vunpack.c.l.b16 %v3709
    %v4747 = vunpack.c.h.b16 %v3709
    %v4748 = vunpack.c.l.b16 %v3710
    %v4749 = vunpack.c.h.b16 %v3710
    %v4750 = vunpack.c.l.b16 %v3711
    %v4751 = vunpack.c.h.b16 %v3711
    %v4752 = vunpack.c.l.b16 %v3712
    %v4753 = vpack.c.b16 %v4186, %v4177
    %v4754 = vpack.c.b16 %v4187, %v4178
    %v4755 = vpack.c.b16 %v4188, %v4179
    %v4756 = vpack.c.b16 %v4189, %v4180
    %v4757 = vpack.c.b16 %v4190, %v4181
    %v4758 = vpack.c.b16 %v4191, %v4182
    %v4759 = vpack.c.b16 %v4192, %v4183
    %v4760 = vpack.c.b16 %v4193, %v4184
    %v4761 = vpack.c.b16 %v4194, %v4185
    %v4762 = vpack.c.b16 %v4204, %v4195
    %v4763 = vpack.c.b16 %v4205, %v4196
    %v4764 = vpack.c.b16 %v4206, %v4197
    %v4765 = vpack.c.b16 %v4207, %v4198
    %v4766 = vpack.c.b16 %v4208, %v4199
    %v4767 = vpack.c.b16 %v4209, %v4200
    %v4768 = vpack.c.b16 %v4210, %v4201
    %v4769 = vpack.c.b16 %v4211, %v4202
    %v4770 = vpack.c.b16 %v4212, %v4203
    %v4771 = vpack.c.b16 %v4222, %v4213
    %v4772 = vpack.c.b16 %v4223, %v4214
    %v4773 = vpack.c.b16 %v4224, %v4215
    %v4774 = vpack.c.b16 %v4225, %v4216
    %v4775 = vpack.c.b16 %v4226, %v4217
    %v4776 = vpack.c.b16 %v4227, %v4218
    %v4777 = vpack.c.b16 %v4228, %v4219
    %v4778 = vpack.c.b16 %v4229, %v4220
    %v4779 = vpack.c.b16 %v4230, %v4221
    %v4780 = vpack.c.b16 %v4240, %v4231
    %v4781 = vpack.c.b16 %v4241, %v4232
    %v4782 = vpack.c.b16 %v4242, %v4233
    %v4783 = vpack.c.b16 %v4243, %v4234
    %v4784 = vpack.c.b16 %v4244, %v4235
    %v4785 = vpack.c.b16 %v4245, %v4236
    %v4786 = vpack.c.b16 %v4246, %v4237
    %v4787 = vpack.c.b16 %v4247, %v4238
    %v4788 = vpack.c.b16 %v4248, %v4239
    %v4789 = vpack.c.b16 %v4258, %v4249
    %v4790 = vpack.c.b16 %v4259, %v4250
    %v4791 = vpack.c.b16 %v4260, %v4251
    %v4792 = vpack.c.b16 %v4261, %v4252
    %v4793 = vpack.c.b16 %v4262, %v4253
    %v4794 = vpack.c.b16 %v4263, %v4254
    %v4795 = vpack.c.b16 %v4264, %v4255
    %v4796 = vpack.c.b16 %v4265, %v4256
    %v4797 = vpack.c.b16 %v4266, %v4257
    %v4798 = vpack.c.b16 %v4276, %v4267
    %v4799 = vpack.c.b16 %v4277, %v4268
    %v4800 = vpack.c.b16 %v4278, %v4269
    %v4801 = vpack.c.b16 %v4279, %v4270
    %v4802 = vpack.c.b16 %v4280, %v4271
    %v4803 = vpack.c.b16 %v4281, %v4272
    %v4804 = vpack.c.b16 %v4282, %v4273
    %v4805 = vpack.c.b16 %v4283, %v4274
    %v4806 = vpack.c.b16 %v4284, %v4275
    %v4807 = vpack.c.b16 %v4294, %v4285
    %v4808 = vpack.c.b16 %v4295, %v4286
    %v4809 = vpack.c.b16 %v4296, %v4287
    %v4810 = vpack.c.b16 %v4297, %v4288
    %v4811 = vpack.c.b16 %v4298, %v4289
    %v4812 = vpack.c.b16 %v4299, %v4290
    %v4813 = vpack.c.b16 %v4300, %v4291
    %v4814 = vpack.c.b16 %v4301, %v4292
    %v4815 = vpack.c.b16 %v4302, %v4293
    %v4816 = vpack.c.b16 %v4312, %v4303
    %v4817 = vpack.c.b16 %v4313, %v4304
    %v4818 = vpack.c.b16 %v4314, %v4305
    %v4819 = vpack.c.b16 %v4315, %v4306
    %v4820 = vpack.c.b16 %v4316, %v4307
    %v4821 = vpack.c.b16 %v4317, %v4308
    %v4822 = vpack.c.b16 %v4318, %v4309
    %v4823 = vpack.c.b16 %v4319, %v4310
    %v4824 = vpack.c.b16 %v4320, %v4311
    %v4825 = vpack.c.b16 %v4330, %v4321
    %v4826 = vpack.c.b16 %v4331, %v4322
    %v4827 = vpack.c.b16 %v4332, %v4323
    %v4828 = vpack.c.b16 %v4333, %v4324
    %v4829 = vpack.c.b16 %v4334, %v4325
    %v4830 = vpack.c.b16 %v4335, %v4326
    %v4831 = vpack.c.b16 %v4336, %v4327
    %v4832 = vpack.c.b16 %v4337, %v4328
    %v4833 = vpack.c.b16 %v4338, %v4329
    %v4834 = vpack.c.b16 %v4348, %v4339
    %v4835 = vpack.c.b16 %v4349, %v4340
    %v4836 = vpack.c.b16 %v4350, %v4341
    %v4837 = vpack.c.b16 %v4351, %v4342
    %v4838 = vpack.c.b16 %v4352, %v4343
    %v4839 = vpack.c.b16 %v4353, %v4344
    %v4840 = vpack.c.b16 %v4354, %v4345
    %v4841 = vpack.c.b16 %v4355, %v4346
    %v4842 = vpack.c.b16 %v4356, %v4347
    %v4843 = vpack.c.b16 %v4366, %v4357
    %v4844 = vpack.c.b16 %v4367, %v4358
    %v4845 = vpack.c.b16 %v4368, %v4359
    %v4846 = vpack.c.b16 %v4369, %v4360
    %v4847 = vpack.c.b16 %v4370, %v4361
    %v4848 = vpack.c.b16 %v4371, %v4362
    %v4849 = vpack.c.b16 %v4372, %v4363
    %v4850 = vpack.c.b16 %v4373, %v4364
    %v4851 = vpack.c.b16 %v4374, %v4365
    %v4852 = vpack.c.b16 %v4384, %v4375
    %v4853 = vpack.c.b16 %v4385, %v4376
    %v4854 = vpack.c.b16 %v4386, %v4377
    %v4855 = vpack.c.b16 %v4387, %v4378
    %v4856 = vpack.c.b16 %v4388, %v4379
    %v4857 = vpack.c.b16 %v4389, %v4380
    %v4858 = vpack.c.b16 %v4390, %v4381
    %v4859 = vpack.c.b16 %v4391, %v4382
    %v4860 = vpack.c.b16 %v4392, %v4383
    %v4861 = vpack.c.b16 %v4402, %v4393
    %v4862 = vpack.c.b16 %v4403, %v4394
    %v4863 = vpack.c.b16 %v4404, %v4395
    %v4864 = vpack.c.b16 %v4405, %v4396
    %v4865 = vpack.c.b16 %v4406, %v4397
    %v4866 = vpack.c.b16 %v4407, %v4398
    %v4867 = vpack.c.b16 %v4408, %v4399
    %v4868 = vpack.c.b16 %v4409, %v4400
    %v4869 = vpack.c.b16 %v4410, %v4401
    %v4870 = vpack.c.b16 %v4420, %v4411
    %v4871 = vpack.c.b16 %v4421, %v4412
    %v4872 = vpack.c.b16 %v4422, %v4413
    %v4873 = vpack.c.b16 %v4423, %v4414
    %v4874 = vpack.c.b16 %v4424, %v4415
    %v4875 = vpack.c.b16 %v4425, %v4416
    %v4876 = vpack.c.b16 %v4426, %v4417
    %v4877 = vpack.c.b16 %v4427, %v4418
    %v4878 = vpack.c.b16 %v4428, %v4419
    %v4879 = vpack.c.b16 %v4438, %v4429
    %v4880 = vpack.c.b16 %v4439, %v4430
    %v4881 = vpack.c.b16 %v4440, %v4431
    %v4882 = vpack.c.b16 %v4441, %v4432
    %v4883 = vpack.c.b16 %v4442, %v4433
    %v4884 = vpack.c.b16 %v4443, %v4434
    %v4885 = vpack.c.b16 %v4444, %v4435
    %v4886 = vpack.c.b16 %v4445, %v4436
    %v4887 = vpack.c.b16 %v4446, %v4437
    %v4888 = vpack.c.b16 %v4456, %v4447
    %v4889 = vpack.c.b16 %v4457, %v4448
    %v4890 = vpack.c.b16 %v4458, %v4449
    %v4891 = vpack.c.b16 %v4459, %v4450
    %v4892 = vpack.c.b16 %v4460, %v4451
    %v4893 = vpack.c.b16 %v4461, %v4452
    %v4894 = vpack.c.b16 %v4462, %v4453
    %v4895 = vpack.c.b16 %v4463, %v4454
    %v4896 = vpack.c.b16 %v4464, %v4455
    %v4897 = vpack.c.b16 %v4474, %v4465
    %v4898 = vpack.c.b16 %v4475, %v4466
    %v4899 = vpack.c.b16 %v4476, %v4467
    %v4900 = vpack.c.b16 %v4477, %v4468
    %v4901 = vpack.c.b16 %v4478, %v4469
    %v4902 = vpack.c.b16 %v4479, %v4470
    %v4903 = vpack.c.b16 %v4480, %v4471
    %v4904 = vpack.c.b16 %v4481, %v4472
    %v4905 = vpack.c.b16 %v4482, %v4473
    %v4906 = vpack.c.b16 %v4492, %v4483
    %v4907 = vpack.c.b16 %v4493, %v4484
    %v4908 = vpack.c.b16 %v4494, %v4485
    %v4909 = vpack.c.b16 %v4495, %v4486
    %v4910 = vpack.c.b16 %v4496, %v4487
    %v4911 = vpack.c.b16 %v4497, %v4488
    %v4912 = vpack.c.b16 %v4498, %v4489
    %v4913 = vpack.c.b16 %v4499, %v4490
    %v4914 = vpack.c.b16 %v4500, %v4491
    %v4915 = vpack.c.b16 %v4510, %v4501
    %v4916 = vpack.c.b16 %v4511, %v4502
    %v4917 = vpack.c.b16 %v4512, %v4503
    %v4918 = vpack.c.b16 %v4513, %v4504
    %v4919 = vpack.c.b16 %v4514, %v4505
    %v4920 = vpack.c.b16 %v4515, %v4506
    %v4921 = vpack.c.b16 %v4516, %v4507
    %v4922 = vpack.c.b16 %v4517, %v4508
    %v4923 = vpack.c.b16 %v4518, %v4509
    %v4924 = vpack.c.b16 %v4528, %v4519
    %v4925 = vpack.c.b16 %v4529, %v4520
    %v4926 = vpack.c.b16 %v4530, %v4521
    %v4927 = vpack.c.b16 %v4531, %v4522
    %v4928 = vpack.c.b16 %v4532, %v4523
    %v4929 = vpack.c.b16 %v4533, %v4524
    %v4930 = vpack.c.b16 %v4534, %v4525
    %v4931 = vpack.c.b16 %v4535, %v4526
    %v4932 = vpack.c.b16 %v4536, %v4527
    %v4933 = vpack.c.b16 %v4546, %v4537
    %v4934 = vpack.c.b16 %v4547, %v4538
    %v4935 = vpack.c.b16 %v4548, %v4539
    %v4936 = vpack.c.b16 %v4549, %v4540
    %v4937 = vpack.c.b16 %v4550, %v4541
    %v4938 = vpack.c.b16 %v4551, %v4542
    %v4939 = vpack.c.b16 %v4552, %v4543
    %v4940 = vpack.c.b16 %v4553, %v4544
    %v4941 = vpack.c.b16 %v4554, %v4545
    %v4942 = vpack.c.b16 %v4564, %v4555
    %v4943 = vpack.c.b16 %v4565, %v4556
    %v4944 = vpack.c.b16 %v4566, %v4557
    %v4945 = vpack.c.b16 %v4567, %v4558
    %v4946 = vpack.c.b16 %v4568, %v4559
    %v4947 = vpack.c.b16 %v4569, %v4560
    %v4948 = vpack.c.b16 %v4570, %v4561
    %v4949 = vpack.c.b16 %v4571, %v4562
    %v4950 = vpack.c.b16 %v4572, %v4563
    %v4951 = vpack.c.b16 %v4582, %v4573
    %v4952 = vpack.c.b16 %v4583, %v4574
    %v4953 = vpack.c.b16 %v4584, %v4575
    %v4954 = vpack.c.b16 %v4585, %v4576
    %v4955 = vpack.c.b16 %v4586, %v4577
    %v4956 = vpack.c.b16 %v4587, %v4578
    %v4957 = vpack.c.b16 %v4588, %v4579
    %v4958 = vpack.c.b16 %v4589, %v4580
    %v4959 = vpack.c.b16 %v4590, %v4581
    %v4960 = vpack.c.b16 %v4600, %v4591
    %v4961 = vpack.c.b16 %v4601, %v4592
    %v4962 = vpack.c.b16 %v4602, %v4593
    %v4963 = vpack.c.b16 %v4603, %v4594
    %v4964 = vpack.c.b16 %v4604, %v4595
    %v4965 = vpack.c.b16 %v4605, %v4596
    %v4966 = vpack.c.b16 %v4606, %v4597
    %v4967 = vpack.c.b16 %v4607, %v4598
    %v4968 = vpack.c.b16 %v4608, %v4599
    %v4969 = vpack.c.b16 %v4618, %v4609
    %v4970 = vpack.c.b16 %v4619, %v4610
    %v4971 = vpack.c.b16 %v4620, %v4611
    %v4972 = vpack.c.b16 %v4621, %v4612
    %v4973 = vpack.c.b16 %v4622, %v4613
    %v4974 = vpack.c.b16 %v4623, %v4614
    %v4975 = vpack.c.b16 %v4624, %v4615
    %v4976 = vpack.c.b16 %v4625, %v4616
    %v4977 = vpack.c.b16 %v4626, %v4617
    %v4978 = vpack.c.b16 %v4636, %v4627
    %v4979 = vpack.c.b16 %v4637, %v4628
    %v4980 = vpack.c.b16 %v4638, %v4629
    %v4981 = vpack.c.b16 %v4639, %v4630
    %v4982 = vpack.c.b16 %v4640, %v4631
    %v4983 = vpack.c.b16 %v4641, %v4632
    %v4984 = vpack.c.b16 %v4642, %v4633
    %v4985 = vpack.c.b16 %v4643, %v4634
    %v4986 = vpack.c.b16 %v4644, %v4635
    %v4987 = vpack.c.b16 %v4654, %v4645
    %v4988 = vpack.c.b16 %v4655, %v4646
    %v4989 = vpack.c.b16 %v4656, %v4647
    %v4990 = vpack.c.b16 %v4657, %v4648
    %v4991 = vpack.c.b16 %v4658, %v4649
    %v4992 = vpack.c.b16 %v4659, %v4650
    %v4993 = vpack.c.b16 %v4660, %v4651
    %v4994 = vpack.c.b16 %v4661, %v4652
    %v4995 = vpack.c.b16 %v4662, %v4653
    %v4996 = vpack.c.b16 %v4672, %v4663
    %v4997 = vpack.c.b16 %v4673, %v4664
    %v4998 = vpack.c.b16 %v4674, %v4665
    %v4999 = vpack.c.b16 %v4675, %v4666
    %v5000 = vpack.c.b16 %v4676, %v4667
    %v5001 = vpack.c.b16 %v4677, %v4668
    %v5002 = vpack.c.b16 %v4678, %v4669
    %v5003 = vpack.c.b16 %v4679, %v4670
    %v5004 = vpack.c.b16 %v4680, %v4671
    %v5005 = vpack.c.b16 %v4690, %v4681
    %v5006 = vpack.c.b16 %v4691, %v4682
    %v5007 = vpack.c.b16 %v4692, %v4683
    %v5008 = vpack.c.b16 %v4693, %v4684
    %v5009 = vpack.c.b16 %v4694, %v4685
    %v5010 = vpack.c.b16 %v4695, %v4686
    %v5011 = vpack.c.b16 %v4696, %v4687
    %v5012 = vpack.c.b16 %v4697, %v4688
    %v5013 = vpack.c.b16 %v4698, %v4689
    %v5014 = vpack.c.b16 %v4708, %v4699
    %v5015 = vpack.c.b16 %v4709, %v4700
    %v5016 = vpack.c.b16 %v4710, %v4701
    %v5017 = vpack.c.b16 %v4711, %v4702
    %v5018 = vpack.c.b16 %v4712, %v4703
    %v5019 = vpack.c.b16 %v4713, %v4704
    %v5020 = vpack.c.b16 %v4714, %v4705
    %v5021 = vpack.c.b16 %v4715, %v4706
    %v5022 = vpack.c.b16 %v4716, %v4707
    %v5023 = vpack.c.b16 %v4726, %v4717
    %v5024 = vpack.c.b16 %v4727, %v4718
    %v5025 = vpack.c.b16 %v4728, %v4719
    %v5026 = vpack.c.b16 %v4729, %v4720
    %v5027 = vpack.c.b16 %v4730, %v4721
    %v5028 = vpack.c.b16 %v4731, %v4722
    %v5029 = vpack.c.b16 %v4732, %v4723
    %v5030 = vpack.c.b16 %v4733, %v4724
    %v5031 = vpack.c.b16 %v4734, %v4725
    %v5032 = vpack.c.b16 %v4744, %v4735
    %v5033 = vpack.c.b16 %v4745, %v4736
    %v5034 = vpack.c.b16 %v4746, %v4737
    %v5035 = vpack.c.b16 %v4747, %v4738
    %v5036 = vpack.c.b16 %v4748, %v4739
    %v5037 = vpack.c.b16 %v4749, %v4740
    %v5038 = vpack.c.b16 %v4750, %v4741
    %v5039 = vpack.c.b16 %v4751, %v4742
    %v5040 = vpack.c.b16 %v4752, %v4743
    %v5473 = vunpack.c.l.b16 %v3713
    %v5474 = vunpack.c.l.b16 %v3714
    %v5475 = vunpack.c.l.b16 %v3715
    %v5476 = vunpack.c.l.b16 %v3716
    %v5477 = vunpack.c.l.b16 %v3717
    %v5478 = vunpack.c.l.b16 %v3718
    %v5479 = vunpack.c.l.b16 %v3719
    %v5480 = vunpack.c.l.b16 %v3720
    %v5481 = vunpack.c.l.b16 %v3721
    %v5482 = vunpack.c.l.b16 %v3722
    %v5483 = vunpack.c.l.b16 %v3723
    %v5484 = vunpack.c.l.b16 %v3724
    %v5485 = vunpack.c.l.b16 %v3725
    %v5486 = vunpack.c.l.b16 %v3726
    %v5487 = vunpack.c.l.b16 %v3727
    %v5488 = vunpack.c.l.b16 %v3728
    %v5489 = vunpack.c.l.b16 %v3729
    %v5490 = vunpack.c.l.b16 %v3730
    %v5491 = vunpack.c.l.b16 %v3731
    %v5492 = vunpack.c.l.b16 %v3732
    %v5493 = vunpack.c.l.b16 %v3733
    %v5494 = vunpack.c.l.b16 %v3734
    %v5495 = vunpack.c.l.b16 %v3735
    %v5496 = vunpack.c.l.b16 %v3736
    %v5497 = vunpack.c.l.b16 %v3737
    %v5498 = vunpack.c.l.b16 %v3738
    %v5499 = vunpack.c.l.b16 %v3739
    %v5500 = vunpack.c.l.b16 %v3740
    %v5501 = vunpack.c.l.b16 %v3741
    %v5502 = vunpack.c.l.b16 %v3742
    %v5503 = vunpack.c.l.b16 %v3743
    %v5504 = vunpack.c.l.b16 %v3744
    %v5505 = vunpack.c.l.b16 %v3745
    %v5506 = vunpack.c.l.b16 %v3746
    %v5507 = vunpack.c.l.b16 %v3747
    %v5508 = vunpack.c.l.b16 %v3748
    %v5509 = vunpack.c.l.b16 %v3749
    %v5510 = vunpack.c.l.b16 %v3750
    %v5511 = vunpack.c.l.b16 %v3751
    %v5512 = vunpack.c.l.b16 %v3752
    %v5513 = vunpack.c.l.b16 %v3753
    %v5514 = vunpack.c.l.b16 %v3754
    %v5515 = vunpack.c.l.b16 %v3755
    %v5516 = vunpack.c.l.b16 %v3756
    %v5517 = vunpack.c.l.b16 %v3757
    %v5518 = vunpack.c.l.b16 %v3758
    %v5519 = vunpack.c.l.b16 %v3759
    %v5520 = vunpack.c.l.b16 %v3760
    %v5521 = vunpack.c.l.b16 %v3761
    %v5522 = vunpack.c.l.b16 %v3762
    %v5523 = vunpack.c.l.b16 %v3763
    %v5524 = vunpack.c.l.b16 %v3764
    %v5525 = vunpack.c.l.b16 %v3765
    %v5526 = vunpack.c.l.b16 %v3766
    %v5527 = vunpack.c.l.b16 %v3767
    %v5528 = vunpack.c.l.b16 %v3768
    %v5529 = vunpack.c.l.b16 %v3769
    %v5530 = vunpack.c.l.b16 %v3770
    %v5531 = vunpack.c.l.b16 %v3771
    %v5532 = vunpack.c.l.b16 %v3772
    %v5533 = vunpack.c.l.b16 %v3773
    %v5534 = vunpack.c.l.b16 %v3774
    %v5535 = vunpack.c.l.b16 %v3775
    %v5536 = vunpack.c.l.b16 %v3776
    %v5537 = vunpack.c.l.b16 %v3777
    %v5538 = vunpack.c.l.b16 %v3778
    %v5539 = vunpack.c.l.b16 %v3779
    %v5540 = vunpack.c.l.b16 %v3780
    %v5541 = vunpack.c.l.b16 %v3781
    %v5542 = vunpack.c.l.b16 %v3782
    %v5543 = vunpack.c.l.b16 %v3783
    %v5544 = vunpack.c.l.b16 %v3784
    %v5545 = vunpack.c.l.b16 %v3785
    %v5546 = vunpack.c.l.b16 %v3786
    %v5547 = vunpack.c.l.b16 %v3787
    %v5548 = vunpack.c.l.b16 %v3788
    %v5549 = vunpack.c.l.b16 %v3789
    %v5550 = vunpack.c.l.b16 %v3790
    %v5551 = vunpack.c.l.b16 %v3791
    %v5552 = vunpack.c.l.b16 %v3792
    %v5553 = vunpack.c.l.b16 %v3793
    %v5554 = vunpack.c.l.b16 %v3794
    %v5555 = vunpack.c.l.b16 %v3795
    %v5556 = vunpack.c.l.b16 %v3796
    %v5557 = vunpack.c.l.b16 %v3797
    %v5558 = vunpack.c.l.b16 %v3798
    %v5559 = vunpack.c.l.b16 %v3799
    %v5560 = vunpack.c.l.b16 %v3800
    %v5561 = vunpack.c.l.b16 %v3801
    %v5562 = vunpack.c.l.b16 %v3802
    %v5563 = vunpack.c.l.b16 %v3803
    %v5564 = vunpack.c.l.b16 %v3804
    %v5565 = vunpack.c.l.b16 %v3805
    %v5566 = vunpack.c.l.b16 %v3806
    %v5567 = vunpack.c.l.b16 %v3807
    %v5568 = vunpack.c.l.b16 %v3808
    %v5569 = vunpack.c.l.b16 %v3809
    %v5570 = vunpack.c.l.b16 %v3810
    %v5571 = vunpack.c.l.b16 %v3811
    %v5572 = vunpack.c.l.b16 %v3812
    %v5573 = vunpack.c.l.b16 %v3813
    %v5574 = vunpack.c.l.b16 %v3814
    %v5575 = vunpack.c.l.b16 %v3815
    %v5576 = vunpack.c.l.b16 %v3816
    %v5577 = vunpack.c.l.b16 %v3817
    %v5578 = vunpack.c.l.b16 %v3818
    %v5579 = vunpack.c.l.b16 %v3819
    %v5580 = vunpack.c.l.b16 %v3820
    %v5581 = vunpack.c.l.b16 %v3821
    %v5582 = vunpack.c.l.b16 %v3822
    %v5583 = vunpack.c.l.b16 %v3823
    %v5584 = vunpack.c.l.b16 %v3824
    %v5585 = vunpack.c.l.b16 %v3825
    %v5586 = vunpack.c.l.b16 %v3826
    %v5587 = vunpack.c.l.b16 %v3827
    %v5588 = vunpack.c.l.b16 %v3828
    %v5589 = vunpack.c.l.b16 %v3829
    %v5590 = vunpack.c.l.b16 %v3830
    %v5591 = vunpack.c.l.b16 %v3831
    %v5592 = vunpack.c.l.b16 %v3832
    %v5593 = vunpack.c.l.b16 %v3833
    %v5594 = vunpack.c.l.b16 %v3834
    %v5595 = vunpack.c.l.b16 %v3835
    %v5596 = vunpack.c.l.b16 %v3836
    %v5597 = vunpack.c.l.b16 %v3837
    %v5598 = vunpack.c.l.b16 %v3838
    %v5599 = vunpack.c.l.b16 %v3839
    %v5600 = vunpack.c.l.b16 %v3840
    %v5601 = vunpack.c.l.b16 %v3841
    %v5602 = vunpack.c.l.b16 %v3842
    %v5603 = vunpack.c.l.b16 %v3843
    %v5604 = vunpack.c.l.b16 %v3844
    %v5605 = vunpack.c.l.b16 %v3845
    %v5606 = vunpack.c.l.b16 %v3846
    %v5607 = vunpack.c.l.b16 %v3847
    %v5608 = vunpack.c.l.b16 %v3848
    %v5609 = vunpack.c.l.b16 %v3849
    %v5610 = vunpack.c.l.b16 %v3850
    %v5611 = vunpack.c.l.b16 %v3851
    %v5612 = vunpack.c.l.b16 %v3852
    %v5613 = vunpack.c.l.b16 %v3853
    %v5614 = vunpack.c.l.b16 %v3854
    %v5615 = vunpack.c.l.b16 %v3855
    %v5616 = vunpack.c.l.b16 %v3856
    %v5617 = vpack.c.b16 %v5474, %v5473
    %v5618 = vpack.c.b16 %v5476, %v5475
    %v5619 = vpack.c.b16 %v5478, %v5477
    %v5620 = vpack.c.b16 %v5480, %v5479
    %v5621 = vpack.c.b16 %v5482, %v5481
    %v5622 = vpack.c.b16 %v5484, %v5483
    %v5623 = vpack.c.b16 %v5486, %v5485
    %v5624 = vpack.c.b16 %v5488, %v5487
    %v5625 = vpack.c.b16 %v5490, %v5489
    %v5626 = vpack.c.b16 %v5492, %v5491
    %v5627 = vpack.c.b16 %v5494, %v5493
    %v5628 = vpack.c.b16 %v5496, %v5495
    %v5629 = vpack.c.b16 %v5498, %v5497
    %v5630 = vpack.c.b16 %v5500, %v5499
    %v5631 = vpack.c.b16 %v5502, %v5501
    %v5632 = vpack.c.b16 %v5504, %v5503
    %v5633 = vpack.c.b16 %v5506, %v5505
    %v5634 = vpack.c.b16 %v5508, %v5507
    %v5635 = vpack.c.b16 %v5510, %v5509
    %v5636 = vpack.c.b16 %v5512, %v5511
    %v5637 = vpack.c.b16 %v5514, %v5513
    %v5638 = vpack.c.b16 %v5516, %v5515
    %v5639 = vpack.c.b16 %v5518, %v5517
    %v5640 = vpack.c.b16 %v5520, %v5519
    %v5641 = vpack.c.b16 %v5522, %v5521
    %v5642 = vpack.c.b16 %v5524, %v5523
    %v5643 = vpack.c.b16 %v5526, %v5525
    %v5644 = vpack.c.b16 %v5528, %v5527
    %v5645 = vpack.c.b16 %v5530, %v5529
    %v5646 = vpack.c.b16 %v5532, %v5531
    %v5647 = vpack.c.b16 %v5534, %v5533
    %v5648 = vpack.c.b16 %v5536, %v5535
    %v5649 = vpack.c.b16 %v5538, %v5537
    %v5650 = vpack.c.b16 %v5540, %v5539
    %v5651 = vpack.c.b16 %v5542, %v5541
    %v5652 = vpack.c.b16 %v5544, %v5543
    %v5653 = vpack.c.b16 %v5546, %v5545
    %v5654 = vpack.c.b16 %v5548, %v5547
    %v5655 = vpack.c.b16 %v5550, %v5549
    %v5656 = vpack.c.b16 %v5552, %v5551
    %v5657 = vpack.c.b16 %v5554, %v5553
    %v5658 = vpack.c.b16 %v5556, %v5555
    %v5659 = vpack.c.b16 %v5558, %v5557
    %v5660 = vpack.c.b16 %v5560, %v5559
    %v5661 = vpack.c.b16 %v5562, %v5561
    %v5662 = vpack.c.b16 %v5564, %v5563
    %v5663 = vpack.c.b16 %v5566, %v5565
    %v5664 = vpack.c.b16 %v5568, %v5567
    %v5665 = vpack.c.b16 %v5570, %v5569
    %v5666 = vpack.c.b16 %v5572, %v5571
    %v5667 = vpack.c.b16 %v5574, %v5573
    %v5668 = vpack.c.b16 %v5576, %v5575
    %v5669 = vpack.c.b16 %v5578, %v5577
    %v5670 = vpack.c.b16 %v5580, %v5579
    %v5671 = vpack.c.b16 %v5582, %v5581
    %v5672 = vpack.c.b16 %v5584, %v5583
    %v5673 = vpack.c.b16 %v5586, %v5585
    %v5674 = vpack.c.b16 %v5588, %v5587
    %v5675 = vpack.c.b16 %v5590, %v5589
    %v5676 = vpack.c.b16 %v5592, %v5591
    %v5677 = vpack.c.b16 %v5594, %v5593
    %v5678 = vpack.c.b16 %v5596, %v5595
    %v5679 = vpack.c.b16 %v5598, %v5597
    %v5680 = vpack.c.b16 %v5600, %v5599
    %v5681 = vpack.c.b16 %v5602, %v5601
    %v5682 = vpack.c.b16 %v5604, %v5603
    %v5683 = vpack.c.b16 %v5606, %v5605
    %v5684 = vpack.c.b16 %v5608, %v5607
    %v5685 = vpack.c.b16 %v5610, %v5609
    %v5686 = vpack.c.b16 %v5612, %v5611
    %v5687 = vpack.c.b16 %v5614, %v5613
    %v5688 = vpack.c.b16 %v5616, %v5615
    %5761 = vmatprep.subr.bf16.mxu0 0
    %5762 = vmatpush1.bf16.msra.mxu0 %v5624
    %5763 = vmatprep.subr.bf16.mxu0 0
    %5764 = vmatpush1.bf16.msra.mxu0 %v5623
    %5765 = vmatprep.subr.bf16.mxu0 0
    %5766 = vmatpush1.bf16.msra.mxu0 %v5622
    %5767 = vmatprep.subr.bf16.mxu0 0
    %5768 = vmatpush1.bf16.msra.mxu0 %v5621
    %5769 = vmatprep.subr.bf16.mxu0 0
    %5770 = vmatpush1.bf16.msra.mxu0 %v5620
    %5771 = vmatprep.subr.bf16.mxu0 0
    %5772 = vmatpush1.bf16.msra.mxu0 %v5619
    %5773 = vmatprep.subr.bf16.mxu0 0
    %5774 = vmatpush1.bf16.msra.mxu0 %v5618
    %5775 = vmatprep.subr.bf16.mxu0 0
    %5776 = vmatpush1.bf16.msra.mxu0 %v5617
    %5777 = vmatprep.subr.bf16.mxu0 0
    %5778 = vmatpush2.bf16.msra.mxu0 %v5632
    %5779 = vmatprep.subr.bf16.mxu0 0
    %5780 = vmatpush2.bf16.msra.mxu0 %v5631
    %5781 = vmatprep.subr.bf16.mxu0 0
    %5782 = vmatpush2.bf16.msra.mxu0 %v5630
    %5783 = vmatprep.subr.bf16.mxu0 0
    %5784 = vmatpush2.bf16.msra.mxu0 %v5629
    %5785 = vmatprep.subr.bf16.mxu0 0
    %5786 = vmatpush2.bf16.msra.mxu0 %v5628
    %5787 = vmatprep.subr.bf16.mxu0 0
    %5788 = vmatpush2.bf16.msra.mxu0 %v5627
    %5789 = vmatprep.subr.bf16.mxu0 0
    %5790 = vmatpush2.bf16.msra.mxu0 %v5626
    %5791 = vmatprep.subr.bf16.mxu0 0
    %5792 = vmatpush2.bf16.msra.mxu0 %v5625
    %5793 = vmatprep.mubr.bf16.mxu0 %v4754
    %5794 = vmatmul.mubr.bf16.gmra.mxu0 %v4753
    %v5795 = vpop.f32.mrf.mxu0
    %v5796 = vadd.f32 0.0, %v5795
    %v5797 = vpop.f32.mrf.mxu0
    %v5798 = vpop.f32.mrf.mxu0
    %v5799 = vadd.f32 0.0, %v5798
    %v5800 = vpop.f32.mrf.mxu0
    %5801 = vmatprep.mubr.bf16.mxu0 %v4763
    %5802 = vmatmul.mubr.bf16.gmra.mxu0 %v4762
    %v5803 = vpop.f32.mrf.mxu0
    %v5804 = vadd.f32 0.0, %v5803
    %v5805 = vpop.f32.mrf.mxu0
    %v5806 = vpop.f32.mrf.mxu0
    %v5807 = vadd.f32 0.0, %v5806
    %v5808 = vpop.f32.mrf.mxu0
    %5809 = vmatprep.mubr.bf16.mxu0 %v4772
    %5810 = vmatmul.mubr.bf16.gmra.mxu0 %v4771
    %v5811 = vpop.f32.mrf.mxu0
    %v5812 = vadd.f32 0.0, %v5811
    %v5813 = vpop.f32.mrf.mxu0
    %v5814 = vpop.f32.mrf.mxu0
    %v5815 = vadd.f32 0.0, %v5814
    %v5816 = vpop.f32.mrf.mxu0
    %5817 = vmatprep.mubr.bf16.mxu0 %v4781
    %5818 = vmatmul.mubr.bf16.gmra.mxu0 %v4780
    %v5819 = vpop.f32.mrf.mxu0
    %v5820 = vadd.f32 0.0, %v5819
    %v5821 = vpop.f32.mrf.mxu0
    %v5822 = vpop.f32.mrf.mxu0
    %v5823 = vadd.f32 0.0, %v5822
    %v5824 = vpop.f32.mrf.mxu0
    %5825 = vmatprep.mubr.bf16.mxu0 %v4790
    %5826 = vmatmul.mubr.bf16.gmra.mxu0 %v4789
    %v5827 = vpop.f32.mrf.mxu0
    %v5828 = vadd.f32 0.0, %v5827
    %v5829 = vpop.f32.mrf.mxu0
    %v5830 = vpop.f32.mrf.mxu0
    %v5831 = vadd.f32 0.0, %v5830
    %v5832 = vpop.f32.mrf.mxu0
    %5833 = vmatprep.mubr.bf16.mxu0 %v4799
    %5834 = vmatmul.mubr.bf16.gmra.mxu0 %v4798
    %v5835 = vpop.f32.mrf.mxu0
    %v5836 = vadd.f32 0.0, %v5835
    %v5837 = vpop.f32.mrf.mxu0
    %v5838 = vpop.f32.mrf.mxu0
    %v5839 = vadd.f32 0.0, %v5838
    %v5840 = vpop.f32.mrf.mxu0
    %5841 = vmatprep.mubr.bf16.mxu0 %v4808
    %5842 = vmatmul.mubr.bf16.gmra.mxu0 %v4807
    %v5843 = vpop.f32.mrf.mxu0
    %v5844 = vadd.f32 0.0, %v5843
    %v5845 = vpop.f32.mrf.mxu0
    %v5846 = vpop.f32.mrf.mxu0
    %v5847 = vadd.f32 0.0, %v5846
    %v5848 = vpop.f32.mrf.mxu0
    %5849 = vmatprep.mubr.bf16.mxu0 %v4817
    %5850 = vmatmul.mubr.bf16.gmra.mxu0 %v4816
    %v5851 = vpop.f32.mrf.mxu0
    %v5852 = vadd.f32 0.0, %v5851
    %v5853 = vpop.f32.mrf.mxu0
    %v5854 = vpop.f32.mrf.mxu0
    %v5855 = vadd.f32 0.0, %v5854
    %v5856 = vpop.f32.mrf.mxu0
    %5857 = vmatprep.mubr.bf16.mxu0 %v4826
    %5858 = vmatmul.mubr.bf16.gmra.mxu0 %v4825
    %v5859 = vpop.f32.mrf.mxu0
    %v5860 = vadd.f32 0.0, %v5859
    %v5861 = vpop.f32.mrf.mxu0
    %v5862 = vpop.f32.mrf.mxu0
    %v5863 = vadd.f32 0.0, %v5862
    %v5864 = vpop.f32.mrf.mxu0
    %5865 = vmatprep.mubr.bf16.mxu0 %v4835
    %5866 = vmatmul.mubr.bf16.gmra.mxu0 %v4834
    %v5867 = vpop.f32.mrf.mxu0
    %v5868 = vadd.f32 0.0, %v5867
    %v5869 = vpop.f32.mrf.mxu0
    %v5870 = vpop.f32.mrf.mxu0
    %v5871 = vadd.f32 0.0, %v5870
    %v5872 = vpop.f32.mrf.mxu0
    %5873 = vmatprep.mubr.bf16.mxu0 %v4844
    %5874 = vmatmul.mubr.bf16.gmra.mxu0 %v4843
    %v5875 = vpop.f32.mrf.mxu0
    %v5876 = vadd.f32 0.0, %v5875
    %v5877 = vpop.f32.mrf.mxu0
    %v5878 = vpop.f32.mrf.mxu0
    %v5879 = vadd.f32 0.0, %v5878
    %v5880 = vpop.f32.mrf.mxu0
    %5881 = vmatprep.mubr.bf16.mxu0 %v4853
    %5882 = vmatmul.mubr.bf16.gmra.mxu0 %v4852
    %v5883 = vpop.f32.mrf.mxu0
    %v5884 = vadd.f32 0.0, %v5883
    %v5885 = vpop.f32.mrf.mxu0
    %v5886 = vpop.f32.mrf.mxu0
    %v5887 = vadd.f32 0.0, %v5886
    %v5888 = vpop.f32.mrf.mxu0
    %5889 = vmatprep.mubr.bf16.mxu0 %v4862
    %5890 = vmatmul.mubr.bf16.gmra.mxu0 %v4861
    %v5891 = vpop.f32.mrf.mxu0
    %v5892 = vadd.f32 0.0, %v5891
    %v5893 = vpop.f32.mrf.mxu0
    %v5894 = vpop.f32.mrf.mxu0
    %v5895 = vadd.f32 0.0, %v5894
    %v5896 = vpop.f32.mrf.mxu0
    %5897 = vmatprep.mubr.bf16.mxu0 %v4871
    %5898 = vmatmul.mubr.bf16.gmra.mxu0 %v4870
    %v5899 = vpop.f32.mrf.mxu0
    %v5900 = vadd.f32 0.0, %v5899
    %v5901 = vpop.f32.mrf.mxu0
    %v5902 = vpop.f32.mrf.mxu0
    %v5903 = vadd.f32 0.0, %v5902
    %v5904 = vpop.f32.mrf.mxu0
    %5905 = vmatprep.mubr.bf16.mxu0 %v4880
    %5906 = vmatmul.mubr.bf16.gmra.mxu0 %v4879
    %v5907 = vpop.f32.mrf.mxu0
    %v5908 = vadd.f32 0.0, %v5907
    %v5909 = vpop.f32.mrf.mxu0
    %v5910 = vpop.f32.mrf.mxu0
    %v5911 = vadd.f32 0.0, %v5910
    %v5912 = vpop.f32.mrf.mxu0
    %5913 = vmatprep.mubr.bf16.mxu0 %v4889
    %5914 = vmatmul.mubr.bf16.gmra.mxu0 %v4888
    %v5915 = vpop.f32.mrf.mxu0
    %v5916 = vadd.f32 0.0, %v5915
    %v5917 = vpop.f32.mrf.mxu0
    %v5918 = vpop.f32.mrf.mxu0
    %v5919 = vadd.f32 0.0, %v5918
    %v5920 = vpop.f32.mrf.mxu0
    %5921 = vmatprep.mubr.bf16.mxu0 %v4898
    %5922 = vmatmul.mubr.bf16.gmra.mxu0 %v4897
    %v5923 = vpop.f32.mrf.mxu0
    %v5924 = vadd.f32 0.0, %v5923
    %v5925 = vpop.f32.mrf.mxu0
    %v5926 = vpop.f32.mrf.mxu0
    %v5927 = vadd.f32 0.0, %v5926
    %v5928 = vpop.f32.mrf.mxu0
    %5929 = vmatprep.mubr.bf16.mxu0 %v4907
    %5930 = vmatmul.mubr.bf16.gmra.mxu0 %v4906
    %v5931 = vpop.f32.mrf.mxu0
    %v5932 = vadd.f32 0.0, %v5931
    %v5933 = vpop.f32.mrf.mxu0
    %v5934 = vpop.f32.mrf.mxu0
    %v5935 = vadd.f32 0.0, %v5934
    %v5936 = vpop.f32.mrf.mxu0
    %5937 = vmatprep.mubr.bf16.mxu0 %v4916
    %5938 = vmatmul.mubr.bf16.gmra.mxu0 %v4915
    %v5939 = vpop.f32.mrf.mxu0
    %v5940 = vadd.f32 0.0, %v5939
    %v5941 = vpop.f32.mrf.mxu0
    %v5942 = vpop.f32.mrf.mxu0
    %v5943 = vadd.f32 0.0, %v5942
    %v5944 = vpop.f32.mrf.mxu0
    %5945 = vmatprep.mubr.bf16.mxu0 %v4925
    %5946 = vmatmul.mubr.bf16.gmra.mxu0 %v4924
    %v5947 = vpop.f32.mrf.mxu0
    %v5948 = vadd.f32 0.0, %v5947
    %v5949 = vpop.f32.mrf.mxu0
    %v5950 = vpop.f32.mrf.mxu0
    %v5951 = vadd.f32 0.0, %v5950
    %v5952 = vpop.f32.mrf.mxu0
    %5953 = vmatprep.mubr.bf16.mxu0 %v4934
    %5954 = vmatmul.mubr.bf16.gmra.mxu0 %v4933
    %v5955 = vpop.f32.mrf.mxu0
    %v5956 = vadd.f32 0.0, %v5955
    %v5957 = vpop.f32.mrf.mxu0
    %v5958 = vpop.f32.mrf.mxu0
    %v5959 = vadd.f32 0.0, %v5958
    %v5960 = vpop.f32.mrf.mxu0
    %5961 = vmatprep.mubr.bf16.mxu0 %v4943
    %5962 = vmatmul.mubr.bf16.gmra.mxu0 %v4942
    %v5963 = vpop.f32.mrf.mxu0
    %v5964 = vadd.f32 0.0, %v5963
    %v5965 = vpop.f32.mrf.mxu0
    %v5966 = vpop.f32.mrf.mxu0
    %v5967 = vadd.f32 0.0, %v5966
    %v5968 = vpop.f32.mrf.mxu0
    %5969 = vmatprep.mubr.bf16.mxu0 %v4952
    %5970 = vmatmul.mubr.bf16.gmra.mxu0 %v4951
    %v5971 = vpop.f32.mrf.mxu0
    %v5972 = vadd.f32 0.0, %v5971
    %v5973 = vpop.f32.mrf.mxu0
    %v5974 = vpop.f32.mrf.mxu0
    %v5975 = vadd.f32 0.0, %v5974
    %v5976 = vpop.f32.mrf.mxu0
    %5977 = vmatprep.mubr.bf16.mxu0 %v4961
    %5978 = vmatmul.mubr.bf16.gmra.mxu0 %v4960
    %v5979 = vpop.f32.mrf.mxu0
    %v5980 = vadd.f32 0.0, %v5979
    %v5981 = vpop.f32.mrf.mxu0
    %v5982 = vpop.f32.mrf.mxu0
    %v5983 = vadd.f32 0.0, %v5982
    %v5984 = vpop.f32.mrf.mxu0
    %5985 = vmatprep.mubr.bf16.mxu0 %v4970
    %5986 = vmatmul.mubr.bf16.gmra.mxu0 %v4969
    %v5987 = vpop.f32.mrf.mxu0
    %v5988 = vadd.f32 0.0, %v5987
    %v5989 = vpop.f32.mrf.mxu0
    %v5990 = vpop.f32.mrf.mxu0
    %v5991 = vadd.f32 0.0, %v5990
    %v5992 = vpop.f32.mrf.mxu0
    %5993 = vmatprep.mubr.bf16.mxu0 %v4979
    %5994 = vmatmul.mubr.bf16.gmra.mxu0 %v4978
    %v5995 = vpop.f32.mrf.mxu0
    %v5996 = vadd.f32 0.0, %v5995
    %v5997 = vpop.f32.mrf.mxu0
    %v5998 = vpop.f32.mrf.mxu0
    %v5999 = vadd.f32 0.0, %v5998
    %v6000 = vpop.f32.mrf.mxu0
    %6001 = vmatprep.mubr.bf16.mxu0 %v4988
    %6002 = vmatmul.mubr.bf16.gmra.mxu0 %v4987
    %v6003 = vpop.f32.mrf.mxu0
    %v6004 = vadd.f32 0.0, %v6003
    %v6005 = vpop.f32.mrf.mxu0
    %v6006 = vpop.f32.mrf.mxu0
    %v6007 = vadd.f32 0.0, %v6006
    %v6008 = vpop.f32.mrf.mxu0
    %6009 = vmatprep.mubr.bf16.mxu0 %v4997
    %6010 = vmatmul.mubr.bf16.gmra.mxu0 %v4996
    %v6011 = vpop.f32.mrf.mxu0
    %v6012 = vadd.f32 0.0, %v6011
    %v6013 = vpop.f32.mrf.mxu0
    %v6014 = vpop.f32.mrf.mxu0
    %v6015 = vadd.f32 0.0, %v6014
    %v6016 = vpop.f32.mrf.mxu0
    %6017 = vmatprep.mubr.bf16.mxu0 %v5006
    %6018 = vmatmul.mubr.bf16.gmra.mxu0 %v5005
    %v6019 = vpop.f32.mrf.mxu0
    %v6020 = vadd.f32 0.0, %v6019
    %v6021 = vpop.f32.mrf.mxu0
    %v6022 = vpop.f32.mrf.mxu0
    %v6023 = vadd.f32 0.0, %v6022
    %v6024 = vpop.f32.mrf.mxu0
    %6025 = vmatprep.mubr.bf16.mxu0 %v5015
    %6026 = vmatmul.mubr.bf16.gmra.mxu0 %v5014
    %v6027 = vpop.f32.mrf.mxu0
    %v6028 = vadd.f32 0.0, %v6027
    %v6029 = vpop.f32.mrf.mxu0
    %v6030 = vpop.f32.mrf.mxu0
    %v6031 = vadd.f32 0.0, %v6030
    %v6032 = vpop.f32.mrf.mxu0
    %6033 = vmatprep.mubr.bf16.mxu0 %v5024
    %6034 = vmatmul.mubr.bf16.gmra.mxu0 %v5023
    %v6035 = vpop.f32.mrf.mxu0
    %v6036 = vadd.f32 0.0, %v6035
    %v6037 = vpop.f32.mrf.mxu0
    %v6038 = vpop.f32.mrf.mxu0
    %v6039 = vadd.f32 0.0, %v6038
    %v6040 = vpop.f32.mrf.mxu0
    %6041 = vmatprep.mubr.bf16.mxu0 %v5033
    %6042 = vmatmul.mubr.bf16.gmra.mxu0 %v5032
    %v6043 = vpop.f32.mrf.mxu0
    %v6044 = vadd.f32 0.0, %v6043
    %v6045 = vpop.f32.mrf.mxu0
    %v6046 = vpop.f32.mrf.mxu0
    %v6047 = vadd.f32 0.0, %v6046
    %v6048 = vpop.f32.mrf.mxu0
    %6049 = vdwg.mxu0
    %6050 = vmatprep.subr.bf16.mxu0 0
    %6051 = vmatpush1.bf16.msra.mxu0 %v5640
    %6052 = vmatprep.subr.bf16.mxu0 0
    %6053 = vmatpush1.bf16.msra.mxu0 %v5639
    %6054 = vmatprep.subr.bf16.mxu0 0
    %6055 = vmatpush1.bf16.msra.mxu0 %v5638
    %6056 = vmatprep.subr.bf16.mxu0 0
    %6057 = vmatpush1.bf16.msra.mxu0 %v5637
    %6058 = vmatprep.subr.bf16.mxu0 0
    %6059 = vmatpush1.bf16.msra.mxu0 %v5636
    %6060 = vmatprep.subr.bf16.mxu0 0
    %6061 = vmatpush1.bf16.msra.mxu0 %v5635
    %6062 = vmatprep.subr.bf16.mxu0 0
    %6063 = vmatpush1.bf16.msra.mxu0 %v5634
    %6064 = vmatprep.subr.bf16.mxu0 0
    %6065 = vmatpush1.bf16.msra.mxu0 %v5633
    %6066 = vmatprep.subr.bf16.mxu0 0
    %6067 = vmatpush2.bf16.msra.mxu0 %v5648
    %6068 = vmatprep.subr.bf16.mxu0 0
    %6069 = vmatpush2.bf16.msra.mxu0 %v5647
    %6070 = vmatprep.subr.bf16.mxu0 0
    %6071 = vmatpush2.bf16.msra.mxu0 %v5646
    %6072 = vmatprep.subr.bf16.mxu0 0
    %6073 = vmatpush2.bf16.msra.mxu0 %v5645
    %6074 = vmatprep.subr.bf16.mxu0 0
    %6075 = vmatpush2.bf16.msra.mxu0 %v5644
    %6076 = vmatprep.subr.bf16.mxu0 0
    %6077 = vmatpush2.bf16.msra.mxu0 %v5643
    %6078 = vmatprep.subr.bf16.mxu0 0
    %6079 = vmatpush2.bf16.msra.mxu0 %v5642
    %6080 = vmatprep.subr.bf16.mxu0 0
    %6081 = vmatpush2.bf16.msra.mxu0 %v5641
    %6082 = vmatprep.mubr.bf16.mxu0 %v4756
    %6083 = vmatmul.mubr.bf16.gmra.mxu0 %v4755
    %v6084 = vpop.f32.mrf.mxu0
    %v6085 = vadd.f32 %v5796, %v6084
    %v6086 = vpop.f32.mrf.mxu0
    %v6087 = vpop.f32.mrf.mxu0
    %v6088 = vadd.f32 %v5799, %v6087
    %v6089 = vpop.f32.mrf.mxu0
    %6090 = vmatprep.mubr.bf16.mxu0 %v4765
    %6091 = vmatmul.mubr.bf16.gmra.mxu0 %v4764
    %v6092 = vpop.f32.mrf.mxu0
    %v6093 = vadd.f32 %v5804, %v6092
    %v6094 = vpop.f32.mrf.mxu0
    %v6095 = vpop.f32.mrf.mxu0
    %v6096 = vadd.f32 %v5807, %v6095
    %v6097 = vpop.f32.mrf.mxu0
    %6098 = vmatprep.mubr.bf16.mxu0 %v4774
    %6099 = vmatmul.mubr.bf16.gmra.mxu0 %v4773
    %v6100 = vpop.f32.mrf.mxu0
    %v6101 = vadd.f32 %v5812, %v6100
    %v6102 = vpop.f32.mrf.mxu0
    %v6103 = vpop.f32.mrf.mxu0
    %v6104 = vadd.f32 %v5815, %v6103
    %v6105 = vpop.f32.mrf.mxu0
    %6106 = vmatprep.mubr.bf16.mxu0 %v4783
    %6107 = vmatmul.mubr.bf16.gmra.mxu0 %v4782
    %v6108 = vpop.f32.mrf.mxu0
    %v6109 = vadd.f32 %v5820, %v6108
    %v6110 = vpop.f32.mrf.mxu0
    %v6111 = vpop.f32.mrf.mxu0
    %v6112 = vadd.f32 %v5823, %v6111
    %v6113 = vpop.f32.mrf.mxu0
    %6114 = vmatprep.mubr.bf16.mxu0 %v4792
    %6115 = vmatmul.mubr.bf16.gmra.mxu0 %v4791
    %v6116 = vpop.f32.mrf.mxu0
    %v6117 = vadd.f32 %v5828, %v6116
    %v6118 = vpop.f32.mrf.mxu0
    %v6119 = vpop.f32.mrf.mxu0
    %v6120 = vadd.f32 %v5831, %v6119
    %v6121 = vpop.f32.mrf.mxu0
    %6122 = vmatprep.mubr.bf16.mxu0 %v4801
    %6123 = vmatmul.mubr.bf16.gmra.mxu0 %v4800
    %v6124 = vpop.f32.mrf.mxu0
    %v6125 = vadd.f32 %v5836, %v6124
    %v6126 = vpop.f32.mrf.mxu0
    %v6127 = vpop.f32.mrf.mxu0
    %v6128 = vadd.f32 %v5839, %v6127
    %v6129 = vpop.f32.mrf.mxu0
    %6130 = vmatprep.mubr.bf16.mxu0 %v4810
    %6131 = vmatmul.mubr.bf16.gmra.mxu0 %v4809
    %v6132 = vpop.f32.mrf.mxu0
    %v6133 = vadd.f32 %v5844, %v6132
    %v6134 = vpop.f32.mrf.mxu0
    %v6135 = vpop.f32.mrf.mxu0
    %v6136 = vadd.f32 %v5847, %v6135
    %v6137 = vpop.f32.mrf.mxu0
    %6138 = vmatprep.mubr.bf16.mxu0 %v4819
    %6139 = vmatmul.mubr.bf16.gmra.mxu0 %v4818
    %v6140 = vpop.f32.mrf.mxu0
    %v6141 = vadd.f32 %v5852, %v6140
    %v6142 = vpop.f32.mrf.mxu0
    %v6143 = vpop.f32.mrf.mxu0
    %v6144 = vadd.f32 %v5855, %v6143
    %v6145 = vpop.f32.mrf.mxu0
    %6146 = vmatprep.mubr.bf16.mxu0 %v4828
    %6147 = vmatmul.mubr.bf16.gmra.mxu0 %v4827
    %v6148 = vpop.f32.mrf.mxu0
    %v6149 = vadd.f32 %v5860, %v6148
    %v6150 = vpop.f32.mrf.mxu0
    %v6151 = vpop.f32.mrf.mxu0
    %v6152 = vadd.f32 %v5863, %v6151
    %v6153 = vpop.f32.mrf.mxu0
    %6154 = vmatprep.mubr.bf16.mxu0 %v4837
    %6155 = vmatmul.mubr.bf16.gmra.mxu0 %v4836
    %v6156 = vpop.f32.mrf.mxu0
    %v6157 = vadd.f32 %v5868, %v6156
    %v6158 = vpop.f32.mrf.mxu0
    %v6159 = vpop.f32.mrf.mxu0
    %v6160 = vadd.f32 %v5871, %v6159
    %v6161 = vpop.f32.mrf.mxu0
    %6162 = vmatprep.mubr.bf16.mxu0 %v4846
    %6163 = vmatmul.mubr.bf16.gmra.mxu0 %v4845
    %v6164 = vpop.f32.mrf.mxu0
    %v6165 = vadd.f32 %v5876, %v6164
    %v6166 = vpop.f32.mrf.mxu0
    %v6167 = vpop.f32.mrf.mxu0
    %v6168 = vadd.f32 %v5879, %v6167
    %v6169 = vpop.f32.mrf.mxu0
    %6170 = vmatprep.mubr.bf16.mxu0 %v4855
    %6171 = vmatmul.mubr.bf16.gmra.mxu0 %v4854
    %v6172 = vpop.f32.mrf.mxu0
    %v6173 = vadd.f32 %v5884, %v6172
    %v6174 = vpop.f32.mrf.mxu0
    %v6175 = vpop.f32.mrf.mxu0
    %v6176 = vadd.f32 %v5887, %v6175
    %v6177 = vpop.f32.mrf.mxu0
    %6178 = vmatprep.mubr.bf16.mxu0 %v4864
    %6179 = vmatmul.mubr.bf16.gmra.mxu0 %v4863
    %v6180 = vpop.f32.mrf.mxu0
    %v6181 = vadd.f32 %v5892, %v6180
    %v6182 = vpop.f32.mrf.mxu0
    %v6183 = vpop.f32.mrf.mxu0
    %v6184 = vadd.f32 %v5895, %v6183
    %v6185 = vpop.f32.mrf.mxu0
    %6186 = vmatprep.mubr.bf16.mxu0 %v4873
    %6187 = vmatmul.mubr.bf16.gmra.mxu0 %v4872
    %v6188 = vpop.f32.mrf.mxu0
    %v6189 = vadd.f32 %v5900, %v6188
    %v6190 = vpop.f32.mrf.mxu0
    %v6191 = vpop.f32.mrf.mxu0
    %v6192 = vadd.f32 %v5903, %v6191
    %v6193 = vpop.f32.mrf.mxu0
    %6194 = vmatprep.mubr.bf16.mxu0 %v4882
    %6195 = vmatmul.mubr.bf16.gmra.mxu0 %v4881
    %v6196 = vpop.f32.mrf.mxu0
    %v6197 = vadd.f32 %v5908, %v6196
    %v6198 = vpop.f32.mrf.mxu0
    %v6199 = vpop.f32.mrf.mxu0
    %v6200 = vadd.f32 %v5911, %v6199
    %v6201 = vpop.f32.mrf.mxu0
    %6202 = vmatprep.mubr.bf16.mxu0 %v4891
    %6203 = vmatmul.mubr.bf16.gmra.mxu0 %v4890
    %v6204 = vpop.f32.mrf.mxu0
    %v6205 = vadd.f32 %v5916, %v6204
    %v6206 = vpop.f32.mrf.mxu0
    %v6207 = vpop.f32.mrf.mxu0
    %v6208 = vadd.f32 %v5919, %v6207
    %v6209 = vpop.f32.mrf.mxu0
    %6210 = vmatprep.mubr.bf16.mxu0 %v4900
    %6211 = vmatmul.mubr.bf16.gmra.mxu0 %v4899
    %v6212 = vpop.f32.mrf.mxu0
    %v6213 = vadd.f32 %v5924, %v6212
    %v6214 = vpop.f32.mrf.mxu0
    %v6215 = vpop.f32.mrf.mxu0
    %v6216 = vadd.f32 %v5927, %v6215
    %v6217 = vpop.f32.mrf.mxu0
    %6218 = vmatprep.mubr.bf16.mxu0 %v4909
    %6219 = vmatmul.mubr.bf16.gmra.mxu0 %v4908
    %v6220 = vpop.f32.mrf.mxu0
    %v6221 = vadd.f32 %v5932, %v6220
    %v6222 = vpop.f32.mrf.mxu0
    %v6223 = vpop.f32.mrf.mxu0
    %v6224 = vadd.f32 %v5935, %v6223
    %v6225 = vpop.f32.mrf.mxu0
    %6226 = vmatprep.mubr.bf16.mxu0 %v4918
    %6227 = vmatmul.mubr.bf16.gmra.mxu0 %v4917
    %v6228 = vpop.f32.mrf.mxu0
    %v6229 = vadd.f32 %v5940, %v6228
    %v6230 = vpop.f32.mrf.mxu0
    %v6231 = vpop.f32.mrf.mxu0
    %v6232 = vadd.f32 %v5943, %v6231
    %v6233 = vpop.f32.mrf.mxu0
    %6234 = vmatprep.mubr.bf16.mxu0 %v4927
    %6235 = vmatmul.mubr.bf16.gmra.mxu0 %v4926
    %v6236 = vpop.f32.mrf.mxu0
    %v6237 = vadd.f32 %v5948, %v6236
    %v6238 = vpop.f32.mrf.mxu0
    %v6239 = vpop.f32.mrf.mxu0
    %v6240 = vadd.f32 %v5951, %v6239
    %v6241 = vpop.f32.mrf.mxu0
    %6242 = vmatprep.mubr.bf16.mxu0 %v4936
    %6243 = vmatmul.mubr.bf16.gmra.mxu0 %v4935
    %v6244 = vpop.f32.mrf.mxu0
    %v6245 = vadd.f32 %v5956, %v6244
    %v6246 = vpop.f32.mrf.mxu0
    %v6247 = vpop.f32.mrf.mxu0
    %v6248 = vadd.f32 %v5959, %v6247
    %v6249 = vpop.f32.mrf.mxu0
    %6250 = vmatprep.mubr.bf16.mxu0 %v4945
    %6251 = vmatmul.mubr.bf16.gmra.mxu0 %v4944
    %v6252 = vpop.f32.mrf.mxu0
    %v6253 = vadd.f32 %v5964, %v6252
    %v6254 = vpop.f32.mrf.mxu0
    %v6255 = vpop.f32.mrf.mxu0
    %v6256 = vadd.f32 %v5967, %v6255
    %v6257 = vpop.f32.mrf.mxu0
    %6258 = vmatprep.mubr.bf16.mxu0 %v4954
    %6259 = vmatmul.mubr.bf16.gmra.mxu0 %v4953
    %v6260 = vpop.f32.mrf.mxu0
    %v6261 = vadd.f32 %v5972, %v6260
    %v6262 = vpop.f32.mrf.mxu0
    %v6263 = vpop.f32.mrf.mxu0
    %v6264 = vadd.f32 %v5975, %v6263
    %v6265 = vpop.f32.mrf.mxu0
    %6266 = vmatprep.mubr.bf16.mxu0 %v4963
    %6267 = vmatmul.mubr.bf16.gmra.mxu0 %v4962
    %v6268 = vpop.f32.mrf.mxu0
    %v6269 = vadd.f32 %v5980, %v6268
    %v6270 = vpop.f32.mrf.mxu0
    %v6271 = vpop.f32.mrf.mxu0
    %v6272 = vadd.f32 %v5983, %v6271
    %v6273 = vpop.f32.mrf.mxu0
    %6274 = vmatprep.mubr.bf16.mxu0 %v4972
    %6275 = vmatmul.mubr.bf16.gmra.mxu0 %v4971
    %v6276 = vpop.f32.mrf.mxu0
    %v6277 = vadd.f32 %v5988, %v6276
    %v6278 = vpop.f32.mrf.mxu0
    %v6279 = vpop.f32.mrf.mxu0
    %v6280 = vadd.f32 %v5991, %v6279
    %v6281 = vpop.f32.mrf.mxu0
    %6282 = vmatprep.mubr.bf16.mxu0 %v4981
    %6283 = vmatmul.mubr.bf16.gmra.mxu0 %v4980
    %v6284 = vpop.f32.mrf.mxu0
    %v6285 = vadd.f32 %v5996, %v6284
    %v6286 = vpop.f32.mrf.mxu0
    %v6287 = vpop.f32.mrf.mxu0
    %v6288 = vadd.f32 %v5999, %v6287
    %v6289 = vpop.f32.mrf.mxu0
    %6290 = vmatprep.mubr.bf16.mxu0 %v4990
    %6291 = vmatmul.mubr.bf16.gmra.mxu0 %v4989
    %v6292 = vpop.f32.mrf.mxu0
    %v6293 = vadd.f32 %v6004, %v6292
    %v6294 = vpop.f32.mrf.mxu0
    %v6295 = vpop.f32.mrf.mxu0
    %v6296 = vadd.f32 %v6007, %v6295
    %v6297 = vpop.f32.mrf.mxu0
    %6298 = vmatprep.mubr.bf16.mxu0 %v4999
    %6299 = vmatmul.mubr.bf16.gmra.mxu0 %v4998
    %v6300 = vpop.f32.mrf.mxu0
    %v6301 = vadd.f32 %v6012, %v6300
    %v6302 = vpop.f32.mrf.mxu0
    %v6303 = vpop.f32.mrf.mxu0
    %v6304 = vadd.f32 %v6015, %v6303
    %v6305 = vpop.f32.mrf.mxu0
    %6306 = vmatprep.mubr.bf16.mxu0 %v5008
    %6307 = vmatmul.mubr.bf16.gmra.mxu0 %v5007
    %v6308 = vpop.f32.mrf.mxu0
    %v6309 = vadd.f32 %v6020, %v6308
    %v6310 = vpop.f32.mrf.mxu0
    %v6311 = vpop.f32.mrf.mxu0
    %v6312 = vadd.f32 %v6023, %v6311
    %v6313 = vpop.f32.mrf.mxu0
    %6314 = vmatprep.mubr.bf16.mxu0 %v5017
    %6315 = vmatmul.mubr.bf16.gmra.mxu0 %v5016
    %v6316 = vpop.f32.mrf.mxu0
    %v6317 = vadd.f32 %v6028, %v6316
    %v6318 = vpop.f32.mrf.mxu0
    %v6319 = vpop.f32.mrf.mxu0
    %v6320 = vadd.f32 %v6031, %v6319
    %v6321 = vpop.f32.mrf.mxu0
    %6322 = vmatprep.mubr.bf16.mxu0 %v5026
    %6323 = vmatmul.mubr.bf16.gmra.mxu0 %v5025
    %v6324 = vpop.f32.mrf.mxu0
    %v6325 = vadd.f32 %v6036, %v6324
    %v6326 = vpop.f32.mrf.mxu0
    %v6327 = vpop.f32.mrf.mxu0
    %v6328 = vadd.f32 %v6039, %v6327
    %v6329 = vpop.f32.mrf.mxu0
    %6330 = vmatprep.mubr.bf16.mxu0 %v5035
    %6331 = vmatmul.mubr.bf16.gmra.mxu0 %v5034
    %v6332 = vpop.f32.mrf.mxu0
    %v6333 = vadd.f32 %v6044, %v6332
    %v6334 = vpop.f32.mrf.mxu0
    %v6335 = vpop.f32.mrf.mxu0
    %v6336 = vadd.f32 %v6047, %v6335
    %v6337 = vpop.f32.mrf.mxu0
    %6338 = vdwg.mxu0
    %6339 = vmatprep.subr.bf16.mxu0 0
    %6340 = vmatpush1.bf16.msra.mxu0 %v5656
    %6341 = vmatprep.subr.bf16.mxu0 0
    %6342 = vmatpush1.bf16.msra.mxu0 %v5655
    %6343 = vmatprep.subr.bf16.mxu0 0
    %6344 = vmatpush1.bf16.msra.mxu0 %v5654
    %6345 = vmatprep.subr.bf16.mxu0 0
    %6346 = vmatpush1.bf16.msra.mxu0 %v5653
    %6347 = vmatprep.subr.bf16.mxu0 0
    %6348 = vmatpush1.bf16.msra.mxu0 %v5652
    %6349 = vmatprep.subr.bf16.mxu0 0
    %6350 = vmatpush1.bf16.msra.mxu0 %v5651
    %6351 = vmatprep.subr.bf16.mxu0 0
    %6352 = vmatpush1.bf16.msra.mxu0 %v5650
    %6353 = vmatprep.subr.bf16.mxu0 0
    %6354 = vmatpush1.bf16.msra.mxu0 %v5649
    %6355 = vmatprep.subr.bf16.mxu0 0
    %6356 = vmatpush2.bf16.msra.mxu0 %v5664
    %6357 = vmatprep.subr.bf16.mxu0 0
    %6358 = vmatpush2.bf16.msra.mxu0 %v5663
    %6359 = vmatprep.subr.bf16.mxu0 0
    %6360 = vmatpush2.bf16.msra.mxu0 %v5662
    %6361 = vmatprep.subr.bf16.mxu0 0
    %6362 = vmatpush2.bf16.msra.mxu0 %v5661
    %6363 = vmatprep.subr.bf16.mxu0 0
    %6364 = vmatpush2.bf16.msra.mxu0 %v5660
    %6365 = vmatprep.subr.bf16.mxu0 0
    %6366 = vmatpush2.bf16.msra.mxu0 %v5659
    %6367 = vmatprep.subr.bf16.mxu0 0
    %6368 = vmatpush2.bf16.msra.mxu0 %v5658
    %6369 = vmatprep.subr.bf16.mxu0 0
    %6370 = vmatpush2.bf16.msra.mxu0 %v5657
    %6371 = vmatprep.mubr.bf16.mxu0 %v4758
    %6372 = vmatmul.mubr.bf16.gmra.mxu0 %v4757
    %v6373 = vpop.f32.mrf.mxu0
    %v6374 = vadd.f32 %v6085, %v6373
    %v6375 = vpop.f32.mrf.mxu0
    %v6376 = vpop.f32.mrf.mxu0
    %v6377 = vadd.f32 %v6088, %v6376
    %v6378 = vpop.f32.mrf.mxu0
    %6379 = vmatprep.mubr.bf16.mxu0 %v4767
    %6380 = vmatmul.mubr.bf16.gmra.mxu0 %v4766
    %v6381 = vpop.f32.mrf.mxu0
    %v6382 = vadd.f32 %v6093, %v6381
    %v6383 = vpop.f32.mrf.mxu0
    %v6384 = vpop.f32.mrf.mxu0
    %v6385 = vadd.f32 %v6096, %v6384
    %v6386 = vpop.f32.mrf.mxu0
    %6387 = vmatprep.mubr.bf16.mxu0 %v4776
    %6388 = vmatmul.mubr.bf16.gmra.mxu0 %v4775
    %v6389 = vpop.f32.mrf.mxu0
    %v6390 = vadd.f32 %v6101, %v6389
    %v6391 = vpop.f32.mrf.mxu0
    %v6392 = vpop.f32.mrf.mxu0
    %v6393 = vadd.f32 %v6104, %v6392
    %v6394 = vpop.f32.mrf.mxu0
    %6395 = vmatprep.mubr.bf16.mxu0 %v4785
    %6396 = vmatmul.mubr.bf16.gmra.mxu0 %v4784
    %v6397 = vpop.f32.mrf.mxu0
    %v6398 = vadd.f32 %v6109, %v6397
    %v6399 = vpop.f32.mrf.mxu0
    %v6400 = vpop.f32.mrf.mxu0
    %v6401 = vadd.f32 %v6112, %v6400
    %v6402 = vpop.f32.mrf.mxu0
    %6403 = vmatprep.mubr.bf16.mxu0 %v4794
    %6404 = vmatmul.mubr.bf16.gmra.mxu0 %v4793
    %v6405 = vpop.f32.mrf.mxu0
    %v6406 = vadd.f32 %v6117, %v6405
    %v6407 = vpop.f32.mrf.mxu0
    %v6408 = vpop.f32.mrf.mxu0
    %v6409 = vadd.f32 %v6120, %v6408
    %v6410 = vpop.f32.mrf.mxu0
    %6411 = vmatprep.mubr.bf16.mxu0 %v4803
    %6412 = vmatmul.mubr.bf16.gmra.mxu0 %v4802
    %v6413 = vpop.f32.mrf.mxu0
    %v6414 = vadd.f32 %v6125, %v6413
    %v6415 = vpop.f32.mrf.mxu0
    %v6416 = vpop.f32.mrf.mxu0
    %v6417 = vadd.f32 %v6128, %v6416
    %v6418 = vpop.f32.mrf.mxu0
    %6419 = vmatprep.mubr.bf16.mxu0 %v4812
    %6420 = vmatmul.mubr.bf16.gmra.mxu0 %v4811
    %v6421 = vpop.f32.mrf.mxu0
    %v6422 = vadd.f32 %v6133, %v6421
    %v6423 = vpop.f32.mrf.mxu0
    %v6424 = vpop.f32.mrf.mxu0
    %v6425 = vadd.f32 %v6136, %v6424
    %v6426 = vpop.f32.mrf.mxu0
    %6427 = vmatprep.mubr.bf16.mxu0 %v4821
    %6428 = vmatmul.mubr.bf16.gmra.mxu0 %v4820
    %v6429 = vpop.f32.mrf.mxu0
    %v6430 = vadd.f32 %v6141, %v6429
    %v6431 = vpop.f32.mrf.mxu0
    %v6432 = vpop.f32.mrf.mxu0
    %v6433 = vadd.f32 %v6144, %v6432
    %v6434 = vpop.f32.mrf.mxu0
    %6435 = vmatprep.mubr.bf16.mxu0 %v4830
    %6436 = vmatmul.mubr.bf16.gmra.mxu0 %v4829
    %v6437 = vpop.f32.mrf.mxu0
    %v6438 = vadd.f32 %v6149, %v6437
    %v6439 = vpop.f32.mrf.mxu0
    %v6440 = vpop.f32.mrf.mxu0
    %v6441 = vadd.f32 %v6152, %v6440
    %v6442 = vpop.f32.mrf.mxu0
    %6443 = vmatprep.mubr.bf16.mxu0 %v4839
    %6444 = vmatmul.mubr.bf16.gmra.mxu0 %v4838
    %v6445 = vpop.f32.mrf.mxu0
    %v6446 = vadd.f32 %v6157, %v6445
    %v6447 = vpop.f32.mrf.mxu0
    %v6448 = vpop.f32.mrf.mxu0
    %v6449 = vadd.f32 %v6160, %v6448
    %v6450 = vpop.f32.mrf.mxu0
    %6451 = vmatprep.mubr.bf16.mxu0 %v4848
    %6452 = vmatmul.mubr.bf16.gmra.mxu0 %v4847
    %v6453 = vpop.f32.mrf.mxu0
    %v6454 = vadd.f32 %v6165, %v6453
    %v6455 = vpop.f32.mrf.mxu0
    %v6456 = vpop.f32.mrf.mxu0
    %v6457 = vadd.f32 %v6168, %v6456
    %v6458 = vpop.f32.mrf.mxu0
    %6459 = vmatprep.mubr.bf16.mxu0 %v4857
    %6460 = vmatmul.mubr.bf16.gmra.mxu0 %v4856
    %v6461 = vpop.f32.mrf.mxu0
    %v6462 = vadd.f32 %v6173, %v6461
    %v6463 = vpop.f32.mrf.mxu0
    %v6464 = vpop.f32.mrf.mxu0
    %v6465 = vadd.f32 %v6176, %v6464
    %v6466 = vpop.f32.mrf.mxu0
    %6467 = vmatprep.mubr.bf16.mxu0 %v4866
    %6468 = vmatmul.mubr.bf16.gmra.mxu0 %v4865
    %v6469 = vpop.f32.mrf.mxu0
    %v6470 = vadd.f32 %v6181, %v6469
    %v6471 = vpop.f32.mrf.mxu0
    %v6472 = vpop.f32.mrf.mxu0
    %v6473 = vadd.f32 %v6184, %v6472
    %v6474 = vpop.f32.mrf.mxu0
    %6475 = vmatprep.mubr.bf16.mxu0 %v4875
    %6476 = vmatmul.mubr.bf16.gmra.mxu0 %v4874
    %v6477 = vpop.f32.mrf.mxu0
    %v6478 = vadd.f32 %v6189, %v6477
    %v6479 = vpop.f32.mrf.mxu0
    %v6480 = vpop.f32.mrf.mxu0
    %v6481 = vadd.f32 %v6192, %v6480
    %v6482 = vpop.f32.mrf.mxu0
    %6483 = vmatprep.mubr.bf16.mxu0 %v4884
    %6484 = vmatmul.mubr.bf16.gmra.mxu0 %v4883
    %v6485 = vpop.f32.mrf.mxu0
    %v6486 = vadd.f32 %v6197, %v6485
    %v6487 = vpop.f32.mrf.mxu0
    %v6488 = vpop.f32.mrf.mxu0
    %v6489 = vadd.f32 %v6200, %v6488
    %v6490 = vpop.f32.mrf.mxu0
    %6491 = vmatprep.mubr.bf16.mxu0 %v4893
    %6492 = vmatmul.mubr.bf16.gmra.mxu0 %v4892
    %v6493 = vpop.f32.mrf.mxu0
    %v6494 = vadd.f32 %v6205, %v6493
    %v6495 = vpop.f32.mrf.mxu0
    %v6496 = vpop.f32.mrf.mxu0
    %v6497 = vadd.f32 %v6208, %v6496
    %v6498 = vpop.f32.mrf.mxu0
    %6499 = vmatprep.mubr.bf16.mxu0 %v4902
    %6500 = vmatmul.mubr.bf16.gmra.mxu0 %v4901
    %v6501 = vpop.f32.mrf.mxu0
    %v6502 = vadd.f32 %v6213, %v6501
    %v6503 = vpop.f32.mrf.mxu0
    %v6504 = vpop.f32.mrf.mxu0
    %v6505 = vadd.f32 %v6216, %v6504
    %v6506 = vpop.f32.mrf.mxu0
    %6507 = vmatprep.mubr.bf16.mxu0 %v4911
    %6508 = vmatmul.mubr.bf16.gmra.mxu0 %v4910
    %v6509 = vpop.f32.mrf.mxu0
    %v6510 = vadd.f32 %v6221, %v6509
    %v6511 = vpop.f32.mrf.mxu0
    %v6512 = vpop.f32.mrf.mxu0
    %v6513 = vadd.f32 %v6224, %v6512
    %v6514 = vpop.f32.mrf.mxu0
    %6515 = vmatprep.mubr.bf16.mxu0 %v4920
    %6516 = vmatmul.mubr.bf16.gmra.mxu0 %v4919
    %v6517 = vpop.f32.mrf.mxu0
    %v6518 = vadd.f32 %v6229, %v6517
    %v6519 = vpop.f32.mrf.mxu0
    %v6520 = vpop.f32.mrf.mxu0
    %v6521 = vadd.f32 %v6232, %v6520
    %v6522 = vpop.f32.mrf.mxu0
    %6523 = vmatprep.mubr.bf16.mxu0 %v4929
    %6524 = vmatmul.mubr.bf16.gmra.mxu0 %v4928
    %v6525 = vpop.f32.mrf.mxu0
    %v6526 = vadd.f32 %v6237, %v6525
    %v6527 = vpop.f32.mrf.mxu0
    %v6528 = vpop.f32.mrf.mxu0
    %v6529 = vadd.f32 %v6240, %v6528
    %v6530 = vpop.f32.mrf.mxu0
    %6531 = vmatprep.mubr.bf16.mxu0 %v4938
    %6532 = vmatmul.mubr.bf16.gmra.mxu0 %v4937
    %v6533 = vpop.f32.mrf.mxu0
    %v6534 = vadd.f32 %v6245, %v6533
    %v6535 = vpop.f32.mrf.mxu0
    %v6536 = vpop.f32.mrf.mxu0
    %v6537 = vadd.f32 %v6248, %v6536
    %v6538 = vpop.f32.mrf.mxu0
    %6539 = vmatprep.mubr.bf16.mxu0 %v4947
    %6540 = vmatmul.mubr.bf16.gmra.mxu0 %v4946
    %v6541 = vpop.f32.mrf.mxu0
    %v6542 = vadd.f32 %v6253, %v6541
    %v6543 = vpop.f32.mrf.mxu0
    %v6544 = vpop.f32.mrf.mxu0
    %v6545 = vadd.f32 %v6256, %v6544
    %v6546 = vpop.f32.mrf.mxu0
    %6547 = vmatprep.mubr.bf16.mxu0 %v4956
    %6548 = vmatmul.mubr.bf16.gmra.mxu0 %v4955
    %v6549 = vpop.f32.mrf.mxu0
    %v6550 = vadd.f32 %v6261, %v6549
    %v6551 = vpop.f32.mrf.mxu0
    %v6552 = vpop.f32.mrf.mxu0
    %v6553 = vadd.f32 %v6264, %v6552
    %v6554 = vpop.f32.mrf.mxu0
    %6555 = vmatprep.mubr.bf16.mxu0 %v4965
    %6556 = vmatmul.mubr.bf16.gmra.mxu0 %v4964
    %v6557 = vpop.f32.mrf.mxu0
    %v6558 = vadd.f32 %v6269, %v6557
    %v6559 = vpop.f32.mrf.mxu0
    %v6560 = vpop.f32.mrf.mxu0
    %v6561 = vadd.f32 %v6272, %v6560
    %v6562 = vpop.f32.mrf.mxu0
    %6563 = vmatprep.mubr.bf16.mxu0 %v4974
    %6564 = vmatmul.mubr.bf16.gmra.mxu0 %v4973
    %v6565 = vpop.f32.mrf.mxu0
    %v6566 = vadd.f32 %v6277, %v6565
    %v6567 = vpop.f32.mrf.mxu0
    %v6568 = vpop.f32.mrf.mxu0
    %v6569 = vadd.f32 %v6280, %v6568
    %v6570 = vpop.f32.mrf.mxu0
    %6571 = vmatprep.mubr.bf16.mxu0 %v4983
    %6572 = vmatmul.mubr.bf16.gmra.mxu0 %v4982
    %v6573 = vpop.f32.mrf.mxu0
    %v6574 = vadd.f32 %v6285, %v6573
    %v6575 = vpop.f32.mrf.mxu0
    %v6576 = vpop.f32.mrf.mxu0
    %v6577 = vadd.f32 %v6288, %v6576
    %v6578 = vpop.f32.mrf.mxu0
    %6579 = vmatprep.mubr.bf16.mxu0 %v4992
    %6580 = vmatmul.mubr.bf16.gmra.mxu0 %v4991
    %v6581 = vpop.f32.mrf.mxu0
    %v6582 = vadd.f32 %v6293, %v6581
    %v6583 = vpop.f32.mrf.mxu0
    %v6584 = vpop.f32.mrf.mxu0
    %v6585 = vadd.f32 %v6296, %v6584
    %v6586 = vpop.f32.mrf.mxu0
    %6587 = vmatprep.mubr.bf16.mxu0 %v5001
    %6588 = vmatmul.mubr.bf16.gmra.mxu0 %v5000
    %v6589 = vpop.f32.mrf.mxu0
    %v6590 = vadd.f32 %v6301, %v6589
    %v6591 = vpop.f32.mrf.mxu0
    %v6592 = vpop.f32.mrf.mxu0
    %v6593 = vadd.f32 %v6304, %v6592
    %v6594 = vpop.f32.mrf.mxu0
    %6595 = vmatprep.mubr.bf16.mxu0 %v5010
    %6596 = vmatmul.mubr.bf16.gmra.mxu0 %v5009
    %v6597 = vpop.f32.mrf.mxu0
    %v6598 = vadd.f32 %v6309, %v6597
    %v6599 = vpop.f32.mrf.mxu0
    %v6600 = vpop.f32.mrf.mxu0
    %v6601 = vadd.f32 %v6312, %v6600
    %v6602 = vpop.f32.mrf.mxu0
    %6603 = vmatprep.mubr.bf16.mxu0 %v5019
    %6604 = vmatmul.mubr.bf16.gmra.mxu0 %v5018
    %v6605 = vpop.f32.mrf.mxu0
    %v6606 = vadd.f32 %v6317, %v6605
    %v6607 = vpop.f32.mrf.mxu0
    %v6608 = vpop.f32.mrf.mxu0
    %v6609 = vadd.f32 %v6320, %v6608
    %v6610 = vpop.f32.mrf.mxu0
    %6611 = vmatprep.mubr.bf16.mxu0 %v5028
    %6612 = vmatmul.mubr.bf16.gmra.mxu0 %v5027
    %v6613 = vpop.f32.mrf.mxu0
    %v6614 = vadd.f32 %v6325, %v6613
    %v6615 = vpop.f32.mrf.mxu0
    %v6616 = vpop.f32.mrf.mxu0
    %v6617 = vadd.f32 %v6328, %v6616
    %v6618 = vpop.f32.mrf.mxu0
    %6619 = vmatprep.mubr.bf16.mxu0 %v5037
    %6620 = vmatmul.mubr.bf16.gmra.mxu0 %v5036
    %v6621 = vpop.f32.mrf.mxu0
    %v6622 = vadd.f32 %v6333, %v6621
    %v6623 = vpop.f32.mrf.mxu0
    %v6624 = vpop.f32.mrf.mxu0
    %v6625 = vadd.f32 %v6336, %v6624
    %v6626 = vpop.f32.mrf.mxu0
    %6627 = vdwg.mxu0
    %6628 = vmatprep.subr.bf16.mxu0 0
    %6629 = vmatpush1.bf16.msra.mxu0 %v5672
    %6630 = vmatprep.subr.bf16.mxu0 0
    %6631 = vmatpush1.bf16.msra.mxu0 %v5671
    %6632 = vmatprep.subr.bf16.mxu0 0
    %6633 = vmatpush1.bf16.msra.mxu0 %v5670
    %6634 = vmatprep.subr.bf16.mxu0 0
    %6635 = vmatpush1.bf16.msra.mxu0 %v5669
    %6636 = vmatprep.subr.bf16.mxu0 0
    %6637 = vmatpush1.bf16.msra.mxu0 %v5668
    %6638 = vmatprep.subr.bf16.mxu0 0
    %6639 = vmatpush1.bf16.msra.mxu0 %v5667
    %6640 = vmatprep.subr.bf16.mxu0 0
    %6641 = vmatpush1.bf16.msra.mxu0 %v5666
    %6642 = vmatprep.subr.bf16.mxu0 0
    %6643 = vmatpush1.bf16.msra.mxu0 %v5665
    %6644 = vmatprep.subr.bf16.mxu0 0
    %6645 = vmatpush2.bf16.msra.mxu0 %v5680
    %6646 = vmatprep.subr.bf16.mxu0 0
    %6647 = vmatpush2.bf16.msra.mxu0 %v5679
    %6648 = vmatprep.subr.bf16.mxu0 0
    %6649 = vmatpush2.bf16.msra.mxu0 %v5678
    %6650 = vmatprep.subr.bf16.mxu0 0
    %6651 = vmatpush2.bf16.msra.mxu0 %v5677
    %6652 = vmatprep.subr.bf16.mxu0 0
    %6653 = vmatpush2.bf16.msra.mxu0 %v5676
    %6654 = vmatprep.subr.bf16.mxu0 0
    %6655 = vmatpush2.bf16.msra.mxu0 %v5675
    %6656 = vmatprep.subr.bf16.mxu0 0
    %6657 = vmatpush2.bf16.msra.mxu0 %v5674
    %6658 = vmatprep.subr.bf16.mxu0 0
    %6659 = vmatpush2.bf16.msra.mxu0 %v5673
    %6660 = vmatprep.mubr.bf16.mxu0 %v4760
    %6661 = vmatmul.mubr.bf16.gmra.mxu0 %v4759
    %v6662 = vpop.f32.mrf.mxu0
    %v6663 = vadd.f32 %v6374, %v6662
    %v6664 = vpop.f32.mrf.mxu0
    %v6665 = vpop.f32.mrf.mxu0
    %v6666 = vadd.f32 %v6377, %v6665
    %v6667 = vpop.f32.mrf.mxu0
    %6668 = vmatprep.mubr.bf16.mxu0 %v4769
    %6669 = vmatmul.mubr.bf16.gmra.mxu0 %v4768
    %v6670 = vpop.f32.mrf.mxu0
    %v6671 = vadd.f32 %v6382, %v6670
    %v6672 = vpop.f32.mrf.mxu0
    %v6673 = vpop.f32.mrf.mxu0
    %v6674 = vadd.f32 %v6385, %v6673
    %v6675 = vpop.f32.mrf.mxu0
    %6676 = vmatprep.mubr.bf16.mxu0 %v4778
    %6677 = vmatmul.mubr.bf16.gmra.mxu0 %v4777
    %v6678 = vpop.f32.mrf.mxu0
    %v6679 = vadd.f32 %v6390, %v6678
    %v6680 = vpop.f32.mrf.mxu0
    %v6681 = vpop.f32.mrf.mxu0
    %v6682 = vadd.f32 %v6393, %v6681
    %v6683 = vpop.f32.mrf.mxu0
    %6684 = vmatprep.mubr.bf16.mxu0 %v4787
    %6685 = vmatmul.mubr.bf16.gmra.mxu0 %v4786
    %v6686 = vpop.f32.mrf.mxu0
    %v6687 = vadd.f32 %v6398, %v6686
    %v6688 = vpop.f32.mrf.mxu0
    %v6689 = vpop.f32.mrf.mxu0
    %v6690 = vadd.f32 %v6401, %v6689
    %v6691 = vpop.f32.mrf.mxu0
    %6692 = vmatprep.mubr.bf16.mxu0 %v4796
    %6693 = vmatmul.mubr.bf16.gmra.mxu0 %v4795
    %v6694 = vpop.f32.mrf.mxu0
    %v6695 = vadd.f32 %v6406, %v6694
    %v6696 = vpop.f32.mrf.mxu0
    %v6697 = vpop.f32.mrf.mxu0
    %v6698 = vadd.f32 %v6409, %v6697
    %v6699 = vpop.f32.mrf.mxu0
    %6700 = vmatprep.mubr.bf16.mxu0 %v4805
    %6701 = vmatmul.mubr.bf16.gmra.mxu0 %v4804
    %v6702 = vpop.f32.mrf.mxu0
    %v6703 = vadd.f32 %v6414, %v6702
    %v6704 = vpop.f32.mrf.mxu0
    %v6705 = vpop.f32.mrf.mxu0
    %v6706 = vadd.f32 %v6417, %v6705
    %v6707 = vpop.f32.mrf.mxu0
    %6708 = vmatprep.mubr.bf16.mxu0 %v4814
    %6709 = vmatmul.mubr.bf16.gmra.mxu0 %v4813
    %v6710 = vpop.f32.mrf.mxu0
    %v6711 = vadd.f32 %v6422, %v6710
    %v6712 = vpop.f32.mrf.mxu0
    %v6713 = vpop.f32.mrf.mxu0
    %v6714 = vadd.f32 %v6425, %v6713
    %v6715 = vpop.f32.mrf.mxu0
    %6716 = vmatprep.mubr.bf16.mxu0 %v4823
    %6717 = vmatmul.mubr.bf16.gmra.mxu0 %v4822
    %v6718 = vpop.f32.mrf.mxu0
    %v6719 = vadd.f32 %v6430, %v6718
    %v6720 = vpop.f32.mrf.mxu0
    %v6721 = vpop.f32.mrf.mxu0
    %v6722 = vadd.f32 %v6433, %v6721
    %v6723 = vpop.f32.mrf.mxu0
    %6724 = vmatprep.mubr.bf16.mxu0 %v4832
    %6725 = vmatmul.mubr.bf16.gmra.mxu0 %v4831
    %v6726 = vpop.f32.mrf.mxu0
    %v6727 = vadd.f32 %v6438, %v6726
    %v6728 = vpop.f32.mrf.mxu0
    %v6729 = vpop.f32.mrf.mxu0
    %v6730 = vadd.f32 %v6441, %v6729
    %v6731 = vpop.f32.mrf.mxu0
    %6732 = vmatprep.mubr.bf16.mxu0 %v4841
    %6733 = vmatmul.mubr.bf16.gmra.mxu0 %v4840
    %v6734 = vpop.f32.mrf.mxu0
    %v6735 = vadd.f32 %v6446, %v6734
    %v6736 = vpop.f32.mrf.mxu0
    %v6737 = vpop.f32.mrf.mxu0
    %v6738 = vadd.f32 %v6449, %v6737
    %v6739 = vpop.f32.mrf.mxu0
    %6740 = vmatprep.mubr.bf16.mxu0 %v4850
    %6741 = vmatmul.mubr.bf16.gmra.mxu0 %v4849
    %v6742 = vpop.f32.mrf.mxu0
    %v6743 = vadd.f32 %v6454, %v6742
    %v6744 = vpop.f32.mrf.mxu0
    %v6745 = vpop.f32.mrf.mxu0
    %v6746 = vadd.f32 %v6457, %v6745
    %v6747 = vpop.f32.mrf.mxu0
    %6748 = vmatprep.mubr.bf16.mxu0 %v4859
    %6749 = vmatmul.mubr.bf16.gmra.mxu0 %v4858
    %v6750 = vpop.f32.mrf.mxu0
    %v6751 = vadd.f32 %v6462, %v6750
    %v6752 = vpop.f32.mrf.mxu0
    %v6753 = vpop.f32.mrf.mxu0
    %v6754 = vadd.f32 %v6465, %v6753
    %v6755 = vpop.f32.mrf.mxu0
    %6756 = vmatprep.mubr.bf16.mxu0 %v4868
    %6757 = vmatmul.mubr.bf16.gmra.mxu0 %v4867
    %v6758 = vpop.f32.mrf.mxu0
    %v6759 = vadd.f32 %v6470, %v6758
    %v6760 = vpop.f32.mrf.mxu0
    %v6761 = vpop.f32.mrf.mxu0
    %v6762 = vadd.f32 %v6473, %v6761
    %v6763 = vpop.f32.mrf.mxu0
    %6764 = vmatprep.mubr.bf16.mxu0 %v4877
    %6765 = vmatmul.mubr.bf16.gmra.mxu0 %v4876
    %v6766 = vpop.f32.mrf.mxu0
    %v6767 = vadd.f32 %v6478, %v6766
    %v6768 = vpop.f32.mrf.mxu0
    %v6769 = vpop.f32.mrf.mxu0
    %v6770 = vadd.f32 %v6481, %v6769
    %v6771 = vpop.f32.mrf.mxu0
    %6772 = vmatprep.mubr.bf16.mxu0 %v4886
    %6773 = vmatmul.mubr.bf16.gmra.mxu0 %v4885
    %v6774 = vpop.f32.mrf.mxu0
    %v6775 = vadd.f32 %v6486, %v6774
    %v6776 = vpop.f32.mrf.mxu0
    %v6777 = vpop.f32.mrf.mxu0
    %v6778 = vadd.f32 %v6489, %v6777
    %v6779 = vpop.f32.mrf.mxu0
    %6780 = vmatprep.mubr.bf16.mxu0 %v4895
    %6781 = vmatmul.mubr.bf16.gmra.mxu0 %v4894
    %v6782 = vpop.f32.mrf.mxu0
    %v6783 = vadd.f32 %v6494, %v6782
    %v6784 = vpop.f32.mrf.mxu0
    %v6785 = vpop.f32.mrf.mxu0
    %v6786 = vadd.f32 %v6497, %v6785
    %v6787 = vpop.f32.mrf.mxu0
    %6788 = vmatprep.mubr.bf16.mxu0 %v4904
    %6789 = vmatmul.mubr.bf16.gmra.mxu0 %v4903
    %v6790 = vpop.f32.mrf.mxu0
    %v6791 = vadd.f32 %v6502, %v6790
    %v6792 = vpop.f32.mrf.mxu0
    %v6793 = vpop.f32.mrf.mxu0
    %v6794 = vadd.f32 %v6505, %v6793
    %v6795 = vpop.f32.mrf.mxu0
    %6796 = vmatprep.mubr.bf16.mxu0 %v4913
    %6797 = vmatmul.mubr.bf16.gmra.mxu0 %v4912
    %v6798 = vpop.f32.mrf.mxu0
    %v6799 = vadd.f32 %v6510, %v6798
    %v6800 = vpop.f32.mrf.mxu0
    %v6801 = vpop.f32.mrf.mxu0
    %v6802 = vadd.f32 %v6513, %v6801
    %v6803 = vpop.f32.mrf.mxu0
    %6804 = vmatprep.mubr.bf16.mxu0 %v4922
    %6805 = vmatmul.mubr.bf16.gmra.mxu0 %v4921
    %v6806 = vpop.f32.mrf.mxu0
    %v6807 = vadd.f32 %v6518, %v6806
    %v6808 = vpop.f32.mrf.mxu0
    %v6809 = vpop.f32.mrf.mxu0
    %v6810 = vadd.f32 %v6521, %v6809
    %v6811 = vpop.f32.mrf.mxu0
    %6812 = vmatprep.mubr.bf16.mxu0 %v4931
    %6813 = vmatmul.mubr.bf16.gmra.mxu0 %v4930
    %v6814 = vpop.f32.mrf.mxu0
    %v6815 = vadd.f32 %v6526, %v6814
    %v6816 = vpop.f32.mrf.mxu0
    %v6817 = vpop.f32.mrf.mxu0
    %v6818 = vadd.f32 %v6529, %v6817
    %v6819 = vpop.f32.mrf.mxu0
    %6820 = vmatprep.mubr.bf16.mxu0 %v4940
    %6821 = vmatmul.mubr.bf16.gmra.mxu0 %v4939
    %v6822 = vpop.f32.mrf.mxu0
    %v6823 = vadd.f32 %v6534, %v6822
    %v6824 = vpop.f32.mrf.mxu0
    %v6825 = vpop.f32.mrf.mxu0
    %v6826 = vadd.f32 %v6537, %v6825
    %v6827 = vpop.f32.mrf.mxu0
    %6828 = vmatprep.mubr.bf16.mxu0 %v4949
    %6829 = vmatmul.mubr.bf16.gmra.mxu0 %v4948
    %v6830 = vpop.f32.mrf.mxu0
    %v6831 = vadd.f32 %v6542, %v6830
    %v6832 = vpop.f32.mrf.mxu0
    %v6833 = vpop.f32.mrf.mxu0
    %v6834 = vadd.f32 %v6545, %v6833
    %v6835 = vpop.f32.mrf.mxu0
    %6836 = vmatprep.mubr.bf16.mxu0 %v4958
    %6837 = vmatmul.mubr.bf16.gmra.mxu0 %v4957
    %v6838 = vpop.f32.mrf.mxu0
    %v6839 = vadd.f32 %v6550, %v6838
    %v6840 = vpop.f32.mrf.mxu0
    %v6841 = vpop.f32.mrf.mxu0
    %v6842 = vadd.f32 %v6553, %v6841
    %v6843 = vpop.f32.mrf.mxu0
    %6844 = vmatprep.mubr.bf16.mxu0 %v4967
    %6845 = vmatmul.mubr.bf16.gmra.mxu0 %v4966
    %v6846 = vpop.f32.mrf.mxu0
    %v6847 = vadd.f32 %v6558, %v6846
    %v6848 = vpop.f32.mrf.mxu0
    %v6849 = vpop.f32.mrf.mxu0
    %v6850 = vadd.f32 %v6561, %v6849
    %v6851 = vpop.f32.mrf.mxu0
    %6852 = vmatprep.mubr.bf16.mxu0 %v4976
    %6853 = vmatmul.mubr.bf16.gmra.mxu0 %v4975
    %v6854 = vpop.f32.mrf.mxu0
    %v6855 = vadd.f32 %v6566, %v6854
    %v6856 = vpop.f32.mrf.mxu0
    %v6857 = vpop.f32.mrf.mxu0
    %v6858 = vadd.f32 %v6569, %v6857
    %v6859 = vpop.f32.mrf.mxu0
    %6860 = vmatprep.mubr.bf16.mxu0 %v4985
    %6861 = vmatmul.mubr.bf16.gmra.mxu0 %v4984
    %v6862 = vpop.f32.mrf.mxu0
    %v6863 = vadd.f32 %v6574, %v6862
    %v6864 = vpop.f32.mrf.mxu0
    %v6865 = vpop.f32.mrf.mxu0
    %v6866 = vadd.f32 %v6577, %v6865
    %v6867 = vpop.f32.mrf.mxu0
    %6868 = vmatprep.mubr.bf16.mxu0 %v4994
    %6869 = vmatmul.mubr.bf16.gmra.mxu0 %v4993
    %v6870 = vpop.f32.mrf.mxu0
    %v6871 = vadd.f32 %v6582, %v6870
    %v6872 = vpop.f32.mrf.mxu0
    %v6873 = vpop.f32.mrf.mxu0
    %v6874 = vadd.f32 %v6585, %v6873
    %v6875 = vpop.f32.mrf.mxu0
    %6876 = vmatprep.mubr.bf16.mxu0 %v5003
    %6877 = vmatmul.mubr.bf16.gmra.mxu0 %v5002
    %v6878 = vpop.f32.mrf.mxu0
    %v6879 = vadd.f32 %v6590, %v6878
    %v6880 = vpop.f32.mrf.mxu0
    %v6881 = vpop.f32.mrf.mxu0
    %v6882 = vadd.f32 %v6593, %v6881
    %v6883 = vpop.f32.mrf.mxu0
    %6884 = vmatprep.mubr.bf16.mxu0 %v5012
    %6885 = vmatmul.mubr.bf16.gmra.mxu0 %v5011
    %v6886 = vpop.f32.mrf.mxu0
    %v6887 = vadd.f32 %v6598, %v6886
    %v6888 = vpop.f32.mrf.mxu0
    %v6889 = vpop.f32.mrf.mxu0
    %v6890 = vadd.f32 %v6601, %v6889
    %v6891 = vpop.f32.mrf.mxu0
    %6892 = vmatprep.mubr.bf16.mxu0 %v5021
    %6893 = vmatmul.mubr.bf16.gmra.mxu0 %v5020
    %v6894 = vpop.f32.mrf.mxu0
    %v6895 = vadd.f32 %v6606, %v6894
    %v6896 = vpop.f32.mrf.mxu0
    %v6897 = vpop.f32.mrf.mxu0
    %v6898 = vadd.f32 %v6609, %v6897
    %v6899 = vpop.f32.mrf.mxu0
    %6900 = vmatprep.mubr.bf16.mxu0 %v5030
    %6901 = vmatmul.mubr.bf16.gmra.mxu0 %v5029
    %v6902 = vpop.f32.mrf.mxu0
    %v6903 = vadd.f32 %v6614, %v6902
    %v6904 = vpop.f32.mrf.mxu0
    %v6905 = vpop.f32.mrf.mxu0
    %v6906 = vadd.f32 %v6617, %v6905
    %v6907 = vpop.f32.mrf.mxu0
    %6908 = vmatprep.mubr.bf16.mxu0 %v5039
    %6909 = vmatmul.mubr.bf16.gmra.mxu0 %v5038
    %v6910 = vpop.f32.mrf.mxu0
    %v6911 = vadd.f32 %v6622, %v6910
    %v6912 = vpop.f32.mrf.mxu0
    %v6913 = vpop.f32.mrf.mxu0
    %v6914 = vadd.f32 %v6625, %v6913
    %v6915 = vpop.f32.mrf.mxu0
    %6916 = vdwg.mxu0
    %6917 = vmatprep.subr.bf16.mxu0 0
    %6918 = vmatpush1.bf16.msra.mxu0 %v5688
    %6919 = vmatprep.subr.bf16.mxu0 0
    %6920 = vmatpush1.bf16.msra.mxu0 %v5687
    %6921 = vmatprep.subr.bf16.mxu0 0
    %6922 = vmatpush1.bf16.msra.mxu0 %v5686
    %6923 = vmatprep.subr.bf16.mxu0 0
    %6924 = vmatpush1.bf16.msra.mxu0 %v5685
    %6925 = vmatprep.subr.bf16.mxu0 0
    %6926 = vmatpush1.bf16.msra.mxu0 %v5684
    %6927 = vmatprep.subr.bf16.mxu0 0
    %6928 = vmatpush1.bf16.msra.mxu0 %v5683
    %6929 = vmatprep.subr.bf16.mxu0 0
    %6930 = vmatpush1.bf16.msra.mxu0 %v5682
    %6931 = vmatprep.subr.bf16.mxu0 0
    %6932 = vmatpush1.bf16.msra.mxu0 %v5681
    %6933 = vmatprep.subr.bf16.mxu0 0
    %6934 = vmatpush2.bf16.msra.mxu0 0
    %6935 = vmatprep.subr.bf16.mxu0 0
    %6936 = vmatpush2.bf16.msra.mxu0 0
    %6937 = vmatprep.subr.bf16.mxu0 0
    %6938 = vmatpush2.bf16.msra.mxu0 0
    %6939 = vmatprep.subr.bf16.mxu0 0
    %6940 = vmatpush2.bf16.msra.mxu0 0
    %6941 = vmatprep.subr.bf16.mxu0 0
    %6942 = vmatpush2.bf16.msra.mxu0 0
    %6943 = vmatprep.subr.bf16.mxu0 0
    %6944 = vmatpush2.bf16.msra.mxu0 0
    %6945 = vmatprep.subr.bf16.mxu0 0
    %6946 = vmatpush2.bf16.msra.mxu0 0
    %6947 = vmatprep.subr.bf16.mxu0 0
    %6948 = vmatpush2.bf16.msra.mxu0 0
    %6949 = vmatprep.mubr.bf16.mxu0 0
    %6950 = vmatmul.mubr.bf16.gmra.mxu0 %v4761
    %v6951 = vpop.f32.mrf.mxu0
    %v6952 = vadd.f32 %v6663, %v6951
    %v6953 = vpop.f32.mrf.mxu0
    %v6954 = vpop.f32.mrf.mxu0
    %v6955 = vadd.f32 %v6666, %v6954
    %v6956 = vpop.f32.mrf.mxu0
    %6957 = vmatprep.mubr.bf16.mxu0 0
    %6958 = vmatmul.mubr.bf16.gmra.mxu0 %v4770
    %v6959 = vpop.f32.mrf.mxu0
    %v6960 = vadd.f32 %v6671, %v6959
    %v6961 = vpop.f32.mrf.mxu0
    %v6962 = vpop.f32.mrf.mxu0
    %v6963 = vadd.f32 %v6674, %v6962
    %v6964 = vpop.f32.mrf.mxu0
    %6965 = vmatprep.mubr.bf16.mxu0 0
    %6966 = vmatmul.mubr.bf16.gmra.mxu0 %v4779
    %v6967 = vpop.f32.mrf.mxu0
    %v6968 = vadd.f32 %v6679, %v6967
    %v6969 = vpop.f32.mrf.mxu0
    %v6970 = vpop.f32.mrf.mxu0
    %v6971 = vadd.f32 %v6682, %v6970
    %v6972 = vpop.f32.mrf.mxu0
    %6973 = vmatprep.mubr.bf16.mxu0 0
    %6974 = vmatmul.mubr.bf16.gmra.mxu0 %v4788
    %v6975 = vpop.f32.mrf.mxu0
    %v6976 = vadd.f32 %v6687, %v6975
    %v6977 = vpop.f32.mrf.mxu0
    %v6978 = vpop.f32.mrf.mxu0
    %v6979 = vadd.f32 %v6690, %v6978
    %v6980 = vpop.f32.mrf.mxu0
    %6981 = vmatprep.mubr.bf16.mxu0 0
    %6982 = vmatmul.mubr.bf16.gmra.mxu0 %v4797
    %v6983 = vpop.f32.mrf.mxu0
    %v6984 = vadd.f32 %v6695, %v6983
    %v6985 = vpop.f32.mrf.mxu0
    %v6986 = vpop.f32.mrf.mxu0
    %v6987 = vadd.f32 %v6698, %v6986
    %v6988 = vpop.f32.mrf.mxu0
    %6989 = vmatprep.mubr.bf16.mxu0 0
    %6990 = vmatmul.mubr.bf16.gmra.mxu0 %v4806
    %v6991 = vpop.f32.mrf.mxu0
    %v6992 = vadd.f32 %v6703, %v6991
    %v6993 = vpop.f32.mrf.mxu0
    %v6994 = vpop.f32.mrf.mxu0
    %v6995 = vadd.f32 %v6706, %v6994
    %v6996 = vpop.f32.mrf.mxu0
    %6997 = vmatprep.mubr.bf16.mxu0 0
    %6998 = vmatmul.mubr.bf16.gmra.mxu0 %v4815
    %v6999 = vpop.f32.mrf.mxu0
    %v7000 = vadd.f32 %v6711, %v6999
    %v7001 = vpop.f32.mrf.mxu0
    %v7002 = vpop.f32.mrf.mxu0
    %v7003 = vadd.f32 %v6714, %v7002
    %v7004 = vpop.f32.mrf.mxu0
    %7005 = vmatprep.mubr.bf16.mxu0 0
    %7006 = vmatmul.mubr.bf16.gmra.mxu0 %v4824
    %v7007 = vpop.f32.mrf.mxu0
    %v7008 = vadd.f32 %v6719, %v7007
    %v7009 = vpop.f32.mrf.mxu0
    %v7010 = vpop.f32.mrf.mxu0
    %v7011 = vadd.f32 %v6722, %v7010
    %v7012 = vpop.f32.mrf.mxu0
    %7013 = vmatprep.mubr.bf16.mxu0 0
    %7014 = vmatmul.mubr.bf16.gmra.mxu0 %v4833
    %v7015 = vpop.f32.mrf.mxu0
    %v7016 = vadd.f32 %v6727, %v7015
    %v7017 = vpop.f32.mrf.mxu0
    %v7018 = vpop.f32.mrf.mxu0
    %v7019 = vadd.f32 %v6730, %v7018
    %v7020 = vpop.f32.mrf.mxu0
    %7021 = vmatprep.mubr.bf16.mxu0 0
    %7022 = vmatmul.mubr.bf16.gmra.mxu0 %v4842
    %v7023 = vpop.f32.mrf.mxu0
    %v7024 = vadd.f32 %v6735, %v7023
    %v7025 = vpop.f32.mrf.mxu0
    %v7026 = vpop.f32.mrf.mxu0
    %v7027 = vadd.f32 %v6738, %v7026
    %v7028 = vpop.f32.mrf.mxu0
    %7029 = vmatprep.mubr.bf16.mxu0 0
    %7030 = vmatmul.mubr.bf16.gmra.mxu0 %v4851
    %v7031 = vpop.f32.mrf.mxu0
    %v7032 = vadd.f32 %v6743, %v7031
    %v7033 = vpop.f32.mrf.mxu0
    %v7034 = vpop.f32.mrf.mxu0
    %v7035 = vadd.f32 %v6746, %v7034
    %v7036 = vpop.f32.mrf.mxu0
    %7037 = vmatprep.mubr.bf16.mxu0 0
    %7038 = vmatmul.mubr.bf16.gmra.mxu0 %v4860
    %v7039 = vpop.f32.mrf.mxu0
    %v7040 = vadd.f32 %v6751, %v7039
    %v7041 = vpop.f32.mrf.mxu0
    %v7042 = vpop.f32.mrf.mxu0
    %v7043 = vadd.f32 %v6754, %v7042
    %v7044 = vpop.f32.mrf.mxu0
    %7045 = vmatprep.mubr.bf16.mxu0 0
    %7046 = vmatmul.mubr.bf16.gmra.mxu0 %v4869
    %v7047 = vpop.f32.mrf.mxu0
    %v7048 = vadd.f32 %v6759, %v7047
    %v7049 = vpop.f32.mrf.mxu0
    %v7050 = vpop.f32.mrf.mxu0
    %v7051 = vadd.f32 %v6762, %v7050
    %v7052 = vpop.f32.mrf.mxu0
    %7053 = vmatprep.mubr.bf16.mxu0 0
    %7054 = vmatmul.mubr.bf16.gmra.mxu0 %v4878
    %v7055 = vpop.f32.mrf.mxu0
    %v7056 = vadd.f32 %v6767, %v7055
    %v7057 = vpop.f32.mrf.mxu0
    %v7058 = vpop.f32.mrf.mxu0
    %v7059 = vadd.f32 %v6770, %v7058
    %v7060 = vpop.f32.mrf.mxu0
    %7061 = vmatprep.mubr.bf16.mxu0 0
    %7062 = vmatmul.mubr.bf16.gmra.mxu0 %v4887
    %v7063 = vpop.f32.mrf.mxu0
    %v7064 = vadd.f32 %v6775, %v7063
    %v7065 = vpop.f32.mrf.mxu0
    %v7066 = vpop.f32.mrf.mxu0
    %v7067 = vadd.f32 %v6778, %v7066
    %v7068 = vpop.f32.mrf.mxu0
    %7069 = vmatprep.mubr.bf16.mxu0 0
    %7070 = vmatmul.mubr.bf16.gmra.mxu0 %v4896
    %v7071 = vpop.f32.mrf.mxu0
    %v7072 = vadd.f32 %v6783, %v7071
    %v7073 = vpop.f32.mrf.mxu0
    %v7074 = vpop.f32.mrf.mxu0
    %v7075 = vadd.f32 %v6786, %v7074
    %v7076 = vpop.f32.mrf.mxu0
    %7077 = vmatprep.mubr.bf16.mxu0 0
    %7078 = vmatmul.mubr.bf16.gmra.mxu0 %v4905
    %v7079 = vpop.f32.mrf.mxu0
    %v7080 = vadd.f32 %v6791, %v7079
    %v7081 = vpop.f32.mrf.mxu0
    %v7082 = vpop.f32.mrf.mxu0
    %v7083 = vadd.f32 %v6794, %v7082
    %v7084 = vpop.f32.mrf.mxu0
    %7085 = vmatprep.mubr.bf16.mxu0 0
    %7086 = vmatmul.mubr.bf16.gmra.mxu0 %v4914
    %v7087 = vpop.f32.mrf.mxu0
    %v7088 = vadd.f32 %v6799, %v7087
    %v7089 = vpop.f32.mrf.mxu0
    %v7090 = vpop.f32.mrf.mxu0
    %v7091 = vadd.f32 %v6802, %v7090
    %v7092 = vpop.f32.mrf.mxu0
    %7093 = vmatprep.mubr.bf16.mxu0 0
    %7094 = vmatmul.mubr.bf16.gmra.mxu0 %v4923
    %v7095 = vpop.f32.mrf.mxu0
    %v7096 = vadd.f32 %v6807, %v7095
    %v7097 = vpop.f32.mrf.mxu0
    %v7098 = vpop.f32.mrf.mxu0
    %v7099 = vadd.f32 %v6810, %v7098
    %v7100 = vpop.f32.mrf.mxu0
    %7101 = vmatprep.mubr.bf16.mxu0 0
    %7102 = vmatmul.mubr.bf16.gmra.mxu0 %v4932
    %v7103 = vpop.f32.mrf.mxu0
    %v7104 = vadd.f32 %v6815, %v7103
    %v7105 = vpop.f32.mrf.mxu0
    %v7106 = vpop.f32.mrf.mxu0
    %v7107 = vadd.f32 %v6818, %v7106
    %v7108 = vpop.f32.mrf.mxu0
    %7109 = vmatprep.mubr.bf16.mxu0 0
    %7110 = vmatmul.mubr.bf16.gmra.mxu0 %v4941
    %v7111 = vpop.f32.mrf.mxu0
    %v7112 = vadd.f32 %v6823, %v7111
    %v7113 = vpop.f32.mrf.mxu0
    %v7114 = vpop.f32.mrf.mxu0
    %v7115 = vadd.f32 %v6826, %v7114
    %v7116 = vpop.f32.mrf.mxu0
    %7117 = vmatprep.mubr.bf16.mxu0 0
    %7118 = vmatmul.mubr.bf16.gmra.mxu0 %v4950
    %v7119 = vpop.f32.mrf.mxu0
    %v7120 = vadd.f32 %v6831, %v7119
    %v7121 = vpop.f32.mrf.mxu0
    %v7122 = vpop.f32.mrf.mxu0
    %v7123 = vadd.f32 %v6834, %v7122
    %v7124 = vpop.f32.mrf.mxu0
    %7125 = vmatprep.mubr.bf16.mxu0 0
    %7126 = vmatmul.mubr.bf16.gmra.mxu0 %v4959
    %v7127 = vpop.f32.mrf.mxu0
    %v7128 = vadd.f32 %v6839, %v7127
    %v7129 = vpop.f32.mrf.mxu0
    %v7130 = vpop.f32.mrf.mxu0
    %v7131 = vadd.f32 %v6842, %v7130
    %v7132 = vpop.f32.mrf.mxu0
    %7133 = vmatprep.mubr.bf16.mxu0 0
    %7134 = vmatmul.mubr.bf16.gmra.mxu0 %v4968
    %v7135 = vpop.f32.mrf.mxu0
    %v7136 = vadd.f32 %v6847, %v7135
    %v7137 = vpop.f32.mrf.mxu0
    %v7138 = vpop.f32.mrf.mxu0
    %v7139 = vadd.f32 %v6850, %v7138
    %v7140 = vpop.f32.mrf.mxu0
    %7141 = vmatprep.mubr.bf16.mxu0 0
    %7142 = vmatmul.mubr.bf16.gmra.mxu0 %v4977
    %v7143 = vpop.f32.mrf.mxu0
    %v7144 = vadd.f32 %v6855, %v7143
    %v7145 = vpop.f32.mrf.mxu0
    %v7146 = vpop.f32.mrf.mxu0
    %v7147 = vadd.f32 %v6858, %v7146
    %v7148 = vpop.f32.mrf.mxu0
    %7149 = vmatprep.mubr.bf16.mxu0 0
    %7150 = vmatmul.mubr.bf16.gmra.mxu0 %v4986
    %v7151 = vpop.f32.mrf.mxu0
    %v7152 = vadd.f32 %v6863, %v7151
    %v7153 = vpop.f32.mrf.mxu0
    %v7154 = vpop.f32.mrf.mxu0
    %v7155 = vadd.f32 %v6866, %v7154
    %v7156 = vpop.f32.mrf.mxu0
    %7157 = vmatprep.mubr.bf16.mxu0 0
    %7158 = vmatmul.mubr.bf16.gmra.mxu0 %v4995
    %v7159 = vpop.f32.mrf.mxu0
    %v7160 = vadd.f32 %v6871, %v7159
    %v7161 = vpop.f32.mrf.mxu0
    %v7162 = vpop.f32.mrf.mxu0
    %v7163 = vadd.f32 %v6874, %v7162
    %v7164 = vpop.f32.mrf.mxu0
    %7165 = vmatprep.mubr.bf16.mxu0 0
    %7166 = vmatmul.mubr.bf16.gmra.mxu0 %v5004
    %v7167 = vpop.f32.mrf.mxu0
    %v7168 = vadd.f32 %v6879, %v7167
    %v7169 = vpop.f32.mrf.mxu0
    %v7170 = vpop.f32.mrf.mxu0
    %v7171 = vadd.f32 %v6882, %v7170
    %v7172 = vpop.f32.mrf.mxu0
    %7173 = vmatprep.mubr.bf16.mxu0 0
    %7174 = vmatmul.mubr.bf16.gmra.mxu0 %v5013
    %v7175 = vpop.f32.mrf.mxu0
    %v7176 = vadd.f32 %v6887, %v7175
    %v7177 = vpop.f32.mrf.mxu0
    %v7178 = vpop.f32.mrf.mxu0
    %v7179 = vadd.f32 %v6890, %v7178
    %v7180 = vpop.f32.mrf.mxu0
    %7181 = vmatprep.mubr.bf16.mxu0 0
    %7182 = vmatmul.mubr.bf16.gmra.mxu0 %v5022
    %v7183 = vpop.f32.mrf.mxu0
    %v7184 = vadd.f32 %v6895, %v7183
    %v7185 = vpop.f32.mrf.mxu0
    %v7186 = vpop.f32.mrf.mxu0
    %v7187 = vadd.f32 %v6898, %v7186
    %v7188 = vpop.f32.mrf.mxu0
    %7189 = vmatprep.mubr.bf16.mxu0 0
    %7190 = vmatmul.mubr.bf16.gmra.mxu0 %v5031
    %v7191 = vpop.f32.mrf.mxu0
    %v7192 = vadd.f32 %v6903, %v7191
    %v7193 = vpop.f32.mrf.mxu0
    %v7194 = vpop.f32.mrf.mxu0
    %v7195 = vadd.f32 %v6906, %v7194
    %v7196 = vpop.f32.mrf.mxu0
    %7197 = vmatprep.mubr.bf16.mxu0 0
    %7198 = vmatmul.mubr.bf16.gmra.mxu0 %v5040
    %v7199 = vpop.f32.mrf.mxu0
    %v7200 = vadd.f32 %v6911, %v7199
    %v7201 = vpop.f32.mrf.mxu0
    %v7202 = vpop.f32.mrf.mxu0
    %v7203 = vadd.f32 %v6914, %v7202
    %v7204 = vpop.f32.mrf.mxu0
    %7205 = vdwg.mxu0
    %v7206 = vadd.f32 %v6952, %v6955
    %v7207 = vadd.f32 %v7206, %v6960
    %v7208 = vadd.f32 %v7207, %v6963
    %v7209 = vadd.f32 %v7208, %v6968
    %v7210 = vadd.f32 %v7209, %v6971
    %v7211 = vadd.f32 %v7210, %v6976
    %v7212 = vadd.f32 %v7211, %v6979
    %v7213 = vadd.f32 %v7212, %v6984
    %v7214 = vadd.f32 %v7213, %v6987
    %v7215 = vadd.f32 %v7214, %v6992
    %v7216 = vadd.f32 %v7215, %v6995
    %v7217 = vadd.f32 %v7216, %v7000
    %v7218 = vadd.f32 %v7217, %v7003
    %v7219 = vadd.f32 %v7218, %v7008
    %v7220 = vadd.f32 %v7219, %v7011
    %v7221 = vadd.f32 %v7220, %v7016
    %v7222 = vadd.f32 %v7221, %v7019
    %v7223 = vadd.f32 %v7222, %v7024
    %v7224 = vadd.f32 %v7223, %v7027
    %v7225 = vadd.f32 %v7224, %v7032
    %v7226 = vadd.f32 %v7225, %v7035
    %v7227 = vadd.f32 %v7226, %v7040
    %v7228 = vadd.f32 %v7227, %v7043
    %v7229 = vadd.f32 %v7228, %v7048
    %v7230 = vadd.f32 %v7229, %v7051
    %v7231 = vadd.f32 %v7230, %v7056
    %v7232 = vadd.f32 %v7231, %v7059
    %v7233 = vadd.f32 %v7232, %v7064
    %v7234 = vadd.f32 %v7233, %v7067
    %v7235 = vadd.f32 %v7234, %v7072
    %v7236 = vadd.f32 %v7235, %v7075
    %v7237 = vadd.f32 %v7236, %v7080
    %v7238 = vadd.f32 %v7237, %v7083
    %v7239 = vadd.f32 %v7238, %v7088
    %v7240 = vadd.f32 %v7239, %v7091
    %v7241 = vadd.f32 %v7240, %v7096
    %v7242 = vadd.f32 %v7241, %v7099
    %v7243 = vadd.f32 %v7242, %v7104
    %v7244 = vadd.f32 %v7243, %v7107
    %v7245 = vadd.f32 %v7244, %v7112
    %v7246 = vadd.f32 %v7245, %v7115
    %v7247 = vadd.f32 %v7246, %v7120
    %v7248 = vadd.f32 %v7247, %v7123
    %v7249 = vadd.f32 %v7248, %v7128
    %v7250 = vadd.f32 %v7249, %v7131
    %v7251 = vadd.f32 %v7250, %v7136
    %v7252 = vadd.f32 %v7251, %v7139
    %v7253 = vadd.f32 %v7252, %v7144
    %v7254 = vadd.f32 %v7253, %v7147
    %v7255 = vadd.f32 %v7254, %v7152
    %v7256 = vadd.f32 %v7255, %v7155
    %v7257 = vadd.f32 %v7256, %v7160
    %v7258 = vadd.f32 %v7257, %v7163
    %v7259 = vadd.f32 %v7258, %v7168
    %v7260 = vadd.f32 %v7259, %v7171
    %v7261 = vadd.f32 %v7260, %v7176
    %v7262 = vadd.f32 %v7261, %v7179
    %v7263 = vadd.f32 %v7262, %v7184
    %v7264 = vadd.f32 %v7263, %v7187
    %v7265 = vadd.f32 %v7264, %v7192
    %v7266 = vadd.f32 %v7265, %v7195
    %v7267 = vadd.f32 %v7266, %v7200
    %v7268 = vadd.f32 %v7267, %v7203
    %v7269 = vrot.slane %v7268, 4
    %v7270 = vadd.f32 %v7268, %v7269
    %v7271 = vrot.slane %v7270, 2
    %v7272 = vadd.f32 %v7270, %v7271
    %v7273 = vrot.slane %v7272, 1
    %v7274 = vadd.f32 %v7272, %v7273
    %v7275 = vmul.f32 %v6952, %v6952
    %v7276 = vmul.f32 %v6955, %v6955
    %v7277 = vmul.f32 %v6960, %v6960
    %v7278 = vmul.f32 %v6963, %v6963
    %v7279 = vmul.f32 %v6968, %v6968
    %v7280 = vmul.f32 %v6971, %v6971
    %v7281 = vmul.f32 %v6976, %v6976
    %v7282 = vmul.f32 %v6979, %v6979
    %v7283 = vmul.f32 %v6984, %v6984
    %v7284 = vmul.f32 %v6987, %v6987
    %v7285 = vmul.f32 %v6992, %v6992
    %v7286 = vmul.f32 %v6995, %v6995
    %v7287 = vmul.f32 %v7000, %v7000
    %v7288 = vmul.f32 %v7003, %v7003
    %v7289 = vmul.f32 %v7008, %v7008
    %v7290 = vmul.f32 %v7011, %v7011
    %v7291 = vmul.f32 %v7016, %v7016
    %v7292 = vmul.f32 %v7019, %v7019
    %v7293 = vmul.f32 %v7024, %v7024
    %v7294 = vmul.f32 %v7027, %v7027
    %v7295 = vmul.f32 %v7032, %v7032
    %v7296 = vmul.f32 %v7035, %v7035
    %v7297 = vmul.f32 %v7040, %v7040
    %v7298 = vmul.f32 %v7043, %v7043
    %v7299 = vmul.f32 %v7048, %v7048
    %v7300 = vmul.f32 %v7051, %v7051
    %v7301 = vmul.f32 %v7056, %v7056
    %v7302 = vmul.f32 %v7059, %v7059
    %v7303 = vmul.f32 %v7064, %v7064
    %v7304 = vmul.f32 %v7067, %v7067
    %v7305 = vmul.f32 %v7072, %v7072
    %v7306 = vmul.f32 %v7075, %v7075
    %v7307 = vmul.f32 %v7080, %v7080
    %v7308 = vmul.f32 %v7083, %v7083
    %v7309 = vmul.f32 %v7088, %v7088
    %v7310 = vmul.f32 %v7091, %v7091
    %v7311 = vmul.f32 %v7096, %v7096
    %v7312 = vmul.f32 %v7099, %v7099
    %v7313 = vmul.f32 %v7104, %v7104
    %v7314 = vmul.f32 %v7107, %v7107
    %v7315 = vmul.f32 %v7112, %v7112
    %v7316 = vmul.f32 %v7115, %v7115
    %v7317 = vmul.f32 %v7120, %v7120
    %v7318 = vmul.f32 %v7123, %v7123
    %v7319 = vmul.f32 %v7128, %v7128
    %v7320 = vmul.f32 %v7131, %v7131
    %v7321 = vmul.f32 %v7136, %v7136
    %v7322 = vmul.f32 %v7139, %v7139
    %v7323 = vmul.f32 %v7144, %v7144
    %v7324 = vmul.f32 %v7147, %v7147
    %v7325 = vmul.f32 %v7152, %v7152
    %v7326 = vmul.f32 %v7155, %v7155
    %v7327 = vmul.f32 %v7160, %v7160
    %v7328 = vmul.f32 %v7163, %v7163
    %v7329 = vmul.f32 %v7168, %v7168
    %v7330 = vmul.f32 %v7171, %v7171
    %v7331 = vmul.f32 %v7176, %v7176
    %v7332 = vmul.f32 %v7179, %v7179
    %v7333 = vmul.f32 %v7184, %v7184
    %v7334 = vmul.f32 %v7187, %v7187
    %v7335 = vmul.f32 %v7192, %v7192
    %v7336 = vmul.f32 %v7195, %v7195
    %v7337 = vmul.f32 %v7200, %v7200
    %v7338 = vmul.f32 %v7203, %v7203
    %v7339 = vadd.f32 %v7275, %v7276
    %v7340 = vadd.f32 %v7339, %v7277
    %v7341 = vadd.f32 %v7340, %v7278
    %v7342 = vadd.f32 %v7341, %v7279
    %v7343 = vadd.f32 %v7342, %v7280
    %v7344 = vadd.f32 %v7343, %v7281
    %v7345 = vadd.f32 %v7344, %v7282
    %v7346 = vadd.f32 %v7345, %v7283
    %v7347 = vadd.f32 %v7346, %v7284
    %v7348 = vadd.f32 %v7347, %v7285
    %v7349 = vadd.f32 %v7348, %v7286
    %v7350 = vadd.f32 %v7349, %v7287
    %v7351 = vadd.f32 %v7350, %v7288
    %v7352 = vadd.f32 %v7351, %v7289
    %v7353 = vadd.f32 %v7352, %v7290
    %v7354 = vadd.f32 %v7353, %v7291
    %v7355 = vadd.f32 %v7354, %v7292
    %v7356 = vadd.f32 %v7355, %v7293
    %v7357 = vadd.f32 %v7356, %v7294
    %v7358 = vadd.f32 %v7357, %v7295
    %v7359 = vadd.f32 %v7358, %v7296
    %v7360 = vadd.f32 %v7359, %v7297
    %v7361 = vadd.f32 %v7360, %v7298
    %v7362 = vadd.f32 %v7361, %v7299
    %v7363 = vadd.f32 %v7362, %v7300
    %v7364 = vadd.f32 %v7363, %v7301
    %v7365 = vadd.f32 %v7364, %v7302
    %v7366 = vadd.f32 %v7365, %v7303
    %v7367 = vadd.f32 %v7366, %v7304
    %v7368 = vadd.f32 %v7367, %v7305
    %v7369 = vadd.f32 %v7368, %v7306
    %v7370 = vadd.f32 %v7369, %v7307
    %v7371 = vadd.f32 %v7370, %v7308
    %v7372 = vadd.f32 %v7371, %v7309
    %v7373 = vadd.f32 %v7372, %v7310
    %v7374 = vadd.f32 %v7373, %v7311
    %v7375 = vadd.f32 %v7374, %v7312
    %v7376 = vadd.f32 %v7375, %v7313
    %v7377 = vadd.f32 %v7376, %v7314
    %v7378 = vadd.f32 %v7377, %v7315
    %v7379 = vadd.f32 %v7378, %v7316
    %v7380 = vadd.f32 %v7379, %v7317
    %v7381 = vadd.f32 %v7380, %v7318
    %v7382 = vadd.f32 %v7381, %v7319
    %v7383 = vadd.f32 %v7382, %v7320
    %v7384 = vadd.f32 %v7383, %v7321
    %v7385 = vadd.f32 %v7384, %v7322
    %v7386 = vadd.f32 %v7385, %v7323
    %v7387 = vadd.f32 %v7386, %v7324
    %v7388 = vadd.f32 %v7387, %v7325
    %v7389 = vadd.f32 %v7388, %v7326
    %v7390 = vadd.f32 %v7389, %v7327
    %v7391 = vadd.f32 %v7390, %v7328
    %v7392 = vadd.f32 %v7391, %v7329
    %v7393 = vadd.f32 %v7392, %v7330
    %v7394 = vadd.f32 %v7393, %v7331
    %v7395 = vadd.f32 %v7394, %v7332
    %v7396 = vadd.f32 %v7395, %v7333
    %v7397 = vadd.f32 %v7396, %v7334
    %v7398 = vadd.f32 %v7397, %v7335
    %v7399 = vadd.f32 %v7398, %v7336
    %v7400 = vadd.f32 %v7399, %v7337
    %v7401 = vadd.f32 %v7400, %v7338
    %v7402 = vrot.slane %v7401, 4
    %v7403 = vadd.f32 %v7401, %v7402
    %v7404 = vrot.slane %v7403, 2
    %v7405 = vadd.f32 %v7403, %v7404
    %v7406 = vrot.slane %v7405, 1
    %v7407 = vadd.f32 %v7405, %v7406
    %v7408 = vmul.f32 %v7274, 0.001953125
    %v7409 = vmul.f32 %v7407, 0.001953125
    %v7410 = vmul.f32 %v7408, %v7408
    %v7411 = vsub.f32 %v7409, %v7410
    %v7412 = vld [vmem:[%s5] sm:$0x1]
    %v7413 = vadd.f32 %v7411, 1e-05
    %v7414 = vrsqrt.pop %v7413
    %v7415 = vmul.f32 %v7412, %v7414
    %v7416 = vld [vmem:[%s6] sm:$0x1]
    %v7417 = vmul.f32 %v7408, %v7415
    %v7418 = vsub.f32 %v7416, %v7417
    %v7420 = vlaneseq
    %v7421 = vshrl.u32 %v7420, 7
    %v7422 = vsub.s32 0, %v7421
    %v7423 = vrot.slane %v7415, %v7422
    %v7425 = vmul.f32 %v6952, %v7423
    %v7426 = vmul.f32 %v6955, %v7423
    %v7427 = vmul.f32 %v6960, %v7423
    %v7428 = vmul.f32 %v6963, %v7423
    %v7429 = vmul.f32 %v6968, %v7423
    %v7430 = vmul.f32 %v6971, %v7423
    %v7431 = vmul.f32 %v6976, %v7423
    %v7432 = vmul.f32 %v6979, %v7423
    %v7433 = vmul.f32 %v6984, %v7423
    %v7434 = vmul.f32 %v6987, %v7423
    %v7435 = vmul.f32 %v6992, %v7423
    %v7436 = vmul.f32 %v6995, %v7423
    %v7437 = vmul.f32 %v7000, %v7423
    %v7438 = vmul.f32 %v7003, %v7423
    %v7439 = vmul.f32 %v7008, %v7423
    %v7440 = vmul.f32 %v7011, %v7423
    %v7441 = vmul.f32 %v7016, %v7423
    %v7442 = vmul.f32 %v7019, %v7423
    %v7443 = vmul.f32 %v7024, %v7423
    %v7444 = vmul.f32 %v7027, %v7423
    %v7445 = vmul.f32 %v7032, %v7423
    %v7446 = vmul.f32 %v7035, %v7423
    %v7447 = vmul.f32 %v7040, %v7423
    %v7448 = vmul.f32 %v7043, %v7423
    %v7449 = vmul.f32 %v7048, %v7423
    %v7450 = vmul.f32 %v7051, %v7423
    %v7451 = vmul.f32 %v7056, %v7423
    %v7452 = vmul.f32 %v7059, %v7423
    %v7453 = vmul.f32 %v7064, %v7423
    %v7454 = vmul.f32 %v7067, %v7423
    %v7455 = vmul.f32 %v7072, %v7423
    %v7456 = vmul.f32 %v7075, %v7423
    %v7457 = vmul.f32 %v7080, %v7423
    %v7458 = vmul.f32 %v7083, %v7423
    %v7459 = vmul.f32 %v7088, %v7423
    %v7460 = vmul.f32 %v7091, %v7423
    %v7461 = vmul.f32 %v7096, %v7423
    %v7462 = vmul.f32 %v7099, %v7423
    %v7463 = vmul.f32 %v7104, %v7423
    %v7464 = vmul.f32 %v7107, %v7423
    %v7465 = vmul.f32 %v7112, %v7423
    %v7466 = vmul.f32 %v7115, %v7423
    %v7467 = vmul.f32 %v7120, %v7423
    %v7468 = vmul.f32 %v7123, %v7423
    %v7469 = vmul.f32 %v7128, %v7423
    %v7470 = vmul.f32 %v7131, %v7423
    %v7471 = vmul.f32 %v7136, %v7423
    %v7472 = vmul.f32 %v7139, %v7423
    %v7473 = vmul.f32 %v7144, %v7423
    %v7474 = vmul.f32 %v7147, %v7423
    %v7475 = vmul.f32 %v7152, %v7423
    %v7476 = vmul.f32 %v7155, %v7423
    %v7477 = vmul.f32 %v7160, %v7423
    %v7478 = vmul.f32 %v7163, %v7423
    %v7479 = vmul.f32 %v7168, %v7423
    %v7480 = vmul.f32 %v7171, %v7423
    %v7481 = vmul.f32 %v7176, %v7423
    %v7482 = vmul.f32 %v7179, %v7423
    %v7483 = vmul.f32 %v7184, %v7423
    %v7484 = vmul.f32 %v7187, %v7423
    %v7485 = vmul.f32 %v7192, %v7423
    %v7486 = vmul.f32 %v7195, %v7423
    %v7487 = vmul.f32 %v7200, %v7423
    %v7488 = vmul.f32 %v7203, %v7423
    %v7490 = vlaneseq
    %v7491 = vshrl.u32 %v7490, 7
    %v7492 = vsub.s32 0, %v7491
    %v7493 = vrot.slane %v7418, %v7492
    %v7495 = vadd.f32 %v7425, %v7493
    %v7496 = vadd.f32 %v7426, %v7493
    %v7497 = vadd.f32 %v7427, %v7493
    %v7498 = vadd.f32 %v7428, %v7493
    %v7499 = vadd.f32 %v7429, %v7493
    %v7500 = vadd.f32 %v7430, %v7493
    %v7501 = vadd.f32 %v7431, %v7493
    %v7502 = vadd.f32 %v7432, %v7493
    %v7503 = vadd.f32 %v7433, %v7493
    %v7504 = vadd.f32 %v7434, %v7493
    %v7505 = vadd.f32 %v7435, %v7493
    %v7506 = vadd.f32 %v7436, %v7493
    %v7507 = vadd.f32 %v7437, %v7493
    %v7508 = vadd.f32 %v7438, %v7493
    %v7509 = vadd.f32 %v7439, %v7493
    %v7510 = vadd.f32 %v7440, %v7493
    %v7511 = vadd.f32 %v7441, %v7493
    %v7512 = vadd.f32 %v7442, %v7493
    %v7513 = vadd.f32 %v7443, %v7493
    %v7514 = vadd.f32 %v7444, %v7493
    %v7515 = vadd.f32 %v7445, %v7493
    %v7516 = vadd.f32 %v7446, %v7493
    %v7517 = vadd.f32 %v7447, %v7493
    %v7518 = vadd.f32 %v7448, %v7493
    %v7519 = vadd.f32 %v7449, %v7493
    %v7520 = vadd.f32 %v7450, %v7493
    %v7521 = vadd.f32 %v7451, %v7493
    %v7522 = vadd.f32 %v7452, %v7493
    %v7523 = vadd.f32 %v7453, %v7493
    %v7524 = vadd.f32 %v7454, %v7493
    %v7525 = vadd.f32 %v7455, %v7493
    %v7526 = vadd.f32 %v7456, %v7493
    %v7527 = vadd.f32 %v7457, %v7493
    %v7528 = vadd.f32 %v7458, %v7493
    %v7529 = vadd.f32 %v7459, %v7493
    %v7530 = vadd.f32 %v7460, %v7493
    %v7531 = vadd.f32 %v7461, %v7493
    %v7532 = vadd.f32 %v7462, %v7493
    %v7533 = vadd.f32 %v7463, %v7493
    %v7534 = vadd.f32 %v7464, %v7493
    %v7535 = vadd.f32 %v7465, %v7493
    %v7536 = vadd.f32 %v7466, %v7493
    %v7537 = vadd.f32 %v7467, %v7493
    %v7538 = vadd.f32 %v7468, %v7493
    %v7539 = vadd.f32 %v7469, %v7493
    %v7540 = vadd.f32 %v7470, %v7493
    %v7541 = vadd.f32 %v7471, %v7493
    %v7542 = vadd.f32 %v7472, %v7493
    %v7543 = vadd.f32 %v7473, %v7493
    %v7544 = vadd.f32 %v7474, %v7493
    %v7545 = vadd.f32 %v7475, %v7493
    %v7546 = vadd.f32 %v7476, %v7493
    %v7547 = vadd.f32 %v7477, %v7493
    %v7548 = vadd.f32 %v7478, %v7493
    %v7549 = vadd.f32 %v7479, %v7493
    %v7550 = vadd.f32 %v7480, %v7493
    %v7551 = vadd.f32 %v7481, %v7493
    %v7552 = vadd.f32 %v7482, %v7493
    %v7553 = vadd.f32 %v7483, %v7493
    %v7554 = vadd.f32 %v7484, %v7493
    %v7555 = vadd.f32 %v7485, %v7493
    %v7556 = vadd.f32 %v7486, %v7493
    %v7557 = vadd.f32 %v7487, %v7493
    %v7558 = vadd.f32 %v7488, %v7493
    %v7559 = vmax.f32 %v7495, 0.0
    %v7560 = vmax.f32 %v7496, 0.0
    %v7561 = vmax.f32 %v7497, 0.0
    %v7562 = vmax.f32 %v7498, 0.0
    %v7563 = vmax.f32 %v7499, 0.0
    %v7564 = vmax.f32 %v7500, 0.0
    %v7565 = vmax.f32 %v7501, 0.0
    %v7566 = vmax.f32 %v7502, 0.0
    %v7567 = vmax.f32 %v7503, 0.0
    %v7568 = vmax.f32 %v7504, 0.0
    %v7569 = vmax.f32 %v7505, 0.0
    %v7570 = vmax.f32 %v7506, 0.0
    %v7571 = vmax.f32 %v7507, 0.0
    %v7572 = vmax.f32 %v7508, 0.0
    %v7573 = vmax.f32 %v7509, 0.0
    %v7574 = vmax.f32 %v7510, 0.0
    %v7575 = vmax.f32 %v7511, 0.0
    %v7576 = vmax.f32 %v7512, 0.0
    %v7577 = vmax.f32 %v7513, 0.0
    %v7578 = vmax.f32 %v7514, 0.0
    %v7579 = vmax.f32 %v7515, 0.0
    %v7580 = vmax.f32 %v7516, 0.0
    %v7581 = vmax.f32 %v7517, 0.0
    %v7582 = vmax.f32 %v7518, 0.0
    %v7583 = vmax.f32 %v7519, 0.0
    %v7584 = vmax.f32 %v7520, 0.0
    %v7585 = vmax.f32 %v7521, 0.0
    %v7586 = vmax.f32 %v7522, 0.0
    %v7587 = vmax.f32 %v7523, 0.0
    %v7588 = vmax.f32 %v7524, 0.0
    %v7589 = vmax.f32 %v7525, 0.0
    %v7590 = vmax.f32 %v7526, 0.0
    %v7591 = vmax.f32 %v7527, 0.0
    %v7592 = vmax.f32 %v7528, 0.0
    %v7593 = vmax.f32 %v7529, 0.0
    %v7594 = vmax.f32 %v7530, 0.0
    %v7595 = vmax.f32 %v7531, 0.0
    %v7596 = vmax.f32 %v7532, 0.0
    %v7597 = vmax.f32 %v7533, 0.0
    %v7598 = vmax.f32 %v7534, 0.0
    %v7599 = vmax.f32 %v7535, 0.0
    %v7600 = vmax.f32 %v7536, 0.0
    %v7601 = vmax.f32 %v7537, 0.0
    %v7602 = vmax.f32 %v7538, 0.0
    %v7603 = vmax.f32 %v7539, 0.0
    %v7604 = vmax.f32 %v7540, 0.0
    %v7605 = vmax.f32 %v7541, 0.0
    %v7606 = vmax.f32 %v7542, 0.0
    %v7607 = vmax.f32 %v7543, 0.0
    %v7608 = vmax.f32 %v7544, 0.0
    %v7609 = vmax.f32 %v7545, 0.0
    %v7610 = vmax.f32 %v7546, 0.0
    %v7611 = vmax.f32 %v7547, 0.0
    %v7612 = vmax.f32 %v7548, 0.0
    %v7613 = vmax.f32 %v7549, 0.0
    %v7614 = vmax.f32 %v7550, 0.0
    %v7615 = vmax.f32 %v7551, 0.0
    %v7616 = vmax.f32 %v7552, 0.0
    %v7617 = vmax.f32 %v7553, 0.0
    %v7618 = vmax.f32 %v7554, 0.0
    %v7619 = vmax.f32 %v7555, 0.0
    %v7620 = vmax.f32 %v7556, 0.0
    %v7621 = vmax.f32 %v7557, 0.0
    %v7622 = vmax.f32 %v7558, 0.0
    %v7623 = vpack.c.bf16 %v7560, %v7559
    %v7624 = vpack.c.bf16 %v7562, %v7561
    %v7625 = vpack.c.bf16 %v7564, %v7563
    %v7626 = vpack.c.bf16 %v7566, %v7565
    %v7627 = vpack.c.bf16 %v7568, %v7567
    %v7628 = vpack.c.bf16 %v7570, %v7569
    %v7629 = vpack.c.bf16 %v7572, %v7571
    %v7630 = vpack.c.bf16 %v7574, %v7573
    %v7631 = vpack.c.bf16 %v7576, %v7575
    %v7632 = vpack.c.bf16 %v7578, %v7577
    %v7633 = vpack.c.bf16 %v7580, %v7579
    %v7634 = vpack.c.bf16 %v7582, %v7581
    %v7635 = vpack.c.bf16 %v7584, %v7583
    %v7636 = vpack.c.bf16 %v7586, %v7585
    %v7637 = vpack.c.bf16 %v7588, %v7587
    %v7638 = vpack.c.bf16 %v7590, %v7589
    %v7639 = vpack.c.bf16 %v7592, %v7591
    %v7640 = vpack.c.bf16 %v7594, %v7593
    %v7641 = vpack.c.bf16 %v7596, %v7595
    %v7642 = vpack.c.bf16 %v7598, %v7597
    %v7643 = vpack.c.bf16 %v7600, %v7599
    %v7644 = vpack.c.bf16 %v7602, %v7601
    %v7645 = vpack.c.bf16 %v7604, %v7603
    %v7646 = vpack.c.bf16 %v7606, %v7605
    %v7647 = vpack.c.bf16 %v7608, %v7607
    %v7648 = vpack.c.bf16 %v7610, %v7609
    %v7649 = vpack.c.bf16 %v7612, %v7611
    %v7650 = vpack.c.bf16 %v7614, %v7613
    %v7651 = vpack.c.bf16 %v7616, %v7615
    %v7652 = vpack.c.bf16 %v7618, %v7617
    %v7653 = vpack.c.bf16 %v7620, %v7619
    %v7654 = vpack.c.bf16 %v7622, %v7621
    %v7655 = vld [vmem:[#allocation9] sm:$0xf]
    %v7656 = vld [vmem:[#allocation9 + $0x4] sm:$0xf]
    %v7657 = vld [vmem:[#allocation9 + $0x8] sm:$0xf]
    %v7658 = vld [vmem:[#allocation9 + $0xc] sm:$0xf]
    %v7659 = vld [vmem:[#allocation9 + $0x10] sm:$0xf]
    %v7660 = vld [vmem:[#allocation9 + $0x14] sm:$0xf]
    %v7661 = vld [vmem:[#allocation9 + $0x18] sm:$0xf]
    %v7662 = vld [vmem:[#allocation9 + $0x1c] sm:$0xf]
    %v7663 = vld [vmem:[#allocation9 + $0x20] sm:$0xf]
    %v7664 = vld [vmem:[#allocation9 + $0x24] sm:$0xf]
    %v7665 = vld [vmem:[#allocation9 + $0x28] sm:$0xf]
    %v7666 = vld [vmem:[#allocation9 + $0x2c] sm:$0xf]
    %v7667 = vld [vmem:[#allocation9 + $0x30] sm:$0xf]
    %v7668 = vld [vmem:[#allocation9 + $0x34] sm:$0xf]
    %v7669 = vld [vmem:[#allocation9 + $0x38] sm:$0xf]
    %v7670 = vld [vmem:[#allocation9 + $0x3c] sm:$0xf]
    %v7687 = vunpack.c.l.b16 %v7655
    %v7688 = vunpack.c.l.b16 %v7656
    %v7689 = vunpack.c.l.b16 %v7657
    %v7690 = vunpack.c.l.b16 %v7658
    %v7691 = vunpack.c.l.b16 %v7659
    %v7692 = vunpack.c.l.b16 %v7660
    %v7693 = vunpack.c.l.b16 %v7661
    %v7694 = vunpack.c.l.b16 %v7662
    %v7695 = vunpack.c.l.b16 %v7663
    %v7696 = vunpack.c.l.b16 %v7664
    %v7697 = vunpack.c.l.b16 %v7665
    %v7698 = vunpack.c.l.b16 %v7666
    %v7699 = vunpack.c.l.b16 %v7667
    %v7700 = vunpack.c.l.b16 %v7668
    %v7701 = vunpack.c.l.b16 %v7669
    %v7702 = vunpack.c.l.b16 %v7670
    %v7703 = vpack.c.b16 %v7688, %v7687
    %v7704 = vpack.c.b16 %v7690, %v7689
    %v7705 = vpack.c.b16 %v7692, %v7691
    %v7706 = vpack.c.b16 %v7694, %v7693
    %v7707 = vpack.c.b16 %v7696, %v7695
    %v7708 = vpack.c.b16 %v7698, %v7697
    %v7709 = vpack.c.b16 %v7700, %v7699
    %v7710 = vpack.c.b16 %v7702, %v7701
    %7719 = vmatprep.subr.bf16.mxu0 0
    %7720 = vmatpush1.bf16.msra.mxu0 %v7710
    %7721 = vmatprep.subr.bf16.mxu0 0
    %7722 = vmatpush1.bf16.msra.mxu0 %v7709
    %7723 = vmatprep.subr.bf16.mxu0 0
    %7724 = vmatpush1.bf16.msra.mxu0 %v7708
    %7725 = vmatprep.subr.bf16.mxu0 0
    %7726 = vmatpush1.bf16.msra.mxu0 %v7707
    %7727 = vmatprep.subr.bf16.mxu0 0
    %7728 = vmatpush1.bf16.msra.mxu0 %v7706
    %7729 = vmatprep.subr.bf16.mxu0 0
    %7730 = vmatpush1.bf16.msra.mxu0 %v7705
    %7731 = vmatprep.subr.bf16.mxu0 0
    %7732 = vmatpush1.bf16.msra.mxu0 %v7704
    %7733 = vmatprep.subr.bf16.mxu0 0
    %7734 = vmatpush1.bf16.msra.mxu0 %v7703
    %7735 = vmatprep.subr.bf16.mxu0 0
    %7736 = vmatpush2.bf16.msra.mxu0 0
    %7737 = vmatprep.subr.bf16.mxu0 0
    %7738 = vmatpush2.bf16.msra.mxu0 0
    %7739 = vmatprep.subr.bf16.mxu0 0
    %7740 = vmatpush2.bf16.msra.mxu0 0
    %7741 = vmatprep.subr.bf16.mxu0 0
    %7742 = vmatpush2.bf16.msra.mxu0 0
    %7743 = vmatprep.subr.bf16.mxu0 0
    %7744 = vmatpush2.bf16.msra.mxu0 0
    %7745 = vmatprep.subr.bf16.mxu0 0
    %7746 = vmatpush2.bf16.msra.mxu0 0
    %7747 = vmatprep.subr.bf16.mxu0 0
    %7748 = vmatpush2.bf16.msra.mxu0 0
    %7749 = vmatprep.subr.bf16.mxu0 0
    %7750 = vmatpush2.bf16.msra.mxu0 0
    %7751 = vmatprep.mubr.bf16.mxu0 0
    %7752 = vmatmul.mubr.bf16.gmra.mxu0 %v7623
    %v7753 = vpop.f32.mrf.mxu0
    %v7754 = vadd.f32 0.0, %v7753
    %v7755 = vpop.f32.mrf.mxu0
    %v7756 = vpop.f32.mrf.mxu0
    %v7757 = vadd.f32 0.0, %v7756
    %v7758 = vpop.f32.mrf.mxu0
    %7759 = vmatprep.mubr.bf16.mxu0 0
    %7760 = vmatmul.mubr.bf16.gmra.mxu0 %v7624
    %v7761 = vpop.f32.mrf.mxu0
    %v7762 = vadd.f32 0.0, %v7761
    %v7763 = vpop.f32.mrf.mxu0
    %v7764 = vpop.f32.mrf.mxu0
    %v7765 = vadd.f32 0.0, %v7764
    %v7766 = vpop.f32.mrf.mxu0
    %7767 = vmatprep.mubr.bf16.mxu0 0
    %7768 = vmatmul.mubr.bf16.gmra.mxu0 %v7625
    %v7769 = vpop.f32.mrf.mxu0
    %v7770 = vadd.f32 0.0, %v7769
    %v7771 = vpop.f32.mrf.mxu0
    %v7772 = vpop.f32.mrf.mxu0
    %v7773 = vadd.f32 0.0, %v7772
    %v7774 = vpop.f32.mrf.mxu0
    %7775 = vmatprep.mubr.bf16.mxu0 0
    %7776 = vmatmul.mubr.bf16.gmra.mxu0 %v7626
    %v7777 = vpop.f32.mrf.mxu0
    %v7778 = vadd.f32 0.0, %v7777
    %v7779 = vpop.f32.mrf.mxu0
    %v7780 = vpop.f32.mrf.mxu0
    %v7781 = vadd.f32 0.0, %v7780
    %v7782 = vpop.f32.mrf.mxu0
    %7783 = vmatprep.mubr.bf16.mxu0 0
    %7784 = vmatmul.mubr.bf16.gmra.mxu0 %v7627
    %v7785 = vpop.f32.mrf.mxu0
    %v7786 = vadd.f32 0.0, %v7785
    %v7787 = vpop.f32.mrf.mxu0
    %v7788 = vpop.f32.mrf.mxu0
    %v7789 = vadd.f32 0.0, %v7788
    %v7790 = vpop.f32.mrf.mxu0
    %7791 = vmatprep.mubr.bf16.mxu0 0
    %7792 = vmatmul.mubr.bf16.gmra.mxu0 %v7628
    %v7793 = vpop.f32.mrf.mxu0
    %v7794 = vadd.f32 0.0, %v7793
    %v7795 = vpop.f32.mrf.mxu0
    %v7796 = vpop.f32.mrf.mxu0
    %v7797 = vadd.f32 0.0, %v7796
    %v7798 = vpop.f32.mrf.mxu0
    %7799 = vmatprep.mubr.bf16.mxu0 0
    %7800 = vmatmul.mubr.bf16.gmra.mxu0 %v7629
    %v7801 = vpop.f32.mrf.mxu0
    %v7802 = vadd.f32 0.0, %v7801
    %v7803 = vpop.f32.mrf.mxu0
    %v7804 = vpop.f32.mrf.mxu0
    %v7805 = vadd.f32 0.0, %v7804
    %v7806 = vpop.f32.mrf.mxu0
    %7807 = vmatprep.mubr.bf16.mxu0 0
    %7808 = vmatmul.mubr.bf16.gmra.mxu0 %v7630
    %v7809 = vpop.f32.mrf.mxu0
    %v7810 = vadd.f32 0.0, %v7809
    %v7811 = vpop.f32.mrf.mxu0
    %v7812 = vpop.f32.mrf.mxu0
    %v7813 = vadd.f32 0.0, %v7812
    %v7814 = vpop.f32.mrf.mxu0
    %7815 = vmatprep.mubr.bf16.mxu0 0
    %7816 = vmatmul.mubr.bf16.gmra.mxu0 %v7631
    %v7817 = vpop.f32.mrf.mxu0
    %v7818 = vadd.f32 0.0, %v7817
    %v7819 = vpop.f32.mrf.mxu0
    %v7820 = vpop.f32.mrf.mxu0
    %v7821 = vadd.f32 0.0, %v7820
    %v7822 = vpop.f32.mrf.mxu0
    %7823 = vmatprep.mubr.bf16.mxu0 0
    %7824 = vmatmul.mubr.bf16.gmra.mxu0 %v7632
    %v7825 = vpop.f32.mrf.mxu0
    %v7826 = vadd.f32 0.0, %v7825
    %v7827 = vpop.f32.mrf.mxu0
    %v7828 = vpop.f32.mrf.mxu0
    %v7829 = vadd.f32 0.0, %v7828
    %v7830 = vpop.f32.mrf.mxu0
    %7831 = vmatprep.mubr.bf16.mxu0 0
    %7832 = vmatmul.mubr.bf16.gmra.mxu0 %v7633
    %v7833 = vpop.f32.mrf.mxu0
    %v7834 = vadd.f32 0.0, %v7833
    %v7835 = vpop.f32.mrf.mxu0
    %v7836 = vpop.f32.mrf.mxu0
    %v7837 = vadd.f32 0.0, %v7836
    %v7838 = vpop.f32.mrf.mxu0
    %7839 = vmatprep.mubr.bf16.mxu0 0
    %7840 = vmatmul.mubr.bf16.gmra.mxu0 %v7634
    %v7841 = vpop.f32.mrf.mxu0
    %v7842 = vadd.f32 0.0, %v7841
    %v7843 = vpop.f32.mrf.mxu0
    %v7844 = vpop.f32.mrf.mxu0
    %v7845 = vadd.f32 0.0, %v7844
    %v7846 = vpop.f32.mrf.mxu0
    %7847 = vmatprep.mubr.bf16.mxu0 0
    %7848 = vmatmul.mubr.bf16.gmra.mxu0 %v7635
    %v7849 = vpop.f32.mrf.mxu0
    %v7850 = vadd.f32 0.0, %v7849
    %v7851 = vpop.f32.mrf.mxu0
    %v7852 = vpop.f32.mrf.mxu0
    %v7853 = vadd.f32 0.0, %v7852
    %v7854 = vpop.f32.mrf.mxu0
    %7855 = vmatprep.mubr.bf16.mxu0 0
    %7856 = vmatmul.mubr.bf16.gmra.mxu0 %v7636
    %v7857 = vpop.f32.mrf.mxu0
    %v7858 = vadd.f32 0.0, %v7857
    %v7859 = vpop.f32.mrf.mxu0
    %v7860 = vpop.f32.mrf.mxu0
    %v7861 = vadd.f32 0.0, %v7860
    %v7862 = vpop.f32.mrf.mxu0
    %7863 = vmatprep.mubr.bf16.mxu0 0
    %7864 = vmatmul.mubr.bf16.gmra.mxu0 %v7637
    %v7865 = vpop.f32.mrf.mxu0
    %v7866 = vadd.f32 0.0, %v7865
    %v7867 = vpop.f32.mrf.mxu0
    %v7868 = vpop.f32.mrf.mxu0
    %v7869 = vadd.f32 0.0, %v7868
    %v7870 = vpop.f32.mrf.mxu0
    %7871 = vmatprep.mubr.bf16.mxu0 0
    %7872 = vmatmul.mubr.bf16.gmra.mxu0 %v7638
    %v7873 = vpop.f32.mrf.mxu0
    %v7874 = vadd.f32 0.0, %v7873
    %v7875 = vpop.f32.mrf.mxu0
    %v7876 = vpop.f32.mrf.mxu0
    %v7877 = vadd.f32 0.0, %v7876
    %v7878 = vpop.f32.mrf.mxu0
    %7879 = vmatprep.mubr.bf16.mxu0 0
    %7880 = vmatmul.mubr.bf16.gmra.mxu0 %v7639
    %v7881 = vpop.f32.mrf.mxu0
    %v7882 = vadd.f32 0.0, %v7881
    %v7883 = vpop.f32.mrf.mxu0
    %v7884 = vpop.f32.mrf.mxu0
    %v7885 = vadd.f32 0.0, %v7884
    %v7886 = vpop.f32.mrf.mxu0
    %7887 = vmatprep.mubr.bf16.mxu0 0
    %7888 = vmatmul.mubr.bf16.gmra.mxu0 %v7640
    %v7889 = vpop.f32.mrf.mxu0
    %v7890 = vadd.f32 0.0, %v7889
    %v7891 = vpop.f32.mrf.mxu0
    %v7892 = vpop.f32.mrf.mxu0
    %v7893 = vadd.f32 0.0, %v7892
    %v7894 = vpop.f32.mrf.mxu0
    %7895 = vmatprep.mubr.bf16.mxu0 0
    %7896 = vmatmul.mubr.bf16.gmra.mxu0 %v7641
    %v7897 = vpop.f32.mrf.mxu0
    %v7898 = vadd.f32 0.0, %v7897
    %v7899 = vpop.f32.mrf.mxu0
    %v7900 = vpop.f32.mrf.mxu0
    %v7901 = vadd.f32 0.0, %v7900
    %v7902 = vpop.f32.mrf.mxu0
    %7903 = vmatprep.mubr.bf16.mxu0 0
    %7904 = vmatmul.mubr.bf16.gmra.mxu0 %v7642
    %v7905 = vpop.f32.mrf.mxu0
    %v7906 = vadd.f32 0.0, %v7905
    %v7907 = vpop.f32.mrf.mxu0
    %v7908 = vpop.f32.mrf.mxu0
    %v7909 = vadd.f32 0.0, %v7908
    %v7910 = vpop.f32.mrf.mxu0
    %7911 = vmatprep.mubr.bf16.mxu0 0
    %7912 = vmatmul.mubr.bf16.gmra.mxu0 %v7643
    %v7913 = vpop.f32.mrf.mxu0
    %v7914 = vadd.f32 0.0, %v7913
    %v7915 = vpop.f32.mrf.mxu0
    %v7916 = vpop.f32.mrf.mxu0
    %v7917 = vadd.f32 0.0, %v7916
    %v7918 = vpop.f32.mrf.mxu0
    %7919 = vmatprep.mubr.bf16.mxu0 0
    %7920 = vmatmul.mubr.bf16.gmra.mxu0 %v7644
    %v7921 = vpop.f32.mrf.mxu0
    %v7922 = vadd.f32 0.0, %v7921
    %v7923 = vpop.f32.mrf.mxu0
    %v7924 = vpop.f32.mrf.mxu0
    %v7925 = vadd.f32 0.0, %v7924
    %v7926 = vpop.f32.mrf.mxu0
    %7927 = vmatprep.mubr.bf16.mxu0 0
    %7928 = vmatmul.mubr.bf16.gmra.mxu0 %v7645
    %v7929 = vpop.f32.mrf.mxu0
    %v7930 = vadd.f32 0.0, %v7929
    %v7931 = vpop.f32.mrf.mxu0
    %v7932 = vpop.f32.mrf.mxu0
    %v7933 = vadd.f32 0.0, %v7932
    %v7934 = vpop.f32.mrf.mxu0
    %7935 = vmatprep.mubr.bf16.mxu0 0
    %7936 = vmatmul.mubr.bf16.gmra.mxu0 %v7646
    %v7937 = vpop.f32.mrf.mxu0
    %v7938 = vadd.f32 0.0, %v7937
    %v7939 = vpop.f32.mrf.mxu0
    %v7940 = vpop.f32.mrf.mxu0
    %v7941 = vadd.f32 0.0, %v7940
    %v7942 = vpop.f32.mrf.mxu0
    %7943 = vmatprep.mubr.bf16.mxu0 0
    %7944 = vmatmul.mubr.bf16.gmra.mxu0 %v7647
    %v7945 = vpop.f32.mrf.mxu0
    %v7946 = vadd.f32 0.0, %v7945
    %v7947 = vpop.f32.mrf.mxu0
    %v7948 = vpop.f32.mrf.mxu0
    %v7949 = vadd.f32 0.0, %v7948
    %v7950 = vpop.f32.mrf.mxu0
    %7951 = vmatprep.mubr.bf16.mxu0 0
    %7952 = vmatmul.mubr.bf16.gmra.mxu0 %v7648
    %v7953 = vpop.f32.mrf.mxu0
    %v7954 = vadd.f32 0.0, %v7953
    %v7955 = vpop.f32.mrf.mxu0
    %v7956 = vpop.f32.mrf.mxu0
    %v7957 = vadd.f32 0.0, %v7956
    %v7958 = vpop.f32.mrf.mxu0
    %7959 = vmatprep.mubr.bf16.mxu0 0
    %7960 = vmatmul.mubr.bf16.gmra.mxu0 %v7649
    %v7961 = vpop.f32.mrf.mxu0
    %v7962 = vadd.f32 0.0, %v7961
    %v7963 = vpop.f32.mrf.mxu0
    %v7964 = vpop.f32.mrf.mxu0
    %v7965 = vadd.f32 0.0, %v7964
    %v7966 = vpop.f32.mrf.mxu0
    %7967 = vmatprep.mubr.bf16.mxu0 0
    %7968 = vmatmul.mubr.bf16.gmra.mxu0 %v7650
    %v7969 = vpop.f32.mrf.mxu0
    %v7970 = vadd.f32 0.0, %v7969
    %v7971 = vpop.f32.mrf.mxu0
    %v7972 = vpop.f32.mrf.mxu0
    %v7973 = vadd.f32 0.0, %v7972
    %v7974 = vpop.f32.mrf.mxu0
    %7975 = vmatprep.mubr.bf16.mxu0 0
    %7976 = vmatmul.mubr.bf16.gmra.mxu0 %v7651
    %v7977 = vpop.f32.mrf.mxu0
    %v7978 = vadd.f32 0.0, %v7977
    %v7979 = vpop.f32.mrf.mxu0
    %v7980 = vpop.f32.mrf.mxu0
    %v7981 = vadd.f32 0.0, %v7980
    %v7982 = vpop.f32.mrf.mxu0
    %7983 = vmatprep.mubr.bf16.mxu0 0
    %7984 = vmatmul.mubr.bf16.gmra.mxu0 %v7652
    %v7985 = vpop.f32.mrf.mxu0
    %v7986 = vadd.f32 0.0, %v7985
    %v7987 = vpop.f32.mrf.mxu0
    %v7988 = vpop.f32.mrf.mxu0
    %v7989 = vadd.f32 0.0, %v7988
    %v7990 = vpop.f32.mrf.mxu0
    %7991 = vmatprep.mubr.bf16.mxu0 0
    %7992 = vmatmul.mubr.bf16.gmra.mxu0 %v7653
    %v7993 = vpop.f32.mrf.mxu0
    %v7994 = vadd.f32 0.0, %v7993
    %v7995 = vpop.f32.mrf.mxu0
    %v7996 = vpop.f32.mrf.mxu0
    %v7997 = vadd.f32 0.0, %v7996
    %v7998 = vpop.f32.mrf.mxu0
    %7999 = vmatprep.mubr.bf16.mxu0 0
    %8000 = vmatmul.mubr.bf16.gmra.mxu0 %v7654
    %v8001 = vpop.f32.mrf.mxu0
    %v8002 = vadd.f32 0.0, %v8001
    %v8003 = vpop.f32.mrf.mxu0
    %v8004 = vpop.f32.mrf.mxu0
    %v8005 = vadd.f32 0.0, %v8004
    %v8006 = vpop.f32.mrf.mxu0
    %8007 = vdwg.mxu0
    %v8008 = vadd.f32 %v7754, %v7757
    %v8009 = vadd.f32 %v8008, %v7762
    %v8010 = vadd.f32 %v8009, %v7765
    %v8011 = vadd.f32 %v8010, %v7770
    %v8012 = vadd.f32 %v8011, %v7773
    %v8013 = vadd.f32 %v8012, %v7778
    %v8014 = vadd.f32 %v8013, %v7781
    %v8015 = vadd.f32 %v8014, %v7786
    %v8016 = vadd.f32 %v8015, %v7789
    %v8017 = vadd.f32 %v8016, %v7794
    %v8018 = vadd.f32 %v8017, %v7797
    %v8019 = vadd.f32 %v8018, %v7802
    %v8020 = vadd.f32 %v8019, %v7805
    %v8021 = vadd.f32 %v8020, %v7810
    %v8022 = vadd.f32 %v8021, %v7813
    %v8023 = vadd.f32 %v8022, %v7818
    %v8024 = vadd.f32 %v8023, %v7821
    %v8025 = vadd.f32 %v8024, %v7826
    %v8026 = vadd.f32 %v8025, %v7829
    %v8027 = vadd.f32 %v8026, %v7834
    %v8028 = vadd.f32 %v8027, %v7837
    %v8029 = vadd.f32 %v8028, %v7842
    %v8030 = vadd.f32 %v8029, %v7845
    %v8031 = vadd.f32 %v8030, %v7850
    %v8032 = vadd.f32 %v8031, %v7853
    %v8033 = vadd.f32 %v8032, %v7858
    %v8034 = vadd.f32 %v8033, %v7861
    %v8035 = vadd.f32 %v8034, %v7866
    %v8036 = vadd.f32 %v8035, %v7869
    %v8037 = vadd.f32 %v8036, %v7874
    %v8038 = vadd.f32 %v8037, %v7877
    %v8039 = vadd.f32 %v8038, %v7882
    %v8040 = vadd.f32 %v8039, %v7885
    %v8041 = vadd.f32 %v8040, %v7890
    %v8042 = vadd.f32 %v8041, %v7893
    %v8043 = vadd.f32 %v8042, %v7898
    %v8044 = vadd.f32 %v8043, %v7901
    %v8045 = vadd.f32 %v8044, %v7906
    %v8046 = vadd.f32 %v8045, %v7909
    %v8047 = vadd.f32 %v8046, %v7914
    %v8048 = vadd.f32 %v8047, %v7917
    %v8049 = vadd.f32 %v8048, %v7922
    %v8050 = vadd.f32 %v8049, %v7925
    %v8051 = vadd.f32 %v8050, %v7930
    %v8052 = vadd.f32 %v8051, %v7933
    %v8053 = vadd.f32 %v8052, %v7938
    %v8054 = vadd.f32 %v8053, %v7941
    %v8055 = vadd.f32 %v8054, %v7946
    %v8056 = vadd.f32 %v8055, %v7949
    %v8057 = vadd.f32 %v8056, %v7954
    %v8058 = vadd.f32 %v8057, %v7957
    %v8059 = vadd.f32 %v8058, %v7962
    %v8060 = vadd.f32 %v8059, %v7965
    %v8061 = vadd.f32 %v8060, %v7970
    %v8062 = vadd.f32 %v8061, %v7973
    %v8063 = vadd.f32 %v8062, %v7978
    %v8064 = vadd.f32 %v8063, %v7981
    %v8065 = vadd.f32 %v8064, %v7986
    %v8066 = vadd.f32 %v8065, %v7989
    %v8067 = vadd.f32 %v8066, %v7994
    %v8068 = vadd.f32 %v8067, %v7997
    %v8069 = vadd.f32 %v8068, %v8002
    %v8070 = vadd.f32 %v8069, %v8005
    %v8071 = vrot.slane %v8070, 4
    %v8072 = vadd.f32 %v8070, %v8071
    %v8073 = vrot.slane %v8072, 2
    %v8074 = vadd.f32 %v8072, %v8073
    %v8075 = vrot.slane %v8074, 1
    %v8076 = vadd.f32 %v8074, %v8075
    %v8077 = vmul.f32 %v7754, %v7754
    %v8078 = vmul.f32 %v7757, %v7757
    %v8079 = vmul.f32 %v7762, %v7762
    %v8080 = vmul.f32 %v7765, %v7765
    %v8081 = vmul.f32 %v7770, %v7770
    %v8082 = vmul.f32 %v7773, %v7773
    %v8083 = vmul.f32 %v7778, %v7778
    %v8084 = vmul.f32 %v7781, %v7781
    %v8085 = vmul.f32 %v7786, %v7786
    %v8086 = vmul.f32 %v7789, %v7789
    %v8087 = vmul.f32 %v7794, %v7794
    %v8088 = vmul.f32 %v7797, %v7797
    %v8089 = vmul.f32 %v7802, %v7802
    %v8090 = vmul.f32 %v7805, %v7805
    %v8091 = vmul.f32 %v7810, %v7810
    %v8092 = vmul.f32 %v7813, %v7813
    %v8093 = vmul.f32 %v7818, %v7818
    %v8094 = vmul.f32 %v7821, %v7821
    %v8095 = vmul.f32 %v7826, %v7826
    %v8096 = vmul.f32 %v7829, %v7829
    %v8097 = vmul.f32 %v7834, %v7834
    %v8098 = vmul.f32 %v7837, %v7837
    %v8099 = vmul.f32 %v7842, %v7842
    %v8100 = vmul.f32 %v7845, %v7845
    %v8101 = vmul.f32 %v7850, %v7850
    %v8102 = vmul.f32 %v7853, %v7853
    %v8103 = vmul.f32 %v7858, %v7858
    %v8104 = vmul.f32 %v7861, %v7861
    %v8105 = vmul.f32 %v7866, %v7866
    %v8106 = vmul.f32 %v7869, %v7869
    %v8107 = vmul.f32 %v7874, %v7874
    %v8108 = vmul.f32 %v7877, %v7877
    %v8109 = vmul.f32 %v7882, %v7882
    %v8110 = vmul.f32 %v7885, %v7885
    %v8111 = vmul.f32 %v7890, %v7890
    %v8112 = vmul.f32 %v7893, %v7893
    %v8113 = vmul.f32 %v7898, %v7898
    %v8114 = vmul.f32 %v7901, %v7901
    %v8115 = vmul.f32 %v7906, %v7906
    %v8116 = vmul.f32 %v7909, %v7909
    %v8117 = vmul.f32 %v7914, %v7914
    %v8118 = vmul.f32 %v7917, %v7917
    %v8119 = vmul.f32 %v7922, %v7922
    %v8120 = vmul.f32 %v7925, %v7925
    %v8121 = vmul.f32 %v7930, %v7930
    %v8122 = vmul.f32 %v7933, %v7933
    %v8123 = vmul.f32 %v7938, %v7938
    %v8124 = vmul.f32 %v7941, %v7941
    %v8125 = vmul.f32 %v7946, %v7946
    %v8126 = vmul.f32 %v7949, %v7949
    %v8127 = vmul.f32 %v7954, %v7954
    %v8128 = vmul.f32 %v7957, %v7957
    %v8129 = vmul.f32 %v7962, %v7962
    %v8130 = vmul.f32 %v7965, %v7965
    %v8131 = vmul.f32 %v7970, %v7970
    %v8132 = vmul.f32 %v7973, %v7973
    %v8133 = vmul.f32 %v7978, %v7978
    %v8134 = vmul.f32 %v7981, %v7981
    %v8135 = vmul.f32 %v7986, %v7986
    %v8136 = vmul.f32 %v7989, %v7989
    %v8137 = vmul.f32 %v7994, %v7994
    %v8138 = vmul.f32 %v7997, %v7997
    %v8139 = vmul.f32 %v8002, %v8002
    %v8140 = vmul.f32 %v8005, %v8005
    %v8141 = vadd.f32 %v8077, %v8078
    %v8142 = vadd.f32 %v8141, %v8079
    %v8143 = vadd.f32 %v8142, %v8080
    %v8144 = vadd.f32 %v8143, %v8081
    %v8145 = vadd.f32 %v8144, %v8082
    %v8146 = vadd.f32 %v8145, %v8083
    %v8147 = vadd.f32 %v8146, %v8084
    %v8148 = vadd.f32 %v8147, %v8085
    %v8149 = vadd.f32 %v8148, %v8086
    %v8150 = vadd.f32 %v8149, %v8087
    %v8151 = vadd.f32 %v8150, %v8088
    %v8152 = vadd.f32 %v8151, %v8089
    %v8153 = vadd.f32 %v8152, %v8090
    %v8154 = vadd.f32 %v8153, %v8091
    %v8155 = vadd.f32 %v8154, %v8092
    %v8156 = vadd.f32 %v8155, %v8093
    %v8157 = vadd.f32 %v8156, %v8094
    %v8158 = vadd.f32 %v8157, %v8095
    %v8159 = vadd.f32 %v8158, %v8096
    %v8160 = vadd.f32 %v8159, %v8097
    %v8161 = vadd.f32 %v8160, %v8098
    %v8162 = vadd.f32 %v8161, %v8099
    %v8163 = vadd.f32 %v8162, %v8100
    %v8164 = vadd.f32 %v8163, %v8101
    %v8165 = vadd.f32 %v8164, %v8102
    %v8166 = vadd.f32 %v8165, %v8103
    %v8167 = vadd.f32 %v8166, %v8104
    %v8168 = vadd.f32 %v8167, %v8105
    %v8169 = vadd.f32 %v8168, %v8106
    %v8170 = vadd.f32 %v8169, %v8107
    %v8171 = vadd.f32 %v8170, %v8108
    %v8172 = vadd.f32 %v8171, %v8109
    %v8173 = vadd.f32 %v8172, %v8110
    %v8174 = vadd.f32 %v8173, %v8111
    %v8175 = vadd.f32 %v8174, %v8112
    %v8176 = vadd.f32 %v8175, %v8113
    %v8177 = vadd.f32 %v8176, %v8114
    %v8178 = vadd.f32 %v8177, %v8115
    %v8179 = vadd.f32 %v8178, %v8116
    %v8180 = vadd.f32 %v8179, %v8117
    %v8181 = vadd.f32 %v8180, %v8118
    %v8182 = vadd.f32 %v8181, %v8119
    %v8183 = vadd.f32 %v8182, %v8120
    %v8184 = vadd.f32 %v8183, %v8121
    %v8185 = vadd.f32 %v8184, %v8122
    %v8186 = vadd.f32 %v8185, %v8123
    %v8187 = vadd.f32 %v8186, %v8124
    %v8188 = vadd.f32 %v8187, %v8125
    %v8189 = vadd.f32 %v8188, %v8126
    %v8190 = vadd.f32 %v8189, %v8127
    %v8191 = vadd.f32 %v8190, %v8128
    %v8192 = vadd.f32 %v8191, %v8129
    %v8193 = vadd.f32 %v8192, %v8130
    %v8194 = vadd.f32 %v8193, %v8131
    %v8195 = vadd.f32 %v8194, %v8132
    %v8196 = vadd.f32 %v8195, %v8133
    %v8197 = vadd.f32 %v8196, %v8134
    %v8198 = vadd.f32 %v8197, %v8135
    %v8199 = vadd.f32 %v8198, %v8136
    %v8200 = vadd.f32 %v8199, %v8137
    %v8201 = vadd.f32 %v8200, %v8138
    %v8202 = vadd.f32 %v8201, %v8139
    %v8203 = vadd.f32 %v8202, %v8140
    %v8204 = vrot.slane %v8203, 4
    %v8205 = vadd.f32 %v8203, %v8204
    %v8206 = vrot.slane %v8205, 2
    %v8207 = vadd.f32 %v8205, %v8206
    %v8208 = vrot.slane %v8207, 1
    %v8209 = vadd.f32 %v8207, %v8208
    %v8210 = vmul.f32 %v8076, 0.001953125
    %v8211 = vmul.f32 %v8209, 0.001953125
    %v8212 = vmul.f32 %v8210, %v8210
    %v8213 = vsub.f32 %v8211, %v8212
    %v8214 = vld [vmem:[%s8] sm:$0x1]
    %v8215 = vadd.f32 %v8213, 1e-05
    %v8216 = vrsqrt.pop %v8215
    %v8217 = vmul.f32 %v8214, %v8216
    %v8218 = vld [vmem:[%s9] sm:$0x1]
    %v8219 = vmul.f32 %v8210, %v8217
    %v8220 = vsub.f32 %v8218, %v8219
    %v8222 = vlaneseq
    %v8223 = vshrl.u32 %v8222, 7
    %v8224 = vsub.s32 0, %v8223
    %v8225 = vrot.slane %v8217, %v8224
    %v8227 = vmul.f32 %v7754, %v8225
    %v8228 = vmul.f32 %v7757, %v8225
    %v8229 = vmul.f32 %v7762, %v8225
    %v8230 = vmul.f32 %v7765, %v8225
    %v8231 = vmul.f32 %v7770, %v8225
    %v8232 = vmul.f32 %v7773, %v8225
    %v8233 = vmul.f32 %v7778, %v8225
    %v8234 = vmul.f32 %v7781, %v8225
    %v8235 = vmul.f32 %v7786, %v8225
    %v8236 = vmul.f32 %v7789, %v8225
    %v8237 = vmul.f32 %v7794, %v8225
    %v8238 = vmul.f32 %v7797, %v8225
    %v8239 = vmul.f32 %v7802, %v8225
    %v8240 = vmul.f32 %v7805, %v8225
    %v8241 = vmul.f32 %v7810, %v8225
    %v8242 = vmul.f32 %v7813, %v8225
    %v8243 = vmul.f32 %v7818, %v8225
    %v8244 = vmul.f32 %v7821, %v8225
    %v8245 = vmul.f32 %v7826, %v8225
    %v8246 = vmul.f32 %v7829, %v8225
    %v8247 = vmul.f32 %v7834, %v8225
    %v8248 = vmul.f32 %v7837, %v8225
    %v8249 = vmul.f32 %v7842, %v8225
    %v8250 = vmul.f32 %v7845, %v8225
    %v8251 = vmul.f32 %v7850, %v8225
    %v8252 = vmul.f32 %v7853, %v8225
    %v8253 = vmul.f32 %v7858, %v8225
    %v8254 = vmul.f32 %v7861, %v8225
    %v8255 = vmul.f32 %v7866, %v8225
    %v8256 = vmul.f32 %v7869, %v8225
    %v8257 = vmul.f32 %v7874, %v8225
    %v8258 = vmul.f32 %v7877, %v8225
    %v8259 = vmul.f32 %v7882, %v8225
    %v8260 = vmul.f32 %v7885, %v8225
    %v8261 = vmul.f32 %v7890, %v8225
    %v8262 = vmul.f32 %v7893, %v8225
    %v8263 = vmul.f32 %v7898, %v8225
    %v8264 = vmul.f32 %v7901, %v8225
    %v8265 = vmul.f32 %v7906, %v8225
    %v8266 = vmul.f32 %v7909, %v8225
    %v8267 = vmul.f32 %v7914, %v8225
    %v8268 = vmul.f32 %v7917, %v8225
    %v8269 = vmul.f32 %v7922, %v8225
    %v8270 = vmul.f32 %v7925, %v8225
    %v8271 = vmul.f32 %v7930, %v8225
    %v8272 = vmul.f32 %v7933, %v8225
    %v8273 = vmul.f32 %v7938, %v8225
    %v8274 = vmul.f32 %v7941, %v8225
    %v8275 = vmul.f32 %v7946, %v8225
    %v8276 = vmul.f32 %v7949, %v8225
    %v8277 = vmul.f32 %v7954, %v8225
    %v8278 = vmul.f32 %v7957, %v8225
    %v8279 = vmul.f32 %v7962, %v8225
    %v8280 = vmul.f32 %v7965, %v8225
    %v8281 = vmul.f32 %v7970, %v8225
    %v8282 = vmul.f32 %v7973, %v8225
    %v8283 = vmul.f32 %v7978, %v8225
    %v8284 = vmul.f32 %v7981, %v8225
    %v8285 = vmul.f32 %v7986, %v8225
    %v8286 = vmul.f32 %v7989, %v8225
    %v8287 = vmul.f32 %v7994, %v8225
    %v8288 = vmul.f32 %v7997, %v8225
    %v8289 = vmul.f32 %v8002, %v8225
    %v8290 = vmul.f32 %v8005, %v8225
    %v8292 = vlaneseq
    %v8293 = vshrl.u32 %v8292, 7
    %v8294 = vsub.s32 0, %v8293
    %v8295 = vrot.slane %v8220, %v8294
    %v8297 = vadd.f32 %v8227, %v8295
    %v8298 = vadd.f32 %v8228, %v8295
    %v8299 = vadd.f32 %v8229, %v8295
    %v8300 = vadd.f32 %v8230, %v8295
    %v8301 = vadd.f32 %v8231, %v8295
    %v8302 = vadd.f32 %v8232, %v8295
    %v8303 = vadd.f32 %v8233, %v8295
    %v8304 = vadd.f32 %v8234, %v8295
    %v8305 = vadd.f32 %v8235, %v8295
    %v8306 = vadd.f32 %v8236, %v8295
    %v8307 = vadd.f32 %v8237, %v8295
    %v8308 = vadd.f32 %v8238, %v8295
    %v8309 = vadd.f32 %v8239, %v8295
    %v8310 = vadd.f32 %v8240, %v8295
    %v8311 = vadd.f32 %v8241, %v8295
    %v8312 = vadd.f32 %v8242, %v8295
    %v8313 = vadd.f32 %v8243, %v8295
    %v8314 = vadd.f32 %v8244, %v8295
    %v8315 = vadd.f32 %v8245, %v8295
    %v8316 = vadd.f32 %v8246, %v8295
    %v8317 = vadd.f32 %v8247, %v8295
    %v8318 = vadd.f32 %v8248, %v8295
    %v8319 = vadd.f32 %v8249, %v8295
    %v8320 = vadd.f32 %v8250, %v8295
    %v8321 = vadd.f32 %v8251, %v8295
    %v8322 = vadd.f32 %v8252, %v8295
    %v8323 = vadd.f32 %v8253, %v8295
    %v8324 = vadd.f32 %v8254, %v8295
    %v8325 = vadd.f32 %v8255, %v8295
    %v8326 = vadd.f32 %v8256, %v8295
    %v8327 = vadd.f32 %v8257, %v8295
    %v8328 = vadd.f32 %v8258, %v8295
    %v8329 = vadd.f32 %v8259, %v8295
    %v8330 = vadd.f32 %v8260, %v8295
    %v8331 = vadd.f32 %v8261, %v8295
    %v8332 = vadd.f32 %v8262, %v8295
    %v8333 = vadd.f32 %v8263, %v8295
    %v8334 = vadd.f32 %v8264, %v8295
    %v8335 = vadd.f32 %v8265, %v8295
    %v8336 = vadd.f32 %v8266, %v8295
    %v8337 = vadd.f32 %v8267, %v8295
    %v8338 = vadd.f32 %v8268, %v8295
    %v8339 = vadd.f32 %v8269, %v8295
    %v8340 = vadd.f32 %v8270, %v8295
    %v8341 = vadd.f32 %v8271, %v8295
    %v8342 = vadd.f32 %v8272, %v8295
    %v8343 = vadd.f32 %v8273, %v8295
    %v8344 = vadd.f32 %v8274, %v8295
    %v8345 = vadd.f32 %v8275, %v8295
    %v8346 = vadd.f32 %v8276, %v8295
    %v8347 = vadd.f32 %v8277, %v8295
    %v8348 = vadd.f32 %v8278, %v8295
    %v8349 = vadd.f32 %v8279, %v8295
    %v8350 = vadd.f32 %v8280, %v8295
    %v8351 = vadd.f32 %v8281, %v8295
    %v8352 = vadd.f32 %v8282, %v8295
    %v8353 = vadd.f32 %v8283, %v8295
    %v8354 = vadd.f32 %v8284, %v8295
    %v8355 = vadd.f32 %v8285, %v8295
    %v8356 = vadd.f32 %v8286, %v8295
    %v8357 = vadd.f32 %v8287, %v8295
    %v8358 = vadd.f32 %v8288, %v8295
    %v8359 = vadd.f32 %v8289, %v8295
    %v8360 = vadd.f32 %v8290, %v8295
    %v8361 = vld [vmem:[#allocation3] sm:$0xff]
    %v8362 = vld [vmem:[#allocation3 + $0x8] sm:$0xff]
    %v8363 = vld [vmem:[#allocation3 + $0x10] sm:$0xff]
    %v8364 = vld [vmem:[#allocation3 + $0x18] sm:$0xff]
    %v8365 = vld [vmem:[#allocation3 + $0x20] sm:$0xff]
    %v8366 = vld [vmem:[#allocation3 + $0x28] sm:$0xff]
    %v8367 = vld [vmem:[#allocation3 + $0x30] sm:$0xff]
    %v8368 = vld [vmem:[#allocation3 + $0x38] sm:$0xff]
    %v8369 = vld [vmem:[#allocation3 + $0x40] sm:$0xff]
    %v8370 = vld [vmem:[#allocation3 + $0x48] sm:$0xff]
    %v8371 = vld [vmem:[#allocation3 + $0x50] sm:$0xff]
    %v8372 = vld [vmem:[#allocation3 + $0x58] sm:$0xff]
    %v8373 = vld [vmem:[#allocation3 + $0x60] sm:$0xff]
    %v8374 = vld [vmem:[#allocation3 + $0x68] sm:$0xff]
    %v8375 = vld [vmem:[#allocation3 + $0x70] sm:$0xff]
    %v8376 = vld [vmem:[#allocation3 + $0x78] sm:$0xff]
    %v8377 = vld [vmem:[#allocation3 + $0x80] sm:$0xff]
    %v8378 = vld [vmem:[#allocation3 + $0x88] sm:$0xff]
    %v8379 = vld [vmem:[#allocation3 + $0x90] sm:$0xff]
    %v8380 = vld [vmem:[#allocation3 + $0x98] sm:$0xff]
    %v8381 = vld [vmem:[#allocation3 + $0xa0] sm:$0xff]
    %v8382 = vld [vmem:[#allocation3 + $0xa8] sm:$0xff]
    %v8383 = vld [vmem:[#allocation3 + $0xb0] sm:$0xff]
    %v8384 = vld [vmem:[#allocation3 + $0xb8] sm:$0xff]
    %v8385 = vld [vmem:[#allocation3 + $0xc0] sm:$0xff]
    %v8386 = vld [vmem:[#allocation3 + $0xc8] sm:$0xff]
    %v8387 = vld [vmem:[#allocation3 + $0xd0] sm:$0xff]
    %v8388 = vld [vmem:[#allocation3 + $0xd8] sm:$0xff]
    %v8389 = vld [vmem:[#allocation3 + $0xe0] sm:$0xff]
    %v8390 = vld [vmem:[#allocation3 + $0xe8] sm:$0xff]
    %v8391 = vld [vmem:[#allocation3 + $0xf0] sm:$0xff]
    %v8392 = vld [vmem:[#allocation3 + $0xf8] sm:$0xff]
    %v8393 = vld [vmem:[#allocation3 + $0x100] sm:$0xff]
    %v8394 = vld [vmem:[#allocation3 + $0x108] sm:$0xff]
    %v8395 = vld [vmem:[#allocation3 + $0x110] sm:$0xff]
    %v8396 = vld [vmem:[#allocation3 + $0x118] sm:$0xff]
    %v8397 = vld [vmem:[#allocation3 + $0x120] sm:$0xff]
    %v8398 = vld [vmem:[#allocation3 + $0x128] sm:$0xff]
    %v8399 = vld [vmem:[#allocation3 + $0x130] sm:$0xff]
    %v8400 = vld [vmem:[#allocation3 + $0x138] sm:$0xff]
    %v8401 = vld [vmem:[#allocation3 + $0x140] sm:$0xff]
    %v8402 = vld [vmem:[#allocation3 + $0x148] sm:$0xff]
    %v8403 = vld [vmem:[#allocation3 + $0x150] sm:$0xff]
    %v8404 = vld [vmem:[#allocation3 + $0x158] sm:$0xff]
    %v8405 = vld [vmem:[#allocation3 + $0x160] sm:$0xff]
    %v8406 = vld [vmem:[#allocation3 + $0x168] sm:$0xff]
    %v8407 = vld [vmem:[#allocation3 + $0x170] sm:$0xff]
    %v8408 = vld [vmem:[#allocation3 + $0x178] sm:$0xff]
    %v8409 = vld [vmem:[#allocation3 + $0x180] sm:$0xff]
    %v8410 = vld [vmem:[#allocation3 + $0x188] sm:$0xff]
    %v8411 = vld [vmem:[#allocation3 + $0x190] sm:$0xff]
    %v8412 = vld [vmem:[#allocation3 + $0x198] sm:$0xff]
    %v8413 = vld [vmem:[#allocation3 + $0x1a0] sm:$0xff]
    %v8414 = vld [vmem:[#allocation3 + $0x1a8] sm:$0xff]
    %v8415 = vld [vmem:[#allocation3 + $0x1b0] sm:$0xff]
    %v8416 = vld [vmem:[#allocation3 + $0x1b8] sm:$0xff]
    %v8417 = vld [vmem:[#allocation3 + $0x1c0] sm:$0xff]
    %v8418 = vld [vmem:[#allocation3 + $0x1c8] sm:$0xff]
    %v8419 = vld [vmem:[#allocation3 + $0x1d0] sm:$0xff]
    %v8420 = vld [vmem:[#allocation3 + $0x1d8] sm:$0xff]
    %v8421 = vld [vmem:[#allocation3 + $0x1e0] sm:$0xff]
    %v8422 = vld [vmem:[#allocation3 + $0x1e8] sm:$0xff]
    %v8423 = vld [vmem:[#allocation3 + $0x1f0] sm:$0xff]
    %v8424 = vld [vmem:[#allocation3 + $0x1f8] sm:$0xff]
    %v8425 = vadd.f32 %v8297, %v8361
    %v8426 = vadd.f32 %v8298, %v8362
    %v8427 = vadd.f32 %v8299, %v8363
    %v8428 = vadd.f32 %v8300, %v8364
    %v8429 = vadd.f32 %v8301, %v8365
    %v8430 = vadd.f32 %v8302, %v8366
    %v8431 = vadd.f32 %v8303, %v8367
    %v8432 = vadd.f32 %v8304, %v8368
    %v8433 = vadd.f32 %v8305, %v8369
    %v8434 = vadd.f32 %v8306, %v8370
    %v8435 = vadd.f32 %v8307, %v8371
    %v8436 = vadd.f32 %v8308, %v8372
    %v8437 = vadd.f32 %v8309, %v8373
    %v8438 = vadd.f32 %v8310, %v8374
    %v8439 = vadd.f32 %v8311, %v8375
    %v8440 = vadd.f32 %v8312, %v8376
    %v8441 = vadd.f32 %v8313, %v8377
    %v8442 = vadd.f32 %v8314, %v8378
    %v8443 = vadd.f32 %v8315, %v8379
    %v8444 = vadd.f32 %v8316, %v8380
    %v8445 = vadd.f32 %v8317, %v8381
    %v8446 = vadd.f32 %v8318, %v8382
    %v8447 = vadd.f32 %v8319, %v8383
    %v8448 = vadd.f32 %v8320, %v8384
    %v8449 = vadd.f32 %v8321, %v8385
    %v8450 = vadd.f32 %v8322, %v8386
    %v8451 = vadd.f32 %v8323, %v8387
    %v8452 = vadd.f32 %v8324, %v8388
    %v8453 = vadd.f32 %v8325, %v8389
    %v8454 = vadd.f32 %v8326, %v8390
    %v8455 = vadd.f32 %v8327, %v8391
    %v8456 = vadd.f32 %v8328, %v8392
    %v8457 = vadd.f32 %v8329, %v8393
    %v8458 = vadd.f32 %v8330, %v8394
    %v8459 = vadd.f32 %v8331, %v8395
    %v8460 = vadd.f32 %v8332, %v8396
    %v8461 = vadd.f32 %v8333, %v8397
    %v8462 = vadd.f32 %v8334, %v8398
    %v8463 = vadd.f32 %v8335, %v8399
    %v8464 = vadd.f32 %v8336, %v8400
    %v8465 = vadd.f32 %v8337, %v8401
    %v8466 = vadd.f32 %v8338, %v8402
    %v8467 = vadd.f32 %v8339, %v8403
    %v8468 = vadd.f32 %v8340, %v8404
    %v8469 = vadd.f32 %v8341, %v8405
    %v8470 = vadd.f32 %v8342, %v8406
    %v8471 = vadd.f32 %v8343, %v8407
    %v8472 = vadd.f32 %v8344, %v8408
    %v8473 = vadd.f32 %v8345, %v8409
    %v8474 = vadd.f32 %v8346, %v8410
    %v8475 = vadd.f32 %v8347, %v8411
    %v8476 = vadd.f32 %v8348, %v8412
    %v8477 = vadd.f32 %v8349, %v8413
    %v8478 = vadd.f32 %v8350, %v8414
    %v8479 = vadd.f32 %v8351, %v8415
    %v8480 = vadd.f32 %v8352, %v8416
    %v8481 = vadd.f32 %v8353, %v8417
    %v8482 = vadd.f32 %v8354, %v8418
    %v8483 = vadd.f32 %v8355, %v8419
    %v8484 = vadd.f32 %v8356, %v8420
    %v8485 = vadd.f32 %v8357, %v8421
    %v8486 = vadd.f32 %v8358, %v8422
    %v8487 = vadd.f32 %v8359, %v8423
    %v8488 = vadd.f32 %v8360, %v8424
    %v8489 = vmax.f32 %v8425, 0.0
    %v8490 = vmax.f32 %v8426, 0.0
    %v8491 = vmax.f32 %v8427, 0.0
    %v8492 = vmax.f32 %v8428, 0.0
    %v8493 = vmax.f32 %v8429, 0.0
    %v8494 = vmax.f32 %v8430, 0.0
    %v8495 = vmax.f32 %v8431, 0.0
    %v8496 = vmax.f32 %v8432, 0.0
    %v8497 = vmax.f32 %v8433, 0.0
    %v8498 = vmax.f32 %v8434, 0.0
    %v8499 = vmax.f32 %v8435, 0.0
    %v8500 = vmax.f32 %v8436, 0.0
    %v8501 = vmax.f32 %v8437, 0.0
    %v8502 = vmax.f32 %v8438, 0.0
    %v8503 = vmax.f32 %v8439, 0.0
    %v8504 = vmax.f32 %v8440, 0.0
    %v8505 = vmax.f32 %v8441, 0.0
    %v8506 = vmax.f32 %v8442, 0.0
    %v8507 = vmax.f32 %v8443, 0.0
    %v8508 = vmax.f32 %v8444, 0.0
    %v8509 = vmax.f32 %v8445, 0.0
    %v8510 = vmax.f32 %v8446, 0.0
    %v8511 = vmax.f32 %v8447, 0.0
    %v8512 = vmax.f32 %v8448, 0.0
    %v8513 = vmax.f32 %v8449, 0.0
    %v8514 = vmax.f32 %v8450, 0.0
    %v8515 = vmax.f32 %v8451, 0.0
    %v8516 = vmax.f32 %v8452, 0.0
    %v8517 = vmax.f32 %v8453, 0.0
    %v8518 = vmax.f32 %v8454, 0.0
    %v8519 = vmax.f32 %v8455, 0.0
    %v8520 = vmax.f32 %v8456, 0.0
    %v8521 = vmax.f32 %v8457, 0.0
    %v8522 = vmax.f32 %v8458, 0.0
    %v8523 = vmax.f32 %v8459, 0.0
    %v8524 = vmax.f32 %v8460, 0.0
    %v8525 = vmax.f32 %v8461, 0.0
    %v8526 = vmax.f32 %v8462, 0.0
    %v8527 = vmax.f32 %v8463, 0.0
    %v8528 = vmax.f32 %v8464, 0.0
    %v8529 = vmax.f32 %v8465, 0.0
    %v8530 = vmax.f32 %v8466, 0.0
    %v8531 = vmax.f32 %v8467, 0.0
    %v8532 = vmax.f32 %v8468, 0.0
    %v8533 = vmax.f32 %v8469, 0.0
    %v8534 = vmax.f32 %v8470, 0.0
    %v8535 = vmax.f32 %v8471, 0.0
    %v8536 = vmax.f32 %v8472, 0.0
    %v8537 = vmax.f32 %v8473, 0.0
    %v8538 = vmax.f32 %v8474, 0.0
    %v8539 = vmax.f32 %v8475, 0.0
    %v8540 = vmax.f32 %v8476, 0.0
    %v8541 = vmax.f32 %v8477, 0.0
    %v8542 = vmax.f32 %v8478, 0.0
    %v8543 = vmax.f32 %v8479, 0.0
    %v8544 = vmax.f32 %v8480, 0.0
    %v8545 = vmax.f32 %v8481, 0.0
    %v8546 = vmax.f32 %v8482, 0.0
    %v8547 = vmax.f32 %v8483, 0.0
    %v8548 = vmax.f32 %v8484, 0.0
    %v8549 = vmax.f32 %v8485, 0.0
    %v8550 = vmax.f32 %v8486, 0.0
    %v8551 = vmax.f32 %v8487, 0.0
    %v8552 = vmax.f32 %v8488, 0.0
    %8553 = vst [vmem:[#allocation11] sm:$0xff] %v8489
    %8554 = vst [vmem:[#allocation11 + $0x8] sm:$0xff] %v8490
    %8555 = vst [vmem:[#allocation11 + $0x10] sm:$0xff] %v8491
    %8556 = vst [vmem:[#allocation11 + $0x18] sm:$0xff] %v8492
    %8557 = vst [vmem:[#allocation11 + $0x20] sm:$0xff] %v8493
    %8558 = vst [vmem:[#allocation11 + $0x28] sm:$0xff] %v8494
    %8559 = vst [vmem:[#allocation11 + $0x30] sm:$0xff] %v8495
    %8560 = vst [vmem:[#allocation11 + $0x38] sm:$0xff] %v8496
    %8561 = vst [vmem:[#allocation11 + $0x40] sm:$0xff] %v8497
    %8562 = vst [vmem:[#allocation11 + $0x48] sm:$0xff] %v8498
    %8563 = vst [vmem:[#allocation11 + $0x50] sm:$0xff] %v8499
    %8564 = vst [vmem:[#allocation11 + $0x58] sm:$0xff] %v8500
    %8565 = vst [vmem:[#allocation11 + $0x60] sm:$0xff] %v8501
    %8566 = vst [vmem:[#allocation11 + $0x68] sm:$0xff] %v8502
    %8567 = vst [vmem:[#allocation11 + $0x70] sm:$0xff] %v8503
    %8568 = vst [vmem:[#allocation11 + $0x78] sm:$0xff] %v8504
    %8569 = vst [vmem:[#allocation11 + $0x80] sm:$0xff] %v8505
    %8570 = vst [vmem:[#allocation11 + $0x88] sm:$0xff] %v8506
    %8571 = vst [vmem:[#allocation11 + $0x90] sm:$0xff] %v8507
    %8572 = vst [vmem:[#allocation11 + $0x98] sm:$0xff] %v8508
    %8573 = vst [vmem:[#allocation11 + $0xa0] sm:$0xff] %v8509
    %8574 = vst [vmem:[#allocation11 + $0xa8] sm:$0xff] %v8510
    %8575 = vst [vmem:[#allocation11 + $0xb0] sm:$0xff] %v8511
    %8576 = vst [vmem:[#allocation11 + $0xb8] sm:$0xff] %v8512
    %8577 = vst [vmem:[#allocation11 + $0xc0] sm:$0xff] %v8513
    %8578 = vst [vmem:[#allocation11 + $0xc8] sm:$0xff] %v8514
    %8579 = vst [vmem:[#allocation11 + $0xd0] sm:$0xff] %v8515
    %8580 = vst [vmem:[#allocation11 + $0xd8] sm:$0xff] %v8516
    %8581 = vst [vmem:[#allocation11 + $0xe0] sm:$0xff] %v8517
    %8582 = vst [vmem:[#allocation11 + $0xe8] sm:$0xff] %v8518
    %8583 = vst [vmem:[#allocation11 + $0xf0] sm:$0xff] %v8519
    %8584 = vst [vmem:[#allocation11 + $0xf8] sm:$0xff] %v8520
    %8585 = vst [vmem:[#allocation11 + $0x100] sm:$0xff] %v8521
    %8586 = vst [vmem:[#allocation11 + $0x108] sm:$0xff] %v8522
    %8587 = vst [vmem:[#allocation11 + $0x110] sm:$0xff] %v8523
    %8588 = vst [vmem:[#allocation11 + $0x118] sm:$0xff] %v8524
    %8589 = vst [vmem:[#allocation11 + $0x120] sm:$0xff] %v8525
    %8590 = vst [vmem:[#allocation11 + $0x128] sm:$0xff] %v8526
    %8591 = vst [vmem:[#allocation11 + $0x130] sm:$0xff] %v8527
    %8592 = vst [vmem:[#allocation11 + $0x138] sm:$0xff] %v8528
    %8593 = vst [vmem:[#allocation11 + $0x140] sm:$0xff] %v8529
    %8594 = vst [vmem:[#allocation11 + $0x148] sm:$0xff] %v8530
    %8595 = vst [vmem:[#allocation11 + $0x150] sm:$0xff] %v8531
    %8596 = vst [vmem:[#allocation11 + $0x158] sm:$0xff] %v8532
    %8597 = vst [vmem:[#allocation11 + $0x160] sm:$0xff] %v8533
    %8598 = vst [vmem:[#allocation11 + $0x168] sm:$0xff] %v8534
    %8599 = vst [vmem:[#allocation11 + $0x170] sm:$0xff] %v8535
    %8600 = vst [vmem:[#allocation11 + $0x178] sm:$0xff] %v8536
    %8601 = vst [vmem:[#allocation11 + $0x180] sm:$0xff] %v8537
    %8602 = vst [vmem:[#allocation11 + $0x188] sm:$0xff] %v8538
    %8603 = vst [vmem:[#allocation11 + $0x190] sm:$0xff] %v8539
    %8604 = vst [vmem:[#allocation11 + $0x198] sm:$0xff] %v8540
    %8605 = vst [vmem:[#allocation11 + $0x1a0] sm:$0xff] %v8541
    %8606 = vst [vmem:[#allocation11 + $0x1a8] sm:$0xff] %v8542
    %8607 = vst [vmem:[#allocation11 + $0x1b0] sm:$0xff] %v8543
    %8608 = vst [vmem:[#allocation11 + $0x1b8] sm:$0xff] %v8544
    %8609 = vst [vmem:[#allocation11 + $0x1c0] sm:$0xff] %v8545
    %8610 = vst [vmem:[#allocation11 + $0x1c8] sm:$0xff] %v8546
    %8611 = vst [vmem:[#allocation11 + $0x1d0] sm:$0xff] %v8547
    %8612 = vst [vmem:[#allocation11 + $0x1d8] sm:$0xff] %v8548
    %8613 = vst [vmem:[#allocation11 + $0x1e0] sm:$0xff] %v8549
    %8614 = vst [vmem:[#allocation11 + $0x1e8] sm:$0xff] %v8550
    %8615 = vst [vmem:[#allocation11 + $0x1f0] sm:$0xff] %v8551
    %8616 = vst [vmem:[#allocation11 + $0x1f8] sm:$0xff] %v8552
    // Predicated region
    $region58: #{tpu_custom_call.1} parent=1 // pred_check
      _
    $region59: #{tpu_custom_call.1} parent=1 // pred_check_branch
      %8618 = sbr.rel (0) target = $region61
    $region60: #{tpu_custom_call.1} parent=1 // pred_region
      %s8620 = ssub.s32 8192, 8192
      %8621 = vsyncadd [#allocation5], %s8620
      %s8622 = sshll.u32 [#allocation11], 4
      %s8623 = int_to_ptr.vmem [resolvable:$true] %s8622
      %8628 = dma.vmem_to_hbm [thread:$0]  %s8623, 8192, %s10, [#allocation5], 128, 128, 8
    $region61: #{tpu_custom_call.1} parent=1 // pred_fallthru
      _
    // Predicated region
    $region62: #{tpu_custom_call.1} parent=1 // pred_check
      _
    $region63: #{tpu_custom_call.1} parent=1 // pred_check_branch
      %8630 = sbr.rel (0) target = $region65
    $region64: #{tpu_custom_call.1} parent=1 // pred_region
      %8631 = dma.done [#allocation5], 8192
    $region65: #{tpu_custom_call.1} parent=1 // pred_fallthru
      _
    %8632 = vsyncpa [#allocation4], 1
    %8633 = vsyncpa [#allocation7], 1
    %8634 = vsyncpa [#allocation10], 1
    %8635 = vsyncpa [#allocation5], 1

</llo_original>
